<compile_context>
chip_gen: v5e
topology: v5e:2x2
jax: 0.10.0
libtpu: 0.0.40
codegen_flags: <defaults>
</compile_context>

<pallas_src>
import math

import numpy as np
import jax
import jax.numpy as jnp
from jax.experimental import pallas as pl
from jax.experimental.pallas import tpu as pltpu

# ----------------------------- small config ---------------------------------
POS_L = 4            # pos_encoding_levels
DIR_L = 4            # dir_encoding_levels
HIDDEN = 64          # hidden_dim
NUM_LAYERS = 4       # num_layers (density MLP depth)
SKIPS = (2,)         # skip_connections
APPEAR_DIM = 32      # appearance_dim == appearance_embedding_dim
EXPO_DIM = 8         # exposure_dim == exposure_embedding_dim
NUM_APPEAR_EMB = 100
BLOCK_RADIUS = 50.0

POS_IN_DIM = 3 + 3 * 2 * POS_L                      # 27
DIR_IN_DIM = 3 * 2 * DIR_L                          # 24
COLOR_IN_DIM = HIDDEN + DIR_IN_DIM + APPEAR_DIM + EXPO_DIM   # 128
IPE_ROWS = 3 * 2 * POS_L                            # 24
assert POS_L == DIR_L   # kernel reuses one frequency table for both encodings

# feature-major ray slab rows: [appearance | pos | cov | dir | exposure]
RAY_APP = 0
RAY_POS = APPEAR_DIM              # 32
RAY_COV = RAY_POS + 3             # 35
RAY_DIR = RAY_COV + 3             # 38
RAY_EXPO = RAY_DIR + 3            # 41
RAY_DIM = RAY_EXPO + 1            # 42

# feature-major packed output rows: [raw_density | density | raw_color | color]
OUT_DIM = 8

# --------------------------- weight slab layout ------------------------------
def _round8(n):
    return -(-n // 8) * 8


_SLAB_BLOCKS = [
    # name, out_rows, in_cols (bias column is appended at column `in_cols`)
    ("FREQ", 2 * POS_L, 3),        # [freq | -0.5*freq^2 | phase], no bias
    ("E1",   EXPO_DIM, 1),         # exposure layer 1 column + bias
    ("W0p",  HIDDEN, 3),           # density layer 0, means part
    ("W0e",  HIDDEN, IPE_ROWS),    # density layer 0, IPE part (+ b0)
    ("W1",   HIDDEN, HIDDEN),
    ("W2a",  HIDDEN, HIDDEN),      # skip layer, x part
    ("W2bp", HIDDEN, 3),           # skip layer, means part
    ("W2be", HIDDEN, IPE_ROWS),    # skip layer, IPE part (+ b2)
    ("W3",   HIDDEN, HIDDEN),
    ("FD",   HIDDEN + 1, HIDDEN),  # fused [feature | density] head
    ("C1f",  HIDDEN // 2, HIDDEN),         # color layer 1: feature rows (+ cb1 fold)
    ("C1d",  HIDDEN // 2, DIR_IN_DIM),     # color layer 1: dir-encoding rows
    ("C1a",  HIDDEN // 2, APPEAR_DIM),     # color layer 1: appearance rows
    ("C1e",  HIDDEN // 2, EXPO_DIM),       # exposure layer 2 folded into color layer 1
    ("C2",   HIDDEN // 2, HIDDEN // 2),
    ("CO",   3, HIDDEN // 2),
]
SLAB = {}
_row = 0
for _name, _fo, _k in _SLAB_BLOCKS:
    SLAB[_name] = (_row, _fo, _k)
    _row += _round8(_fo)
SLAB_ROWS = _round8(_row)                                   # 704
SLAB_COLS = _round8(max(k for _, _, k in _SLAB_BLOCKS) + 1)  # 72


# ----------------------------- encodings (reference only) --------------------
def integrated_positional_encoding(means, diag_covs, L):
    enc = []
    for i in range(L):
        freq = (2.0 ** i) * math.pi
        damp = jnp.exp(-0.5 * freq ** 2 * diag_covs)
        enc.append(damp * jnp.sin(freq * means))
        enc.append(damp * jnp.cos(freq * means))
    return jnp.concatenate(enc, axis=-1)


def positional_encoding(x, L):
    enc = []
    for i in range(L):
        freq = (2.0 ** i) * math.pi
        enc.append(jnp.sin(freq * x))
        enc.append(jnp.cos(freq * x))
    return jnp.concatenate(enc, axis=-1)


# ----------------------------- parameters ------------------------------------
def kaiming_linear(key, fan_in, fan_out):
    # PyTorch kaiming_normal_(nonlinearity='relu'), mode='fan_in', bias = 0
    std = math.sqrt(2.0 / fan_in)
    w = std * jax.random.normal(key, (fan_in, fan_out), jnp.float32)
    b = jnp.zeros((1, fan_out), jnp.float32)
    return w, b


def init_params(key):
    keys = iter(jax.random.split(key, 32))
    p = {}

    p["appearance_table"] = 0.01 * jax.random.normal(
        next(keys), (NUM_APPEAR_EMB, APPEAR_DIM), jnp.float32)

    # exposure MLP: Linear(1, E) -> ReLU -> Linear(E, E)
    p["ew1"], p["eb1"] = kaiming_linear(next(keys), 1, EXPO_DIM)
    p["ew2"], p["eb2"] = kaiming_linear(next(keys), EXPO_DIM, EXPO_DIM)

    # density MLP
    p["dw"], p["db"] = [], []
    for i in range(NUM_LAYERS):
        if i == 0:
            fan_in = POS_IN_DIM
        elif i in SKIPS:
            fan_in = HIDDEN + POS_IN_DIM
        else:
            fan_in = HIDDEN
        w, b = kaiming_linear(next(keys), fan_in, HIDDEN)
        p["dw"].append(w)
        p["db"].append(b)

    p["dow"], p["dob"] = kaiming_linear(next(keys), HIDDEN, 1)      # density head
    p["fw"], p["fb"] = kaiming_linear(next(keys), HIDDEN, HIDDEN)   # feature layer

    # color MLP
    p["cw1"], p["cb1"] = kaiming_linear(next(keys), COLOR_IN_DIM, HIDDEN // 2)
    p["cw2"], p["cb2"] = kaiming_linear(next(keys), HIDDEN // 2, HIDDEN // 2)
    p["cow"], p["cob"] = kaiming_linear(next(keys), HIDDEN // 2, 3)

    p["block_center"] = jnp.zeros((3,), jnp.float32)
    p["block_radius"] = jnp.float32(BLOCK_RADIUS)
    return p


# ----------------------------- wrapper-side packing --------------------------
def _freq_table(L):
    """(2L, 3) table: columns [freq, -0.5*freq^2, phase]; rows j<L are sin,
    rows j>=L are cos (cos(x) == sin(x + pi/2))."""
    t = np.zeros((2 * L, 3), np.float32)
    for j in range(2 * L):
        is_cos = j >= L
        level = j - L if is_cos else j
        f = (2.0 ** level) * math.pi
        t[j, 0] = f
        t[j, 1] = -0.5 * f * f
        t[j, 2] = 0.5 * math.pi if is_cos else 0.0
    return t


def _enc_perm(L):
    """Maps the kernel's channel-major encoding row r to the reference
    (level-major, [sin(3) cos(3)] per level) row."""
    perm = np.zeros((3 * 2 * L,), np.int64)
    for c in range(3):
        for j in range(2 * L):
            is_cos = 1 if j >= L else 0
            level = j - L if is_cos else j
            perm[c * 2 * L + j] = level * 6 + 3 * is_cos + c
    return perm


def _pack_slab(params):
    """Pack all weights (transposed), biases and encoding constants into one
    f32 (SLAB_ROWS, SLAB_COLS) slab."""
    f32 = jnp.float32
    slab = jnp.zeros((SLAB_ROWS, SLAB_COLS), f32)

    def put(name, w_t, b=None):
        nonlocal slab
        r0, fo, k = SLAB[name]
        w_t = jnp.asarray(w_t, f32)
        assert w_t.shape == (fo, k), (name, w_t.shape, (fo, k))
        slab = slab.at[r0:r0 + fo, 0:k].set(w_t)
        if b is not None:
            slab = slab.at[r0:r0 + fo, k].set(jnp.asarray(b, f32).reshape(fo))

    perm_pos = _enc_perm(POS_L)
    perm_dir = _enc_perm(DIR_L)

    put("FREQ", _freq_table(POS_L))
    put("E1", params["ew1"].T, params["eb1"][0])

    w0 = params["dw"][0]                                   # (27, 64)
    put("W0p", w0[0:3].T)
    put("W0e", w0[3:][perm_pos].T, params["db"][0][0])
    put("W1", params["dw"][1].T, params["db"][1][0])

    dw2 = params["dw"][2]                                  # (91, 64): [x(64); enc_pos(27)]
    put("W2a", dw2[0:HIDDEN].T)
    put("W2bp", dw2[HIDDEN:HIDDEN + 3].T)
    put("W2be", dw2[HIDDEN + 3:][perm_pos].T, params["db"][2][0])
    put("W3", params["dw"][3].T, params["db"][3][0])

    put("FD", jnp.concatenate([params["fw"], params["dow"]], axis=1).T,
        jnp.concatenate([params["fb"][0], params["dob"][0]]))

    cw1 = params["cw1"]                                    # (128, 32)
    o_dir = HIDDEN
    o_app = HIDDEN + DIR_IN_DIM
    o_exp = o_app + APPEAR_DIM
    # fold the exposure second layer (no nonlinearity in between) into cw1, in f32
    c1e_fold = params["ew2"] @ cw1[o_exp:]                 # (8, 32)
    cb1_fold = params["cb1"][0] + params["eb2"][0] @ cw1[o_exp:]   # (32,)
    put("C1f", cw1[0:o_dir].T, cb1_fold)
    put("C1d", cw1[o_dir:o_app][perm_dir].T)
    put("C1a", cw1[o_app:o_exp].T)
    put("C1e", c1e_fold.T)
    put("C2", params["cw2"].T, params["cb2"][0])
    put("CO", params["cow"].T, params["cob"][0])
    return slab


# ----------------------------- Pallas kernel ---------------------------------
def _make_kernel(use_bf16):
    cdt = jnp.bfloat16 if use_bf16 else jnp.float32
    f32 = jnp.float32

    def kernel(ray_ref, slab_ref, out_ref):
        def dense(x, name, dtype, bias=True):
            r0, fo, k = SLAB[name]
            w = slab_ref[r0:r0 + fo, 0:k].astype(dtype)
            h = jnp.dot(w, x.astype(dtype), preferred_element_type=f32)
            if bias:
                h = h + slab_ref[r0:r0 + fo, k:k + 1]
            return h

        # ------ ray slab slices (features on sublanes, rays on lanes) ------
        app = ray_ref[RAY_APP:RAY_APP + APPEAR_DIM, :]     # (32, T)
        pos = ray_ref[RAY_POS:RAY_POS + 3, :]              # (3, T)
        expo = ray_ref[RAY_EXPO:RAY_EXPO + 1, :]           # (1, T)

        # ------ encodings: lane/sublane-dense, all in f32 ------
        r0, nf, _ = SLAB["FREQ"]
        fq = slab_ref[r0:r0 + nf, 0:1]                     # (8,1) freq
        vr = slab_ref[r0:r0 + nf, 1:2]                     # (8,1) -0.5*freq^2
        ph = slab_ref[r0:r0 + nf, 2:3]                     # (8,1) phase (0 / pi/2)

        def enc_channels(base_row, scale, shift):
            # -> (24, T), rows grouped channel-major (weights permuted to match)
            parts = []
            for c in range(3):
                row = ray_ref[base_row + c:base_row + c + 1, :]   # (1, T)
                a = scale * row                                    # (8, T)
                if shift is not None:
                    a = a + shift
                parts.append(a)
            return jnp.concatenate(parts, axis=0)

        arg_pos = enc_channels(RAY_POS, fq, ph)
        damp = jnp.exp(enc_channels(RAY_COV, vr, None))
        arg_dir = enc_channels(RAY_DIR, fq, ph)
        ipe = damp * jnp.sin(arg_pos)                      # (24, T)
        enc_dir = jnp.sin(arg_dir)                         # (24, T)

        ipe_c = ipe.astype(cdt)
        pos_c = pos.astype(cdt)

        # ------ exposure first layer (element-wise outer product, f32) ------
        e0, ef, ek = SLAB["E1"]
        ew1 = slab_ref[e0:e0 + ef, 0:1]                    # (8, 1)
        eb1 = slab_ref[e0:e0 + ef, ek:ek + 1]              # (8, 1)
        e = jnp.maximum(ew1 * expo + eb1, 0.0)             # (8, T)

        # ------ density MLP (skip connection via split matmuls) ------
        h = jnp.maximum(dense(ipe_c, "W0e", cdt)
                        + dense(pos_c, "W0p", cdt, bias=False), 0.0)
        h = jnp.maximum(dense(h, "W1", cdt), 0.0)
        h = jnp.maximum(dense(h, "W2a", cdt, bias=False)
                        + dense(ipe_c, "W2be", cdt)
                        + dense(pos_c, "W2bp", cdt, bias=False), 0.0)
        h = jnp.maximum(dense(h, "W3", cdt), 0.0)

        # ------ fused feature layer + density head ------
        fd = dense(h, "FD", cdt)                           # (65, T)
        feature = fd[0:HIDDEN, :]
        raw_density = fd[HIDDEN:HIDDEN + 1, :]
        density = jnp.exp(raw_density)                     # density_activation == 'exp'

        # ------ color MLP (color-input concat replaced by split matmuls) ------
        c = (dense(feature, "C1f", cdt)
             + dense(enc_dir, "C1d", cdt, bias=False)
             + dense(app, "C1a", cdt, bias=False)
             + dense(e, "C1e", cdt, bias=False))
        c = jnp.maximum(c, 0.0)
        c = jnp.maximum(dense(c, "C2", cdt), 0.0)
        raw_color = dense(c, "CO", cdt)                    # (3, T)
        color = jax.nn.sigmoid(raw_color)                  # color_activation == 'sigmoid'

        # ------ lane-dense packed output (direct slice stores) ------
        out_ref[0:1, :] = raw_density
        out_ref[1:2, :] = density
        out_ref[2:5, :] = raw_color
        out_ref[5:8, :] = color

    return kernel


# ----------------------------- wrapper ---------------------------------------
def block_nerf_forward(params, positions, directions, appearance_ids,
                       exposure_values, position_covs, *, tile=1024, use_bf16=True):
    f32 = jnp.float32
    N = positions.shape[0]

    # big lane tiles, but keep >= 2 grid steps where possible (v7x has 2 TCs)
    tile = max(256, tile)
    while tile > 256 and pl.cdiv(N, tile) < 2:
        tile //= 2
    assert tile % 128 == 0

    # ---- glue: embedding gather + ONE feature-major ray slab + lane padding ----
    app_emb = jnp.take(params["appearance_table"], appearance_ids, axis=0)   # (N, 32)
    ray = jnp.concatenate(
        [app_emb, positions, position_covs, directions, exposure_values],
        axis=-1).astype(f32).T                                               # (42, N)
    n_pad = (-N) % tile
    if n_pad:
        ray = jnp.pad(ray, ((0, 0), (0, n_pad)))
    n_total = N + n_pad

    slab = _pack_slab(params)                                                # (704, 72)

    out = pl.pallas_call(
        _make_kernel(use_bf16),
        out_shape=jax.ShapeDtypeStruct((OUT_DIM, n_total), f32),
        grid_spec=pltpu.PrefetchScalarGridSpec(
            num_scalar_prefetch=0,
            grid=(n_total // tile,),
            in_specs=[
                pl.BlockSpec((RAY_DIM, tile), lambda i: (0, i)),
                pl.BlockSpec((SLAB_ROWS, SLAB_COLS), lambda i: (0, 0)),
            ],
            out_specs=pl.BlockSpec((OUT_DIM, tile), lambda i: (0, i)),
        ),
        compiler_params=pltpu.CompilerParams(
            dimension_semantics=("parallel",)),
    )(ray, slab)

    out = out[:, :N]
    raw_density = out[0:1, :].T
    density = out[1:2, :].T
    raw_color = out[2:5, :].T
    color = out[5:8, :].T

    # glue outputs (no heavy compute)
    block_center = params["block_center"]
    in_block = jnp.linalg.norm(positions - block_center[None, :], axis=-1) \
        <= params["block_radius"]
    return {
        "density": density,
        "color": color,
        "raw_density": raw_density,
        "raw_color": raw_color,
        "block_center": jnp.broadcast_to(block_center[None, :], (N, 3)),
        "in_block": in_block,
    }


# ----------------------------- plain-JAX reference ---------------------------
def block_nerf_reference(params, positions, directions, appearance_ids,
                         exposure_values, position_covs, *, use_bf16=False):
    """Reference forward. use_bf16=True mirrors the kernel's bf16 MXU-operand
    policy (dot operands bf16, f32 accumulation, element-wise math f32)."""
    f32 = jnp.float32
    wdt = jnp.bfloat16 if use_bf16 else f32

    def dot(x, w):
        return jnp.dot(x.astype(wdt), w.astype(wdt), preferred_element_type=f32)

    enc_pos = jnp.concatenate(
        [positions, integrated_positional_encoding(positions, position_covs, POS_L)],
        axis=-1)
    enc_dir = positional_encoding(directions, DIR_L)
    app_emb = jnp.take(params["appearance_table"], appearance_ids, axis=0)

    e = jnp.maximum(exposure_values * params["ew1"] + params["eb1"], 0.0)
    expo_emb = dot(e, params["ew2"]) + params["eb2"]

    x = enc_pos
    for i in range(NUM_LAYERS):
        if i in SKIPS and i > 0:
            x = jnp.concatenate([x, enc_pos], axis=-1)
        x = jnp.maximum(dot(x, params["dw"][i]) + params["db"][i], 0.0)
    raw_density = dot(x, params["dow"]) + params["dob"]
    density = jnp.exp(raw_density)
    feature = dot(x, params["fw"]) + params["fb"]

    color_in = jnp.concatenate([feature, enc_dir, app_emb, expo_emb], axis=-1)
    c = jnp.maximum(dot(color_in, params["cw1"]) + params["cb1"], 0.0)
    c = jnp.maximum(dot(c, params["cw2"]) + params["cb2"], 0.0)
    raw_color = dot(c, params["cow"]) + params["cob"]
    color = jax.nn.sigmoid(raw_color)
    return density, color, raw_density, raw_color


# ----------------------------- main -------------------------------------------
if __name__ == "__main__":
    key = jax.random.PRNGKey(0)
    k_param, k_pos, k_dir, k_id, k_exp, k_cov = jax.random.split(key, 6)

    params = init_params(k_param)

    N = 1000
    positions = jax.random.uniform(k_pos, (N, 3), jnp.float32, -40.0, 40.0)
    directions = jax.random.normal(k_dir, (N, 3), jnp.float32)
    directions = directions / jnp.linalg.norm(directions, axis=-1, keepdims=True)
    appearance_ids = jax.random.randint(k_id, (N,), 0, NUM_APPEAR_EMB)
    exposure_values = jax.random.uniform(k_exp, (N, 1), jnp.float32, 0.0, 1.0)
    position_covs = jax.random.uniform(k_cov, (N, 3), jnp.float32, 0.0, 0.01)

    # ---- f32 path: tight check against the exact-precision reference ----
    out32 = block_nerf_forward(params, positions, directions, appearance_ids,
                               exposure_values, position_covs,
                               tile=512, use_bf16=False)
    jax.block_until_ready(out32)
    r_d, r_c, r_rd, r_rc = block_nerf_reference(
        params, positions, directions, appearance_ids, exposure_values,
        position_covs, use_bf16=False)
    assert jnp.allclose(out32["raw_density"], r_rd, rtol=1e-2, atol=1e-2)
    assert jnp.allclose(out32["density"], r_d, rtol=1e-2, atol=1e-6)
    assert jnp.allclose(out32["raw_color"], r_rc, rtol=1e-2, atol=1e-2)
    assert jnp.allclose(out32["color"], r_c, rtol=1e-2, atol=1e-2)

    # ---- bf16 fast path: check against the precision-matched reference ----
    out16 = block_nerf_forward(params, positions, directions, appearance_ids,
                               exposure_values, position_covs,
                               tile=1024, use_bf16=True)
    jax.block_until_ready(out16)
    b_d, b_c, b_rd, b_rc = block_nerf_reference(
        params, positions, directions, appearance_ids, exposure_values,
        position_covs, use_bf16=True)
    assert jnp.allclose(out16["raw_density"], b_rd, rtol=2e-2, atol=2e-1)
    assert jnp.allclose(out16["raw_color"], b_rc, rtol=2e-2, atol=2e-1)
    assert jnp.allclose(out16["color"], b_c, rtol=2e-2, atol=5e-2)
    # activation consistency: density == exp(raw_density), computed in f32 in-kernel
    assert jnp.allclose(out16["density"], jnp.exp(out16["raw_density"]),
                        rtol=1e-4, atol=0.0)
    assert bool(jnp.all(jnp.isfinite(out16["density"])))

    assert out16["block_center"].shape == (N, 3)
    assert out16["in_block"].dtype == jnp.bool_

    print("KERNEL_OK")
</pallas_src>

<mosaic_0001>
module attributes {stable_mosaic.version = 11 : i64} {
  func.func @kernel(%arg0: i32, %arg1: memref<42x512xf32, #tpu.memory_space<vmem>>, %arg2: memref<704x72xf32, #tpu.memory_space<vmem>>, %arg3: memref<8x512xf32, #tpu.memory_space<vmem>>) attributes {dimension_semantics = [#tpu.dimension_semantics<parallel>], iteration_bounds = array<i64: 2>, scalar_prefetch = 0 : i64, scratch_operands = 0 : i64, tpu.core_type = #tpu.core_type<tc>, window_params = [{transform_indices = @transform_0, window_bounds = array<i64: 42, 512>}, {pipeline_mode = #tpu.pipeline_mode<synchronous>, transform_indices = @transform_1, window_bounds = array<i64: 704, 72>}, {transform_indices = @transform_2, window_bounds = array<i64: 8, 512>}]} {
    %c0 = arith.constant 0 : index
    %c0_0 = arith.constant 0 : index
    %0 = vector.load %arg1[%c0, %c0_0] : memref<42x512xf32, #tpu.memory_space<vmem>>, vector<32x512xf32>
    %c32 = arith.constant 32 : index
    %c0_1 = arith.constant 0 : index
    %1 = vector.load %arg1[%c32, %c0_1] : memref<42x512xf32, #tpu.memory_space<vmem>>, vector<3x512xf32>
    %c41 = arith.constant 41 : index
    %c0_2 = arith.constant 0 : index
    %2 = vector.load %arg1[%c41, %c0_2] : memref<42x512xf32, #tpu.memory_space<vmem>>, vector<1x512xf32>
    %c0_3 = arith.constant 0 : index
    %c0_4 = arith.constant 0 : index
    %3 = vector.load %arg2[%c0_3, %c0_4] : memref<704x72xf32, #tpu.memory_space<vmem>>, vector<8x1xf32>
    %c0_5 = arith.constant 0 : index
    %c1 = arith.constant 1 : index
    %4 = vector.load %arg2[%c0_5, %c1] : memref<704x72xf32, #tpu.memory_space<vmem>>, vector<8x1xf32>
    %c0_6 = arith.constant 0 : index
    %c2 = arith.constant 2 : index
    %5 = vector.load %arg2[%c0_6, %c2] : memref<704x72xf32, #tpu.memory_space<vmem>>, vector<8x1xf32>
    %c32_7 = arith.constant 32 : index
    %c0_8 = arith.constant 0 : index
    %6 = vector.load %arg1[%c32_7, %c0_8] : memref<42x512xf32, #tpu.memory_space<vmem>>, vector<1x512xf32>
    %7 = vector.broadcast %3 : vector<8x1xf32> to vector<8x512xf32>
    %8 = vector.broadcast %6 : vector<1x512xf32> to vector<8x512xf32>
    %9 = arith.mulf %7, %8 : vector<8x512xf32>
    %10 = vector.broadcast %5 : vector<8x1xf32> to vector<8x512xf32>
    %11 = arith.addf %9, %10 : vector<8x512xf32>
    %c33 = arith.constant 33 : index
    %c0_9 = arith.constant 0 : index
    %12 = vector.load %arg1[%c33, %c0_9] : memref<42x512xf32, #tpu.memory_space<vmem>>, vector<1x512xf32>
    %13 = vector.broadcast %3 : vector<8x1xf32> to vector<8x512xf32>
    %14 = vector.broadcast %12 : vector<1x512xf32> to vector<8x512xf32>
    %15 = arith.mulf %13, %14 : vector<8x512xf32>
    %16 = vector.broadcast %5 : vector<8x1xf32> to vector<8x512xf32>
    %17 = arith.addf %15, %16 : vector<8x512xf32>
    %c34 = arith.constant 34 : index
    %c0_10 = arith.constant 0 : index
    %18 = vector.load %arg1[%c34, %c0_10] : memref<42x512xf32, #tpu.memory_space<vmem>>, vector<1x512xf32>
    %19 = vector.broadcast %3 : vector<8x1xf32> to vector<8x512xf32>
    %20 = vector.broadcast %18 : vector<1x512xf32> to vector<8x512xf32>
    %21 = arith.mulf %19, %20 : vector<8x512xf32>
    %22 = vector.broadcast %5 : vector<8x1xf32> to vector<8x512xf32>
    %23 = arith.addf %21, %22 : vector<8x512xf32>
    %24 = tpu.concatenate %11, %17, %23 in 0 : vector<8x512xf32>, vector<8x512xf32>, vector<8x512xf32> -> vector<24x512xf32>
    %c35 = arith.constant 35 : index
    %c0_11 = arith.constant 0 : index
    %25 = vector.load %arg1[%c35, %c0_11] : memref<42x512xf32, #tpu.memory_space<vmem>>, vector<1x512xf32>
    %26 = vector.broadcast %4 : vector<8x1xf32> to vector<8x512xf32>
    %27 = vector.broadcast %25 : vector<1x512xf32> to vector<8x512xf32>
    %28 = arith.mulf %26, %27 : vector<8x512xf32>
    %c36 = arith.constant 36 : index
    %c0_12 = arith.constant 0 : index
    %29 = vector.load %arg1[%c36, %c0_12] : memref<42x512xf32, #tpu.memory_space<vmem>>, vector<1x512xf32>
    %30 = vector.broadcast %4 : vector<8x1xf32> to vector<8x512xf32>
    %31 = vector.broadcast %29 : vector<1x512xf32> to vector<8x512xf32>
    %32 = arith.mulf %30, %31 : vector<8x512xf32>
    %c37 = arith.constant 37 : index
    %c0_13 = arith.constant 0 : index
    %33 = vector.load %arg1[%c37, %c0_13] : memref<42x512xf32, #tpu.memory_space<vmem>>, vector<1x512xf32>
    %34 = vector.broadcast %4 : vector<8x1xf32> to vector<8x512xf32>
    %35 = vector.broadcast %33 : vector<1x512xf32> to vector<8x512xf32>
    %36 = arith.mulf %34, %35 : vector<8x512xf32>
    %37 = tpu.concatenate %28, %32, %36 in 0 : vector<8x512xf32>, vector<8x512xf32>, vector<8x512xf32> -> vector<24x512xf32>
    %38 = math.exp %37 : vector<24x512xf32>
    %c38 = arith.constant 38 : index
    %c0_14 = arith.constant 0 : index
    %39 = vector.load %arg1[%c38, %c0_14] : memref<42x512xf32, #tpu.memory_space<vmem>>, vector<1x512xf32>
    %40 = vector.broadcast %3 : vector<8x1xf32> to vector<8x512xf32>
    %41 = vector.broadcast %39 : vector<1x512xf32> to vector<8x512xf32>
    %42 = arith.mulf %40, %41 : vector<8x512xf32>
    %43 = vector.broadcast %5 : vector<8x1xf32> to vector<8x512xf32>
    %44 = arith.addf %42, %43 : vector<8x512xf32>
    %c39 = arith.constant 39 : index
    %c0_15 = arith.constant 0 : index
    %45 = vector.load %arg1[%c39, %c0_15] : memref<42x512xf32, #tpu.memory_space<vmem>>, vector<1x512xf32>
    %46 = vector.broadcast %3 : vector<8x1xf32> to vector<8x512xf32>
    %47 = vector.broadcast %45 : vector<1x512xf32> to vector<8x512xf32>
    %48 = arith.mulf %46, %47 : vector<8x512xf32>
    %49 = vector.broadcast %5 : vector<8x1xf32> to vector<8x512xf32>
    %50 = arith.addf %48, %49 : vector<8x512xf32>
    %c40 = arith.constant 40 : index
    %c0_16 = arith.constant 0 : index
    %51 = vector.load %arg1[%c40, %c0_16] : memref<42x512xf32, #tpu.memory_space<vmem>>, vector<1x512xf32>
    %52 = vector.broadcast %3 : vector<8x1xf32> to vector<8x512xf32>
    %53 = vector.broadcast %51 : vector<1x512xf32> to vector<8x512xf32>
    %54 = arith.mulf %52, %53 : vector<8x512xf32>
    %55 = vector.broadcast %5 : vector<8x1xf32> to vector<8x512xf32>
    %56 = arith.addf %54, %55 : vector<8x512xf32>
    %57 = tpu.concatenate %44, %50, %56 in 0 : vector<8x512xf32>, vector<8x512xf32>, vector<8x512xf32> -> vector<24x512xf32>
    %58 = math.sin %24 : vector<24x512xf32>
    %59 = arith.mulf %38, %58 : vector<24x512xf32>
    %60 = math.sin %57 : vector<24x512xf32>
    %c8 = arith.constant 8 : index
    %c0_17 = arith.constant 0 : index
    %61 = vector.load %arg2[%c8, %c0_17] : memref<704x72xf32, #tpu.memory_space<vmem>>, vector<8x1xf32>
    %c8_18 = arith.constant 8 : index
    %c1_19 = arith.constant 1 : index
    %62 = vector.load %arg2[%c8_18, %c1_19] : memref<704x72xf32, #tpu.memory_space<vmem>>, vector<8x1xf32>
    %63 = vector.broadcast %61 : vector<8x1xf32> to vector<8x512xf32>
    %64 = vector.broadcast %2 : vector<1x512xf32> to vector<8x512xf32>
    %65 = arith.mulf %63, %64 : vector<8x512xf32>
    %66 = vector.broadcast %62 : vector<8x1xf32> to vector<8x512xf32>
    %67 = arith.addf %65, %66 : vector<8x512xf32>
    %cst = arith.constant 0.000000e+00 : f32
    %68 = vector.broadcast %cst : f32 to vector<8x512xf32>
    %69 = arith.maximumf %67, %68 : vector<8x512xf32>
    %c80 = arith.constant 80 : index
    %c0_20 = arith.constant 0 : index
    %70 = vector.load %arg2[%c80, %c0_20] : memref<704x72xf32, #tpu.memory_space<vmem>>, vector<64x24xf32>
    %cst_21 = arith.constant dense<0.000000e+00> : vector<64x512xf32>
    %71 = tpu.matmul %70, %59, %cst_21 {dimension_numbers = #tpu.dot_dimension_numbers<[1], [0], [0], [1], [0, 0, 1, 1], [], []>} : vector<64x24xf32>, vector<24x512xf32>, vector<64x512xf32> -> vector<64x512xf32>
    %c80_22 = arith.constant 80 : index
    %c24 = arith.constant 24 : index
    %72 = vector.load %arg2[%c80_22, %c24] : memref<704x72xf32, #tpu.memory_space<vmem>>, vector<64x1xf32>
    %73 = vector.broadcast %72 : vector<64x1xf32> to vector<64x512xf32>
    %74 = arith.addf %71, %73 : vector<64x512xf32>
    %c16 = arith.constant 16 : index
    %c0_23 = arith.constant 0 : index
    %75 = vector.load %arg2[%c16, %c0_23] : memref<704x72xf32, #tpu.memory_space<vmem>>, vector<64x3xf32>
    %cst_24 = arith.constant dense<0.000000e+00> : vector<64x512xf32>
    %76 = tpu.matmul %75, %1, %cst_24 {dimension_numbers = #tpu.dot_dimension_numbers<[1], [0], [0], [1], [0, 0, 1, 1], [], []>} : vector<64x3xf32>, vector<3x512xf32>, vector<64x512xf32> -> vector<64x512xf32>
    %77 = arith.addf %74, %76 : vector<64x512xf32>
    %cst_25 = arith.constant 0.000000e+00 : f32
    %78 = vector.broadcast %cst_25 : f32 to vector<64x512xf32>
    %79 = arith.maximumf %77, %78 : vector<64x512xf32>
    %c144 = arith.constant 144 : index
    %c0_26 = arith.constant 0 : index
    %80 = vector.load %arg2[%c144, %c0_26] : memref<704x72xf32, #tpu.memory_space<vmem>>, vector<64x64xf32>
    %cst_27 = arith.constant dense<0.000000e+00> : vector<64x512xf32>
    %81 = tpu.matmul %80, %79, %cst_27 {dimension_numbers = #tpu.dot_dimension_numbers<[1], [0], [0], [1], [0, 0, 1, 1], [], []>} : vector<64x64xf32>, vector<64x512xf32>, vector<64x512xf32> -> vector<64x512xf32>
    %c144_28 = arith.constant 144 : index
    %c64 = arith.constant 64 : index
    %82 = vector.load %arg2[%c144_28, %c64] : memref<704x72xf32, #tpu.memory_space<vmem>>, vector<64x1xf32>
    %83 = vector.broadcast %82 : vector<64x1xf32> to vector<64x512xf32>
    %84 = arith.addf %81, %83 : vector<64x512xf32>
    %cst_29 = arith.constant 0.000000e+00 : f32
    %85 = vector.broadcast %cst_29 : f32 to vector<64x512xf32>
    %86 = arith.maximumf %84, %85 : vector<64x512xf32>
    %c208 = arith.constant 208 : index
    %c0_30 = arith.constant 0 : index
    %87 = vector.load %arg2[%c208, %c0_30] : memref<704x72xf32, #tpu.memory_space<vmem>>, vector<64x64xf32>
    %cst_31 = arith.constant dense<0.000000e+00> : vector<64x512xf32>
    %88 = tpu.matmul %87, %86, %cst_31 {dimension_numbers = #tpu.dot_dimension_numbers<[1], [0], [0], [1], [0, 0, 1, 1], [], []>} : vector<64x64xf32>, vector<64x512xf32>, vector<64x512xf32> -> vector<64x512xf32>
    %c336 = arith.constant 336 : index
    %c0_32 = arith.constant 0 : index
    %89 = vector.load %arg2[%c336, %c0_32] : memref<704x72xf32, #tpu.memory_space<vmem>>, vector<64x24xf32>
    %cst_33 = arith.constant dense<0.000000e+00> : vector<64x512xf32>
    %90 = tpu.matmul %89, %59, %cst_33 {dimension_numbers = #tpu.dot_dimension_numbers<[1], [0], [0], [1], [0, 0, 1, 1], [], []>} : vector<64x24xf32>, vector<24x512xf32>, vector<64x512xf32> -> vector<64x512xf32>
    %c336_34 = arith.constant 336 : index
    %c24_35 = arith.constant 24 : index
    %91 = vector.load %arg2[%c336_34, %c24_35] : memref<704x72xf32, #tpu.memory_space<vmem>>, vector<64x1xf32>
    %92 = vector.broadcast %91 : vector<64x1xf32> to vector<64x512xf32>
    %93 = arith.addf %90, %92 : vector<64x512xf32>
    %94 = arith.addf %88, %93 : vector<64x512xf32>
    %c272 = arith.constant 272 : index
    %c0_36 = arith.constant 0 : index
    %95 = vector.load %arg2[%c272, %c0_36] : memref<704x72xf32, #tpu.memory_space<vmem>>, vector<64x3xf32>
    %cst_37 = arith.constant dense<0.000000e+00> : vector<64x512xf32>
    %96 = tpu.matmul %95, %1, %cst_37 {dimension_numbers = #tpu.dot_dimension_numbers<[1], [0], [0], [1], [0, 0, 1, 1], [], []>} : vector<64x3xf32>, vector<3x512xf32>, vector<64x512xf32> -> vector<64x512xf32>
    %97 = arith.addf %94, %96 : vector<64x512xf32>
    %cst_38 = arith.constant 0.000000e+00 : f32
    %98 = vector.broadcast %cst_38 : f32 to vector<64x512xf32>
    %99 = arith.maximumf %97, %98 : vector<64x512xf32>
    %c400 = arith.constant 400 : index
    %c0_39 = arith.constant 0 : index
    %100 = vector.load %arg2[%c400, %c0_39] : memref<704x72xf32, #tpu.memory_space<vmem>>, vector<64x64xf32>
    %cst_40 = arith.constant dense<0.000000e+00> : vector<64x512xf32>
    %101 = tpu.matmul %100, %99, %cst_40 {dimension_numbers = #tpu.dot_dimension_numbers<[1], [0], [0], [1], [0, 0, 1, 1], [], []>} : vector<64x64xf32>, vector<64x512xf32>, vector<64x512xf32> -> vector<64x512xf32>
    %c400_41 = arith.constant 400 : index
    %c64_42 = arith.constant 64 : index
    %102 = vector.load %arg2[%c400_41, %c64_42] : memref<704x72xf32, #tpu.memory_space<vmem>>, vector<64x1xf32>
    %103 = vector.broadcast %102 : vector<64x1xf32> to vector<64x512xf32>
    %104 = arith.addf %101, %103 : vector<64x512xf32>
    %cst_43 = arith.constant 0.000000e+00 : f32
    %105 = vector.broadcast %cst_43 : f32 to vector<64x512xf32>
    %106 = arith.maximumf %104, %105 : vector<64x512xf32>
    %c464 = arith.constant 464 : index
    %c0_44 = arith.constant 0 : index
    %107 = vector.load %arg2[%c464, %c0_44] : memref<704x72xf32, #tpu.memory_space<vmem>>, vector<65x64xf32>
    %cst_45 = arith.constant dense<0.000000e+00> : vector<65x512xf32>
    %108 = tpu.matmul %107, %106, %cst_45 {dimension_numbers = #tpu.dot_dimension_numbers<[1], [0], [0], [1], [0, 0, 1, 1], [], []>} : vector<65x64xf32>, vector<64x512xf32>, vector<65x512xf32> -> vector<65x512xf32>
    %c464_46 = arith.constant 464 : index
    %c64_47 = arith.constant 64 : index
    %109 = vector.load %arg2[%c464_46, %c64_47] : memref<704x72xf32, #tpu.memory_space<vmem>>, vector<65x1xf32>
    %110 = vector.broadcast %109 : vector<65x1xf32> to vector<65x512xf32>
    %111 = arith.addf %108, %110 : vector<65x512xf32>
    %112 = vector.extract_strided_slice %111 {offsets = [0, 0], sizes = [64, 512], strides = [1, 1]} : vector<65x512xf32> to vector<64x512xf32>
    %113 = vector.extract_strided_slice %111 {offsets = [64, 0], sizes = [1, 512], strides = [1, 1]} : vector<65x512xf32> to vector<1x512xf32>
    %114 = math.exp %113 : vector<1x512xf32>
    %c536 = arith.constant 536 : index
    %c0_48 = arith.constant 0 : index
    %115 = vector.load %arg2[%c536, %c0_48] : memref<704x72xf32, #tpu.memory_space<vmem>>, vector<32x64xf32>
    %cst_49 = arith.constant dense<0.000000e+00> : vector<32x512xf32>
    %116 = tpu.matmul %115, %112, %cst_49 {dimension_numbers = #tpu.dot_dimension_numbers<[1], [0], [0], [1], [0, 0, 1, 1], [], []>} : vector<32x64xf32>, vector<64x512xf32>, vector<32x512xf32> -> vector<32x512xf32>
    %c536_50 = arith.constant 536 : index
    %c64_51 = arith.constant 64 : index
    %117 = vector.load %arg2[%c536_50, %c64_51] : memref<704x72xf32, #tpu.memory_space<vmem>>, vector<32x1xf32>
    %118 = vector.broadcast %117 : vector<32x1xf32> to vector<32x512xf32>
    %119 = arith.addf %116, %118 : vector<32x512xf32>
    %c568 = arith.constant 568 : index
    %c0_52 = arith.constant 0 : index
    %120 = vector.load %arg2[%c568, %c0_52] : memref<704x72xf32, #tpu.memory_space<vmem>>, vector<32x24xf32>
    %cst_53 = arith.constant dense<0.000000e+00> : vector<32x512xf32>
    %121 = tpu.matmul %120, %60, %cst_53 {dimension_numbers = #tpu.dot_dimension_numbers<[1], [0], [0], [1], [0, 0, 1, 1], [], []>} : vector<32x24xf32>, vector<24x512xf32>, vector<32x512xf32> -> vector<32x512xf32>
    %122 = arith.addf %119, %121 : vector<32x512xf32>
    %c600 = arith.constant 600 : index
    %c0_54 = arith.constant 0 : index
    %123 = vector.load %arg2[%c600, %c0_54] : memref<704x72xf32, #tpu.memory_space<vmem>>, vector<32x32xf32>
    %cst_55 = arith.constant dense<0.000000e+00> : vector<32x512xf32>
    %124 = tpu.matmul %123, %0, %cst_55 {dimension_numbers = #tpu.dot_dimension_numbers<[1], [0], [0], [1], [0, 0, 1, 1], [], []>} : vector<32x32xf32>, vector<32x512xf32>, vector<32x512xf32> -> vector<32x512xf32>
    %125 = arith.addf %122, %124 : vector<32x512xf32>
    %c632 = arith.constant 632 : index
    %c0_56 = arith.constant 0 : index
    %126 = vector.load %arg2[%c632, %c0_56] : memref<704x72xf32, #tpu.memory_space<vmem>>, vector<32x8xf32>
    %cst_57 = arith.constant dense<0.000000e+00> : vector<32x512xf32>
    %127 = tpu.matmul %126, %69, %cst_57 {dimension_numbers = #tpu.dot_dimension_numbers<[1], [0], [0], [1], [0, 0, 1, 1], [], []>} : vector<32x8xf32>, vector<8x512xf32>, vector<32x512xf32> -> vector<32x512xf32>
    %128 = arith.addf %125, %127 : vector<32x512xf32>
    %cst_58 = arith.constant 0.000000e+00 : f32
    %129 = vector.broadcast %cst_58 : f32 to vector<32x512xf32>
    %130 = arith.maximumf %128, %129 : vector<32x512xf32>
    %c664 = arith.constant 664 : index
    %c0_59 = arith.constant 0 : index
    %131 = vector.load %arg2[%c664, %c0_59] : memref<704x72xf32, #tpu.memory_space<vmem>>, vector<32x32xf32>
    %cst_60 = arith.constant dense<0.000000e+00> : vector<32x512xf32>
    %132 = tpu.matmul %131, %130, %cst_60 {dimension_numbers = #tpu.dot_dimension_numbers<[1], [0], [0], [1], [0, 0, 1, 1], [], []>} : vector<32x32xf32>, vector<32x512xf32>, vector<32x512xf32> -> vector<32x512xf32>
    %c664_61 = arith.constant 664 : index
    %c32_62 = arith.constant 32 : index
    %133 = vector.load %arg2[%c664_61, %c32_62] : memref<704x72xf32, #tpu.memory_space<vmem>>, vector<32x1xf32>
    %134 = vector.broadcast %133 : vector<32x1xf32> to vector<32x512xf32>
    %135 = arith.addf %132, %134 : vector<32x512xf32>
    %cst_63 = arith.constant 0.000000e+00 : f32
    %136 = vector.broadcast %cst_63 : f32 to vector<32x512xf32>
    %137 = arith.maximumf %135, %136 : vector<32x512xf32>
    %c696 = arith.constant 696 : index
    %c0_64 = arith.constant 0 : index
    %138 = vector.load %arg2[%c696, %c0_64] : memref<704x72xf32, #tpu.memory_space<vmem>>, vector<3x32xf32>
    %cst_65 = arith.constant dense<0.000000e+00> : vector<3x512xf32>
    %139 = tpu.matmul %138, %137, %cst_65 {dimension_numbers = #tpu.dot_dimension_numbers<[1], [0], [0], [1], [0, 0, 1, 1], [], []>} : vector<3x32xf32>, vector<32x512xf32>, vector<3x512xf32> -> vector<3x512xf32>
    %c696_66 = arith.constant 696 : index
    %c32_67 = arith.constant 32 : index
    %140 = vector.load %arg2[%c696_66, %c32_67] : memref<704x72xf32, #tpu.memory_space<vmem>>, vector<3x1xf32>
    %141 = vector.broadcast %140 : vector<3x1xf32> to vector<3x512xf32>
    %142 = arith.addf %139, %141 : vector<3x512xf32>
    %143 = arith.negf %142 : vector<3x512xf32>
    %144 = math.exp %143 : vector<3x512xf32>
    %cst_68 = arith.constant 1.000000e+00 : f32
    %145 = vector.broadcast %cst_68 : f32 to vector<3x512xf32>
    %146 = arith.addf %145, %144 : vector<3x512xf32>
    %147 = arith.divf %145, %146 : vector<3x512xf32>
    %c0_69 = arith.constant 0 : index
    %c0_70 = arith.constant 0 : index
    %148 = vector.load %arg3[%c0_69, %c0_70] : memref<8x512xf32, #tpu.memory_space<vmem>>, vector<1x512xf32>
    tpu.vector_store %arg3[%c0_69, %c0_70], %113 {strides = array<i32>} : memref<8x512xf32, #tpu.memory_space<vmem>>, vector<1x512xf32>,
    %c1_71 = arith.constant 1 : index
    %c0_72 = arith.constant 0 : index
    %149 = vector.load %arg3[%c1_71, %c0_72] : memref<8x512xf32, #tpu.memory_space<vmem>>, vector<1x512xf32>
    tpu.vector_store %arg3[%c1_71, %c0_72], %114 {strides = array<i32>} : memref<8x512xf32, #tpu.memory_space<vmem>>, vector<1x512xf32>,
    %c2_73 = arith.constant 2 : index
    %c0_74 = arith.constant 0 : index
    %150 = vector.load %arg3[%c2_73, %c0_74] : memref<8x512xf32, #tpu.memory_space<vmem>>, vector<3x512xf32>
    tpu.vector_store %arg3[%c2_73, %c0_74], %142 {strides = array<i32>} : memref<8x512xf32, #tpu.memory_space<vmem>>, vector<3x512xf32>,
    %c5 = arith.constant 5 : index
    %c0_75 = arith.constant 0 : index
    %151 = vector.load %arg3[%c5, %c0_75] : memref<8x512xf32, #tpu.memory_space<vmem>>, vector<3x512xf32>
    tpu.vector_store %arg3[%c5, %c0_75], %147 {strides = array<i32>} : memref<8x512xf32, #tpu.memory_space<vmem>>, vector<3x512xf32>,
    return
  }
  func.func @transform_0(%arg0: i32) -> (i32, i32) {
    %c0_i32 = arith.constant 0 : i32
    %c0_i32_0 = arith.constant 0 : i32
    return %c0_i32, %arg0 : i32, i32
  }
  func.func @transform_1(%arg0: i32) -> (i32, i32) {
    %c0_i32 = arith.constant 0 : i32
    %c0_i32_0 = arith.constant 0 : i32
    %c0_i32_1 = arith.constant 0 : i32
    return %c0_i32, %c0_i32_0 : i32, i32
  }
  func.func @transform_2(%arg0: i32) -> (i32, i32) {
    %c0_i32 = arith.constant 0 : i32
    %c0_i32_0 = arith.constant 0 : i32
    return %c0_i32, %arg0 : i32, i32
  }
}

</mosaic_0001>

<llo_original>
// kernel: tpu_custom_call.1
$region0: #{tpu_custom_call.1}
  #allocation0 [shape = 'u32[]', space=smem, size = 0x4, offset = 0x4, fixed_abs, tag = 'smem constant byte address 0x4 - core index']
  #allocation1 [shape = 'u32[72,128]{1,0:T(1,128)}', space=vmem, size = 0x9000, scoped, tag = 'internal scratch']
  %s0 = inlined_call_operand.vmem [shape: f32[42,1024], index: 0, kind: input, shape index: {}]
  %s1 = inlined_call_operand.vmem [shape: f32[704,72], index: 1, kind: input, shape index: {}]
  %s2 = inlined_call_operand.hbm [shape: f32[8,1024], index: 2, kind: output, shape index: {}]
  %s3 = sld [smem:[#allocation0]]
  $region64: #{tpu_custom_call.1} parent=0
    _
  %s5 = ssub.s32 1, %s3
  %s6 = scalar_select 0, %s5, %s3
  $region1: #{tpu_custom_call.1} parent=0
    #allocation2 [shape = 'u8[196608]{0}', space=vmem, size = 0x30000, scoped, tag = 'input window, operand 0']
    #allocation3 [shape = 'u8[32768]{0}', space=vmem, size = 0x8000, scoped, tag = 'output window, operand 0']
    #allocation4 [shape = 's32[2]{0}', space=sflag, size = 0x8, scoped, tag = 'scoped memory for tpu_custom_call.1']
    %7 = vsyncpa [#allocation4], 0
    %s8 = scalar_lea.sflag [#allocation4], 1
    %9 = vsyncpa %s8, 0
    loop: start=0, step=1, limit=4
    $region2: #{tpu_custom_call.1} parent=1 // loop_pre_header
      _
    $region3: #{tpu_custom_call.1} parent=1 // loop_header
      %s11 = sphi 0, %s15
      %p12 = scmp.ge.s32.totalorder %s11, 4
      %s21 = sphi 0, %s23
      %s24 = sphi 0, %s21
      %s25 = sphi 0, %s24
      %s41 = sphi 0, %s25
      %s45 = sphi 0, %s45
      %s47 = sphi 0, %s45
      %s48 = sphi 0, %s47
      %s62 = sphi 0, %s48
      %s68 = sphi 0, %s70
      %s71 = sphi 0, %s68
      %s72 = sphi 0, %s71
      %s88 = sphi 0, %s72
    $region4: #{tpu_custom_call.1} parent=1 // loop_header_branch
      %14 = sbr.rel (%p12) target = $region8
    $region5: #{tpu_custom_call.1} parent=1 // loop_body
      %s16 = ssub.s32 %s11, 1
      %s17 = ssub.s32 %s11, 2
      %s18 = sadd.s32 %s11, 1
      %s19 = ssub.s32 %s11, %s18
      %p20 = scmp.eq.s32.totalorder %s19, 0
      %s22 = sadd.s32 %s21, 1
      %s23 = scalar_select %p20, %s21, %s22
      %p26 = pneg %p20
      %p27 = scmp.eq.s32.totalorder %s11, 1
      %p28 = por %p26, %p27
      %p29 = scmp.ne.s32.totalorder %s21, %s24
      %p30 = scmp.eq.s32.totalorder %s11, 0
      %p31 = por %p29, %p30
      %p32 = scmp.ne.s32.totalorder %s21, %s24
      %p33 = scmp.eq.s32.totalorder %s16, 1
      %p34 = por %p32, %p33
      %p35 = scmp.ne.s32.totalorder %s24, %s25
      %p36 = scmp.eq.s32.totalorder %s16, 0
      %p37 = por %p35, %p36
      %p38 = scmp.ne.s32.totalorder %s24, %s25
      %p39 = scmp.eq.s32.totalorder %s17, 1
      %p40 = por %p38, %p39
      %p42 = scmp.ne.s32.totalorder %s25, %s41
      %p43 = scmp.eq.s32.totalorder %s17, 0
      %p44 = por %p42, %p43
      %s46 = sadd.s32 %s45, 1
      %p49 = scmp.eq.s32.totalorder %s11, 1
      %p50 = scmp.ne.s32.totalorder %s45, %s47
      %p51 = scmp.eq.s32.totalorder %s11, 0
      %p52 = por %p50, %p51
      %p53 = scmp.ne.s32.totalorder %s45, %s47
      %p54 = scmp.eq.s32.totalorder %s16, 1
      %p55 = por %p53, %p54
      %p56 = scmp.ne.s32.totalorder %s47, %s48
      %p57 = scmp.eq.s32.totalorder %s16, 0
      %p58 = por %p56, %p57
      %p59 = scmp.ne.s32.totalorder %s47, %s48
      %p60 = scmp.eq.s32.totalorder %s17, 1
      %p61 = por %p59, %p60
      %p63 = scmp.ne.s32.totalorder %s48, %s62
      %p64 = scmp.eq.s32.totalorder %s17, 0
      %p65 = por %p63, %p64
      %s66 = ssub.s32 %s11, %s18
      %p67 = scmp.eq.s32.totalorder %s66, 0
      %s69 = sadd.s32 %s68, 1
      %s70 = scalar_select %p67, %s68, %s69
      %p73 = pneg %p67
      %p74 = scmp.eq.s32.totalorder %s11, 1
      %p75 = por %p73, %p74
      %p76 = scmp.ne.s32.totalorder %s68, %s71
      %p77 = scmp.eq.s32.totalorder %s11, 0
      %p78 = por %p76, %p77
      %p79 = scmp.ne.s32.totalorder %s68, %s71
      %p80 = scmp.eq.s32.totalorder %s16, 1
      %p81 = por %p79, %p80
      %p82 = scmp.ne.s32.totalorder %s71, %s72
      %p83 = scmp.eq.s32.totalorder %s16, 0
      %p84 = por %p82, %p83
      %p85 = scmp.ne.s32.totalorder %s71, %s72
      %p86 = scmp.eq.s32.totalorder %s17, 1
      %p87 = por %p85, %p86
      %p89 = scmp.ne.s32.totalorder %s72, %s88
      %p90 = scmp.eq.s32.totalorder %s17, 0
      %p91 = por %p89, %p90
      %p92 = scmp.le.s32.totalorder 1, %s11
      %p93 = scmp.lt.s32.totalorder %s11, 3
      %p94 = pnand %p92, %p93
      %p95 = pneg %p94
      // Predicated region
      $region9: #{tpu_custom_call.1} parent=5 // pred_check
        _
      $region10: #{tpu_custom_call.1} parent=5 // pred_check_branch
        %97 = sbr.rel (%p94) target = $region12
      $region11: #{tpu_custom_call.1} parent=5 // pred_region
        %s98 = ssub.s32 %s11, 1
        // Predicated region
        $region13: #{tpu_custom_call.1} parent=11 // pred_check
          %p99 = pneg %p58
        $region14: #{tpu_custom_call.1} parent=11 // pred_check_branch
          %101 = sbr.rel (%p99) target = $region16
        $region15: #{tpu_custom_call.1} parent=11 // pred_region
          _
        $region16: #{tpu_custom_call.1} parent=11 // pred_fallthru
          _
      $region12: #{tpu_custom_call.1} parent=5 // pred_fallthru
        _
      %p102 = scmp.lt.s32.totalorder %s11, 2
      // Predicated region
      $region17: #{tpu_custom_call.1} parent=5 // pred_check
        %p103 = pneg %p102
      $region18: #{tpu_custom_call.1} parent=5 // pred_check_branch
        %105 = sbr.rel (%p103) target = $region20
      $region19: #{tpu_custom_call.1} parent=5 // pred_region
        // Predicated region
        $region21: #{tpu_custom_call.1} parent=19 // pred_check
          %p106 = pneg %p31
        $region22: #{tpu_custom_call.1} parent=19 // pred_check_branch
          %108 = sbr.rel (%p106) target = $region24
        $region23: #{tpu_custom_call.1} parent=19 // pred_region
          %s109 = sand.u32 %s21, 1
          %s110 = sand.u32 %s21, 1
          %s111 = smul.addr %s110, 192
          %s112 = scalar_lea.vmem [#allocation2], %s111
          %s113 = smul.u32 4, %s11
          %s114 = smul.addr %s113, 8
          %s115 = scalar_lea.vmem %s0, %s114
          // Predicated region
          $region25: #{tpu_custom_call.1} parent=23 // pred_check
            _
          $region26: #{tpu_custom_call.1} parent=23 // pred_check_branch
            %117 = sbr.rel (0) target = $region28
          $region27: #{tpu_custom_call.1} parent=23 // pred_region
            // Predicated region
            $region29: #{tpu_custom_call.1} parent=27 // pred_check
              _
            $region30: #{tpu_custom_call.1} parent=27 // pred_check_branch
              %119 = sbr.rel (0) target = $region32
            $region31: #{tpu_custom_call.1} parent=27 // pred_region
              loop: start=0, step=1, limit=1
              $region33: #{tpu_custom_call.1} parent=31 // loop_pre_header
                _
              $region34: #{tpu_custom_call.1} parent=31 // loop_header
                %s121 = sphi 0, %s125
                %p122 = scmp.ge.s32.totalorder %s121, 1
                %s126 = sphi %s115, %s115
                %s127 = sphi %s112, %s112
              $region35: #{tpu_custom_call.1} parent=31 // loop_header_branch
                %124 = sbr.rel (%p122) target = $region39
              $region36: #{tpu_custom_call.1} parent=31 // loop_body
                %v128 = vld [vmem:[%s126] sm:$0xff]
                %129 = vst [vmem:[%s127] sm:$0xff] %v128
                %v130 = vld [vmem:[%s126 + $0x8] sm:$0xff]
                %131 = vst [vmem:[%s127 + $0x8] sm:$0xff] %v130
                %v132 = vld [vmem:[%s126 + $0x10] sm:$0xff]
                %133 = vst [vmem:[%s127 + $0x10] sm:$0xff] %v132
                %v134 = vld [vmem:[%s126 + $0x18] sm:$0xff]
                %135 = vst [vmem:[%s127 + $0x18] sm:$0xff] %v134
                %v136 = vld [vmem:[%s126 + $0x40] sm:$0xff]
                %137 = vst [vmem:[%s127 + $0x20] sm:$0xff] %v136
                %v138 = vld [vmem:[%s126 + $0x48] sm:$0xff]
                %139 = vst [vmem:[%s127 + $0x28] sm:$0xff] %v138
                %v140 = vld [vmem:[%s126 + $0x50] sm:$0xff]
                %141 = vst [vmem:[%s127 + $0x30] sm:$0xff] %v140
                %v142 = vld [vmem:[%s126 + $0x58] sm:$0xff]
                %143 = vst [vmem:[%s127 + $0x38] sm:$0xff] %v142
                %v144 = vld [vmem:[%s126 + $0x80] sm:$0xff]
                %145 = vst [vmem:[%s127 + $0x40] sm:$0xff] %v144
                %v146 = vld [vmem:[%s126 + $0x88] sm:$0xff]
                %147 = vst [vmem:[%s127 + $0x48] sm:$0xff] %v146
                %v148 = vld [vmem:[%s126 + $0x90] sm:$0xff]
                %149 = vst [vmem:[%s127 + $0x50] sm:$0xff] %v148
                %v150 = vld [vmem:[%s126 + $0x98] sm:$0xff]
                %151 = vst [vmem:[%s127 + $0x58] sm:$0xff] %v150
                %v152 = vld [vmem:[%s126 + $0xc0] sm:$0xff]
                %153 = vst [vmem:[%s127 + $0x60] sm:$0xff] %v152
                %v154 = vld [vmem:[%s126 + $0xc8] sm:$0xff]
                %155 = vst [vmem:[%s127 + $0x68] sm:$0xff] %v154
                %v156 = vld [vmem:[%s126 + $0xd0] sm:$0xff]
                %157 = vst [vmem:[%s127 + $0x70] sm:$0xff] %v156
                %v158 = vld [vmem:[%s126 + $0xd8] sm:$0xff]
                %159 = vst [vmem:[%s127 + $0x78] sm:$0xff] %v158
                %v160 = vld [vmem:[%s126 + $0x100] sm:$0xff]
                %161 = vst [vmem:[%s127 + $0x80] sm:$0xff] %v160
                %v162 = vld [vmem:[%s126 + $0x108] sm:$0xff]
                %163 = vst [vmem:[%s127 + $0x88] sm:$0xff] %v162
                %v164 = vld [vmem:[%s126 + $0x110] sm:$0xff]
                %165 = vst [vmem:[%s127 + $0x90] sm:$0xff] %v164
                %v166 = vld [vmem:[%s126 + $0x118] sm:$0xff]
                %167 = vst [vmem:[%s127 + $0x98] sm:$0xff] %v166
                %v168 = vld [vmem:[%s126 + $0x140] sm:$0xff]
                %169 = vst [vmem:[%s127 + $0xa0] sm:$0xff] %v168
                %v170 = vld [vmem:[%s126 + $0x148] sm:$0xff]
                %171 = vst [vmem:[%s127 + $0xa8] sm:$0xff] %v170
                %v172 = vld [vmem:[%s126 + $0x150] sm:$0xff]
                %173 = vst [vmem:[%s127 + $0xb0] sm:$0xff] %v172
                %v174 = vld [vmem:[%s126 + $0x158] sm:$0xff]
                %175 = vst [vmem:[%s127 + $0xb8] sm:$0xff] %v174
              $region37: #{tpu_custom_call.1} parent=31 // loop_footer
                %s125 = sadd.s32 1, %s121
              $region38: #{tpu_custom_call.1} parent=31 // loop_footer_branch
                %120 = sbr.rel target = $region34
              $region39: #{tpu_custom_call.1} parent=31 // loop_exit
                _
            $region32: #{tpu_custom_call.1} parent=27 // pred_fallthru
              _
            // Predicated region
            $region40: #{tpu_custom_call.1} parent=27 // pred_check
              _
            $region41: #{tpu_custom_call.1} parent=27 // pred_check_branch
              %177 = sbr.rel target = $region43
            $region42: #{tpu_custom_call.1} parent=27 // pred_region
              _
            $region43: #{tpu_custom_call.1} parent=27 // pred_fallthru
              _
          $region28: #{tpu_custom_call.1} parent=23 // pred_fallthru
            _
          %178 = vnop
        $region24: #{tpu_custom_call.1} parent=19 // pred_fallthru
          _
      $region20: #{tpu_custom_call.1} parent=5 // pred_fallthru
        _
      %p179 = scmp.le.s32.totalorder 1, %s11
      %p180 = scmp.lt.s32.totalorder %s11, 3
      %p181 = pnand %p179, %p180
      %p182 = pneg %p181
      // Predicated region
      $region44: #{tpu_custom_call.1} parent=5 // pred_check
        _
      $region45: #{tpu_custom_call.1} parent=5 // pred_check_branch
        %184 = sbr.rel (%p181) target = $region47
      $region46: #{tpu_custom_call.1} parent=5 // pred_region
        %s185 = ssub.s32 %s11, 1
        %s186 = sand.u32 %s24, 1
        %s187 = sand.u32 %s24, 1
        %s188 = smul.addr %s187, 192
        %s189 = scalar_lea.vmem [#allocation2], %s188
        // Predicated region
        $region48: #{tpu_custom_call.1} parent=46 // pred_check
          %p190 = pneg %p37
        $region49: #{tpu_custom_call.1} parent=46 // pred_check_branch
          %192 = sbr.rel (%p190) target = $region51
        $region50: #{tpu_custom_call.1} parent=46 // pred_region
          _
        $region51: #{tpu_custom_call.1} parent=46 // pred_fallthru
          _
        %s193 = sand.u32 %s24, 1
        %s194 = sand.u32 %s24, 1
        %s195 = smul.addr %s194, 192
        %s196 = scalar_lea.vmem [#allocation2], %s195
        %p197 = pneg %p37
        %p198 = pneg %p34
        %p199 = pneg %p58
        %p200 = pneg %p55
        %p201 = pneg %p84
        %p202 = pneg %p81
        %s203 = sand.u32 %s71, 1
        %s204 = scalar_lea.sflag [#allocation4], %s203
        %s205 = sand.u32 %s71, 1
        %s206 = smul.addr %s205, 32
        %s207 = scalar_lea.vmem [#allocation3], %s206
        %s208 = smul.u32 4, %s16
        %s209 = smul.u32 4, %s16
        %v210 = vld [vmem:[%s189] sm:$0xff]
        %v211 = vld [vmem:[%s189 + $0x8] sm:$0xff]
        %v212 = vld [vmem:[%s189 + $0x10] sm:$0xff]
        %v213 = vld [vmem:[%s189 + $0x18] sm:$0xff]
        %v214 = vld [vmem:[%s189 + $0x20] sm:$0xff]
        %v215 = vld [vmem:[%s189 + $0x28] sm:$0xff]
        %v216 = vld [vmem:[%s189 + $0x30] sm:$0xff]
        %v217 = vld [vmem:[%s189 + $0x38] sm:$0xff]
        %v218 = vld [vmem:[%s189 + $0x40] sm:$0xff]
        %v219 = vld [vmem:[%s189 + $0x48] sm:$0xff]
        %v220 = vld [vmem:[%s189 + $0x50] sm:$0xff]
        %v221 = vld [vmem:[%s189 + $0x58] sm:$0xff]
        %v222 = vld [vmem:[%s189 + $0x60] sm:$0xff]
        %v223 = vld [vmem:[%s189 + $0x68] sm:$0xff]
        %v224 = vld [vmem:[%s189 + $0x70] sm:$0xff]
        %v225 = vld [vmem:[%s189 + $0x78] sm:$0xff]
        %v226 = vld [vmem:[%s189 + $0x80] sm:$0x7]
        %v227 = vld [vmem:[%s189 + $0x88] sm:$0x7]
        %v228 = vld [vmem:[%s189 + $0x90] sm:$0x7]
        %v229 = vld [vmem:[%s189 + $0x98] sm:$0x7]
        %s230 = scalar_lea.vmem %s189, 161 [#allocation2]
        %v231 = vld [vmem:[%s230] ss:$8 sm:$0xf]
        %v232 = vld [vmem:[%s1] sm:$0xff]
        %s233 = scalar_lea.vmem %s189, 128 [#allocation2]
        %v234 = vld [vmem:[%s233] ss:$8 sm:$0xf]
        %236 = vset.pattern.permute.xlu0 0
        %237 = vperm.xlu0 %236, %v232
        %v238 = vpop.permute.xlu0 %237
        %v241 = vperm.slane %v234, 0
        %v242 = vperm.slane %v234, 1
        %v243 = vperm.slane %v234, 2
        %v244 = vperm.slane %v234, 3
        %v249 = vmul.f32 %v238, %v241
        %v250 = vmul.f32 %v238, %v242
        %v251 = vmul.f32 %v238, %v243
        %v252 = vmul.f32 %v238, %v244
        %253 = vset.pattern.permute.xlu0 2
        %254 = vperm.xlu0 %253, %v232
        %v255 = vpop.permute.xlu0 %254
        %v257 = vadd.f32 %v249, %v255
        %v258 = vadd.f32 %v250, %v255
        %v259 = vadd.f32 %v251, %v255
        %v260 = vadd.f32 %v252, %v255
        %s261 = scalar_lea.vmem %s189, 129 [#allocation2]
        %v262 = vld [vmem:[%s261] ss:$8 sm:$0xf]
        %v264 = vperm.slane %v262, 0
        %v265 = vperm.slane %v262, 1
        %v266 = vperm.slane %v262, 2
        %v267 = vperm.slane %v262, 3
        %v272 = vmul.f32 %v238, %v264
        %v273 = vmul.f32 %v238, %v265
        %v274 = vmul.f32 %v238, %v266
        %v275 = vmul.f32 %v238, %v267
        %v276 = vadd.f32 %v272, %v255
        %v277 = vadd.f32 %v273, %v255
        %v278 = vadd.f32 %v274, %v255
        %v279 = vadd.f32 %v275, %v255
        %s280 = scalar_lea.vmem %s189, 130 [#allocation2]
        %v281 = vld [vmem:[%s280] ss:$8 sm:$0xf]
        %v283 = vperm.slane %v281, 0
        %v284 = vperm.slane %v281, 1
        %v285 = vperm.slane %v281, 2
        %v286 = vperm.slane %v281, 3
        %v291 = vmul.f32 %v238, %v283
        %v292 = vmul.f32 %v238, %v284
        %v293 = vmul.f32 %v238, %v285
        %v294 = vmul.f32 %v238, %v286
        %v295 = vadd.f32 %v291, %v255
        %v296 = vadd.f32 %v292, %v255
        %v297 = vadd.f32 %v293, %v255
        %v298 = vadd.f32 %v294, %v255
        %s299 = scalar_lea.vmem %s189, 131 [#allocation2]
        %v300 = vld [vmem:[%s299] ss:$8 sm:$0xf]
        %301 = vset.pattern.permute.xlu0 1
        %302 = vperm.xlu0 %301, %v232
        %v303 = vpop.permute.xlu0 %302
        %v306 = vperm.slane %v300, 0
        %v307 = vperm.slane %v300, 1
        %v308 = vperm.slane %v300, 2
        %v309 = vperm.slane %v300, 3
        %v314 = vmul.f32 %v303, %v306
        %v315 = vmul.f32 %v303, %v307
        %v316 = vmul.f32 %v303, %v308
        %v317 = vmul.f32 %v303, %v309
        %s318 = scalar_lea.vmem %s189, 132 [#allocation2]
        %v319 = vld [vmem:[%s318] ss:$8 sm:$0xf]
        %v321 = vperm.slane %v319, 0
        %v322 = vperm.slane %v319, 1
        %v323 = vperm.slane %v319, 2
        %v324 = vperm.slane %v319, 3
        %v329 = vmul.f32 %v303, %v321
        %v330 = vmul.f32 %v303, %v322
        %v331 = vmul.f32 %v303, %v323
        %v332 = vmul.f32 %v303, %v324
        %s333 = scalar_lea.vmem %s189, 133 [#allocation2]
        %v334 = vld [vmem:[%s333] ss:$8 sm:$0xf]
        %v336 = vperm.slane %v334, 0
        %v337 = vperm.slane %v334, 1
        %v338 = vperm.slane %v334, 2
        %v339 = vperm.slane %v334, 3
        %v344 = vmul.f32 %v303, %v336
        %v345 = vmul.f32 %v303, %v337
        %v346 = vmul.f32 %v303, %v338
        %v347 = vmul.f32 %v303, %v339
        %v348 = vmul.f32 %v314, 1.442695
        %v349 = vpow.pop %v348
        %v350 = vmul.f32 %v315, 1.442695
        %v351 = vpow.pop %v350
        %v352 = vmul.f32 %v316, 1.442695
        %v353 = vpow.pop %v352
        %v354 = vmul.f32 %v317, 1.442695
        %v355 = vpow.pop %v354
        %v356 = vmul.f32 %v329, 1.442695
        %v357 = vpow.pop %v356
        %v358 = vmul.f32 %v330, 1.442695
        %v359 = vpow.pop %v358
        %v360 = vmul.f32 %v331, 1.442695
        %v361 = vpow.pop %v360
        %v362 = vmul.f32 %v332, 1.442695
        %v363 = vpow.pop %v362
        %v364 = vmul.f32 %v344, 1.442695
        %v365 = vpow.pop %v364
        %v366 = vmul.f32 %v345, 1.442695
        %v367 = vpow.pop %v366
        %v368 = vmul.f32 %v346, 1.442695
        %v369 = vpow.pop %v368
        %v370 = vmul.f32 %v347, 1.442695
        %v371 = vpow.pop %v370
        %s372 = scalar_lea.vmem %s189, 134 [#allocation2]
        %v373 = vld [vmem:[%s372] ss:$8 sm:$0xf]
        %v375 = vperm.slane %v373, 0
        %v376 = vperm.slane %v373, 1
        %v377 = vperm.slane %v373, 2
        %v378 = vperm.slane %v373, 3
        %v383 = vmul.f32 %v238, %v375
        %v384 = vmul.f32 %v238, %v376
        %v385 = vmul.f32 %v238, %v377
        %v386 = vmul.f32 %v238, %v378
        %v387 = vadd.f32 %v383, %v255
        %v388 = vadd.f32 %v384, %v255
        %v389 = vadd.f32 %v385, %v255
        %v390 = vadd.f32 %v386, %v255
        %s391 = scalar_lea.vmem %s189, 135 [#allocation2]
        %v392 = vld [vmem:[%s391] ss:$8 sm:$0xf]
        %v394 = vperm.slane %v392, 0
        %v395 = vperm.slane %v392, 1
        %v396 = vperm.slane %v392, 2
        %v397 = vperm.slane %v392, 3
        %v402 = vmul.f32 %v238, %v394
        %v403 = vmul.f32 %v238, %v395
        %v404 = vmul.f32 %v238, %v396
        %v405 = vmul.f32 %v238, %v397
        %v406 = vadd.f32 %v402, %v255
        %v407 = vadd.f32 %v403, %v255
        %v408 = vadd.f32 %v404, %v255
        %v409 = vadd.f32 %v405, %v255
        %s410 = scalar_lea.vmem %s189, 160 [#allocation2]
        %v411 = vld [vmem:[%s410] ss:$8 sm:$0xf]
        %v413 = vperm.slane %v411, 0
        %v414 = vperm.slane %v411, 1
        %v415 = vperm.slane %v411, 2
        %v416 = vperm.slane %v411, 3
        %v421 = vmul.f32 %v238, %v413
        %v422 = vmul.f32 %v238, %v414
        %v423 = vmul.f32 %v238, %v415
        %v424 = vmul.f32 %v238, %v416
        %v425 = vadd.f32 %v421, %v255
        %v426 = vadd.f32 %v422, %v255
        %v427 = vadd.f32 %v423, %v255
        %v428 = vadd.f32 %v424, %v255
        %v429 = vand.u32 2147483647, %v257
        %vm430 = vcmp.le.f32.partialorder %v429, 0.7853982
        %vm431 = vcmp.lt.s32.totalorder %v257, 0
        %v432 = vand.u32 %v257, 2139095040
        %v433 = vshrl.u32 %v432, 23
        %v434 = vsub.s32 %v433, 127
        %v435 = vand.u32 2147483647, %v257
        %v436 = vand.u32 %v435, 8388607
        %v437 = vor.u32 %v436, 8388608
        %v438 = vsub.s32 0, %v437
        %v439 = vadd.s32 %v434, 1
        %vm440 = vcmp.gt.s32.totalorder %v439, 0
        %v441 = vsel %vm440, %v439, 0
        %v442 = vshrl.u32 %v441, 5
        %v443 = vand.u32 %v441, 31
        %v444 = vsub.s32 32, %v443
        %v445 = vshrl.u32 683565275, %v444
        %v446 = vshll.u32 683565275, %v443
        %v447 = vshrl.u32 2475754826, %v444
        %v448 = vor.u32 %v446, %v447
        %v449 = vshll.u32 2475754826, %v443
        %v450 = vshrl.u32 2131351028, %v444
        %v451 = vor.u32 %v449, %v450
        %v452 = vshll.u32 2131351028, %v443
        %v453 = vshrl.u32 2102212464, %v444
        %v454 = vor.u32 %v452, %v453
        %v455 = vshll.u32 2102212464, %v443
        %v456 = vshrl.u32 920167782, %v444
        %v457 = vor.u32 %v455, %v456
        %v458 = vshll.u32 920167782, %v443
        %v459 = vshrl.u32 1326507024, %v444
        %v460 = vor.u32 %v458, %v459
        %vm461 = vcmp.lt.s32.totalorder %v442, 1
        %vm462 = vcmp.lt.s32.totalorder %v442, 2
        %vm463 = vcmp.lt.s32.totalorder %v442, 3
        %vm464 = vcmp.lt.s32.totalorder %v442, 4
        %v465 = vsel %vm461, %v445, %v448
        %v466 = vsel %vm464, %v454, 2102212464
        %v467 = vsel %vm463, %v451, %v466
        %v468 = vsel %vm462, %v465, %v467
        %v469 = vsel %vm461, %v448, %v451
        %v470 = vsel %vm464, %v457, 920167782
        %v471 = vsel %vm463, %v454, %v470
        %v472 = vsel %vm462, %v469, %v471
        %v473 = vsel %vm461, %v451, %v454
        %v474 = vsel %vm464, %v460, 1326507024
        %v475 = vsel %vm463, %v457, %v474
        %v476 = vsel %vm462, %v473, %v475
        %v477 = vshll.u32 %v437, 8
        %v478 = vand.u32 %v477, 65535
        %v479 = vshrl.u32 %v477, 16
        %v480 = vand.u32 %v476, 65535
        %v481 = vshrl.u32 %v476, 16
        %v482 = vmul.u32 %v478, %v480
        %v483 = vmul.u32 %v478, %v481
        %v484 = vmul.u32 %v479, %v480
        %v485 = vmul.u32 %v479, %v481
        %v486 = vshll.u32 %v483, 16
        %v487 = vshrl.u32 %v483, 16
        %v488 = vshll.u32 %v484, 16
        %v489 = vshrl.u32 %v484, 16
        %vm490 = vc.u32 %v482, %v486
        %v491 = vsel %vm490, 1, 0
        %v492 = vadd.s32 %v482, %v486
        %v493 = vadd.s32 %v485, %v491
        %vm494 = vc.u32 %v492, %v488
        %v495 = vsel %vm494, 1, 0
        %v496 = vadd.s32 %v492, %v488
        %v497 = vadd.s32 %v493, %v495
        %v498 = vadd.s32 %v497, %v487
        %v499 = vadd.s32 %v498, %v489
        %v500 = vand.u32 %v477, 65535
        %v501 = vshrl.u32 %v477, 16
        %v502 = vand.u32 %v472, 65535
        %v503 = vshrl.u32 %v472, 16
        %v504 = vmul.u32 %v500, %v502
        %v505 = vmul.u32 %v500, %v503
        %v506 = vmul.u32 %v501, %v502
        %v507 = vmul.u32 %v501, %v503
        %v508 = vshll.u32 %v505, 16
        %v509 = vshrl.u32 %v505, 16
        %v510 = vshll.u32 %v506, 16
        %v511 = vshrl.u32 %v506, 16
        %vm512 = vc.u32 %v504, %v508
        %v513 = vsel %vm512, 1, 0
        %v514 = vadd.s32 %v504, %v508
        %v515 = vadd.s32 %v507, %v513
        %vm516 = vc.u32 %v514, %v510
        %v517 = vsel %vm516, 1, 0
        %v518 = vadd.s32 %v514, %v510
        %v519 = vadd.s32 %v515, %v517
        %v520 = vadd.s32 %v519, %v509
        %v521 = vadd.s32 %v520, %v511
        %v522 = vmul.u32 %v477, %v468
        %v523 = vadd.s32 %v499, %v518
        %vm524 = vc.u32 %v499, %v518
        %v525 = vadd.s32 %v521, 1
        %v526 = vsel %vm524, %v525, %v521
        %v527 = vadd.s32 %v522, %v526
        %v528 = vadd.s32 %v527, 536870912
        %v529 = vshrl.u32 %v528, 30
        %v530 = vshll.u32 %v529, 30
        %v531 = vsub.s32 %v527, %v530
        %vm532 = vcmp.lt.s32.totalorder %v531, 0
        %v533 = vsub.s32 0, %v531
        %v534 = vsel %vm532, %v533, %v531
        %v535 = vclz %v534
        %v536 = vsub.s32 %v535, 2
        %vm537 = vcmp.gt.s32.totalorder 0, %v536
        %v538 = vsel %vm537, 0, %v536
        %v539 = vsub.s32 32, %v538
        %v540 = vshll.u32 %v531, %v538
        %v541 = vshrl.u32 %v523, %v539
        %v542 = vor.u32 %v540, %v541
        %v543 = vsub.s32 4294967266, %v538
        %v544 = vadd.s32 %v543, 127
        %v545 = vshll.u32 %v544, 23
        %v546 = vor.u32 4788187, %v545
        %v547 = vand.u32 2147483647, %v546
        %v549 = vcvt.s32.f32 %v542
        %v550 = vmul.f32 %v549, %v547
        %v551 = vxor.u32 %v550, 2147483648
        %v552 = vsel %vm431, %v551, %v550
        %v553 = vsub.s32 4, %v529
        %v554 = vsel %vm431, %v553, %v529
        %v555 = vsel %vm430, %v257, %v552
        %v556 = vsel %vm430, 0, %v554
        %v557 = vmul.f32 %v555, %v555
        %v558 = vmul.f32 %v557, -0.001358992
        %v559 = vadd.f32 %v558, 0.041655596
        %v560 = vmul.f32 %v557, %v559
        %v561 = vadd.f32 %v560, -0.4999988
        %v562 = vmul.f32 %v557, %v561
        %v563 = vadd.f32 1.0, %v562
        %v564 = vmul.f32 %v555, %v555
        %v565 = vmul.f32 %v564, -0.00019511016
        %v566 = vadd.f32 %v565, 0.008332121
        %v567 = vmul.f32 %v564, %v566
        %v568 = vadd.f32 %v567, -0.16666654
        %v569 = vmul.f32 %v564, %v568
        %v570 = vadd.f32 %v569, 1.0
        %v571 = vmul.f32 %v570, %v555
        %vm572 = vweird.f32 %v257
        %v573 = vadd.s32 %v556, 3
        %v574 = vand.u32 %v573, 3
        %vm575 = vcmp.lt.s32.totalorder %v574, 2
        %vm576 = vcmp.eq.s32.totalorder %v574, 0
        %v577 = vxor.u32 %v571, 2147483648
        %v578 = vsel %vm576, %v563, %v577
        %vm579 = vcmp.eq.s32.totalorder %v574, 2
        %v580 = vxor.u32 %v563, 2147483648
        %v581 = vsel %vm579, %v580, %v571
        %v582 = vsel %vm575, %v578, %v581
        %v583 = vsel %vm572, nan, %v582
        %v584 = vand.u32 2147483647, %v258
        %vm585 = vcmp.le.f32.partialorder %v584, 0.7853982
        %vm586 = vcmp.lt.s32.totalorder %v258, 0
        %v587 = vand.u32 %v258, 2139095040
        %v588 = vshrl.u32 %v587, 23
        %v589 = vsub.s32 %v588, 127
        %v590 = vand.u32 2147483647, %v258
        %v591 = vand.u32 %v590, 8388607
        %v592 = vor.u32 %v591, 8388608
        %v593 = vsub.s32 0, %v592
        %v594 = vadd.s32 %v589, 1
        %vm595 = vcmp.gt.s32.totalorder %v594, 0
        %v596 = vsel %vm595, %v594, 0
        %v597 = vshrl.u32 %v596, 5
        %v598 = vand.u32 %v596, 31
        %v599 = vsub.s32 32, %v598
        %v600 = vshrl.u32 683565275, %v599
        %v601 = vshll.u32 683565275, %v598
        %v602 = vshrl.u32 2475754826, %v599
        %v603 = vor.u32 %v601, %v602
        %v604 = vshll.u32 2475754826, %v598
        %v605 = vshrl.u32 2131351028, %v599
        %v606 = vor.u32 %v604, %v605
        %v607 = vshll.u32 2131351028, %v598
        %v608 = vshrl.u32 2102212464, %v599
        %v609 = vor.u32 %v607, %v608
        %v610 = vshll.u32 2102212464, %v598
        %v611 = vshrl.u32 920167782, %v599
        %v612 = vor.u32 %v610, %v611
        %v613 = vshll.u32 920167782, %v598
        %v614 = vshrl.u32 1326507024, %v599
        %v615 = vor.u32 %v613, %v614
        %vm616 = vcmp.lt.s32.totalorder %v597, 1
        %vm617 = vcmp.lt.s32.totalorder %v597, 2
        %vm618 = vcmp.lt.s32.totalorder %v597, 3
        %vm619 = vcmp.lt.s32.totalorder %v597, 4
        %v620 = vsel %vm616, %v600, %v603
        %v621 = vsel %vm619, %v609, 2102212464
        %v622 = vsel %vm618, %v606, %v621
        %v623 = vsel %vm617, %v620, %v622
        %v624 = vsel %vm616, %v603, %v606
        %v625 = vsel %vm619, %v612, 920167782
        %v626 = vsel %vm618, %v609, %v625
        %v627 = vsel %vm617, %v624, %v626
        %v628 = vsel %vm616, %v606, %v609
        %v629 = vsel %vm619, %v615, 1326507024
        %v630 = vsel %vm618, %v612, %v629
        %v631 = vsel %vm617, %v628, %v630
        %v632 = vshll.u32 %v592, 8
        %v633 = vand.u32 %v632, 65535
        %v634 = vshrl.u32 %v632, 16
        %v635 = vand.u32 %v631, 65535
        %v636 = vshrl.u32 %v631, 16
        %v637 = vmul.u32 %v633, %v635
        %v638 = vmul.u32 %v633, %v636
        %v639 = vmul.u32 %v634, %v635
        %v640 = vmul.u32 %v634, %v636
        %v641 = vshll.u32 %v638, 16
        %v642 = vshrl.u32 %v638, 16
        %v643 = vshll.u32 %v639, 16
        %v644 = vshrl.u32 %v639, 16
        %vm645 = vc.u32 %v637, %v641
        %v646 = vsel %vm645, 1, 0
        %v647 = vadd.s32 %v637, %v641
        %v648 = vadd.s32 %v640, %v646
        %vm649 = vc.u32 %v647, %v643
        %v650 = vsel %vm649, 1, 0
        %v651 = vadd.s32 %v647, %v643
        %v652 = vadd.s32 %v648, %v650
        %v653 = vadd.s32 %v652, %v642
        %v654 = vadd.s32 %v653, %v644
        %v655 = vand.u32 %v632, 65535
        %v656 = vshrl.u32 %v632, 16
        %v657 = vand.u32 %v627, 65535
        %v658 = vshrl.u32 %v627, 16
        %v659 = vmul.u32 %v655, %v657
        %v660 = vmul.u32 %v655, %v658
        %v661 = vmul.u32 %v656, %v657
        %v662 = vmul.u32 %v656, %v658
        %v663 = vshll.u32 %v660, 16
        %v664 = vshrl.u32 %v660, 16
        %v665 = vshll.u32 %v661, 16
        %v666 = vshrl.u32 %v661, 16
        %vm667 = vc.u32 %v659, %v663
        %v668 = vsel %vm667, 1, 0
        %v669 = vadd.s32 %v659, %v663
        %v670 = vadd.s32 %v662, %v668
        %vm671 = vc.u32 %v669, %v665
        %v672 = vsel %vm671, 1, 0
        %v673 = vadd.s32 %v669, %v665
        %v674 = vadd.s32 %v670, %v672
        %v675 = vadd.s32 %v674, %v664
        %v676 = vadd.s32 %v675, %v666
        %v677 = vmul.u32 %v632, %v623
        %v678 = vadd.s32 %v654, %v673
        %vm679 = vc.u32 %v654, %v673
        %v680 = vadd.s32 %v676, 1
        %v681 = vsel %vm679, %v680, %v676
        %v682 = vadd.s32 %v677, %v681
        %v683 = vadd.s32 %v682, 536870912
        %v684 = vshrl.u32 %v683, 30
        %v685 = vshll.u32 %v684, 30
        %v686 = vsub.s32 %v682, %v685
        %vm687 = vcmp.lt.s32.totalorder %v686, 0
        %v688 = vsub.s32 0, %v686
        %v689 = vsel %vm687, %v688, %v686
        %v690 = vclz %v689
        %v691 = vsub.s32 %v690, 2
        %vm692 = vcmp.gt.s32.totalorder 0, %v691
        %v693 = vsel %vm692, 0, %v691
        %v694 = vsub.s32 32, %v693
        %v695 = vshll.u32 %v686, %v693
        %v696 = vshrl.u32 %v678, %v694
        %v697 = vor.u32 %v695, %v696
        %v698 = vsub.s32 4294967266, %v693
        %v699 = vadd.s32 %v698, 127
        %v700 = vshll.u32 %v699, 23
        %v701 = vor.u32 4788187, %v700
        %v702 = vand.u32 2147483647, %v701
        %v704 = vcvt.s32.f32 %v697
        %v705 = vmul.f32 %v704, %v702
        %v706 = vxor.u32 %v705, 2147483648
        %v707 = vsel %vm586, %v706, %v705
        %v708 = vsub.s32 4, %v684
        %v709 = vsel %vm586, %v708, %v684
        %v710 = vsel %vm585, %v258, %v707
        %v711 = vsel %vm585, 0, %v709
        %v712 = vmul.f32 %v710, %v710
        %v713 = vmul.f32 %v712, -0.001358992
        %v714 = vadd.f32 %v713, 0.041655596
        %v715 = vmul.f32 %v712, %v714
        %v716 = vadd.f32 %v715, -0.4999988
        %v717 = vmul.f32 %v712, %v716
        %v718 = vadd.f32 1.0, %v717
        %v719 = vmul.f32 %v710, %v710
        %v720 = vmul.f32 %v719, -0.00019511016
        %v721 = vadd.f32 %v720, 0.008332121
        %v722 = vmul.f32 %v719, %v721
        %v723 = vadd.f32 %v722, -0.16666654
        %v724 = vmul.f32 %v719, %v723
        %v725 = vadd.f32 %v724, 1.0
        %v726 = vmul.f32 %v725, %v710
        %vm727 = vweird.f32 %v258
        %v728 = vadd.s32 %v711, 3
        %v729 = vand.u32 %v728, 3
        %vm730 = vcmp.lt.s32.totalorder %v729, 2
        %vm731 = vcmp.eq.s32.totalorder %v729, 0
        %v732 = vxor.u32 %v726, 2147483648
        %v733 = vsel %vm731, %v718, %v732
        %vm734 = vcmp.eq.s32.totalorder %v729, 2
        %v735 = vxor.u32 %v718, 2147483648
        %v736 = vsel %vm734, %v735, %v726
        %v737 = vsel %vm730, %v733, %v736
        %v738 = vsel %vm727, nan, %v737
        %v739 = vand.u32 2147483647, %v259
        %vm740 = vcmp.le.f32.partialorder %v739, 0.7853982
        %vm741 = vcmp.lt.s32.totalorder %v259, 0
        %v742 = vand.u32 %v259, 2139095040
        %v743 = vshrl.u32 %v742, 23
        %v744 = vsub.s32 %v743, 127
        %v745 = vand.u32 2147483647, %v259
        %v746 = vand.u32 %v745, 8388607
        %v747 = vor.u32 %v746, 8388608
        %v748 = vsub.s32 0, %v747
        %v749 = vadd.s32 %v744, 1
        %vm750 = vcmp.gt.s32.totalorder %v749, 0
        %v751 = vsel %vm750, %v749, 0
        %v752 = vshrl.u32 %v751, 5
        %v753 = vand.u32 %v751, 31
        %v754 = vsub.s32 32, %v753
        %v755 = vshrl.u32 683565275, %v754
        %v756 = vshll.u32 683565275, %v753
        %v757 = vshrl.u32 2475754826, %v754
        %v758 = vor.u32 %v756, %v757
        %v759 = vshll.u32 2475754826, %v753
        %v760 = vshrl.u32 2131351028, %v754
        %v761 = vor.u32 %v759, %v760
        %v762 = vshll.u32 2131351028, %v753
        %v763 = vshrl.u32 2102212464, %v754
        %v764 = vor.u32 %v762, %v763
        %v765 = vshll.u32 2102212464, %v753
        %v766 = vshrl.u32 920167782, %v754
        %v767 = vor.u32 %v765, %v766
        %v768 = vshll.u32 920167782, %v753
        %v769 = vshrl.u32 1326507024, %v754
        %v770 = vor.u32 %v768, %v769
        %vm771 = vcmp.lt.s32.totalorder %v752, 1
        %vm772 = vcmp.lt.s32.totalorder %v752, 2
        %vm773 = vcmp.lt.s32.totalorder %v752, 3
        %vm774 = vcmp.lt.s32.totalorder %v752, 4
        %v775 = vsel %vm771, %v755, %v758
        %v776 = vsel %vm774, %v764, 2102212464
        %v777 = vsel %vm773, %v761, %v776
        %v778 = vsel %vm772, %v775, %v777
        %v779 = vsel %vm771, %v758, %v761
        %v780 = vsel %vm774, %v767, 920167782
        %v781 = vsel %vm773, %v764, %v780
        %v782 = vsel %vm772, %v779, %v781
        %v783 = vsel %vm771, %v761, %v764
        %v784 = vsel %vm774, %v770, 1326507024
        %v785 = vsel %vm773, %v767, %v784
        %v786 = vsel %vm772, %v783, %v785
        %v787 = vshll.u32 %v747, 8
        %v788 = vand.u32 %v787, 65535
        %v789 = vshrl.u32 %v787, 16
        %v790 = vand.u32 %v786, 65535
        %v791 = vshrl.u32 %v786, 16
        %v792 = vmul.u32 %v788, %v790
        %v793 = vmul.u32 %v788, %v791
        %v794 = vmul.u32 %v789, %v790
        %v795 = vmul.u32 %v789, %v791
        %v796 = vshll.u32 %v793, 16
        %v797 = vshrl.u32 %v793, 16
        %v798 = vshll.u32 %v794, 16
        %v799 = vshrl.u32 %v794, 16
        %vm800 = vc.u32 %v792, %v796
        %v801 = vsel %vm800, 1, 0
        %v802 = vadd.s32 %v792, %v796
        %v803 = vadd.s32 %v795, %v801
        %vm804 = vc.u32 %v802, %v798
        %v805 = vsel %vm804, 1, 0
        %v806 = vadd.s32 %v802, %v798
        %v807 = vadd.s32 %v803, %v805
        %v808 = vadd.s32 %v807, %v797
        %v809 = vadd.s32 %v808, %v799
        %v810 = vand.u32 %v787, 65535
        %v811 = vshrl.u32 %v787, 16
        %v812 = vand.u32 %v782, 65535
        %v813 = vshrl.u32 %v782, 16
        %v814 = vmul.u32 %v810, %v812
        %v815 = vmul.u32 %v810, %v813
        %v816 = vmul.u32 %v811, %v812
        %v817 = vmul.u32 %v811, %v813
        %v818 = vshll.u32 %v815, 16
        %v819 = vshrl.u32 %v815, 16
        %v820 = vshll.u32 %v816, 16
        %v821 = vshrl.u32 %v816, 16
        %vm822 = vc.u32 %v814, %v818
        %v823 = vsel %vm822, 1, 0
        %v824 = vadd.s32 %v814, %v818
        %v825 = vadd.s32 %v817, %v823
        %vm826 = vc.u32 %v824, %v820
        %v827 = vsel %vm826, 1, 0
        %v828 = vadd.s32 %v824, %v820
        %v829 = vadd.s32 %v825, %v827
        %v830 = vadd.s32 %v829, %v819
        %v831 = vadd.s32 %v830, %v821
        %v832 = vmul.u32 %v787, %v778
        %v833 = vadd.s32 %v809, %v828
        %vm834 = vc.u32 %v809, %v828
        %v835 = vadd.s32 %v831, 1
        %v836 = vsel %vm834, %v835, %v831
        %v837 = vadd.s32 %v832, %v836
        %v838 = vadd.s32 %v837, 536870912
        %v839 = vshrl.u32 %v838, 30
        %v840 = vshll.u32 %v839, 30
        %v841 = vsub.s32 %v837, %v840
        %vm842 = vcmp.lt.s32.totalorder %v841, 0
        %v843 = vsub.s32 0, %v841
        %v844 = vsel %vm842, %v843, %v841
        %v845 = vclz %v844
        %v846 = vsub.s32 %v845, 2
        %vm847 = vcmp.gt.s32.totalorder 0, %v846
        %v848 = vsel %vm847, 0, %v846
        %v849 = vsub.s32 32, %v848
        %v850 = vshll.u32 %v841, %v848
        %v851 = vshrl.u32 %v833, %v849
        %v852 = vor.u32 %v850, %v851
        %v853 = vsub.s32 4294967266, %v848
        %v854 = vadd.s32 %v853, 127
        %v855 = vshll.u32 %v854, 23
        %v856 = vor.u32 4788187, %v855
        %v857 = vand.u32 2147483647, %v856
        %v859 = vcvt.s32.f32 %v852
        %v860 = vmul.f32 %v859, %v857
        %v861 = vxor.u32 %v860, 2147483648
        %v862 = vsel %vm741, %v861, %v860
        %v863 = vsub.s32 4, %v839
        %v864 = vsel %vm741, %v863, %v839
        %v865 = vsel %vm740, %v259, %v862
        %v866 = vsel %vm740, 0, %v864
        %v867 = vmul.f32 %v865, %v865
        %v868 = vmul.f32 %v867, -0.001358992
        %v869 = vadd.f32 %v868, 0.041655596
        %v870 = vmul.f32 %v867, %v869
        %v871 = vadd.f32 %v870, -0.4999988
        %v872 = vmul.f32 %v867, %v871
        %v873 = vadd.f32 1.0, %v872
        %v874 = vmul.f32 %v865, %v865
        %v875 = vmul.f32 %v874, -0.00019511016
        %v876 = vadd.f32 %v875, 0.008332121
        %v877 = vmul.f32 %v874, %v876
        %v878 = vadd.f32 %v877, -0.16666654
        %v879 = vmul.f32 %v874, %v878
        %v880 = vadd.f32 %v879, 1.0
        %v881 = vmul.f32 %v880, %v865
        %vm882 = vweird.f32 %v259
        %v883 = vadd.s32 %v866, 3
        %v884 = vand.u32 %v883, 3
        %vm885 = vcmp.lt.s32.totalorder %v884, 2
        %vm886 = vcmp.eq.s32.totalorder %v884, 0
        %v887 = vxor.u32 %v881, 2147483648
        %v888 = vsel %vm886, %v873, %v887
        %vm889 = vcmp.eq.s32.totalorder %v884, 2
        %v890 = vxor.u32 %v873, 2147483648
        %v891 = vsel %vm889, %v890, %v881
        %v892 = vsel %vm885, %v888, %v891
        %v893 = vsel %vm882, nan, %v892
        %v894 = vand.u32 2147483647, %v260
        %vm895 = vcmp.le.f32.partialorder %v894, 0.7853982
        %vm896 = vcmp.lt.s32.totalorder %v260, 0
        %v897 = vand.u32 %v260, 2139095040
        %v898 = vshrl.u32 %v897, 23
        %v899 = vsub.s32 %v898, 127
        %v900 = vand.u32 2147483647, %v260
        %v901 = vand.u32 %v900, 8388607
        %v902 = vor.u32 %v901, 8388608
        %v903 = vsub.s32 0, %v902
        %v904 = vadd.s32 %v899, 1
        %vm905 = vcmp.gt.s32.totalorder %v904, 0
        %v906 = vsel %vm905, %v904, 0
        %v907 = vshrl.u32 %v906, 5
        %v908 = vand.u32 %v906, 31
        %v909 = vsub.s32 32, %v908
        %v910 = vshrl.u32 683565275, %v909
        %v911 = vshll.u32 683565275, %v908
        %v912 = vshrl.u32 2475754826, %v909
        %v913 = vor.u32 %v911, %v912
        %v914 = vshll.u32 2475754826, %v908
        %v915 = vshrl.u32 2131351028, %v909
        %v916 = vor.u32 %v914, %v915
        %v917 = vshll.u32 2131351028, %v908
        %v918 = vshrl.u32 2102212464, %v909
        %v919 = vor.u32 %v917, %v918
        %v920 = vshll.u32 2102212464, %v908
        %v921 = vshrl.u32 920167782, %v909
        %v922 = vor.u32 %v920, %v921
        %v923 = vshll.u32 920167782, %v908
        %v924 = vshrl.u32 1326507024, %v909
        %v925 = vor.u32 %v923, %v924
        %vm926 = vcmp.lt.s32.totalorder %v907, 1
        %vm927 = vcmp.lt.s32.totalorder %v907, 2
        %vm928 = vcmp.lt.s32.totalorder %v907, 3
        %vm929 = vcmp.lt.s32.totalorder %v907, 4
        %v930 = vsel %vm926, %v910, %v913
        %v931 = vsel %vm929, %v919, 2102212464
        %v932 = vsel %vm928, %v916, %v931
        %v933 = vsel %vm927, %v930, %v932
        %v934 = vsel %vm926, %v913, %v916
        %v935 = vsel %vm929, %v922, 920167782
        %v936 = vsel %vm928, %v919, %v935
        %v937 = vsel %vm927, %v934, %v936
        %v938 = vsel %vm926, %v916, %v919
        %v939 = vsel %vm929, %v925, 1326507024
        %v940 = vsel %vm928, %v922, %v939
        %v941 = vsel %vm927, %v938, %v940
        %v942 = vshll.u32 %v902, 8
        %v943 = vand.u32 %v942, 65535
        %v944 = vshrl.u32 %v942, 16
        %v945 = vand.u32 %v941, 65535
        %v946 = vshrl.u32 %v941, 16
        %v947 = vmul.u32 %v943, %v945
        %v948 = vmul.u32 %v943, %v946
        %v949 = vmul.u32 %v944, %v945
        %v950 = vmul.u32 %v944, %v946
        %v951 = vshll.u32 %v948, 16
        %v952 = vshrl.u32 %v948, 16
        %v953 = vshll.u32 %v949, 16
        %v954 = vshrl.u32 %v949, 16
        %vm955 = vc.u32 %v947, %v951
        %v956 = vsel %vm955, 1, 0
        %v957 = vadd.s32 %v947, %v951
        %v958 = vadd.s32 %v950, %v956
        %vm959 = vc.u32 %v957, %v953
        %v960 = vsel %vm959, 1, 0
        %v961 = vadd.s32 %v957, %v953
        %v962 = vadd.s32 %v958, %v960
        %v963 = vadd.s32 %v962, %v952
        %v964 = vadd.s32 %v963, %v954
        %v965 = vand.u32 %v942, 65535
        %v966 = vshrl.u32 %v942, 16
        %v967 = vand.u32 %v937, 65535
        %v968 = vshrl.u32 %v937, 16
        %v969 = vmul.u32 %v965, %v967
        %v970 = vmul.u32 %v965, %v968
        %v971 = vmul.u32 %v966, %v967
        %v972 = vmul.u32 %v966, %v968
        %v973 = vshll.u32 %v970, 16
        %v974 = vshrl.u32 %v970, 16
        %v975 = vshll.u32 %v971, 16
        %v976 = vshrl.u32 %v971, 16
        %vm977 = vc.u32 %v969, %v973
        %v978 = vsel %vm977, 1, 0
        %v979 = vadd.s32 %v969, %v973
        %v980 = vadd.s32 %v972, %v978
        %vm981 = vc.u32 %v979, %v975
        %v982 = vsel %vm981, 1, 0
        %v983 = vadd.s32 %v979, %v975
        %v984 = vadd.s32 %v980, %v982
        %v985 = vadd.s32 %v984, %v974
        %v986 = vadd.s32 %v985, %v976
        %v987 = vmul.u32 %v942, %v933
        %v988 = vadd.s32 %v964, %v983
        %vm989 = vc.u32 %v964, %v983
        %v990 = vadd.s32 %v986, 1
        %v991 = vsel %vm989, %v990, %v986
        %v992 = vadd.s32 %v987, %v991
        %v993 = vadd.s32 %v992, 536870912
        %v994 = vshrl.u32 %v993, 30
        %v995 = vshll.u32 %v994, 30
        %v996 = vsub.s32 %v992, %v995
        %vm997 = vcmp.lt.s32.totalorder %v996, 0
        %v998 = vsub.s32 0, %v996
        %v999 = vsel %vm997, %v998, %v996
        %v1000 = vclz %v999
        %v1001 = vsub.s32 %v1000, 2
        %vm1002 = vcmp.gt.s32.totalorder 0, %v1001
        %v1003 = vsel %vm1002, 0, %v1001
        %v1004 = vsub.s32 32, %v1003
        %v1005 = vshll.u32 %v996, %v1003
        %v1006 = vshrl.u32 %v988, %v1004
        %v1007 = vor.u32 %v1005, %v1006
        %v1008 = vsub.s32 4294967266, %v1003
        %v1009 = vadd.s32 %v1008, 127
        %v1010 = vshll.u32 %v1009, 23
        %v1011 = vor.u32 4788187, %v1010
        %v1012 = vand.u32 2147483647, %v1011
        %v1014 = vcvt.s32.f32 %v1007
        %v1015 = vmul.f32 %v1014, %v1012
        %v1016 = vxor.u32 %v1015, 2147483648
        %v1017 = vsel %vm896, %v1016, %v1015
        %v1018 = vsub.s32 4, %v994
        %v1019 = vsel %vm896, %v1018, %v994
        %v1020 = vsel %vm895, %v260, %v1017
        %v1021 = vsel %vm895, 0, %v1019
        %v1022 = vmul.f32 %v1020, %v1020
        %v1023 = vmul.f32 %v1022, -0.001358992
        %v1024 = vadd.f32 %v1023, 0.041655596
        %v1025 = vmul.f32 %v1022, %v1024
        %v1026 = vadd.f32 %v1025, -0.4999988
        %v1027 = vmul.f32 %v1022, %v1026
        %v1028 = vadd.f32 1.0, %v1027
        %v1029 = vmul.f32 %v1020, %v1020
        %v1030 = vmul.f32 %v1029, -0.00019511016
        %v1031 = vadd.f32 %v1030, 0.008332121
        %v1032 = vmul.f32 %v1029, %v1031
        %v1033 = vadd.f32 %v1032, -0.16666654
        %v1034 = vmul.f32 %v1029, %v1033
        %v1035 = vadd.f32 %v1034, 1.0
        %v1036 = vmul.f32 %v1035, %v1020
        %vm1037 = vweird.f32 %v260
        %v1038 = vadd.s32 %v1021, 3
        %v1039 = vand.u32 %v1038, 3
        %vm1040 = vcmp.lt.s32.totalorder %v1039, 2
        %vm1041 = vcmp.eq.s32.totalorder %v1039, 0
        %v1042 = vxor.u32 %v1036, 2147483648
        %v1043 = vsel %vm1041, %v1028, %v1042
        %vm1044 = vcmp.eq.s32.totalorder %v1039, 2
        %v1045 = vxor.u32 %v1028, 2147483648
        %v1046 = vsel %vm1044, %v1045, %v1036
        %v1047 = vsel %vm1040, %v1043, %v1046
        %v1048 = vsel %vm1037, nan, %v1047
        %v1049 = vand.u32 2147483647, %v276
        %vm1050 = vcmp.le.f32.partialorder %v1049, 0.7853982
        %vm1051 = vcmp.lt.s32.totalorder %v276, 0
        %v1052 = vand.u32 %v276, 2139095040
        %v1053 = vshrl.u32 %v1052, 23
        %v1054 = vsub.s32 %v1053, 127
        %v1055 = vand.u32 2147483647, %v276
        %v1056 = vand.u32 %v1055, 8388607
        %v1057 = vor.u32 %v1056, 8388608
        %v1058 = vsub.s32 0, %v1057
        %v1059 = vadd.s32 %v1054, 1
        %vm1060 = vcmp.gt.s32.totalorder %v1059, 0
        %v1061 = vsel %vm1060, %v1059, 0
        %v1062 = vshrl.u32 %v1061, 5
        %v1063 = vand.u32 %v1061, 31
        %v1064 = vsub.s32 32, %v1063
        %v1065 = vshrl.u32 683565275, %v1064
        %v1066 = vshll.u32 683565275, %v1063
        %v1067 = vshrl.u32 2475754826, %v1064
        %v1068 = vor.u32 %v1066, %v1067
        %v1069 = vshll.u32 2475754826, %v1063
        %v1070 = vshrl.u32 2131351028, %v1064
        %v1071 = vor.u32 %v1069, %v1070
        %v1072 = vshll.u32 2131351028, %v1063
        %v1073 = vshrl.u32 2102212464, %v1064
        %v1074 = vor.u32 %v1072, %v1073
        %v1075 = vshll.u32 2102212464, %v1063
        %v1076 = vshrl.u32 920167782, %v1064
        %v1077 = vor.u32 %v1075, %v1076
        %v1078 = vshll.u32 920167782, %v1063
        %v1079 = vshrl.u32 1326507024, %v1064
        %v1080 = vor.u32 %v1078, %v1079
        %vm1081 = vcmp.lt.s32.totalorder %v1062, 1
        %vm1082 = vcmp.lt.s32.totalorder %v1062, 2
        %vm1083 = vcmp.lt.s32.totalorder %v1062, 3
        %vm1084 = vcmp.lt.s32.totalorder %v1062, 4
        %v1085 = vsel %vm1081, %v1065, %v1068
        %v1086 = vsel %vm1084, %v1074, 2102212464
        %v1087 = vsel %vm1083, %v1071, %v1086
        %v1088 = vsel %vm1082, %v1085, %v1087
        %v1089 = vsel %vm1081, %v1068, %v1071
        %v1090 = vsel %vm1084, %v1077, 920167782
        %v1091 = vsel %vm1083, %v1074, %v1090
        %v1092 = vsel %vm1082, %v1089, %v1091
        %v1093 = vsel %vm1081, %v1071, %v1074
        %v1094 = vsel %vm1084, %v1080, 1326507024
        %v1095 = vsel %vm1083, %v1077, %v1094
        %v1096 = vsel %vm1082, %v1093, %v1095
        %v1097 = vshll.u32 %v1057, 8
        %v1098 = vand.u32 %v1097, 65535
        %v1099 = vshrl.u32 %v1097, 16
        %v1100 = vand.u32 %v1096, 65535
        %v1101 = vshrl.u32 %v1096, 16
        %v1102 = vmul.u32 %v1098, %v1100
        %v1103 = vmul.u32 %v1098, %v1101
        %v1104 = vmul.u32 %v1099, %v1100
        %v1105 = vmul.u32 %v1099, %v1101
        %v1106 = vshll.u32 %v1103, 16
        %v1107 = vshrl.u32 %v1103, 16
        %v1108 = vshll.u32 %v1104, 16
        %v1109 = vshrl.u32 %v1104, 16
        %vm1110 = vc.u32 %v1102, %v1106
        %v1111 = vsel %vm1110, 1, 0
        %v1112 = vadd.s32 %v1102, %v1106
        %v1113 = vadd.s32 %v1105, %v1111
        %vm1114 = vc.u32 %v1112, %v1108
        %v1115 = vsel %vm1114, 1, 0
        %v1116 = vadd.s32 %v1112, %v1108
        %v1117 = vadd.s32 %v1113, %v1115
        %v1118 = vadd.s32 %v1117, %v1107
        %v1119 = vadd.s32 %v1118, %v1109
        %v1120 = vand.u32 %v1097, 65535
        %v1121 = vshrl.u32 %v1097, 16
        %v1122 = vand.u32 %v1092, 65535
        %v1123 = vshrl.u32 %v1092, 16
        %v1124 = vmul.u32 %v1120, %v1122
        %v1125 = vmul.u32 %v1120, %v1123
        %v1126 = vmul.u32 %v1121, %v1122
        %v1127 = vmul.u32 %v1121, %v1123
        %v1128 = vshll.u32 %v1125, 16
        %v1129 = vshrl.u32 %v1125, 16
        %v1130 = vshll.u32 %v1126, 16
        %v1131 = vshrl.u32 %v1126, 16
        %vm1132 = vc.u32 %v1124, %v1128
        %v1133 = vsel %vm1132, 1, 0
        %v1134 = vadd.s32 %v1124, %v1128
        %v1135 = vadd.s32 %v1127, %v1133
        %vm1136 = vc.u32 %v1134, %v1130
        %v1137 = vsel %vm1136, 1, 0
        %v1138 = vadd.s32 %v1134, %v1130
        %v1139 = vadd.s32 %v1135, %v1137
        %v1140 = vadd.s32 %v1139, %v1129
        %v1141 = vadd.s32 %v1140, %v1131
        %v1142 = vmul.u32 %v1097, %v1088
        %v1143 = vadd.s32 %v1119, %v1138
        %vm1144 = vc.u32 %v1119, %v1138
        %v1145 = vadd.s32 %v1141, 1
        %v1146 = vsel %vm1144, %v1145, %v1141
        %v1147 = vadd.s32 %v1142, %v1146
        %v1148 = vadd.s32 %v1147, 536870912
        %v1149 = vshrl.u32 %v1148, 30
        %v1150 = vshll.u32 %v1149, 30
        %v1151 = vsub.s32 %v1147, %v1150
        %vm1152 = vcmp.lt.s32.totalorder %v1151, 0
        %v1153 = vsub.s32 0, %v1151
        %v1154 = vsel %vm1152, %v1153, %v1151
        %v1155 = vclz %v1154
        %v1156 = vsub.s32 %v1155, 2
        %vm1157 = vcmp.gt.s32.totalorder 0, %v1156
        %v1158 = vsel %vm1157, 0, %v1156
        %v1159 = vsub.s32 32, %v1158
        %v1160 = vshll.u32 %v1151, %v1158
        %v1161 = vshrl.u32 %v1143, %v1159
        %v1162 = vor.u32 %v1160, %v1161
        %v1163 = vsub.s32 4294967266, %v1158
        %v1164 = vadd.s32 %v1163, 127
        %v1165 = vshll.u32 %v1164, 23
        %v1166 = vor.u32 4788187, %v1165
        %v1167 = vand.u32 2147483647, %v1166
        %v1169 = vcvt.s32.f32 %v1162
        %v1170 = vmul.f32 %v1169, %v1167
        %v1171 = vxor.u32 %v1170, 2147483648
        %v1172 = vsel %vm1051, %v1171, %v1170
        %v1173 = vsub.s32 4, %v1149
        %v1174 = vsel %vm1051, %v1173, %v1149
        %v1175 = vsel %vm1050, %v276, %v1172
        %v1176 = vsel %vm1050, 0, %v1174
        %v1177 = vmul.f32 %v1175, %v1175
        %v1178 = vmul.f32 %v1177, -0.001358992
        %v1179 = vadd.f32 %v1178, 0.041655596
        %v1180 = vmul.f32 %v1177, %v1179
        %v1181 = vadd.f32 %v1180, -0.4999988
        %v1182 = vmul.f32 %v1177, %v1181
        %v1183 = vadd.f32 1.0, %v1182
        %v1184 = vmul.f32 %v1175, %v1175
        %v1185 = vmul.f32 %v1184, -0.00019511016
        %v1186 = vadd.f32 %v1185, 0.008332121
        %v1187 = vmul.f32 %v1184, %v1186
        %v1188 = vadd.f32 %v1187, -0.16666654
        %v1189 = vmul.f32 %v1184, %v1188
        %v1190 = vadd.f32 %v1189, 1.0
        %v1191 = vmul.f32 %v1190, %v1175
        %vm1192 = vweird.f32 %v276
        %v1193 = vadd.s32 %v1176, 3
        %v1194 = vand.u32 %v1193, 3
        %vm1195 = vcmp.lt.s32.totalorder %v1194, 2
        %vm1196 = vcmp.eq.s32.totalorder %v1194, 0
        %v1197 = vxor.u32 %v1191, 2147483648
        %v1198 = vsel %vm1196, %v1183, %v1197
        %vm1199 = vcmp.eq.s32.totalorder %v1194, 2
        %v1200 = vxor.u32 %v1183, 2147483648
        %v1201 = vsel %vm1199, %v1200, %v1191
        %v1202 = vsel %vm1195, %v1198, %v1201
        %v1203 = vsel %vm1192, nan, %v1202
        %v1204 = vand.u32 2147483647, %v277
        %vm1205 = vcmp.le.f32.partialorder %v1204, 0.7853982
        %vm1206 = vcmp.lt.s32.totalorder %v277, 0
        %v1207 = vand.u32 %v277, 2139095040
        %v1208 = vshrl.u32 %v1207, 23
        %v1209 = vsub.s32 %v1208, 127
        %v1210 = vand.u32 2147483647, %v277
        %v1211 = vand.u32 %v1210, 8388607
        %v1212 = vor.u32 %v1211, 8388608
        %v1213 = vsub.s32 0, %v1212
        %v1214 = vadd.s32 %v1209, 1
        %vm1215 = vcmp.gt.s32.totalorder %v1214, 0
        %v1216 = vsel %vm1215, %v1214, 0
        %v1217 = vshrl.u32 %v1216, 5
        %v1218 = vand.u32 %v1216, 31
        %v1219 = vsub.s32 32, %v1218
        %v1220 = vshrl.u32 683565275, %v1219
        %v1221 = vshll.u32 683565275, %v1218
        %v1222 = vshrl.u32 2475754826, %v1219
        %v1223 = vor.u32 %v1221, %v1222
        %v1224 = vshll.u32 2475754826, %v1218
        %v1225 = vshrl.u32 2131351028, %v1219
        %v1226 = vor.u32 %v1224, %v1225
        %v1227 = vshll.u32 2131351028, %v1218
        %v1228 = vshrl.u32 2102212464, %v1219
        %v1229 = vor.u32 %v1227, %v1228
        %v1230 = vshll.u32 2102212464, %v1218
        %v1231 = vshrl.u32 920167782, %v1219
        %v1232 = vor.u32 %v1230, %v1231
        %v1233 = vshll.u32 920167782, %v1218
        %v1234 = vshrl.u32 1326507024, %v1219
        %v1235 = vor.u32 %v1233, %v1234
        %vm1236 = vcmp.lt.s32.totalorder %v1217, 1
        %vm1237 = vcmp.lt.s32.totalorder %v1217, 2
        %vm1238 = vcmp.lt.s32.totalorder %v1217, 3
        %vm1239 = vcmp.lt.s32.totalorder %v1217, 4
        %v1240 = vsel %vm1236, %v1220, %v1223
        %v1241 = vsel %vm1239, %v1229, 2102212464
        %v1242 = vsel %vm1238, %v1226, %v1241
        %v1243 = vsel %vm1237, %v1240, %v1242
        %v1244 = vsel %vm1236, %v1223, %v1226
        %v1245 = vsel %vm1239, %v1232, 920167782
        %v1246 = vsel %vm1238, %v1229, %v1245
        %v1247 = vsel %vm1237, %v1244, %v1246
        %v1248 = vsel %vm1236, %v1226, %v1229
        %v1249 = vsel %vm1239, %v1235, 1326507024
        %v1250 = vsel %vm1238, %v1232, %v1249
        %v1251 = vsel %vm1237, %v1248, %v1250
        %v1252 = vshll.u32 %v1212, 8
        %v1253 = vand.u32 %v1252, 65535
        %v1254 = vshrl.u32 %v1252, 16
        %v1255 = vand.u32 %v1251, 65535
        %v1256 = vshrl.u32 %v1251, 16
        %v1257 = vmul.u32 %v1253, %v1255
        %v1258 = vmul.u32 %v1253, %v1256
        %v1259 = vmul.u32 %v1254, %v1255
        %v1260 = vmul.u32 %v1254, %v1256
        %v1261 = vshll.u32 %v1258, 16
        %v1262 = vshrl.u32 %v1258, 16
        %v1263 = vshll.u32 %v1259, 16
        %v1264 = vshrl.u32 %v1259, 16
        %vm1265 = vc.u32 %v1257, %v1261
        %v1266 = vsel %vm1265, 1, 0
        %v1267 = vadd.s32 %v1257, %v1261
        %v1268 = vadd.s32 %v1260, %v1266
        %vm1269 = vc.u32 %v1267, %v1263
        %v1270 = vsel %vm1269, 1, 0
        %v1271 = vadd.s32 %v1267, %v1263
        %v1272 = vadd.s32 %v1268, %v1270
        %v1273 = vadd.s32 %v1272, %v1262
        %v1274 = vadd.s32 %v1273, %v1264
        %v1275 = vand.u32 %v1252, 65535
        %v1276 = vshrl.u32 %v1252, 16
        %v1277 = vand.u32 %v1247, 65535
        %v1278 = vshrl.u32 %v1247, 16
        %v1279 = vmul.u32 %v1275, %v1277
        %v1280 = vmul.u32 %v1275, %v1278
        %v1281 = vmul.u32 %v1276, %v1277
        %v1282 = vmul.u32 %v1276, %v1278
        %v1283 = vshll.u32 %v1280, 16
        %v1284 = vshrl.u32 %v1280, 16
        %v1285 = vshll.u32 %v1281, 16
        %v1286 = vshrl.u32 %v1281, 16
        %vm1287 = vc.u32 %v1279, %v1283
        %v1288 = vsel %vm1287, 1, 0
        %v1289 = vadd.s32 %v1279, %v1283
        %v1290 = vadd.s32 %v1282, %v1288
        %vm1291 = vc.u32 %v1289, %v1285
        %v1292 = vsel %vm1291, 1, 0
        %v1293 = vadd.s32 %v1289, %v1285
        %v1294 = vadd.s32 %v1290, %v1292
        %v1295 = vadd.s32 %v1294, %v1284
        %v1296 = vadd.s32 %v1295, %v1286
        %v1297 = vmul.u32 %v1252, %v1243
        %v1298 = vadd.s32 %v1274, %v1293
        %vm1299 = vc.u32 %v1274, %v1293
        %v1300 = vadd.s32 %v1296, 1
        %v1301 = vsel %vm1299, %v1300, %v1296
        %v1302 = vadd.s32 %v1297, %v1301
        %v1303 = vadd.s32 %v1302, 536870912
        %v1304 = vshrl.u32 %v1303, 30
        %v1305 = vshll.u32 %v1304, 30
        %v1306 = vsub.s32 %v1302, %v1305
        %vm1307 = vcmp.lt.s32.totalorder %v1306, 0
        %v1308 = vsub.s32 0, %v1306
        %v1309 = vsel %vm1307, %v1308, %v1306
        %v1310 = vclz %v1309
        %v1311 = vsub.s32 %v1310, 2
        %vm1312 = vcmp.gt.s32.totalorder 0, %v1311
        %v1313 = vsel %vm1312, 0, %v1311
        %v1314 = vsub.s32 32, %v1313
        %v1315 = vshll.u32 %v1306, %v1313
        %v1316 = vshrl.u32 %v1298, %v1314
        %v1317 = vor.u32 %v1315, %v1316
        %v1318 = vsub.s32 4294967266, %v1313
        %v1319 = vadd.s32 %v1318, 127
        %v1320 = vshll.u32 %v1319, 23
        %v1321 = vor.u32 4788187, %v1320
        %v1322 = vand.u32 2147483647, %v1321
        %v1324 = vcvt.s32.f32 %v1317
        %v1325 = vmul.f32 %v1324, %v1322
        %v1326 = vxor.u32 %v1325, 2147483648
        %v1327 = vsel %vm1206, %v1326, %v1325
        %v1328 = vsub.s32 4, %v1304
        %v1329 = vsel %vm1206, %v1328, %v1304
        %v1330 = vsel %vm1205, %v277, %v1327
        %v1331 = vsel %vm1205, 0, %v1329
        %v1332 = vmul.f32 %v1330, %v1330
        %v1333 = vmul.f32 %v1332, -0.001358992
        %v1334 = vadd.f32 %v1333, 0.041655596
        %v1335 = vmul.f32 %v1332, %v1334
        %v1336 = vadd.f32 %v1335, -0.4999988
        %v1337 = vmul.f32 %v1332, %v1336
        %v1338 = vadd.f32 1.0, %v1337
        %v1339 = vmul.f32 %v1330, %v1330
        %v1340 = vmul.f32 %v1339, -0.00019511016
        %v1341 = vadd.f32 %v1340, 0.008332121
        %v1342 = vmul.f32 %v1339, %v1341
        %v1343 = vadd.f32 %v1342, -0.16666654
        %v1344 = vmul.f32 %v1339, %v1343
        %v1345 = vadd.f32 %v1344, 1.0
        %v1346 = vmul.f32 %v1345, %v1330
        %vm1347 = vweird.f32 %v277
        %v1348 = vadd.s32 %v1331, 3
        %v1349 = vand.u32 %v1348, 3
        %vm1350 = vcmp.lt.s32.totalorder %v1349, 2
        %vm1351 = vcmp.eq.s32.totalorder %v1349, 0
        %v1352 = vxor.u32 %v1346, 2147483648
        %v1353 = vsel %vm1351, %v1338, %v1352
        %vm1354 = vcmp.eq.s32.totalorder %v1349, 2
        %v1355 = vxor.u32 %v1338, 2147483648
        %v1356 = vsel %vm1354, %v1355, %v1346
        %v1357 = vsel %vm1350, %v1353, %v1356
        %v1358 = vsel %vm1347, nan, %v1357
        %v1359 = vand.u32 2147483647, %v278
        %vm1360 = vcmp.le.f32.partialorder %v1359, 0.7853982
        %vm1361 = vcmp.lt.s32.totalorder %v278, 0
        %v1362 = vand.u32 %v278, 2139095040
        %v1363 = vshrl.u32 %v1362, 23
        %v1364 = vsub.s32 %v1363, 127
        %v1365 = vand.u32 2147483647, %v278
        %v1366 = vand.u32 %v1365, 8388607
        %v1367 = vor.u32 %v1366, 8388608
        %v1368 = vsub.s32 0, %v1367
        %v1369 = vadd.s32 %v1364, 1
        %vm1370 = vcmp.gt.s32.totalorder %v1369, 0
        %v1371 = vsel %vm1370, %v1369, 0
        %v1372 = vshrl.u32 %v1371, 5
        %v1373 = vand.u32 %v1371, 31
        %v1374 = vsub.s32 32, %v1373
        %v1375 = vshrl.u32 683565275, %v1374
        %v1376 = vshll.u32 683565275, %v1373
        %v1377 = vshrl.u32 2475754826, %v1374
        %v1378 = vor.u32 %v1376, %v1377
        %v1379 = vshll.u32 2475754826, %v1373
        %v1380 = vshrl.u32 2131351028, %v1374
        %v1381 = vor.u32 %v1379, %v1380
        %v1382 = vshll.u32 2131351028, %v1373
        %v1383 = vshrl.u32 2102212464, %v1374
        %v1384 = vor.u32 %v1382, %v1383
        %v1385 = vshll.u32 2102212464, %v1373
        %v1386 = vshrl.u32 920167782, %v1374
        %v1387 = vor.u32 %v1385, %v1386
        %v1388 = vshll.u32 920167782, %v1373
        %v1389 = vshrl.u32 1326507024, %v1374
        %v1390 = vor.u32 %v1388, %v1389
        %vm1391 = vcmp.lt.s32.totalorder %v1372, 1
        %vm1392 = vcmp.lt.s32.totalorder %v1372, 2
        %vm1393 = vcmp.lt.s32.totalorder %v1372, 3
        %vm1394 = vcmp.lt.s32.totalorder %v1372, 4
        %v1395 = vsel %vm1391, %v1375, %v1378
        %v1396 = vsel %vm1394, %v1384, 2102212464
        %v1397 = vsel %vm1393, %v1381, %v1396
        %v1398 = vsel %vm1392, %v1395, %v1397
        %v1399 = vsel %vm1391, %v1378, %v1381
        %v1400 = vsel %vm1394, %v1387, 920167782
        %v1401 = vsel %vm1393, %v1384, %v1400
        %v1402 = vsel %vm1392, %v1399, %v1401
        %v1403 = vsel %vm1391, %v1381, %v1384
        %v1404 = vsel %vm1394, %v1390, 1326507024
        %v1405 = vsel %vm1393, %v1387, %v1404
        %v1406 = vsel %vm1392, %v1403, %v1405
        %v1407 = vshll.u32 %v1367, 8
        %v1408 = vand.u32 %v1407, 65535
        %v1409 = vshrl.u32 %v1407, 16
        %v1410 = vand.u32 %v1406, 65535
        %v1411 = vshrl.u32 %v1406, 16
        %v1412 = vmul.u32 %v1408, %v1410
        %v1413 = vmul.u32 %v1408, %v1411
        %v1414 = vmul.u32 %v1409, %v1410
        %v1415 = vmul.u32 %v1409, %v1411
        %v1416 = vshll.u32 %v1413, 16
        %v1417 = vshrl.u32 %v1413, 16
        %v1418 = vshll.u32 %v1414, 16
        %v1419 = vshrl.u32 %v1414, 16
        %vm1420 = vc.u32 %v1412, %v1416
        %v1421 = vsel %vm1420, 1, 0
        %v1422 = vadd.s32 %v1412, %v1416
        %v1423 = vadd.s32 %v1415, %v1421
        %vm1424 = vc.u32 %v1422, %v1418
        %v1425 = vsel %vm1424, 1, 0
        %v1426 = vadd.s32 %v1422, %v1418
        %v1427 = vadd.s32 %v1423, %v1425
        %v1428 = vadd.s32 %v1427, %v1417
        %v1429 = vadd.s32 %v1428, %v1419
        %v1430 = vand.u32 %v1407, 65535
        %v1431 = vshrl.u32 %v1407, 16
        %v1432 = vand.u32 %v1402, 65535
        %v1433 = vshrl.u32 %v1402, 16
        %v1434 = vmul.u32 %v1430, %v1432
        %v1435 = vmul.u32 %v1430, %v1433
        %v1436 = vmul.u32 %v1431, %v1432
        %v1437 = vmul.u32 %v1431, %v1433
        %v1438 = vshll.u32 %v1435, 16
        %v1439 = vshrl.u32 %v1435, 16
        %v1440 = vshll.u32 %v1436, 16
        %v1441 = vshrl.u32 %v1436, 16
        %vm1442 = vc.u32 %v1434, %v1438
        %v1443 = vsel %vm1442, 1, 0
        %v1444 = vadd.s32 %v1434, %v1438
        %v1445 = vadd.s32 %v1437, %v1443
        %vm1446 = vc.u32 %v1444, %v1440
        %v1447 = vsel %vm1446, 1, 0
        %v1448 = vadd.s32 %v1444, %v1440
        %v1449 = vadd.s32 %v1445, %v1447
        %v1450 = vadd.s32 %v1449, %v1439
        %v1451 = vadd.s32 %v1450, %v1441
        %v1452 = vmul.u32 %v1407, %v1398
        %v1453 = vadd.s32 %v1429, %v1448
        %vm1454 = vc.u32 %v1429, %v1448
        %v1455 = vadd.s32 %v1451, 1
        %v1456 = vsel %vm1454, %v1455, %v1451
        %v1457 = vadd.s32 %v1452, %v1456
        %v1458 = vadd.s32 %v1457, 536870912
        %v1459 = vshrl.u32 %v1458, 30
        %v1460 = vshll.u32 %v1459, 30
        %v1461 = vsub.s32 %v1457, %v1460
        %vm1462 = vcmp.lt.s32.totalorder %v1461, 0
        %v1463 = vsub.s32 0, %v1461
        %v1464 = vsel %vm1462, %v1463, %v1461
        %v1465 = vclz %v1464
        %v1466 = vsub.s32 %v1465, 2
        %vm1467 = vcmp.gt.s32.totalorder 0, %v1466
        %v1468 = vsel %vm1467, 0, %v1466
        %v1469 = vsub.s32 32, %v1468
        %v1470 = vshll.u32 %v1461, %v1468
        %v1471 = vshrl.u32 %v1453, %v1469
        %v1472 = vor.u32 %v1470, %v1471
        %v1473 = vsub.s32 4294967266, %v1468
        %v1474 = vadd.s32 %v1473, 127
        %v1475 = vshll.u32 %v1474, 23
        %v1476 = vor.u32 4788187, %v1475
        %v1477 = vand.u32 2147483647, %v1476
        %v1479 = vcvt.s32.f32 %v1472
        %v1480 = vmul.f32 %v1479, %v1477
        %v1481 = vxor.u32 %v1480, 2147483648
        %v1482 = vsel %vm1361, %v1481, %v1480
        %v1483 = vsub.s32 4, %v1459
        %v1484 = vsel %vm1361, %v1483, %v1459
        %v1485 = vsel %vm1360, %v278, %v1482
        %v1486 = vsel %vm1360, 0, %v1484
        %v1487 = vmul.f32 %v1485, %v1485
        %v1488 = vmul.f32 %v1487, -0.001358992
        %v1489 = vadd.f32 %v1488, 0.041655596
        %v1490 = vmul.f32 %v1487, %v1489
        %v1491 = vadd.f32 %v1490, -0.4999988
        %v1492 = vmul.f32 %v1487, %v1491
        %v1493 = vadd.f32 1.0, %v1492
        %v1494 = vmul.f32 %v1485, %v1485
        %v1495 = vmul.f32 %v1494, -0.00019511016
        %v1496 = vadd.f32 %v1495, 0.008332121
        %v1497 = vmul.f32 %v1494, %v1496
        %v1498 = vadd.f32 %v1497, -0.16666654
        %v1499 = vmul.f32 %v1494, %v1498
        %v1500 = vadd.f32 %v1499, 1.0
        %v1501 = vmul.f32 %v1500, %v1485
        %vm1502 = vweird.f32 %v278
        %v1503 = vadd.s32 %v1486, 3
        %v1504 = vand.u32 %v1503, 3
        %vm1505 = vcmp.lt.s32.totalorder %v1504, 2
        %vm1506 = vcmp.eq.s32.totalorder %v1504, 0
        %v1507 = vxor.u32 %v1501, 2147483648
        %v1508 = vsel %vm1506, %v1493, %v1507
        %vm1509 = vcmp.eq.s32.totalorder %v1504, 2
        %v1510 = vxor.u32 %v1493, 2147483648
        %v1511 = vsel %vm1509, %v1510, %v1501
        %v1512 = vsel %vm1505, %v1508, %v1511
        %v1513 = vsel %vm1502, nan, %v1512
        %v1514 = vand.u32 2147483647, %v279
        %vm1515 = vcmp.le.f32.partialorder %v1514, 0.7853982
        %vm1516 = vcmp.lt.s32.totalorder %v279, 0
        %v1517 = vand.u32 %v279, 2139095040
        %v1518 = vshrl.u32 %v1517, 23
        %v1519 = vsub.s32 %v1518, 127
        %v1520 = vand.u32 2147483647, %v279
        %v1521 = vand.u32 %v1520, 8388607
        %v1522 = vor.u32 %v1521, 8388608
        %v1523 = vsub.s32 0, %v1522
        %v1524 = vadd.s32 %v1519, 1
        %vm1525 = vcmp.gt.s32.totalorder %v1524, 0
        %v1526 = vsel %vm1525, %v1524, 0
        %v1527 = vshrl.u32 %v1526, 5
        %v1528 = vand.u32 %v1526, 31
        %v1529 = vsub.s32 32, %v1528
        %v1530 = vshrl.u32 683565275, %v1529
        %v1531 = vshll.u32 683565275, %v1528
        %v1532 = vshrl.u32 2475754826, %v1529
        %v1533 = vor.u32 %v1531, %v1532
        %v1534 = vshll.u32 2475754826, %v1528
        %v1535 = vshrl.u32 2131351028, %v1529
        %v1536 = vor.u32 %v1534, %v1535
        %v1537 = vshll.u32 2131351028, %v1528
        %v1538 = vshrl.u32 2102212464, %v1529
        %v1539 = vor.u32 %v1537, %v1538
        %v1540 = vshll.u32 2102212464, %v1528
        %v1541 = vshrl.u32 920167782, %v1529
        %v1542 = vor.u32 %v1540, %v1541
        %v1543 = vshll.u32 920167782, %v1528
        %v1544 = vshrl.u32 1326507024, %v1529
        %v1545 = vor.u32 %v1543, %v1544
        %vm1546 = vcmp.lt.s32.totalorder %v1527, 1
        %vm1547 = vcmp.lt.s32.totalorder %v1527, 2
        %vm1548 = vcmp.lt.s32.totalorder %v1527, 3
        %vm1549 = vcmp.lt.s32.totalorder %v1527, 4
        %v1550 = vsel %vm1546, %v1530, %v1533
        %v1551 = vsel %vm1549, %v1539, 2102212464
        %v1552 = vsel %vm1548, %v1536, %v1551
        %v1553 = vsel %vm1547, %v1550, %v1552
        %v1554 = vsel %vm1546, %v1533, %v1536
        %v1555 = vsel %vm1549, %v1542, 920167782
        %v1556 = vsel %vm1548, %v1539, %v1555
        %v1557 = vsel %vm1547, %v1554, %v1556
        %v1558 = vsel %vm1546, %v1536, %v1539
        %v1559 = vsel %vm1549, %v1545, 1326507024
        %v1560 = vsel %vm1548, %v1542, %v1559
        %v1561 = vsel %vm1547, %v1558, %v1560
        %v1562 = vshll.u32 %v1522, 8
        %v1563 = vand.u32 %v1562, 65535
        %v1564 = vshrl.u32 %v1562, 16
        %v1565 = vand.u32 %v1561, 65535
        %v1566 = vshrl.u32 %v1561, 16
        %v1567 = vmul.u32 %v1563, %v1565
        %v1568 = vmul.u32 %v1563, %v1566
        %v1569 = vmul.u32 %v1564, %v1565
        %v1570 = vmul.u32 %v1564, %v1566
        %v1571 = vshll.u32 %v1568, 16
        %v1572 = vshrl.u32 %v1568, 16
        %v1573 = vshll.u32 %v1569, 16
        %v1574 = vshrl.u32 %v1569, 16
        %vm1575 = vc.u32 %v1567, %v1571
        %v1576 = vsel %vm1575, 1, 0
        %v1577 = vadd.s32 %v1567, %v1571
        %v1578 = vadd.s32 %v1570, %v1576
        %vm1579 = vc.u32 %v1577, %v1573
        %v1580 = vsel %vm1579, 1, 0
        %v1581 = vadd.s32 %v1577, %v1573
        %v1582 = vadd.s32 %v1578, %v1580
        %v1583 = vadd.s32 %v1582, %v1572
        %v1584 = vadd.s32 %v1583, %v1574
        %v1585 = vand.u32 %v1562, 65535
        %v1586 = vshrl.u32 %v1562, 16
        %v1587 = vand.u32 %v1557, 65535
        %v1588 = vshrl.u32 %v1557, 16
        %v1589 = vmul.u32 %v1585, %v1587
        %v1590 = vmul.u32 %v1585, %v1588
        %v1591 = vmul.u32 %v1586, %v1587
        %v1592 = vmul.u32 %v1586, %v1588
        %v1593 = vshll.u32 %v1590, 16
        %v1594 = vshrl.u32 %v1590, 16
        %v1595 = vshll.u32 %v1591, 16
        %v1596 = vshrl.u32 %v1591, 16
        %vm1597 = vc.u32 %v1589, %v1593
        %v1598 = vsel %vm1597, 1, 0
        %v1599 = vadd.s32 %v1589, %v1593
        %v1600 = vadd.s32 %v1592, %v1598
        %vm1601 = vc.u32 %v1599, %v1595
        %v1602 = vsel %vm1601, 1, 0
        %v1603 = vadd.s32 %v1599, %v1595
        %v1604 = vadd.s32 %v1600, %v1602
        %v1605 = vadd.s32 %v1604, %v1594
        %v1606 = vadd.s32 %v1605, %v1596
        %v1607 = vmul.u32 %v1562, %v1553
        %v1608 = vadd.s32 %v1584, %v1603
        %vm1609 = vc.u32 %v1584, %v1603
        %v1610 = vadd.s32 %v1606, 1
        %v1611 = vsel %vm1609, %v1610, %v1606
        %v1612 = vadd.s32 %v1607, %v1611
        %v1613 = vadd.s32 %v1612, 536870912
        %v1614 = vshrl.u32 %v1613, 30
        %v1615 = vshll.u32 %v1614, 30
        %v1616 = vsub.s32 %v1612, %v1615
        %vm1617 = vcmp.lt.s32.totalorder %v1616, 0
        %v1618 = vsub.s32 0, %v1616
        %v1619 = vsel %vm1617, %v1618, %v1616
        %v1620 = vclz %v1619
        %v1621 = vsub.s32 %v1620, 2
        %vm1622 = vcmp.gt.s32.totalorder 0, %v1621
        %v1623 = vsel %vm1622, 0, %v1621
        %v1624 = vsub.s32 32, %v1623
        %v1625 = vshll.u32 %v1616, %v1623
        %v1626 = vshrl.u32 %v1608, %v1624
        %v1627 = vor.u32 %v1625, %v1626
        %v1628 = vsub.s32 4294967266, %v1623
        %v1629 = vadd.s32 %v1628, 127
        %v1630 = vshll.u32 %v1629, 23
        %v1631 = vor.u32 4788187, %v1630
        %v1632 = vand.u32 2147483647, %v1631
        %v1634 = vcvt.s32.f32 %v1627
        %v1635 = vmul.f32 %v1634, %v1632
        %v1636 = vxor.u32 %v1635, 2147483648
        %v1637 = vsel %vm1516, %v1636, %v1635
        %v1638 = vsub.s32 4, %v1614
        %v1639 = vsel %vm1516, %v1638, %v1614
        %v1640 = vsel %vm1515, %v279, %v1637
        %v1641 = vsel %vm1515, 0, %v1639
        %v1642 = vmul.f32 %v1640, %v1640
        %v1643 = vmul.f32 %v1642, -0.001358992
        %v1644 = vadd.f32 %v1643, 0.041655596
        %v1645 = vmul.f32 %v1642, %v1644
        %v1646 = vadd.f32 %v1645, -0.4999988
        %v1647 = vmul.f32 %v1642, %v1646
        %v1648 = vadd.f32 1.0, %v1647
        %v1649 = vmul.f32 %v1640, %v1640
        %v1650 = vmul.f32 %v1649, -0.00019511016
        %v1651 = vadd.f32 %v1650, 0.008332121
        %v1652 = vmul.f32 %v1649, %v1651
        %v1653 = vadd.f32 %v1652, -0.16666654
        %v1654 = vmul.f32 %v1649, %v1653
        %v1655 = vadd.f32 %v1654, 1.0
        %v1656 = vmul.f32 %v1655, %v1640
        %vm1657 = vweird.f32 %v279
        %v1658 = vadd.s32 %v1641, 3
        %v1659 = vand.u32 %v1658, 3
        %vm1660 = vcmp.lt.s32.totalorder %v1659, 2
        %vm1661 = vcmp.eq.s32.totalorder %v1659, 0
        %v1662 = vxor.u32 %v1656, 2147483648
        %v1663 = vsel %vm1661, %v1648, %v1662
        %vm1664 = vcmp.eq.s32.totalorder %v1659, 2
        %v1665 = vxor.u32 %v1648, 2147483648
        %v1666 = vsel %vm1664, %v1665, %v1656
        %v1667 = vsel %vm1660, %v1663, %v1666
        %v1668 = vsel %vm1657, nan, %v1667
        %v1669 = vand.u32 2147483647, %v295
        %vm1670 = vcmp.le.f32.partialorder %v1669, 0.7853982
        %vm1671 = vcmp.lt.s32.totalorder %v295, 0
        %v1672 = vand.u32 %v295, 2139095040
        %v1673 = vshrl.u32 %v1672, 23
        %v1674 = vsub.s32 %v1673, 127
        %v1675 = vand.u32 2147483647, %v295
        %v1676 = vand.u32 %v1675, 8388607
        %v1677 = vor.u32 %v1676, 8388608
        %v1678 = vsub.s32 0, %v1677
        %v1679 = vadd.s32 %v1674, 1
        %vm1680 = vcmp.gt.s32.totalorder %v1679, 0
        %v1681 = vsel %vm1680, %v1679, 0
        %v1682 = vshrl.u32 %v1681, 5
        %v1683 = vand.u32 %v1681, 31
        %v1684 = vsub.s32 32, %v1683
        %v1685 = vshrl.u32 683565275, %v1684
        %v1686 = vshll.u32 683565275, %v1683
        %v1687 = vshrl.u32 2475754826, %v1684
        %v1688 = vor.u32 %v1686, %v1687
        %v1689 = vshll.u32 2475754826, %v1683
        %v1690 = vshrl.u32 2131351028, %v1684
        %v1691 = vor.u32 %v1689, %v1690
        %v1692 = vshll.u32 2131351028, %v1683
        %v1693 = vshrl.u32 2102212464, %v1684
        %v1694 = vor.u32 %v1692, %v1693
        %v1695 = vshll.u32 2102212464, %v1683
        %v1696 = vshrl.u32 920167782, %v1684
        %v1697 = vor.u32 %v1695, %v1696
        %v1698 = vshll.u32 920167782, %v1683
        %v1699 = vshrl.u32 1326507024, %v1684
        %v1700 = vor.u32 %v1698, %v1699
        %vm1701 = vcmp.lt.s32.totalorder %v1682, 1
        %vm1702 = vcmp.lt.s32.totalorder %v1682, 2
        %vm1703 = vcmp.lt.s32.totalorder %v1682, 3
        %vm1704 = vcmp.lt.s32.totalorder %v1682, 4
        %v1705 = vsel %vm1701, %v1685, %v1688
        %v1706 = vsel %vm1704, %v1694, 2102212464
        %v1707 = vsel %vm1703, %v1691, %v1706
        %v1708 = vsel %vm1702, %v1705, %v1707
        %v1709 = vsel %vm1701, %v1688, %v1691
        %v1710 = vsel %vm1704, %v1697, 920167782
        %v1711 = vsel %vm1703, %v1694, %v1710
        %v1712 = vsel %vm1702, %v1709, %v1711
        %v1713 = vsel %vm1701, %v1691, %v1694
        %v1714 = vsel %vm1704, %v1700, 1326507024
        %v1715 = vsel %vm1703, %v1697, %v1714
        %v1716 = vsel %vm1702, %v1713, %v1715
        %v1717 = vshll.u32 %v1677, 8
        %v1718 = vand.u32 %v1717, 65535
        %v1719 = vshrl.u32 %v1717, 16
        %v1720 = vand.u32 %v1716, 65535
        %v1721 = vshrl.u32 %v1716, 16
        %v1722 = vmul.u32 %v1718, %v1720
        %v1723 = vmul.u32 %v1718, %v1721
        %v1724 = vmul.u32 %v1719, %v1720
        %v1725 = vmul.u32 %v1719, %v1721
        %v1726 = vshll.u32 %v1723, 16
        %v1727 = vshrl.u32 %v1723, 16
        %v1728 = vshll.u32 %v1724, 16
        %v1729 = vshrl.u32 %v1724, 16
        %vm1730 = vc.u32 %v1722, %v1726
        %v1731 = vsel %vm1730, 1, 0
        %v1732 = vadd.s32 %v1722, %v1726
        %v1733 = vadd.s32 %v1725, %v1731
        %vm1734 = vc.u32 %v1732, %v1728
        %v1735 = vsel %vm1734, 1, 0
        %v1736 = vadd.s32 %v1732, %v1728
        %v1737 = vadd.s32 %v1733, %v1735
        %v1738 = vadd.s32 %v1737, %v1727
        %v1739 = vadd.s32 %v1738, %v1729
        %v1740 = vand.u32 %v1717, 65535
        %v1741 = vshrl.u32 %v1717, 16
        %v1742 = vand.u32 %v1712, 65535
        %v1743 = vshrl.u32 %v1712, 16
        %v1744 = vmul.u32 %v1740, %v1742
        %v1745 = vmul.u32 %v1740, %v1743
        %v1746 = vmul.u32 %v1741, %v1742
        %v1747 = vmul.u32 %v1741, %v1743
        %v1748 = vshll.u32 %v1745, 16
        %v1749 = vshrl.u32 %v1745, 16
        %v1750 = vshll.u32 %v1746, 16
        %v1751 = vshrl.u32 %v1746, 16
        %vm1752 = vc.u32 %v1744, %v1748
        %v1753 = vsel %vm1752, 1, 0
        %v1754 = vadd.s32 %v1744, %v1748
        %v1755 = vadd.s32 %v1747, %v1753
        %vm1756 = vc.u32 %v1754, %v1750
        %v1757 = vsel %vm1756, 1, 0
        %v1758 = vadd.s32 %v1754, %v1750
        %v1759 = vadd.s32 %v1755, %v1757
        %v1760 = vadd.s32 %v1759, %v1749
        %v1761 = vadd.s32 %v1760, %v1751
        %v1762 = vmul.u32 %v1717, %v1708
        %v1763 = vadd.s32 %v1739, %v1758
        %vm1764 = vc.u32 %v1739, %v1758
        %v1765 = vadd.s32 %v1761, 1
        %v1766 = vsel %vm1764, %v1765, %v1761
        %v1767 = vadd.s32 %v1762, %v1766
        %v1768 = vadd.s32 %v1767, 536870912
        %v1769 = vshrl.u32 %v1768, 30
        %v1770 = vshll.u32 %v1769, 30
        %v1771 = vsub.s32 %v1767, %v1770
        %vm1772 = vcmp.lt.s32.totalorder %v1771, 0
        %v1773 = vsub.s32 0, %v1771
        %v1774 = vsel %vm1772, %v1773, %v1771
        %v1775 = vclz %v1774
        %v1776 = vsub.s32 %v1775, 2
        %vm1777 = vcmp.gt.s32.totalorder 0, %v1776
        %v1778 = vsel %vm1777, 0, %v1776
        %v1779 = vsub.s32 32, %v1778
        %v1780 = vshll.u32 %v1771, %v1778
        %v1781 = vshrl.u32 %v1763, %v1779
        %v1782 = vor.u32 %v1780, %v1781
        %v1783 = vsub.s32 4294967266, %v1778
        %v1784 = vadd.s32 %v1783, 127
        %v1785 = vshll.u32 %v1784, 23
        %v1786 = vor.u32 4788187, %v1785
        %v1787 = vand.u32 2147483647, %v1786
        %v1789 = vcvt.s32.f32 %v1782
        %v1790 = vmul.f32 %v1789, %v1787
        %v1791 = vxor.u32 %v1790, 2147483648
        %v1792 = vsel %vm1671, %v1791, %v1790
        %v1793 = vsub.s32 4, %v1769
        %v1794 = vsel %vm1671, %v1793, %v1769
        %v1795 = vsel %vm1670, %v295, %v1792
        %v1796 = vsel %vm1670, 0, %v1794
        %v1797 = vmul.f32 %v1795, %v1795
        %v1798 = vmul.f32 %v1797, -0.001358992
        %v1799 = vadd.f32 %v1798, 0.041655596
        %v1800 = vmul.f32 %v1797, %v1799
        %v1801 = vadd.f32 %v1800, -0.4999988
        %v1802 = vmul.f32 %v1797, %v1801
        %v1803 = vadd.f32 1.0, %v1802
        %v1804 = vmul.f32 %v1795, %v1795
        %v1805 = vmul.f32 %v1804, -0.00019511016
        %v1806 = vadd.f32 %v1805, 0.008332121
        %v1807 = vmul.f32 %v1804, %v1806
        %v1808 = vadd.f32 %v1807, -0.16666654
        %v1809 = vmul.f32 %v1804, %v1808
        %v1810 = vadd.f32 %v1809, 1.0
        %v1811 = vmul.f32 %v1810, %v1795
        %vm1812 = vweird.f32 %v295
        %v1813 = vadd.s32 %v1796, 3
        %v1814 = vand.u32 %v1813, 3
        %vm1815 = vcmp.lt.s32.totalorder %v1814, 2
        %vm1816 = vcmp.eq.s32.totalorder %v1814, 0
        %v1817 = vxor.u32 %v1811, 2147483648
        %v1818 = vsel %vm1816, %v1803, %v1817
        %vm1819 = vcmp.eq.s32.totalorder %v1814, 2
        %v1820 = vxor.u32 %v1803, 2147483648
        %v1821 = vsel %vm1819, %v1820, %v1811
        %v1822 = vsel %vm1815, %v1818, %v1821
        %v1823 = vsel %vm1812, nan, %v1822
        %v1824 = vand.u32 2147483647, %v296
        %vm1825 = vcmp.le.f32.partialorder %v1824, 0.7853982
        %vm1826 = vcmp.lt.s32.totalorder %v296, 0
        %v1827 = vand.u32 %v296, 2139095040
        %v1828 = vshrl.u32 %v1827, 23
        %v1829 = vsub.s32 %v1828, 127
        %v1830 = vand.u32 2147483647, %v296
        %v1831 = vand.u32 %v1830, 8388607
        %v1832 = vor.u32 %v1831, 8388608
        %v1833 = vsub.s32 0, %v1832
        %v1834 = vadd.s32 %v1829, 1
        %vm1835 = vcmp.gt.s32.totalorder %v1834, 0
        %v1836 = vsel %vm1835, %v1834, 0
        %v1837 = vshrl.u32 %v1836, 5
        %v1838 = vand.u32 %v1836, 31
        %v1839 = vsub.s32 32, %v1838
        %v1840 = vshrl.u32 683565275, %v1839
        %v1841 = vshll.u32 683565275, %v1838
        %v1842 = vshrl.u32 2475754826, %v1839
        %v1843 = vor.u32 %v1841, %v1842
        %v1844 = vshll.u32 2475754826, %v1838
        %v1845 = vshrl.u32 2131351028, %v1839
        %v1846 = vor.u32 %v1844, %v1845
        %v1847 = vshll.u32 2131351028, %v1838
        %v1848 = vshrl.u32 2102212464, %v1839
        %v1849 = vor.u32 %v1847, %v1848
        %v1850 = vshll.u32 2102212464, %v1838
        %v1851 = vshrl.u32 920167782, %v1839
        %v1852 = vor.u32 %v1850, %v1851
        %v1853 = vshll.u32 920167782, %v1838
        %v1854 = vshrl.u32 1326507024, %v1839
        %v1855 = vor.u32 %v1853, %v1854
        %vm1856 = vcmp.lt.s32.totalorder %v1837, 1
        %vm1857 = vcmp.lt.s32.totalorder %v1837, 2
        %vm1858 = vcmp.lt.s32.totalorder %v1837, 3
        %vm1859 = vcmp.lt.s32.totalorder %v1837, 4
        %v1860 = vsel %vm1856, %v1840, %v1843
        %v1861 = vsel %vm1859, %v1849, 2102212464
        %v1862 = vsel %vm1858, %v1846, %v1861
        %v1863 = vsel %vm1857, %v1860, %v1862
        %v1864 = vsel %vm1856, %v1843, %v1846
        %v1865 = vsel %vm1859, %v1852, 920167782
        %v1866 = vsel %vm1858, %v1849, %v1865
        %v1867 = vsel %vm1857, %v1864, %v1866
        %v1868 = vsel %vm1856, %v1846, %v1849
        %v1869 = vsel %vm1859, %v1855, 1326507024
        %v1870 = vsel %vm1858, %v1852, %v1869
        %v1871 = vsel %vm1857, %v1868, %v1870
        %v1872 = vshll.u32 %v1832, 8
        %v1873 = vand.u32 %v1872, 65535
        %v1874 = vshrl.u32 %v1872, 16
        %v1875 = vand.u32 %v1871, 65535
        %v1876 = vshrl.u32 %v1871, 16
        %v1877 = vmul.u32 %v1873, %v1875
        %v1878 = vmul.u32 %v1873, %v1876
        %v1879 = vmul.u32 %v1874, %v1875
        %v1880 = vmul.u32 %v1874, %v1876
        %v1881 = vshll.u32 %v1878, 16
        %v1882 = vshrl.u32 %v1878, 16
        %v1883 = vshll.u32 %v1879, 16
        %v1884 = vshrl.u32 %v1879, 16
        %vm1885 = vc.u32 %v1877, %v1881
        %v1886 = vsel %vm1885, 1, 0
        %v1887 = vadd.s32 %v1877, %v1881
        %v1888 = vadd.s32 %v1880, %v1886
        %vm1889 = vc.u32 %v1887, %v1883
        %v1890 = vsel %vm1889, 1, 0
        %v1891 = vadd.s32 %v1887, %v1883
        %v1892 = vadd.s32 %v1888, %v1890
        %v1893 = vadd.s32 %v1892, %v1882
        %v1894 = vadd.s32 %v1893, %v1884
        %v1895 = vand.u32 %v1872, 65535
        %v1896 = vshrl.u32 %v1872, 16
        %v1897 = vand.u32 %v1867, 65535
        %v1898 = vshrl.u32 %v1867, 16
        %v1899 = vmul.u32 %v1895, %v1897
        %v1900 = vmul.u32 %v1895, %v1898
        %v1901 = vmul.u32 %v1896, %v1897
        %v1902 = vmul.u32 %v1896, %v1898
        %v1903 = vshll.u32 %v1900, 16
        %v1904 = vshrl.u32 %v1900, 16
        %v1905 = vshll.u32 %v1901, 16
        %v1906 = vshrl.u32 %v1901, 16
        %vm1907 = vc.u32 %v1899, %v1903
        %v1908 = vsel %vm1907, 1, 0
        %v1909 = vadd.s32 %v1899, %v1903
        %v1910 = vadd.s32 %v1902, %v1908
        %vm1911 = vc.u32 %v1909, %v1905
        %v1912 = vsel %vm1911, 1, 0
        %v1913 = vadd.s32 %v1909, %v1905
        %v1914 = vadd.s32 %v1910, %v1912
        %v1915 = vadd.s32 %v1914, %v1904
        %v1916 = vadd.s32 %v1915, %v1906
        %v1917 = vmul.u32 %v1872, %v1863
        %v1918 = vadd.s32 %v1894, %v1913
        %vm1919 = vc.u32 %v1894, %v1913
        %v1920 = vadd.s32 %v1916, 1
        %v1921 = vsel %vm1919, %v1920, %v1916
        %v1922 = vadd.s32 %v1917, %v1921
        %v1923 = vadd.s32 %v1922, 536870912
        %v1924 = vshrl.u32 %v1923, 30
        %v1925 = vshll.u32 %v1924, 30
        %v1926 = vsub.s32 %v1922, %v1925
        %vm1927 = vcmp.lt.s32.totalorder %v1926, 0
        %v1928 = vsub.s32 0, %v1926
        %v1929 = vsel %vm1927, %v1928, %v1926
        %v1930 = vclz %v1929
        %v1931 = vsub.s32 %v1930, 2
        %vm1932 = vcmp.gt.s32.totalorder 0, %v1931
        %v1933 = vsel %vm1932, 0, %v1931
        %v1934 = vsub.s32 32, %v1933
        %v1935 = vshll.u32 %v1926, %v1933
        %v1936 = vshrl.u32 %v1918, %v1934
        %v1937 = vor.u32 %v1935, %v1936
        %v1938 = vsub.s32 4294967266, %v1933
        %v1939 = vadd.s32 %v1938, 127
        %v1940 = vshll.u32 %v1939, 23
        %v1941 = vor.u32 4788187, %v1940
        %v1942 = vand.u32 2147483647, %v1941
        %v1944 = vcvt.s32.f32 %v1937
        %v1945 = vmul.f32 %v1944, %v1942
        %v1946 = vxor.u32 %v1945, 2147483648
        %v1947 = vsel %vm1826, %v1946, %v1945
        %v1948 = vsub.s32 4, %v1924
        %v1949 = vsel %vm1826, %v1948, %v1924
        %v1950 = vsel %vm1825, %v296, %v1947
        %v1951 = vsel %vm1825, 0, %v1949
        %v1952 = vmul.f32 %v1950, %v1950
        %v1953 = vmul.f32 %v1952, -0.001358992
        %v1954 = vadd.f32 %v1953, 0.041655596
        %v1955 = vmul.f32 %v1952, %v1954
        %v1956 = vadd.f32 %v1955, -0.4999988
        %v1957 = vmul.f32 %v1952, %v1956
        %v1958 = vadd.f32 1.0, %v1957
        %v1959 = vmul.f32 %v1950, %v1950
        %v1960 = vmul.f32 %v1959, -0.00019511016
        %v1961 = vadd.f32 %v1960, 0.008332121
        %v1962 = vmul.f32 %v1959, %v1961
        %v1963 = vadd.f32 %v1962, -0.16666654
        %v1964 = vmul.f32 %v1959, %v1963
        %v1965 = vadd.f32 %v1964, 1.0
        %v1966 = vmul.f32 %v1965, %v1950
        %vm1967 = vweird.f32 %v296
        %v1968 = vadd.s32 %v1951, 3
        %v1969 = vand.u32 %v1968, 3
        %vm1970 = vcmp.lt.s32.totalorder %v1969, 2
        %vm1971 = vcmp.eq.s32.totalorder %v1969, 0
        %v1972 = vxor.u32 %v1966, 2147483648
        %v1973 = vsel %vm1971, %v1958, %v1972
        %vm1974 = vcmp.eq.s32.totalorder %v1969, 2
        %v1975 = vxor.u32 %v1958, 2147483648
        %v1976 = vsel %vm1974, %v1975, %v1966
        %v1977 = vsel %vm1970, %v1973, %v1976
        %v1978 = vsel %vm1967, nan, %v1977
        %v1979 = vand.u32 2147483647, %v297
        %vm1980 = vcmp.le.f32.partialorder %v1979, 0.7853982
        %vm1981 = vcmp.lt.s32.totalorder %v297, 0
        %v1982 = vand.u32 %v297, 2139095040
        %v1983 = vshrl.u32 %v1982, 23
        %v1984 = vsub.s32 %v1983, 127
        %v1985 = vand.u32 2147483647, %v297
        %v1986 = vand.u32 %v1985, 8388607
        %v1987 = vor.u32 %v1986, 8388608
        %v1988 = vsub.s32 0, %v1987
        %v1989 = vadd.s32 %v1984, 1
        %vm1990 = vcmp.gt.s32.totalorder %v1989, 0
        %v1991 = vsel %vm1990, %v1989, 0
        %v1992 = vshrl.u32 %v1991, 5
        %v1993 = vand.u32 %v1991, 31
        %v1994 = vsub.s32 32, %v1993
        %v1995 = vshrl.u32 683565275, %v1994
        %v1996 = vshll.u32 683565275, %v1993
        %v1997 = vshrl.u32 2475754826, %v1994
        %v1998 = vor.u32 %v1996, %v1997
        %v1999 = vshll.u32 2475754826, %v1993
        %v2000 = vshrl.u32 2131351028, %v1994
        %v2001 = vor.u32 %v1999, %v2000
        %v2002 = vshll.u32 2131351028, %v1993
        %v2003 = vshrl.u32 2102212464, %v1994
        %v2004 = vor.u32 %v2002, %v2003
        %v2005 = vshll.u32 2102212464, %v1993
        %v2006 = vshrl.u32 920167782, %v1994
        %v2007 = vor.u32 %v2005, %v2006
        %v2008 = vshll.u32 920167782, %v1993
        %v2009 = vshrl.u32 1326507024, %v1994
        %v2010 = vor.u32 %v2008, %v2009
        %vm2011 = vcmp.lt.s32.totalorder %v1992, 1
        %vm2012 = vcmp.lt.s32.totalorder %v1992, 2
        %vm2013 = vcmp.lt.s32.totalorder %v1992, 3
        %vm2014 = vcmp.lt.s32.totalorder %v1992, 4
        %v2015 = vsel %vm2011, %v1995, %v1998
        %v2016 = vsel %vm2014, %v2004, 2102212464
        %v2017 = vsel %vm2013, %v2001, %v2016
        %v2018 = vsel %vm2012, %v2015, %v2017
        %v2019 = vsel %vm2011, %v1998, %v2001
        %v2020 = vsel %vm2014, %v2007, 920167782
        %v2021 = vsel %vm2013, %v2004, %v2020
        %v2022 = vsel %vm2012, %v2019, %v2021
        %v2023 = vsel %vm2011, %v2001, %v2004
        %v2024 = vsel %vm2014, %v2010, 1326507024
        %v2025 = vsel %vm2013, %v2007, %v2024
        %v2026 = vsel %vm2012, %v2023, %v2025
        %v2027 = vshll.u32 %v1987, 8
        %v2028 = vand.u32 %v2027, 65535
        %v2029 = vshrl.u32 %v2027, 16
        %v2030 = vand.u32 %v2026, 65535
        %v2031 = vshrl.u32 %v2026, 16
        %v2032 = vmul.u32 %v2028, %v2030
        %v2033 = vmul.u32 %v2028, %v2031
        %v2034 = vmul.u32 %v2029, %v2030
        %v2035 = vmul.u32 %v2029, %v2031
        %v2036 = vshll.u32 %v2033, 16
        %v2037 = vshrl.u32 %v2033, 16
        %v2038 = vshll.u32 %v2034, 16
        %v2039 = vshrl.u32 %v2034, 16
        %vm2040 = vc.u32 %v2032, %v2036
        %v2041 = vsel %vm2040, 1, 0
        %v2042 = vadd.s32 %v2032, %v2036
        %v2043 = vadd.s32 %v2035, %v2041
        %vm2044 = vc.u32 %v2042, %v2038
        %v2045 = vsel %vm2044, 1, 0
        %v2046 = vadd.s32 %v2042, %v2038
        %v2047 = vadd.s32 %v2043, %v2045
        %v2048 = vadd.s32 %v2047, %v2037
        %v2049 = vadd.s32 %v2048, %v2039
        %v2050 = vand.u32 %v2027, 65535
        %v2051 = vshrl.u32 %v2027, 16
        %v2052 = vand.u32 %v2022, 65535
        %v2053 = vshrl.u32 %v2022, 16
        %v2054 = vmul.u32 %v2050, %v2052
        %v2055 = vmul.u32 %v2050, %v2053
        %v2056 = vmul.u32 %v2051, %v2052
        %v2057 = vmul.u32 %v2051, %v2053
        %v2058 = vshll.u32 %v2055, 16
        %v2059 = vshrl.u32 %v2055, 16
        %v2060 = vshll.u32 %v2056, 16
        %v2061 = vshrl.u32 %v2056, 16
        %vm2062 = vc.u32 %v2054, %v2058
        %v2063 = vsel %vm2062, 1, 0
        %v2064 = vadd.s32 %v2054, %v2058
        %v2065 = vadd.s32 %v2057, %v2063
        %vm2066 = vc.u32 %v2064, %v2060
        %v2067 = vsel %vm2066, 1, 0
        %v2068 = vadd.s32 %v2064, %v2060
        %v2069 = vadd.s32 %v2065, %v2067
        %v2070 = vadd.s32 %v2069, %v2059
        %v2071 = vadd.s32 %v2070, %v2061
        %v2072 = vmul.u32 %v2027, %v2018
        %v2073 = vadd.s32 %v2049, %v2068
        %vm2074 = vc.u32 %v2049, %v2068
        %v2075 = vadd.s32 %v2071, 1
        %v2076 = vsel %vm2074, %v2075, %v2071
        %v2077 = vadd.s32 %v2072, %v2076
        %v2078 = vadd.s32 %v2077, 536870912
        %v2079 = vshrl.u32 %v2078, 30
        %v2080 = vshll.u32 %v2079, 30
        %v2081 = vsub.s32 %v2077, %v2080
        %vm2082 = vcmp.lt.s32.totalorder %v2081, 0
        %v2083 = vsub.s32 0, %v2081
        %v2084 = vsel %vm2082, %v2083, %v2081
        %v2085 = vclz %v2084
        %v2086 = vsub.s32 %v2085, 2
        %vm2087 = vcmp.gt.s32.totalorder 0, %v2086
        %v2088 = vsel %vm2087, 0, %v2086
        %v2089 = vsub.s32 32, %v2088
        %v2090 = vshll.u32 %v2081, %v2088
        %v2091 = vshrl.u32 %v2073, %v2089
        %v2092 = vor.u32 %v2090, %v2091
        %v2093 = vsub.s32 4294967266, %v2088
        %v2094 = vadd.s32 %v2093, 127
        %v2095 = vshll.u32 %v2094, 23
        %v2096 = vor.u32 4788187, %v2095
        %v2097 = vand.u32 2147483647, %v2096
        %v2099 = vcvt.s32.f32 %v2092
        %v2100 = vmul.f32 %v2099, %v2097
        %v2101 = vxor.u32 %v2100, 2147483648
        %v2102 = vsel %vm1981, %v2101, %v2100
        %v2103 = vsub.s32 4, %v2079
        %v2104 = vsel %vm1981, %v2103, %v2079
        %v2105 = vsel %vm1980, %v297, %v2102
        %v2106 = vsel %vm1980, 0, %v2104
        %v2107 = vmul.f32 %v2105, %v2105
        %v2108 = vmul.f32 %v2107, -0.001358992
        %v2109 = vadd.f32 %v2108, 0.041655596
        %v2110 = vmul.f32 %v2107, %v2109
        %v2111 = vadd.f32 %v2110, -0.4999988
        %v2112 = vmul.f32 %v2107, %v2111
        %v2113 = vadd.f32 1.0, %v2112
        %v2114 = vmul.f32 %v2105, %v2105
        %v2115 = vmul.f32 %v2114, -0.00019511016
        %v2116 = vadd.f32 %v2115, 0.008332121
        %v2117 = vmul.f32 %v2114, %v2116
        %v2118 = vadd.f32 %v2117, -0.16666654
        %v2119 = vmul.f32 %v2114, %v2118
        %v2120 = vadd.f32 %v2119, 1.0
        %v2121 = vmul.f32 %v2120, %v2105
        %vm2122 = vweird.f32 %v297
        %v2123 = vadd.s32 %v2106, 3
        %v2124 = vand.u32 %v2123, 3
        %vm2125 = vcmp.lt.s32.totalorder %v2124, 2
        %vm2126 = vcmp.eq.s32.totalorder %v2124, 0
        %v2127 = vxor.u32 %v2121, 2147483648
        %v2128 = vsel %vm2126, %v2113, %v2127
        %vm2129 = vcmp.eq.s32.totalorder %v2124, 2
        %v2130 = vxor.u32 %v2113, 2147483648
        %v2131 = vsel %vm2129, %v2130, %v2121
        %v2132 = vsel %vm2125, %v2128, %v2131
        %v2133 = vsel %vm2122, nan, %v2132
        %v2134 = vand.u32 2147483647, %v298
        %vm2135 = vcmp.le.f32.partialorder %v2134, 0.7853982
        %vm2136 = vcmp.lt.s32.totalorder %v298, 0
        %v2137 = vand.u32 %v298, 2139095040
        %v2138 = vshrl.u32 %v2137, 23
        %v2139 = vsub.s32 %v2138, 127
        %v2140 = vand.u32 2147483647, %v298
        %v2141 = vand.u32 %v2140, 8388607
        %v2142 = vor.u32 %v2141, 8388608
        %v2143 = vsub.s32 0, %v2142
        %v2144 = vadd.s32 %v2139, 1
        %vm2145 = vcmp.gt.s32.totalorder %v2144, 0
        %v2146 = vsel %vm2145, %v2144, 0
        %v2147 = vshrl.u32 %v2146, 5
        %v2148 = vand.u32 %v2146, 31
        %v2149 = vsub.s32 32, %v2148
        %v2150 = vshrl.u32 683565275, %v2149
        %v2151 = vshll.u32 683565275, %v2148
        %v2152 = vshrl.u32 2475754826, %v2149
        %v2153 = vor.u32 %v2151, %v2152
        %v2154 = vshll.u32 2475754826, %v2148
        %v2155 = vshrl.u32 2131351028, %v2149
        %v2156 = vor.u32 %v2154, %v2155
        %v2157 = vshll.u32 2131351028, %v2148
        %v2158 = vshrl.u32 2102212464, %v2149
        %v2159 = vor.u32 %v2157, %v2158
        %v2160 = vshll.u32 2102212464, %v2148
        %v2161 = vshrl.u32 920167782, %v2149
        %v2162 = vor.u32 %v2160, %v2161
        %v2163 = vshll.u32 920167782, %v2148
        %v2164 = vshrl.u32 1326507024, %v2149
        %v2165 = vor.u32 %v2163, %v2164
        %vm2166 = vcmp.lt.s32.totalorder %v2147, 1
        %vm2167 = vcmp.lt.s32.totalorder %v2147, 2
        %vm2168 = vcmp.lt.s32.totalorder %v2147, 3
        %vm2169 = vcmp.lt.s32.totalorder %v2147, 4
        %v2170 = vsel %vm2166, %v2150, %v2153
        %v2171 = vsel %vm2169, %v2159, 2102212464
        %v2172 = vsel %vm2168, %v2156, %v2171
        %v2173 = vsel %vm2167, %v2170, %v2172
        %v2174 = vsel %vm2166, %v2153, %v2156
        %v2175 = vsel %vm2169, %v2162, 920167782
        %v2176 = vsel %vm2168, %v2159, %v2175
        %v2177 = vsel %vm2167, %v2174, %v2176
        %v2178 = vsel %vm2166, %v2156, %v2159
        %v2179 = vsel %vm2169, %v2165, 1326507024
        %v2180 = vsel %vm2168, %v2162, %v2179
        %v2181 = vsel %vm2167, %v2178, %v2180
        %v2182 = vshll.u32 %v2142, 8
        %v2183 = vand.u32 %v2182, 65535
        %v2184 = vshrl.u32 %v2182, 16
        %v2185 = vand.u32 %v2181, 65535
        %v2186 = vshrl.u32 %v2181, 16
        %v2187 = vmul.u32 %v2183, %v2185
        %v2188 = vmul.u32 %v2183, %v2186
        %v2189 = vmul.u32 %v2184, %v2185
        %v2190 = vmul.u32 %v2184, %v2186
        %v2191 = vshll.u32 %v2188, 16
        %v2192 = vshrl.u32 %v2188, 16
        %v2193 = vshll.u32 %v2189, 16
        %v2194 = vshrl.u32 %v2189, 16
        %vm2195 = vc.u32 %v2187, %v2191
        %v2196 = vsel %vm2195, 1, 0
        %v2197 = vadd.s32 %v2187, %v2191
        %v2198 = vadd.s32 %v2190, %v2196
        %vm2199 = vc.u32 %v2197, %v2193
        %v2200 = vsel %vm2199, 1, 0
        %v2201 = vadd.s32 %v2197, %v2193
        %v2202 = vadd.s32 %v2198, %v2200
        %v2203 = vadd.s32 %v2202, %v2192
        %v2204 = vadd.s32 %v2203, %v2194
        %v2205 = vand.u32 %v2182, 65535
        %v2206 = vshrl.u32 %v2182, 16
        %v2207 = vand.u32 %v2177, 65535
        %v2208 = vshrl.u32 %v2177, 16
        %v2209 = vmul.u32 %v2205, %v2207
        %v2210 = vmul.u32 %v2205, %v2208
        %v2211 = vmul.u32 %v2206, %v2207
        %v2212 = vmul.u32 %v2206, %v2208
        %v2213 = vshll.u32 %v2210, 16
        %v2214 = vshrl.u32 %v2210, 16
        %v2215 = vshll.u32 %v2211, 16
        %v2216 = vshrl.u32 %v2211, 16
        %vm2217 = vc.u32 %v2209, %v2213
        %v2218 = vsel %vm2217, 1, 0
        %v2219 = vadd.s32 %v2209, %v2213
        %v2220 = vadd.s32 %v2212, %v2218
        %vm2221 = vc.u32 %v2219, %v2215
        %v2222 = vsel %vm2221, 1, 0
        %v2223 = vadd.s32 %v2219, %v2215
        %v2224 = vadd.s32 %v2220, %v2222
        %v2225 = vadd.s32 %v2224, %v2214
        %v2226 = vadd.s32 %v2225, %v2216
        %v2227 = vmul.u32 %v2182, %v2173
        %v2228 = vadd.s32 %v2204, %v2223
        %vm2229 = vc.u32 %v2204, %v2223
        %v2230 = vadd.s32 %v2226, 1
        %v2231 = vsel %vm2229, %v2230, %v2226
        %v2232 = vadd.s32 %v2227, %v2231
        %v2233 = vadd.s32 %v2232, 536870912
        %v2234 = vshrl.u32 %v2233, 30
        %v2235 = vshll.u32 %v2234, 30
        %v2236 = vsub.s32 %v2232, %v2235
        %vm2237 = vcmp.lt.s32.totalorder %v2236, 0
        %v2238 = vsub.s32 0, %v2236
        %v2239 = vsel %vm2237, %v2238, %v2236
        %v2240 = vclz %v2239
        %v2241 = vsub.s32 %v2240, 2
        %vm2242 = vcmp.gt.s32.totalorder 0, %v2241
        %v2243 = vsel %vm2242, 0, %v2241
        %v2244 = vsub.s32 32, %v2243
        %v2245 = vshll.u32 %v2236, %v2243
        %v2246 = vshrl.u32 %v2228, %v2244
        %v2247 = vor.u32 %v2245, %v2246
        %v2248 = vsub.s32 4294967266, %v2243
        %v2249 = vadd.s32 %v2248, 127
        %v2250 = vshll.u32 %v2249, 23
        %v2251 = vor.u32 4788187, %v2250
        %v2252 = vand.u32 2147483647, %v2251
        %v2254 = vcvt.s32.f32 %v2247
        %v2255 = vmul.f32 %v2254, %v2252
        %v2256 = vxor.u32 %v2255, 2147483648
        %v2257 = vsel %vm2136, %v2256, %v2255
        %v2258 = vsub.s32 4, %v2234
        %v2259 = vsel %vm2136, %v2258, %v2234
        %v2260 = vsel %vm2135, %v298, %v2257
        %v2261 = vsel %vm2135, 0, %v2259
        %v2262 = vmul.f32 %v2260, %v2260
        %v2263 = vmul.f32 %v2262, -0.001358992
        %v2264 = vadd.f32 %v2263, 0.041655596
        %v2265 = vmul.f32 %v2262, %v2264
        %v2266 = vadd.f32 %v2265, -0.4999988
        %v2267 = vmul.f32 %v2262, %v2266
        %v2268 = vadd.f32 1.0, %v2267
        %v2269 = vmul.f32 %v2260, %v2260
        %v2270 = vmul.f32 %v2269, -0.00019511016
        %v2271 = vadd.f32 %v2270, 0.008332121
        %v2272 = vmul.f32 %v2269, %v2271
        %v2273 = vadd.f32 %v2272, -0.16666654
        %v2274 = vmul.f32 %v2269, %v2273
        %v2275 = vadd.f32 %v2274, 1.0
        %v2276 = vmul.f32 %v2275, %v2260
        %vm2277 = vweird.f32 %v298
        %v2278 = vadd.s32 %v2261, 3
        %v2279 = vand.u32 %v2278, 3
        %vm2280 = vcmp.lt.s32.totalorder %v2279, 2
        %vm2281 = vcmp.eq.s32.totalorder %v2279, 0
        %v2282 = vxor.u32 %v2276, 2147483648
        %v2283 = vsel %vm2281, %v2268, %v2282
        %vm2284 = vcmp.eq.s32.totalorder %v2279, 2
        %v2285 = vxor.u32 %v2268, 2147483648
        %v2286 = vsel %vm2284, %v2285, %v2276
        %v2287 = vsel %vm2280, %v2283, %v2286
        %v2288 = vsel %vm2277, nan, %v2287
        %v2289 = vmul.f32 %v349, %v583
        %v2290 = vmul.f32 %v351, %v738
        %v2291 = vmul.f32 %v353, %v893
        %v2292 = vmul.f32 %v355, %v1048
        %v2293 = vmul.f32 %v357, %v1203
        %v2294 = vmul.f32 %v359, %v1358
        %v2295 = vmul.f32 %v361, %v1513
        %v2296 = vmul.f32 %v363, %v1668
        %v2297 = vmul.f32 %v365, %v1823
        %v2298 = vmul.f32 %v367, %v1978
        %v2299 = vmul.f32 %v369, %v2133
        %v2300 = vmul.f32 %v371, %v2288
        %v2301 = vand.u32 2147483647, %v387
        %vm2302 = vcmp.le.f32.partialorder %v2301, 0.7853982
        %vm2303 = vcmp.lt.s32.totalorder %v387, 0
        %v2304 = vand.u32 %v387, 2139095040
        %v2305 = vshrl.u32 %v2304, 23
        %v2306 = vsub.s32 %v2305, 127
        %v2307 = vand.u32 2147483647, %v387
        %v2308 = vand.u32 %v2307, 8388607
        %v2309 = vor.u32 %v2308, 8388608
        %v2310 = vsub.s32 0, %v2309
        %v2311 = vadd.s32 %v2306, 1
        %vm2312 = vcmp.gt.s32.totalorder %v2311, 0
        %v2313 = vsel %vm2312, %v2311, 0
        %v2314 = vshrl.u32 %v2313, 5
        %v2315 = vand.u32 %v2313, 31
        %v2316 = vsub.s32 32, %v2315
        %v2317 = vshrl.u32 683565275, %v2316
        %v2318 = vshll.u32 683565275, %v2315
        %v2319 = vshrl.u32 2475754826, %v2316
        %v2320 = vor.u32 %v2318, %v2319
        %v2321 = vshll.u32 2475754826, %v2315
        %v2322 = vshrl.u32 2131351028, %v2316
        %v2323 = vor.u32 %v2321, %v2322
        %v2324 = vshll.u32 2131351028, %v2315
        %v2325 = vshrl.u32 2102212464, %v2316
        %v2326 = vor.u32 %v2324, %v2325
        %v2327 = vshll.u32 2102212464, %v2315
        %v2328 = vshrl.u32 920167782, %v2316
        %v2329 = vor.u32 %v2327, %v2328
        %v2330 = vshll.u32 920167782, %v2315
        %v2331 = vshrl.u32 1326507024, %v2316
        %v2332 = vor.u32 %v2330, %v2331
        %vm2333 = vcmp.lt.s32.totalorder %v2314, 1
        %vm2334 = vcmp.lt.s32.totalorder %v2314, 2
        %vm2335 = vcmp.lt.s32.totalorder %v2314, 3
        %vm2336 = vcmp.lt.s32.totalorder %v2314, 4
        %v2337 = vsel %vm2333, %v2317, %v2320
        %v2338 = vsel %vm2336, %v2326, 2102212464
        %v2339 = vsel %vm2335, %v2323, %v2338
        %v2340 = vsel %vm2334, %v2337, %v2339
        %v2341 = vsel %vm2333, %v2320, %v2323
        %v2342 = vsel %vm2336, %v2329, 920167782
        %v2343 = vsel %vm2335, %v2326, %v2342
        %v2344 = vsel %vm2334, %v2341, %v2343
        %v2345 = vsel %vm2333, %v2323, %v2326
        %v2346 = vsel %vm2336, %v2332, 1326507024
        %v2347 = vsel %vm2335, %v2329, %v2346
        %v2348 = vsel %vm2334, %v2345, %v2347
        %v2349 = vshll.u32 %v2309, 8
        %v2350 = vand.u32 %v2349, 65535
        %v2351 = vshrl.u32 %v2349, 16
        %v2352 = vand.u32 %v2348, 65535
        %v2353 = vshrl.u32 %v2348, 16
        %v2354 = vmul.u32 %v2350, %v2352
        %v2355 = vmul.u32 %v2350, %v2353
        %v2356 = vmul.u32 %v2351, %v2352
        %v2357 = vmul.u32 %v2351, %v2353
        %v2358 = vshll.u32 %v2355, 16
        %v2359 = vshrl.u32 %v2355, 16
        %v2360 = vshll.u32 %v2356, 16
        %v2361 = vshrl.u32 %v2356, 16
        %vm2362 = vc.u32 %v2354, %v2358
        %v2363 = vsel %vm2362, 1, 0
        %v2364 = vadd.s32 %v2354, %v2358
        %v2365 = vadd.s32 %v2357, %v2363
        %vm2366 = vc.u32 %v2364, %v2360
        %v2367 = vsel %vm2366, 1, 0
        %v2368 = vadd.s32 %v2364, %v2360
        %v2369 = vadd.s32 %v2365, %v2367
        %v2370 = vadd.s32 %v2369, %v2359
        %v2371 = vadd.s32 %v2370, %v2361
        %v2372 = vand.u32 %v2349, 65535
        %v2373 = vshrl.u32 %v2349, 16
        %v2374 = vand.u32 %v2344, 65535
        %v2375 = vshrl.u32 %v2344, 16
        %v2376 = vmul.u32 %v2372, %v2374
        %v2377 = vmul.u32 %v2372, %v2375
        %v2378 = vmul.u32 %v2373, %v2374
        %v2379 = vmul.u32 %v2373, %v2375
        %v2380 = vshll.u32 %v2377, 16
        %v2381 = vshrl.u32 %v2377, 16
        %v2382 = vshll.u32 %v2378, 16
        %v2383 = vshrl.u32 %v2378, 16
        %vm2384 = vc.u32 %v2376, %v2380
        %v2385 = vsel %vm2384, 1, 0
        %v2386 = vadd.s32 %v2376, %v2380
        %v2387 = vadd.s32 %v2379, %v2385
        %vm2388 = vc.u32 %v2386, %v2382
        %v2389 = vsel %vm2388, 1, 0
        %v2390 = vadd.s32 %v2386, %v2382
        %v2391 = vadd.s32 %v2387, %v2389
        %v2392 = vadd.s32 %v2391, %v2381
        %v2393 = vadd.s32 %v2392, %v2383
        %v2394 = vmul.u32 %v2349, %v2340
        %v2395 = vadd.s32 %v2371, %v2390
        %vm2396 = vc.u32 %v2371, %v2390
        %v2397 = vadd.s32 %v2393, 1
        %v2398 = vsel %vm2396, %v2397, %v2393
        %v2399 = vadd.s32 %v2394, %v2398
        %v2400 = vadd.s32 %v2399, 536870912
        %v2401 = vshrl.u32 %v2400, 30
        %v2402 = vshll.u32 %v2401, 30
        %v2403 = vsub.s32 %v2399, %v2402
        %vm2404 = vcmp.lt.s32.totalorder %v2403, 0
        %v2405 = vsub.s32 0, %v2403
        %v2406 = vsel %vm2404, %v2405, %v2403
        %v2407 = vclz %v2406
        %v2408 = vsub.s32 %v2407, 2
        %vm2409 = vcmp.gt.s32.totalorder 0, %v2408
        %v2410 = vsel %vm2409, 0, %v2408
        %v2411 = vsub.s32 32, %v2410
        %v2412 = vshll.u32 %v2403, %v2410
        %v2413 = vshrl.u32 %v2395, %v2411
        %v2414 = vor.u32 %v2412, %v2413
        %v2415 = vsub.s32 4294967266, %v2410
        %v2416 = vadd.s32 %v2415, 127
        %v2417 = vshll.u32 %v2416, 23
        %v2418 = vor.u32 4788187, %v2417
        %v2419 = vand.u32 2147483647, %v2418
        %v2421 = vcvt.s32.f32 %v2414
        %v2422 = vmul.f32 %v2421, %v2419
        %v2423 = vxor.u32 %v2422, 2147483648
        %v2424 = vsel %vm2303, %v2423, %v2422
        %v2425 = vsub.s32 4, %v2401
        %v2426 = vsel %vm2303, %v2425, %v2401
        %v2427 = vsel %vm2302, %v387, %v2424
        %v2428 = vsel %vm2302, 0, %v2426
        %v2429 = vmul.f32 %v2427, %v2427
        %v2430 = vmul.f32 %v2429, -0.001358992
        %v2431 = vadd.f32 %v2430, 0.041655596
        %v2432 = vmul.f32 %v2429, %v2431
        %v2433 = vadd.f32 %v2432, -0.4999988
        %v2434 = vmul.f32 %v2429, %v2433
        %v2435 = vadd.f32 1.0, %v2434
        %v2436 = vmul.f32 %v2427, %v2427
        %v2437 = vmul.f32 %v2436, -0.00019511016
        %v2438 = vadd.f32 %v2437, 0.008332121
        %v2439 = vmul.f32 %v2436, %v2438
        %v2440 = vadd.f32 %v2439, -0.16666654
        %v2441 = vmul.f32 %v2436, %v2440
        %v2442 = vadd.f32 %v2441, 1.0
        %v2443 = vmul.f32 %v2442, %v2427
        %vm2444 = vweird.f32 %v387
        %v2445 = vadd.s32 %v2428, 3
        %v2446 = vand.u32 %v2445, 3
        %vm2447 = vcmp.lt.s32.totalorder %v2446, 2
        %vm2448 = vcmp.eq.s32.totalorder %v2446, 0
        %v2449 = vxor.u32 %v2443, 2147483648
        %v2450 = vsel %vm2448, %v2435, %v2449
        %vm2451 = vcmp.eq.s32.totalorder %v2446, 2
        %v2452 = vxor.u32 %v2435, 2147483648
        %v2453 = vsel %vm2451, %v2452, %v2443
        %v2454 = vsel %vm2447, %v2450, %v2453
        %v2455 = vsel %vm2444, nan, %v2454
        %v2456 = vand.u32 2147483647, %v388
        %vm2457 = vcmp.le.f32.partialorder %v2456, 0.7853982
        %vm2458 = vcmp.lt.s32.totalorder %v388, 0
        %v2459 = vand.u32 %v388, 2139095040
        %v2460 = vshrl.u32 %v2459, 23
        %v2461 = vsub.s32 %v2460, 127
        %v2462 = vand.u32 2147483647, %v388
        %v2463 = vand.u32 %v2462, 8388607
        %v2464 = vor.u32 %v2463, 8388608
        %v2465 = vsub.s32 0, %v2464
        %v2466 = vadd.s32 %v2461, 1
        %vm2467 = vcmp.gt.s32.totalorder %v2466, 0
        %v2468 = vsel %vm2467, %v2466, 0
        %v2469 = vshrl.u32 %v2468, 5
        %v2470 = vand.u32 %v2468, 31
        %v2471 = vsub.s32 32, %v2470
        %v2472 = vshrl.u32 683565275, %v2471
        %v2473 = vshll.u32 683565275, %v2470
        %v2474 = vshrl.u32 2475754826, %v2471
        %v2475 = vor.u32 %v2473, %v2474
        %v2476 = vshll.u32 2475754826, %v2470
        %v2477 = vshrl.u32 2131351028, %v2471
        %v2478 = vor.u32 %v2476, %v2477
        %v2479 = vshll.u32 2131351028, %v2470
        %v2480 = vshrl.u32 2102212464, %v2471
        %v2481 = vor.u32 %v2479, %v2480
        %v2482 = vshll.u32 2102212464, %v2470
        %v2483 = vshrl.u32 920167782, %v2471
        %v2484 = vor.u32 %v2482, %v2483
        %v2485 = vshll.u32 920167782, %v2470
        %v2486 = vshrl.u32 1326507024, %v2471
        %v2487 = vor.u32 %v2485, %v2486
        %vm2488 = vcmp.lt.s32.totalorder %v2469, 1
        %vm2489 = vcmp.lt.s32.totalorder %v2469, 2
        %vm2490 = vcmp.lt.s32.totalorder %v2469, 3
        %vm2491 = vcmp.lt.s32.totalorder %v2469, 4
        %v2492 = vsel %vm2488, %v2472, %v2475
        %v2493 = vsel %vm2491, %v2481, 2102212464
        %v2494 = vsel %vm2490, %v2478, %v2493
        %v2495 = vsel %vm2489, %v2492, %v2494
        %v2496 = vsel %vm2488, %v2475, %v2478
        %v2497 = vsel %vm2491, %v2484, 920167782
        %v2498 = vsel %vm2490, %v2481, %v2497
        %v2499 = vsel %vm2489, %v2496, %v2498
        %v2500 = vsel %vm2488, %v2478, %v2481
        %v2501 = vsel %vm2491, %v2487, 1326507024
        %v2502 = vsel %vm2490, %v2484, %v2501
        %v2503 = vsel %vm2489, %v2500, %v2502
        %v2504 = vshll.u32 %v2464, 8
        %v2505 = vand.u32 %v2504, 65535
        %v2506 = vshrl.u32 %v2504, 16
        %v2507 = vand.u32 %v2503, 65535
        %v2508 = vshrl.u32 %v2503, 16
        %v2509 = vmul.u32 %v2505, %v2507
        %v2510 = vmul.u32 %v2505, %v2508
        %v2511 = vmul.u32 %v2506, %v2507
        %v2512 = vmul.u32 %v2506, %v2508
        %v2513 = vshll.u32 %v2510, 16
        %v2514 = vshrl.u32 %v2510, 16
        %v2515 = vshll.u32 %v2511, 16
        %v2516 = vshrl.u32 %v2511, 16
        %vm2517 = vc.u32 %v2509, %v2513
        %v2518 = vsel %vm2517, 1, 0
        %v2519 = vadd.s32 %v2509, %v2513
        %v2520 = vadd.s32 %v2512, %v2518
        %vm2521 = vc.u32 %v2519, %v2515
        %v2522 = vsel %vm2521, 1, 0
        %v2523 = vadd.s32 %v2519, %v2515
        %v2524 = vadd.s32 %v2520, %v2522
        %v2525 = vadd.s32 %v2524, %v2514
        %v2526 = vadd.s32 %v2525, %v2516
        %v2527 = vand.u32 %v2504, 65535
        %v2528 = vshrl.u32 %v2504, 16
        %v2529 = vand.u32 %v2499, 65535
        %v2530 = vshrl.u32 %v2499, 16
        %v2531 = vmul.u32 %v2527, %v2529
        %v2532 = vmul.u32 %v2527, %v2530
        %v2533 = vmul.u32 %v2528, %v2529
        %v2534 = vmul.u32 %v2528, %v2530
        %v2535 = vshll.u32 %v2532, 16
        %v2536 = vshrl.u32 %v2532, 16
        %v2537 = vshll.u32 %v2533, 16
        %v2538 = vshrl.u32 %v2533, 16
        %vm2539 = vc.u32 %v2531, %v2535
        %v2540 = vsel %vm2539, 1, 0
        %v2541 = vadd.s32 %v2531, %v2535
        %v2542 = vadd.s32 %v2534, %v2540
        %vm2543 = vc.u32 %v2541, %v2537
        %v2544 = vsel %vm2543, 1, 0
        %v2545 = vadd.s32 %v2541, %v2537
        %v2546 = vadd.s32 %v2542, %v2544
        %v2547 = vadd.s32 %v2546, %v2536
        %v2548 = vadd.s32 %v2547, %v2538
        %v2549 = vmul.u32 %v2504, %v2495
        %v2550 = vadd.s32 %v2526, %v2545
        %vm2551 = vc.u32 %v2526, %v2545
        %v2552 = vadd.s32 %v2548, 1
        %v2553 = vsel %vm2551, %v2552, %v2548
        %v2554 = vadd.s32 %v2549, %v2553
        %v2555 = vadd.s32 %v2554, 536870912
        %v2556 = vshrl.u32 %v2555, 30
        %v2557 = vshll.u32 %v2556, 30
        %v2558 = vsub.s32 %v2554, %v2557
        %vm2559 = vcmp.lt.s32.totalorder %v2558, 0
        %v2560 = vsub.s32 0, %v2558
        %v2561 = vsel %vm2559, %v2560, %v2558
        %v2562 = vclz %v2561
        %v2563 = vsub.s32 %v2562, 2
        %vm2564 = vcmp.gt.s32.totalorder 0, %v2563
        %v2565 = vsel %vm2564, 0, %v2563
        %v2566 = vsub.s32 32, %v2565
        %v2567 = vshll.u32 %v2558, %v2565
        %v2568 = vshrl.u32 %v2550, %v2566
        %v2569 = vor.u32 %v2567, %v2568
        %v2570 = vsub.s32 4294967266, %v2565
        %v2571 = vadd.s32 %v2570, 127
        %v2572 = vshll.u32 %v2571, 23
        %v2573 = vor.u32 4788187, %v2572
        %v2574 = vand.u32 2147483647, %v2573
        %v2576 = vcvt.s32.f32 %v2569
        %v2577 = vmul.f32 %v2576, %v2574
        %v2578 = vxor.u32 %v2577, 2147483648
        %v2579 = vsel %vm2458, %v2578, %v2577
        %v2580 = vsub.s32 4, %v2556
        %v2581 = vsel %vm2458, %v2580, %v2556
        %v2582 = vsel %vm2457, %v388, %v2579
        %v2583 = vsel %vm2457, 0, %v2581
        %v2584 = vmul.f32 %v2582, %v2582
        %v2585 = vmul.f32 %v2584, -0.001358992
        %v2586 = vadd.f32 %v2585, 0.041655596
        %v2587 = vmul.f32 %v2584, %v2586
        %v2588 = vadd.f32 %v2587, -0.4999988
        %v2589 = vmul.f32 %v2584, %v2588
        %v2590 = vadd.f32 1.0, %v2589
        %v2591 = vmul.f32 %v2582, %v2582
        %v2592 = vmul.f32 %v2591, -0.00019511016
        %v2593 = vadd.f32 %v2592, 0.008332121
        %v2594 = vmul.f32 %v2591, %v2593
        %v2595 = vadd.f32 %v2594, -0.16666654
        %v2596 = vmul.f32 %v2591, %v2595
        %v2597 = vadd.f32 %v2596, 1.0
        %v2598 = vmul.f32 %v2597, %v2582
        %vm2599 = vweird.f32 %v388
        %v2600 = vadd.s32 %v2583, 3
        %v2601 = vand.u32 %v2600, 3
        %vm2602 = vcmp.lt.s32.totalorder %v2601, 2
        %vm2603 = vcmp.eq.s32.totalorder %v2601, 0
        %v2604 = vxor.u32 %v2598, 2147483648
        %v2605 = vsel %vm2603, %v2590, %v2604
        %vm2606 = vcmp.eq.s32.totalorder %v2601, 2
        %v2607 = vxor.u32 %v2590, 2147483648
        %v2608 = vsel %vm2606, %v2607, %v2598
        %v2609 = vsel %vm2602, %v2605, %v2608
        %v2610 = vsel %vm2599, nan, %v2609
        %v2611 = vand.u32 2147483647, %v389
        %vm2612 = vcmp.le.f32.partialorder %v2611, 0.7853982
        %vm2613 = vcmp.lt.s32.totalorder %v389, 0
        %v2614 = vand.u32 %v389, 2139095040
        %v2615 = vshrl.u32 %v2614, 23
        %v2616 = vsub.s32 %v2615, 127
        %v2617 = vand.u32 2147483647, %v389
        %v2618 = vand.u32 %v2617, 8388607
        %v2619 = vor.u32 %v2618, 8388608
        %v2620 = vsub.s32 0, %v2619
        %v2621 = vadd.s32 %v2616, 1
        %vm2622 = vcmp.gt.s32.totalorder %v2621, 0
        %v2623 = vsel %vm2622, %v2621, 0
        %v2624 = vshrl.u32 %v2623, 5
        %v2625 = vand.u32 %v2623, 31
        %v2626 = vsub.s32 32, %v2625
        %v2627 = vshrl.u32 683565275, %v2626
        %v2628 = vshll.u32 683565275, %v2625
        %v2629 = vshrl.u32 2475754826, %v2626
        %v2630 = vor.u32 %v2628, %v2629
        %v2631 = vshll.u32 2475754826, %v2625
        %v2632 = vshrl.u32 2131351028, %v2626
        %v2633 = vor.u32 %v2631, %v2632
        %v2634 = vshll.u32 2131351028, %v2625
        %v2635 = vshrl.u32 2102212464, %v2626
        %v2636 = vor.u32 %v2634, %v2635
        %v2637 = vshll.u32 2102212464, %v2625
        %v2638 = vshrl.u32 920167782, %v2626
        %v2639 = vor.u32 %v2637, %v2638
        %v2640 = vshll.u32 920167782, %v2625
        %v2641 = vshrl.u32 1326507024, %v2626
        %v2642 = vor.u32 %v2640, %v2641
        %vm2643 = vcmp.lt.s32.totalorder %v2624, 1
        %vm2644 = vcmp.lt.s32.totalorder %v2624, 2
        %vm2645 = vcmp.lt.s32.totalorder %v2624, 3
        %vm2646 = vcmp.lt.s32.totalorder %v2624, 4
        %v2647 = vsel %vm2643, %v2627, %v2630
        %v2648 = vsel %vm2646, %v2636, 2102212464
        %v2649 = vsel %vm2645, %v2633, %v2648
        %v2650 = vsel %vm2644, %v2647, %v2649
        %v2651 = vsel %vm2643, %v2630, %v2633
        %v2652 = vsel %vm2646, %v2639, 920167782
        %v2653 = vsel %vm2645, %v2636, %v2652
        %v2654 = vsel %vm2644, %v2651, %v2653
        %v2655 = vsel %vm2643, %v2633, %v2636
        %v2656 = vsel %vm2646, %v2642, 1326507024
        %v2657 = vsel %vm2645, %v2639, %v2656
        %v2658 = vsel %vm2644, %v2655, %v2657
        %v2659 = vshll.u32 %v2619, 8
        %v2660 = vand.u32 %v2659, 65535
        %v2661 = vshrl.u32 %v2659, 16
        %v2662 = vand.u32 %v2658, 65535
        %v2663 = vshrl.u32 %v2658, 16
        %v2664 = vmul.u32 %v2660, %v2662
        %v2665 = vmul.u32 %v2660, %v2663
        %v2666 = vmul.u32 %v2661, %v2662
        %v2667 = vmul.u32 %v2661, %v2663
        %v2668 = vshll.u32 %v2665, 16
        %v2669 = vshrl.u32 %v2665, 16
        %v2670 = vshll.u32 %v2666, 16
        %v2671 = vshrl.u32 %v2666, 16
        %vm2672 = vc.u32 %v2664, %v2668
        %v2673 = vsel %vm2672, 1, 0
        %v2674 = vadd.s32 %v2664, %v2668
        %v2675 = vadd.s32 %v2667, %v2673
        %vm2676 = vc.u32 %v2674, %v2670
        %v2677 = vsel %vm2676, 1, 0
        %v2678 = vadd.s32 %v2674, %v2670
        %v2679 = vadd.s32 %v2675, %v2677
        %v2680 = vadd.s32 %v2679, %v2669
        %v2681 = vadd.s32 %v2680, %v2671
        %v2682 = vand.u32 %v2659, 65535
        %v2683 = vshrl.u32 %v2659, 16
        %v2684 = vand.u32 %v2654, 65535
        %v2685 = vshrl.u32 %v2654, 16
        %v2686 = vmul.u32 %v2682, %v2684
        %v2687 = vmul.u32 %v2682, %v2685
        %v2688 = vmul.u32 %v2683, %v2684
        %v2689 = vmul.u32 %v2683, %v2685
        %v2690 = vshll.u32 %v2687, 16
        %v2691 = vshrl.u32 %v2687, 16
        %v2692 = vshll.u32 %v2688, 16
        %v2693 = vshrl.u32 %v2688, 16
        %vm2694 = vc.u32 %v2686, %v2690
        %v2695 = vsel %vm2694, 1, 0
        %v2696 = vadd.s32 %v2686, %v2690
        %v2697 = vadd.s32 %v2689, %v2695
        %vm2698 = vc.u32 %v2696, %v2692
        %v2699 = vsel %vm2698, 1, 0
        %v2700 = vadd.s32 %v2696, %v2692
        %v2701 = vadd.s32 %v2697, %v2699
        %v2702 = vadd.s32 %v2701, %v2691
        %v2703 = vadd.s32 %v2702, %v2693
        %v2704 = vmul.u32 %v2659, %v2650
        %v2705 = vadd.s32 %v2681, %v2700
        %vm2706 = vc.u32 %v2681, %v2700
        %v2707 = vadd.s32 %v2703, 1
        %v2708 = vsel %vm2706, %v2707, %v2703
        %v2709 = vadd.s32 %v2704, %v2708
        %v2710 = vadd.s32 %v2709, 536870912
        %v2711 = vshrl.u32 %v2710, 30
        %v2712 = vshll.u32 %v2711, 30
        %v2713 = vsub.s32 %v2709, %v2712
        %vm2714 = vcmp.lt.s32.totalorder %v2713, 0
        %v2715 = vsub.s32 0, %v2713
        %v2716 = vsel %vm2714, %v2715, %v2713
        %v2717 = vclz %v2716
        %v2718 = vsub.s32 %v2717, 2
        %vm2719 = vcmp.gt.s32.totalorder 0, %v2718
        %v2720 = vsel %vm2719, 0, %v2718
        %v2721 = vsub.s32 32, %v2720
        %v2722 = vshll.u32 %v2713, %v2720
        %v2723 = vshrl.u32 %v2705, %v2721
        %v2724 = vor.u32 %v2722, %v2723
        %v2725 = vsub.s32 4294967266, %v2720
        %v2726 = vadd.s32 %v2725, 127
        %v2727 = vshll.u32 %v2726, 23
        %v2728 = vor.u32 4788187, %v2727
        %v2729 = vand.u32 2147483647, %v2728
        %v2731 = vcvt.s32.f32 %v2724
        %v2732 = vmul.f32 %v2731, %v2729
        %v2733 = vxor.u32 %v2732, 2147483648
        %v2734 = vsel %vm2613, %v2733, %v2732
        %v2735 = vsub.s32 4, %v2711
        %v2736 = vsel %vm2613, %v2735, %v2711
        %v2737 = vsel %vm2612, %v389, %v2734
        %v2738 = vsel %vm2612, 0, %v2736
        %v2739 = vmul.f32 %v2737, %v2737
        %v2740 = vmul.f32 %v2739, -0.001358992
        %v2741 = vadd.f32 %v2740, 0.041655596
        %v2742 = vmul.f32 %v2739, %v2741
        %v2743 = vadd.f32 %v2742, -0.4999988
        %v2744 = vmul.f32 %v2739, %v2743
        %v2745 = vadd.f32 1.0, %v2744
        %v2746 = vmul.f32 %v2737, %v2737
        %v2747 = vmul.f32 %v2746, -0.00019511016
        %v2748 = vadd.f32 %v2747, 0.008332121
        %v2749 = vmul.f32 %v2746, %v2748
        %v2750 = vadd.f32 %v2749, -0.16666654
        %v2751 = vmul.f32 %v2746, %v2750
        %v2752 = vadd.f32 %v2751, 1.0
        %v2753 = vmul.f32 %v2752, %v2737
        %vm2754 = vweird.f32 %v389
        %v2755 = vadd.s32 %v2738, 3
        %v2756 = vand.u32 %v2755, 3
        %vm2757 = vcmp.lt.s32.totalorder %v2756, 2
        %vm2758 = vcmp.eq.s32.totalorder %v2756, 0
        %v2759 = vxor.u32 %v2753, 2147483648
        %v2760 = vsel %vm2758, %v2745, %v2759
        %vm2761 = vcmp.eq.s32.totalorder %v2756, 2
        %v2762 = vxor.u32 %v2745, 2147483648
        %v2763 = vsel %vm2761, %v2762, %v2753
        %v2764 = vsel %vm2757, %v2760, %v2763
        %v2765 = vsel %vm2754, nan, %v2764
        %v2766 = vand.u32 2147483647, %v390
        %vm2767 = vcmp.le.f32.partialorder %v2766, 0.7853982
        %vm2768 = vcmp.lt.s32.totalorder %v390, 0
        %v2769 = vand.u32 %v390, 2139095040
        %v2770 = vshrl.u32 %v2769, 23
        %v2771 = vsub.s32 %v2770, 127
        %v2772 = vand.u32 2147483647, %v390
        %v2773 = vand.u32 %v2772, 8388607
        %v2774 = vor.u32 %v2773, 8388608
        %v2775 = vsub.s32 0, %v2774
        %v2776 = vadd.s32 %v2771, 1
        %vm2777 = vcmp.gt.s32.totalorder %v2776, 0
        %v2778 = vsel %vm2777, %v2776, 0
        %v2779 = vshrl.u32 %v2778, 5
        %v2780 = vand.u32 %v2778, 31
        %v2781 = vsub.s32 32, %v2780
        %v2782 = vshrl.u32 683565275, %v2781
        %v2783 = vshll.u32 683565275, %v2780
        %v2784 = vshrl.u32 2475754826, %v2781
        %v2785 = vor.u32 %v2783, %v2784
        %v2786 = vshll.u32 2475754826, %v2780
        %v2787 = vshrl.u32 2131351028, %v2781
        %v2788 = vor.u32 %v2786, %v2787
        %v2789 = vshll.u32 2131351028, %v2780
        %v2790 = vshrl.u32 2102212464, %v2781
        %v2791 = vor.u32 %v2789, %v2790
        %v2792 = vshll.u32 2102212464, %v2780
        %v2793 = vshrl.u32 920167782, %v2781
        %v2794 = vor.u32 %v2792, %v2793
        %v2795 = vshll.u32 920167782, %v2780
        %v2796 = vshrl.u32 1326507024, %v2781
        %v2797 = vor.u32 %v2795, %v2796
        %vm2798 = vcmp.lt.s32.totalorder %v2779, 1
        %vm2799 = vcmp.lt.s32.totalorder %v2779, 2
        %vm2800 = vcmp.lt.s32.totalorder %v2779, 3
        %vm2801 = vcmp.lt.s32.totalorder %v2779, 4
        %v2802 = vsel %vm2798, %v2782, %v2785
        %v2803 = vsel %vm2801, %v2791, 2102212464
        %v2804 = vsel %vm2800, %v2788, %v2803
        %v2805 = vsel %vm2799, %v2802, %v2804
        %v2806 = vsel %vm2798, %v2785, %v2788
        %v2807 = vsel %vm2801, %v2794, 920167782
        %v2808 = vsel %vm2800, %v2791, %v2807
        %v2809 = vsel %vm2799, %v2806, %v2808
        %v2810 = vsel %vm2798, %v2788, %v2791
        %v2811 = vsel %vm2801, %v2797, 1326507024
        %v2812 = vsel %vm2800, %v2794, %v2811
        %v2813 = vsel %vm2799, %v2810, %v2812
        %v2814 = vshll.u32 %v2774, 8
        %v2815 = vand.u32 %v2814, 65535
        %v2816 = vshrl.u32 %v2814, 16
        %v2817 = vand.u32 %v2813, 65535
        %v2818 = vshrl.u32 %v2813, 16
        %v2819 = vmul.u32 %v2815, %v2817
        %v2820 = vmul.u32 %v2815, %v2818
        %v2821 = vmul.u32 %v2816, %v2817
        %v2822 = vmul.u32 %v2816, %v2818
        %v2823 = vshll.u32 %v2820, 16
        %v2824 = vshrl.u32 %v2820, 16
        %v2825 = vshll.u32 %v2821, 16
        %v2826 = vshrl.u32 %v2821, 16
        %vm2827 = vc.u32 %v2819, %v2823
        %v2828 = vsel %vm2827, 1, 0
        %v2829 = vadd.s32 %v2819, %v2823
        %v2830 = vadd.s32 %v2822, %v2828
        %vm2831 = vc.u32 %v2829, %v2825
        %v2832 = vsel %vm2831, 1, 0
        %v2833 = vadd.s32 %v2829, %v2825
        %v2834 = vadd.s32 %v2830, %v2832
        %v2835 = vadd.s32 %v2834, %v2824
        %v2836 = vadd.s32 %v2835, %v2826
        %v2837 = vand.u32 %v2814, 65535
        %v2838 = vshrl.u32 %v2814, 16
        %v2839 = vand.u32 %v2809, 65535
        %v2840 = vshrl.u32 %v2809, 16
        %v2841 = vmul.u32 %v2837, %v2839
        %v2842 = vmul.u32 %v2837, %v2840
        %v2843 = vmul.u32 %v2838, %v2839
        %v2844 = vmul.u32 %v2838, %v2840
        %v2845 = vshll.u32 %v2842, 16
        %v2846 = vshrl.u32 %v2842, 16
        %v2847 = vshll.u32 %v2843, 16
        %v2848 = vshrl.u32 %v2843, 16
        %vm2849 = vc.u32 %v2841, %v2845
        %v2850 = vsel %vm2849, 1, 0
        %v2851 = vadd.s32 %v2841, %v2845
        %v2852 = vadd.s32 %v2844, %v2850
        %vm2853 = vc.u32 %v2851, %v2847
        %v2854 = vsel %vm2853, 1, 0
        %v2855 = vadd.s32 %v2851, %v2847
        %v2856 = vadd.s32 %v2852, %v2854
        %v2857 = vadd.s32 %v2856, %v2846
        %v2858 = vadd.s32 %v2857, %v2848
        %v2859 = vmul.u32 %v2814, %v2805
        %v2860 = vadd.s32 %v2836, %v2855
        %vm2861 = vc.u32 %v2836, %v2855
        %v2862 = vadd.s32 %v2858, 1
        %v2863 = vsel %vm2861, %v2862, %v2858
        %v2864 = vadd.s32 %v2859, %v2863
        %v2865 = vadd.s32 %v2864, 536870912
        %v2866 = vshrl.u32 %v2865, 30
        %v2867 = vshll.u32 %v2866, 30
        %v2868 = vsub.s32 %v2864, %v2867
        %vm2869 = vcmp.lt.s32.totalorder %v2868, 0
        %v2870 = vsub.s32 0, %v2868
        %v2871 = vsel %vm2869, %v2870, %v2868
        %v2872 = vclz %v2871
        %v2873 = vsub.s32 %v2872, 2
        %vm2874 = vcmp.gt.s32.totalorder 0, %v2873
        %v2875 = vsel %vm2874, 0, %v2873
        %v2876 = vsub.s32 32, %v2875
        %v2877 = vshll.u32 %v2868, %v2875
        %v2878 = vshrl.u32 %v2860, %v2876
        %v2879 = vor.u32 %v2877, %v2878
        %v2880 = vsub.s32 4294967266, %v2875
        %v2881 = vadd.s32 %v2880, 127
        %v2882 = vshll.u32 %v2881, 23
        %v2883 = vor.u32 4788187, %v2882
        %v2884 = vand.u32 2147483647, %v2883
        %v2886 = vcvt.s32.f32 %v2879
        %v2887 = vmul.f32 %v2886, %v2884
        %v2888 = vxor.u32 %v2887, 2147483648
        %v2889 = vsel %vm2768, %v2888, %v2887
        %v2890 = vsub.s32 4, %v2866
        %v2891 = vsel %vm2768, %v2890, %v2866
        %v2892 = vsel %vm2767, %v390, %v2889
        %v2893 = vsel %vm2767, 0, %v2891
        %v2894 = vmul.f32 %v2892, %v2892
        %v2895 = vmul.f32 %v2894, -0.001358992
        %v2896 = vadd.f32 %v2895, 0.041655596
        %v2897 = vmul.f32 %v2894, %v2896
        %v2898 = vadd.f32 %v2897, -0.4999988
        %v2899 = vmul.f32 %v2894, %v2898
        %v2900 = vadd.f32 1.0, %v2899
        %v2901 = vmul.f32 %v2892, %v2892
        %v2902 = vmul.f32 %v2901, -0.00019511016
        %v2903 = vadd.f32 %v2902, 0.008332121
        %v2904 = vmul.f32 %v2901, %v2903
        %v2905 = vadd.f32 %v2904, -0.16666654
        %v2906 = vmul.f32 %v2901, %v2905
        %v2907 = vadd.f32 %v2906, 1.0
        %v2908 = vmul.f32 %v2907, %v2892
        %vm2909 = vweird.f32 %v390
        %v2910 = vadd.s32 %v2893, 3
        %v2911 = vand.u32 %v2910, 3
        %vm2912 = vcmp.lt.s32.totalorder %v2911, 2
        %vm2913 = vcmp.eq.s32.totalorder %v2911, 0
        %v2914 = vxor.u32 %v2908, 2147483648
        %v2915 = vsel %vm2913, %v2900, %v2914
        %vm2916 = vcmp.eq.s32.totalorder %v2911, 2
        %v2917 = vxor.u32 %v2900, 2147483648
        %v2918 = vsel %vm2916, %v2917, %v2908
        %v2919 = vsel %vm2912, %v2915, %v2918
        %v2920 = vsel %vm2909, nan, %v2919
        %v2921 = vand.u32 2147483647, %v406
        %vm2922 = vcmp.le.f32.partialorder %v2921, 0.7853982
        %vm2923 = vcmp.lt.s32.totalorder %v406, 0
        %v2924 = vand.u32 %v406, 2139095040
        %v2925 = vshrl.u32 %v2924, 23
        %v2926 = vsub.s32 %v2925, 127
        %v2927 = vand.u32 2147483647, %v406
        %v2928 = vand.u32 %v2927, 8388607
        %v2929 = vor.u32 %v2928, 8388608
        %v2930 = vsub.s32 0, %v2929
        %v2931 = vadd.s32 %v2926, 1
        %vm2932 = vcmp.gt.s32.totalorder %v2931, 0
        %v2933 = vsel %vm2932, %v2931, 0
        %v2934 = vshrl.u32 %v2933, 5
        %v2935 = vand.u32 %v2933, 31
        %v2936 = vsub.s32 32, %v2935
        %v2937 = vshrl.u32 683565275, %v2936
        %v2938 = vshll.u32 683565275, %v2935
        %v2939 = vshrl.u32 2475754826, %v2936
        %v2940 = vor.u32 %v2938, %v2939
        %v2941 = vshll.u32 2475754826, %v2935
        %v2942 = vshrl.u32 2131351028, %v2936
        %v2943 = vor.u32 %v2941, %v2942
        %v2944 = vshll.u32 2131351028, %v2935
        %v2945 = vshrl.u32 2102212464, %v2936
        %v2946 = vor.u32 %v2944, %v2945
        %v2947 = vshll.u32 2102212464, %v2935
        %v2948 = vshrl.u32 920167782, %v2936
        %v2949 = vor.u32 %v2947, %v2948
        %v2950 = vshll.u32 920167782, %v2935
        %v2951 = vshrl.u32 1326507024, %v2936
        %v2952 = vor.u32 %v2950, %v2951
        %vm2953 = vcmp.lt.s32.totalorder %v2934, 1
        %vm2954 = vcmp.lt.s32.totalorder %v2934, 2
        %vm2955 = vcmp.lt.s32.totalorder %v2934, 3
        %vm2956 = vcmp.lt.s32.totalorder %v2934, 4
        %v2957 = vsel %vm2953, %v2937, %v2940
        %v2958 = vsel %vm2956, %v2946, 2102212464
        %v2959 = vsel %vm2955, %v2943, %v2958
        %v2960 = vsel %vm2954, %v2957, %v2959
        %v2961 = vsel %vm2953, %v2940, %v2943
        %v2962 = vsel %vm2956, %v2949, 920167782
        %v2963 = vsel %vm2955, %v2946, %v2962
        %v2964 = vsel %vm2954, %v2961, %v2963
        %v2965 = vsel %vm2953, %v2943, %v2946
        %v2966 = vsel %vm2956, %v2952, 1326507024
        %v2967 = vsel %vm2955, %v2949, %v2966
        %v2968 = vsel %vm2954, %v2965, %v2967
        %v2969 = vshll.u32 %v2929, 8
        %v2970 = vand.u32 %v2969, 65535
        %v2971 = vshrl.u32 %v2969, 16
        %v2972 = vand.u32 %v2968, 65535
        %v2973 = vshrl.u32 %v2968, 16
        %v2974 = vmul.u32 %v2970, %v2972
        %v2975 = vmul.u32 %v2970, %v2973
        %v2976 = vmul.u32 %v2971, %v2972
        %v2977 = vmul.u32 %v2971, %v2973
        %v2978 = vshll.u32 %v2975, 16
        %v2979 = vshrl.u32 %v2975, 16
        %v2980 = vshll.u32 %v2976, 16
        %v2981 = vshrl.u32 %v2976, 16
        %vm2982 = vc.u32 %v2974, %v2978
        %v2983 = vsel %vm2982, 1, 0
        %v2984 = vadd.s32 %v2974, %v2978
        %v2985 = vadd.s32 %v2977, %v2983
        %vm2986 = vc.u32 %v2984, %v2980
        %v2987 = vsel %vm2986, 1, 0
        %v2988 = vadd.s32 %v2984, %v2980
        %v2989 = vadd.s32 %v2985, %v2987
        %v2990 = vadd.s32 %v2989, %v2979
        %v2991 = vadd.s32 %v2990, %v2981
        %v2992 = vand.u32 %v2969, 65535
        %v2993 = vshrl.u32 %v2969, 16
        %v2994 = vand.u32 %v2964, 65535
        %v2995 = vshrl.u32 %v2964, 16
        %v2996 = vmul.u32 %v2992, %v2994
        %v2997 = vmul.u32 %v2992, %v2995
        %v2998 = vmul.u32 %v2993, %v2994
        %v2999 = vmul.u32 %v2993, %v2995
        %v3000 = vshll.u32 %v2997, 16
        %v3001 = vshrl.u32 %v2997, 16
        %v3002 = vshll.u32 %v2998, 16
        %v3003 = vshrl.u32 %v2998, 16
        %vm3004 = vc.u32 %v2996, %v3000
        %v3005 = vsel %vm3004, 1, 0
        %v3006 = vadd.s32 %v2996, %v3000
        %v3007 = vadd.s32 %v2999, %v3005
        %vm3008 = vc.u32 %v3006, %v3002
        %v3009 = vsel %vm3008, 1, 0
        %v3010 = vadd.s32 %v3006, %v3002
        %v3011 = vadd.s32 %v3007, %v3009
        %v3012 = vadd.s32 %v3011, %v3001
        %v3013 = vadd.s32 %v3012, %v3003
        %v3014 = vmul.u32 %v2969, %v2960
        %v3015 = vadd.s32 %v2991, %v3010
        %vm3016 = vc.u32 %v2991, %v3010
        %v3017 = vadd.s32 %v3013, 1
        %v3018 = vsel %vm3016, %v3017, %v3013
        %v3019 = vadd.s32 %v3014, %v3018
        %v3020 = vadd.s32 %v3019, 536870912
        %v3021 = vshrl.u32 %v3020, 30
        %v3022 = vshll.u32 %v3021, 30
        %v3023 = vsub.s32 %v3019, %v3022
        %vm3024 = vcmp.lt.s32.totalorder %v3023, 0
        %v3025 = vsub.s32 0, %v3023
        %v3026 = vsel %vm3024, %v3025, %v3023
        %v3027 = vclz %v3026
        %v3028 = vsub.s32 %v3027, 2
        %vm3029 = vcmp.gt.s32.totalorder 0, %v3028
        %v3030 = vsel %vm3029, 0, %v3028
        %v3031 = vsub.s32 32, %v3030
        %v3032 = vshll.u32 %v3023, %v3030
        %v3033 = vshrl.u32 %v3015, %v3031
        %v3034 = vor.u32 %v3032, %v3033
        %v3035 = vsub.s32 4294967266, %v3030
        %v3036 = vadd.s32 %v3035, 127
        %v3037 = vshll.u32 %v3036, 23
        %v3038 = vor.u32 4788187, %v3037
        %v3039 = vand.u32 2147483647, %v3038
        %v3041 = vcvt.s32.f32 %v3034
        %v3042 = vmul.f32 %v3041, %v3039
        %v3043 = vxor.u32 %v3042, 2147483648
        %v3044 = vsel %vm2923, %v3043, %v3042
        %v3045 = vsub.s32 4, %v3021
        %v3046 = vsel %vm2923, %v3045, %v3021
        %v3047 = vsel %vm2922, %v406, %v3044
        %v3048 = vsel %vm2922, 0, %v3046
        %v3049 = vmul.f32 %v3047, %v3047
        %v3050 = vmul.f32 %v3049, -0.001358992
        %v3051 = vadd.f32 %v3050, 0.041655596
        %v3052 = vmul.f32 %v3049, %v3051
        %v3053 = vadd.f32 %v3052, -0.4999988
        %v3054 = vmul.f32 %v3049, %v3053
        %v3055 = vadd.f32 1.0, %v3054
        %v3056 = vmul.f32 %v3047, %v3047
        %v3057 = vmul.f32 %v3056, -0.00019511016
        %v3058 = vadd.f32 %v3057, 0.008332121
        %v3059 = vmul.f32 %v3056, %v3058
        %v3060 = vadd.f32 %v3059, -0.16666654
        %v3061 = vmul.f32 %v3056, %v3060
        %v3062 = vadd.f32 %v3061, 1.0
        %v3063 = vmul.f32 %v3062, %v3047
        %vm3064 = vweird.f32 %v406
        %v3065 = vadd.s32 %v3048, 3
        %v3066 = vand.u32 %v3065, 3
        %vm3067 = vcmp.lt.s32.totalorder %v3066, 2
        %vm3068 = vcmp.eq.s32.totalorder %v3066, 0
        %v3069 = vxor.u32 %v3063, 2147483648
        %v3070 = vsel %vm3068, %v3055, %v3069
        %vm3071 = vcmp.eq.s32.totalorder %v3066, 2
        %v3072 = vxor.u32 %v3055, 2147483648
        %v3073 = vsel %vm3071, %v3072, %v3063
        %v3074 = vsel %vm3067, %v3070, %v3073
        %v3075 = vsel %vm3064, nan, %v3074
        %v3076 = vand.u32 2147483647, %v407
        %vm3077 = vcmp.le.f32.partialorder %v3076, 0.7853982
        %vm3078 = vcmp.lt.s32.totalorder %v407, 0
        %v3079 = vand.u32 %v407, 2139095040
        %v3080 = vshrl.u32 %v3079, 23
        %v3081 = vsub.s32 %v3080, 127
        %v3082 = vand.u32 2147483647, %v407
        %v3083 = vand.u32 %v3082, 8388607
        %v3084 = vor.u32 %v3083, 8388608
        %v3085 = vsub.s32 0, %v3084
        %v3086 = vadd.s32 %v3081, 1
        %vm3087 = vcmp.gt.s32.totalorder %v3086, 0
        %v3088 = vsel %vm3087, %v3086, 0
        %v3089 = vshrl.u32 %v3088, 5
        %v3090 = vand.u32 %v3088, 31
        %v3091 = vsub.s32 32, %v3090
        %v3092 = vshrl.u32 683565275, %v3091
        %v3093 = vshll.u32 683565275, %v3090
        %v3094 = vshrl.u32 2475754826, %v3091
        %v3095 = vor.u32 %v3093, %v3094
        %v3096 = vshll.u32 2475754826, %v3090
        %v3097 = vshrl.u32 2131351028, %v3091
        %v3098 = vor.u32 %v3096, %v3097
        %v3099 = vshll.u32 2131351028, %v3090
        %v3100 = vshrl.u32 2102212464, %v3091
        %v3101 = vor.u32 %v3099, %v3100
        %v3102 = vshll.u32 2102212464, %v3090
        %v3103 = vshrl.u32 920167782, %v3091
        %v3104 = vor.u32 %v3102, %v3103
        %v3105 = vshll.u32 920167782, %v3090
        %v3106 = vshrl.u32 1326507024, %v3091
        %v3107 = vor.u32 %v3105, %v3106
        %vm3108 = vcmp.lt.s32.totalorder %v3089, 1
        %vm3109 = vcmp.lt.s32.totalorder %v3089, 2
        %vm3110 = vcmp.lt.s32.totalorder %v3089, 3
        %vm3111 = vcmp.lt.s32.totalorder %v3089, 4
        %v3112 = vsel %vm3108, %v3092, %v3095
        %v3113 = vsel %vm3111, %v3101, 2102212464
        %v3114 = vsel %vm3110, %v3098, %v3113
        %v3115 = vsel %vm3109, %v3112, %v3114
        %v3116 = vsel %vm3108, %v3095, %v3098
        %v3117 = vsel %vm3111, %v3104, 920167782
        %v3118 = vsel %vm3110, %v3101, %v3117
        %v3119 = vsel %vm3109, %v3116, %v3118
        %v3120 = vsel %vm3108, %v3098, %v3101
        %v3121 = vsel %vm3111, %v3107, 1326507024
        %v3122 = vsel %vm3110, %v3104, %v3121
        %v3123 = vsel %vm3109, %v3120, %v3122
        %v3124 = vshll.u32 %v3084, 8
        %v3125 = vand.u32 %v3124, 65535
        %v3126 = vshrl.u32 %v3124, 16
        %v3127 = vand.u32 %v3123, 65535
        %v3128 = vshrl.u32 %v3123, 16
        %v3129 = vmul.u32 %v3125, %v3127
        %v3130 = vmul.u32 %v3125, %v3128
        %v3131 = vmul.u32 %v3126, %v3127
        %v3132 = vmul.u32 %v3126, %v3128
        %v3133 = vshll.u32 %v3130, 16
        %v3134 = vshrl.u32 %v3130, 16
        %v3135 = vshll.u32 %v3131, 16
        %v3136 = vshrl.u32 %v3131, 16
        %vm3137 = vc.u32 %v3129, %v3133
        %v3138 = vsel %vm3137, 1, 0
        %v3139 = vadd.s32 %v3129, %v3133
        %v3140 = vadd.s32 %v3132, %v3138
        %vm3141 = vc.u32 %v3139, %v3135
        %v3142 = vsel %vm3141, 1, 0
        %v3143 = vadd.s32 %v3139, %v3135
        %v3144 = vadd.s32 %v3140, %v3142
        %v3145 = vadd.s32 %v3144, %v3134
        %v3146 = vadd.s32 %v3145, %v3136
        %v3147 = vand.u32 %v3124, 65535
        %v3148 = vshrl.u32 %v3124, 16
        %v3149 = vand.u32 %v3119, 65535
        %v3150 = vshrl.u32 %v3119, 16
        %v3151 = vmul.u32 %v3147, %v3149
        %v3152 = vmul.u32 %v3147, %v3150
        %v3153 = vmul.u32 %v3148, %v3149
        %v3154 = vmul.u32 %v3148, %v3150
        %v3155 = vshll.u32 %v3152, 16
        %v3156 = vshrl.u32 %v3152, 16
        %v3157 = vshll.u32 %v3153, 16
        %v3158 = vshrl.u32 %v3153, 16
        %vm3159 = vc.u32 %v3151, %v3155
        %v3160 = vsel %vm3159, 1, 0
        %v3161 = vadd.s32 %v3151, %v3155
        %v3162 = vadd.s32 %v3154, %v3160
        %vm3163 = vc.u32 %v3161, %v3157
        %v3164 = vsel %vm3163, 1, 0
        %v3165 = vadd.s32 %v3161, %v3157
        %v3166 = vadd.s32 %v3162, %v3164
        %v3167 = vadd.s32 %v3166, %v3156
        %v3168 = vadd.s32 %v3167, %v3158
        %v3169 = vmul.u32 %v3124, %v3115
        %v3170 = vadd.s32 %v3146, %v3165
        %vm3171 = vc.u32 %v3146, %v3165
        %v3172 = vadd.s32 %v3168, 1
        %v3173 = vsel %vm3171, %v3172, %v3168
        %v3174 = vadd.s32 %v3169, %v3173
        %v3175 = vadd.s32 %v3174, 536870912
        %v3176 = vshrl.u32 %v3175, 30
        %v3177 = vshll.u32 %v3176, 30
        %v3178 = vsub.s32 %v3174, %v3177
        %vm3179 = vcmp.lt.s32.totalorder %v3178, 0
        %v3180 = vsub.s32 0, %v3178
        %v3181 = vsel %vm3179, %v3180, %v3178
        %v3182 = vclz %v3181
        %v3183 = vsub.s32 %v3182, 2
        %vm3184 = vcmp.gt.s32.totalorder 0, %v3183
        %v3185 = vsel %vm3184, 0, %v3183
        %v3186 = vsub.s32 32, %v3185
        %v3187 = vshll.u32 %v3178, %v3185
        %v3188 = vshrl.u32 %v3170, %v3186
        %v3189 = vor.u32 %v3187, %v3188
        %v3190 = vsub.s32 4294967266, %v3185
        %v3191 = vadd.s32 %v3190, 127
        %v3192 = vshll.u32 %v3191, 23
        %v3193 = vor.u32 4788187, %v3192
        %v3194 = vand.u32 2147483647, %v3193
        %v3196 = vcvt.s32.f32 %v3189
        %v3197 = vmul.f32 %v3196, %v3194
        %v3198 = vxor.u32 %v3197, 2147483648
        %v3199 = vsel %vm3078, %v3198, %v3197
        %v3200 = vsub.s32 4, %v3176
        %v3201 = vsel %vm3078, %v3200, %v3176
        %v3202 = vsel %vm3077, %v407, %v3199
        %v3203 = vsel %vm3077, 0, %v3201
        %v3204 = vmul.f32 %v3202, %v3202
        %v3205 = vmul.f32 %v3204, -0.001358992
        %v3206 = vadd.f32 %v3205, 0.041655596
        %v3207 = vmul.f32 %v3204, %v3206
        %v3208 = vadd.f32 %v3207, -0.4999988
        %v3209 = vmul.f32 %v3204, %v3208
        %v3210 = vadd.f32 1.0, %v3209
        %v3211 = vmul.f32 %v3202, %v3202
        %v3212 = vmul.f32 %v3211, -0.00019511016
        %v3213 = vadd.f32 %v3212, 0.008332121
        %v3214 = vmul.f32 %v3211, %v3213
        %v3215 = vadd.f32 %v3214, -0.16666654
        %v3216 = vmul.f32 %v3211, %v3215
        %v3217 = vadd.f32 %v3216, 1.0
        %v3218 = vmul.f32 %v3217, %v3202
        %vm3219 = vweird.f32 %v407
        %v3220 = vadd.s32 %v3203, 3
        %v3221 = vand.u32 %v3220, 3
        %vm3222 = vcmp.lt.s32.totalorder %v3221, 2
        %vm3223 = vcmp.eq.s32.totalorder %v3221, 0
        %v3224 = vxor.u32 %v3218, 2147483648
        %v3225 = vsel %vm3223, %v3210, %v3224
        %vm3226 = vcmp.eq.s32.totalorder %v3221, 2
        %v3227 = vxor.u32 %v3210, 2147483648
        %v3228 = vsel %vm3226, %v3227, %v3218
        %v3229 = vsel %vm3222, %v3225, %v3228
        %v3230 = vsel %vm3219, nan, %v3229
        %v3231 = vand.u32 2147483647, %v408
        %vm3232 = vcmp.le.f32.partialorder %v3231, 0.7853982
        %vm3233 = vcmp.lt.s32.totalorder %v408, 0
        %v3234 = vand.u32 %v408, 2139095040
        %v3235 = vshrl.u32 %v3234, 23
        %v3236 = vsub.s32 %v3235, 127
        %v3237 = vand.u32 2147483647, %v408
        %v3238 = vand.u32 %v3237, 8388607
        %v3239 = vor.u32 %v3238, 8388608
        %v3240 = vsub.s32 0, %v3239
        %v3241 = vadd.s32 %v3236, 1
        %vm3242 = vcmp.gt.s32.totalorder %v3241, 0
        %v3243 = vsel %vm3242, %v3241, 0
        %v3244 = vshrl.u32 %v3243, 5
        %v3245 = vand.u32 %v3243, 31
        %v3246 = vsub.s32 32, %v3245
        %v3247 = vshrl.u32 683565275, %v3246
        %v3248 = vshll.u32 683565275, %v3245
        %v3249 = vshrl.u32 2475754826, %v3246
        %v3250 = vor.u32 %v3248, %v3249
        %v3251 = vshll.u32 2475754826, %v3245
        %v3252 = vshrl.u32 2131351028, %v3246
        %v3253 = vor.u32 %v3251, %v3252
        %v3254 = vshll.u32 2131351028, %v3245
        %v3255 = vshrl.u32 2102212464, %v3246
        %v3256 = vor.u32 %v3254, %v3255
        %v3257 = vshll.u32 2102212464, %v3245
        %v3258 = vshrl.u32 920167782, %v3246
        %v3259 = vor.u32 %v3257, %v3258
        %v3260 = vshll.u32 920167782, %v3245
        %v3261 = vshrl.u32 1326507024, %v3246
        %v3262 = vor.u32 %v3260, %v3261
        %vm3263 = vcmp.lt.s32.totalorder %v3244, 1
        %vm3264 = vcmp.lt.s32.totalorder %v3244, 2
        %vm3265 = vcmp.lt.s32.totalorder %v3244, 3
        %vm3266 = vcmp.lt.s32.totalorder %v3244, 4
        %v3267 = vsel %vm3263, %v3247, %v3250
        %v3268 = vsel %vm3266, %v3256, 2102212464
        %v3269 = vsel %vm3265, %v3253, %v3268
        %v3270 = vsel %vm3264, %v3267, %v3269
        %v3271 = vsel %vm3263, %v3250, %v3253
        %v3272 = vsel %vm3266, %v3259, 920167782
        %v3273 = vsel %vm3265, %v3256, %v3272
        %v3274 = vsel %vm3264, %v3271, %v3273
        %v3275 = vsel %vm3263, %v3253, %v3256
        %v3276 = vsel %vm3266, %v3262, 1326507024
        %v3277 = vsel %vm3265, %v3259, %v3276
        %v3278 = vsel %vm3264, %v3275, %v3277
        %v3279 = vshll.u32 %v3239, 8
        %v3280 = vand.u32 %v3279, 65535
        %v3281 = vshrl.u32 %v3279, 16
        %v3282 = vand.u32 %v3278, 65535
        %v3283 = vshrl.u32 %v3278, 16
        %v3284 = vmul.u32 %v3280, %v3282
        %v3285 = vmul.u32 %v3280, %v3283
        %v3286 = vmul.u32 %v3281, %v3282
        %v3287 = vmul.u32 %v3281, %v3283
        %v3288 = vshll.u32 %v3285, 16
        %v3289 = vshrl.u32 %v3285, 16
        %v3290 = vshll.u32 %v3286, 16
        %v3291 = vshrl.u32 %v3286, 16
        %vm3292 = vc.u32 %v3284, %v3288
        %v3293 = vsel %vm3292, 1, 0
        %v3294 = vadd.s32 %v3284, %v3288
        %v3295 = vadd.s32 %v3287, %v3293
        %vm3296 = vc.u32 %v3294, %v3290
        %v3297 = vsel %vm3296, 1, 0
        %v3298 = vadd.s32 %v3294, %v3290
        %v3299 = vadd.s32 %v3295, %v3297
        %v3300 = vadd.s32 %v3299, %v3289
        %v3301 = vadd.s32 %v3300, %v3291
        %v3302 = vand.u32 %v3279, 65535
        %v3303 = vshrl.u32 %v3279, 16
        %v3304 = vand.u32 %v3274, 65535
        %v3305 = vshrl.u32 %v3274, 16
        %v3306 = vmul.u32 %v3302, %v3304
        %v3307 = vmul.u32 %v3302, %v3305
        %v3308 = vmul.u32 %v3303, %v3304
        %v3309 = vmul.u32 %v3303, %v3305
        %v3310 = vshll.u32 %v3307, 16
        %v3311 = vshrl.u32 %v3307, 16
        %v3312 = vshll.u32 %v3308, 16
        %v3313 = vshrl.u32 %v3308, 16
        %vm3314 = vc.u32 %v3306, %v3310
        %v3315 = vsel %vm3314, 1, 0
        %v3316 = vadd.s32 %v3306, %v3310
        %v3317 = vadd.s32 %v3309, %v3315
        %vm3318 = vc.u32 %v3316, %v3312
        %v3319 = vsel %vm3318, 1, 0
        %v3320 = vadd.s32 %v3316, %v3312
        %v3321 = vadd.s32 %v3317, %v3319
        %v3322 = vadd.s32 %v3321, %v3311
        %v3323 = vadd.s32 %v3322, %v3313
        %v3324 = vmul.u32 %v3279, %v3270
        %v3325 = vadd.s32 %v3301, %v3320
        %vm3326 = vc.u32 %v3301, %v3320
        %v3327 = vadd.s32 %v3323, 1
        %v3328 = vsel %vm3326, %v3327, %v3323
        %v3329 = vadd.s32 %v3324, %v3328
        %v3330 = vadd.s32 %v3329, 536870912
        %v3331 = vshrl.u32 %v3330, 30
        %v3332 = vshll.u32 %v3331, 30
        %v3333 = vsub.s32 %v3329, %v3332
        %vm3334 = vcmp.lt.s32.totalorder %v3333, 0
        %v3335 = vsub.s32 0, %v3333
        %v3336 = vsel %vm3334, %v3335, %v3333
        %v3337 = vclz %v3336
        %v3338 = vsub.s32 %v3337, 2
        %vm3339 = vcmp.gt.s32.totalorder 0, %v3338
        %v3340 = vsel %vm3339, 0, %v3338
        %v3341 = vsub.s32 32, %v3340
        %v3342 = vshll.u32 %v3333, %v3340
        %v3343 = vshrl.u32 %v3325, %v3341
        %v3344 = vor.u32 %v3342, %v3343
        %v3345 = vsub.s32 4294967266, %v3340
        %v3346 = vadd.s32 %v3345, 127
        %v3347 = vshll.u32 %v3346, 23
        %v3348 = vor.u32 4788187, %v3347
        %v3349 = vand.u32 2147483647, %v3348
        %v3351 = vcvt.s32.f32 %v3344
        %v3352 = vmul.f32 %v3351, %v3349
        %v3353 = vxor.u32 %v3352, 2147483648
        %v3354 = vsel %vm3233, %v3353, %v3352
        %v3355 = vsub.s32 4, %v3331
        %v3356 = vsel %vm3233, %v3355, %v3331
        %v3357 = vsel %vm3232, %v408, %v3354
        %v3358 = vsel %vm3232, 0, %v3356
        %v3359 = vmul.f32 %v3357, %v3357
        %v3360 = vmul.f32 %v3359, -0.001358992
        %v3361 = vadd.f32 %v3360, 0.041655596
        %v3362 = vmul.f32 %v3359, %v3361
        %v3363 = vadd.f32 %v3362, -0.4999988
        %v3364 = vmul.f32 %v3359, %v3363
        %v3365 = vadd.f32 1.0, %v3364
        %v3366 = vmul.f32 %v3357, %v3357
        %v3367 = vmul.f32 %v3366, -0.00019511016
        %v3368 = vadd.f32 %v3367, 0.008332121
        %v3369 = vmul.f32 %v3366, %v3368
        %v3370 = vadd.f32 %v3369, -0.16666654
        %v3371 = vmul.f32 %v3366, %v3370
        %v3372 = vadd.f32 %v3371, 1.0
        %v3373 = vmul.f32 %v3372, %v3357
        %vm3374 = vweird.f32 %v408
        %v3375 = vadd.s32 %v3358, 3
        %v3376 = vand.u32 %v3375, 3
        %vm3377 = vcmp.lt.s32.totalorder %v3376, 2
        %vm3378 = vcmp.eq.s32.totalorder %v3376, 0
        %v3379 = vxor.u32 %v3373, 2147483648
        %v3380 = vsel %vm3378, %v3365, %v3379
        %vm3381 = vcmp.eq.s32.totalorder %v3376, 2
        %v3382 = vxor.u32 %v3365, 2147483648
        %v3383 = vsel %vm3381, %v3382, %v3373
        %v3384 = vsel %vm3377, %v3380, %v3383
        %v3385 = vsel %vm3374, nan, %v3384
        %v3386 = vand.u32 2147483647, %v409
        %vm3387 = vcmp.le.f32.partialorder %v3386, 0.7853982
        %vm3388 = vcmp.lt.s32.totalorder %v409, 0
        %v3389 = vand.u32 %v409, 2139095040
        %v3390 = vshrl.u32 %v3389, 23
        %v3391 = vsub.s32 %v3390, 127
        %v3392 = vand.u32 2147483647, %v409
        %v3393 = vand.u32 %v3392, 8388607
        %v3394 = vor.u32 %v3393, 8388608
        %v3395 = vsub.s32 0, %v3394
        %v3396 = vadd.s32 %v3391, 1
        %vm3397 = vcmp.gt.s32.totalorder %v3396, 0
        %v3398 = vsel %vm3397, %v3396, 0
        %v3399 = vshrl.u32 %v3398, 5
        %v3400 = vand.u32 %v3398, 31
        %v3401 = vsub.s32 32, %v3400
        %v3402 = vshrl.u32 683565275, %v3401
        %v3403 = vshll.u32 683565275, %v3400
        %v3404 = vshrl.u32 2475754826, %v3401
        %v3405 = vor.u32 %v3403, %v3404
        %v3406 = vshll.u32 2475754826, %v3400
        %v3407 = vshrl.u32 2131351028, %v3401
        %v3408 = vor.u32 %v3406, %v3407
        %v3409 = vshll.u32 2131351028, %v3400
        %v3410 = vshrl.u32 2102212464, %v3401
        %v3411 = vor.u32 %v3409, %v3410
        %v3412 = vshll.u32 2102212464, %v3400
        %v3413 = vshrl.u32 920167782, %v3401
        %v3414 = vor.u32 %v3412, %v3413
        %v3415 = vshll.u32 920167782, %v3400
        %v3416 = vshrl.u32 1326507024, %v3401
        %v3417 = vor.u32 %v3415, %v3416
        %vm3418 = vcmp.lt.s32.totalorder %v3399, 1
        %vm3419 = vcmp.lt.s32.totalorder %v3399, 2
        %vm3420 = vcmp.lt.s32.totalorder %v3399, 3
        %vm3421 = vcmp.lt.s32.totalorder %v3399, 4
        %v3422 = vsel %vm3418, %v3402, %v3405
        %v3423 = vsel %vm3421, %v3411, 2102212464
        %v3424 = vsel %vm3420, %v3408, %v3423
        %v3425 = vsel %vm3419, %v3422, %v3424
        %v3426 = vsel %vm3418, %v3405, %v3408
        %v3427 = vsel %vm3421, %v3414, 920167782
        %v3428 = vsel %vm3420, %v3411, %v3427
        %v3429 = vsel %vm3419, %v3426, %v3428
        %v3430 = vsel %vm3418, %v3408, %v3411
        %v3431 = vsel %vm3421, %v3417, 1326507024
        %v3432 = vsel %vm3420, %v3414, %v3431
        %v3433 = vsel %vm3419, %v3430, %v3432
        %v3434 = vshll.u32 %v3394, 8
        %v3435 = vand.u32 %v3434, 65535
        %v3436 = vshrl.u32 %v3434, 16
        %v3437 = vand.u32 %v3433, 65535
        %v3438 = vshrl.u32 %v3433, 16
        %v3439 = vmul.u32 %v3435, %v3437
        %v3440 = vmul.u32 %v3435, %v3438
        %v3441 = vmul.u32 %v3436, %v3437
        %v3442 = vmul.u32 %v3436, %v3438
        %v3443 = vshll.u32 %v3440, 16
        %v3444 = vshrl.u32 %v3440, 16
        %v3445 = vshll.u32 %v3441, 16
        %v3446 = vshrl.u32 %v3441, 16
        %vm3447 = vc.u32 %v3439, %v3443
        %v3448 = vsel %vm3447, 1, 0
        %v3449 = vadd.s32 %v3439, %v3443
        %v3450 = vadd.s32 %v3442, %v3448
        %vm3451 = vc.u32 %v3449, %v3445
        %v3452 = vsel %vm3451, 1, 0
        %v3453 = vadd.s32 %v3449, %v3445
        %v3454 = vadd.s32 %v3450, %v3452
        %v3455 = vadd.s32 %v3454, %v3444
        %v3456 = vadd.s32 %v3455, %v3446
        %v3457 = vand.u32 %v3434, 65535
        %v3458 = vshrl.u32 %v3434, 16
        %v3459 = vand.u32 %v3429, 65535
        %v3460 = vshrl.u32 %v3429, 16
        %v3461 = vmul.u32 %v3457, %v3459
        %v3462 = vmul.u32 %v3457, %v3460
        %v3463 = vmul.u32 %v3458, %v3459
        %v3464 = vmul.u32 %v3458, %v3460
        %v3465 = vshll.u32 %v3462, 16
        %v3466 = vshrl.u32 %v3462, 16
        %v3467 = vshll.u32 %v3463, 16
        %v3468 = vshrl.u32 %v3463, 16
        %vm3469 = vc.u32 %v3461, %v3465
        %v3470 = vsel %vm3469, 1, 0
        %v3471 = vadd.s32 %v3461, %v3465
        %v3472 = vadd.s32 %v3464, %v3470
        %vm3473 = vc.u32 %v3471, %v3467
        %v3474 = vsel %vm3473, 1, 0
        %v3475 = vadd.s32 %v3471, %v3467
        %v3476 = vadd.s32 %v3472, %v3474
        %v3477 = vadd.s32 %v3476, %v3466
        %v3478 = vadd.s32 %v3477, %v3468
        %v3479 = vmul.u32 %v3434, %v3425
        %v3480 = vadd.s32 %v3456, %v3475
        %vm3481 = vc.u32 %v3456, %v3475
        %v3482 = vadd.s32 %v3478, 1
        %v3483 = vsel %vm3481, %v3482, %v3478
        %v3484 = vadd.s32 %v3479, %v3483
        %v3485 = vadd.s32 %v3484, 536870912
        %v3486 = vshrl.u32 %v3485, 30
        %v3487 = vshll.u32 %v3486, 30
        %v3488 = vsub.s32 %v3484, %v3487
        %vm3489 = vcmp.lt.s32.totalorder %v3488, 0
        %v3490 = vsub.s32 0, %v3488
        %v3491 = vsel %vm3489, %v3490, %v3488
        %v3492 = vclz %v3491
        %v3493 = vsub.s32 %v3492, 2
        %vm3494 = vcmp.gt.s32.totalorder 0, %v3493
        %v3495 = vsel %vm3494, 0, %v3493
        %v3496 = vsub.s32 32, %v3495
        %v3497 = vshll.u32 %v3488, %v3495
        %v3498 = vshrl.u32 %v3480, %v3496
        %v3499 = vor.u32 %v3497, %v3498
        %v3500 = vsub.s32 4294967266, %v3495
        %v3501 = vadd.s32 %v3500, 127
        %v3502 = vshll.u32 %v3501, 23
        %v3503 = vor.u32 4788187, %v3502
        %v3504 = vand.u32 2147483647, %v3503
        %v3506 = vcvt.s32.f32 %v3499
        %v3507 = vmul.f32 %v3506, %v3504
        %v3508 = vxor.u32 %v3507, 2147483648
        %v3509 = vsel %vm3388, %v3508, %v3507
        %v3510 = vsub.s32 4, %v3486
        %v3511 = vsel %vm3388, %v3510, %v3486
        %v3512 = vsel %vm3387, %v409, %v3509
        %v3513 = vsel %vm3387, 0, %v3511
        %v3514 = vmul.f32 %v3512, %v3512
        %v3515 = vmul.f32 %v3514, -0.001358992
        %v3516 = vadd.f32 %v3515, 0.041655596
        %v3517 = vmul.f32 %v3514, %v3516
        %v3518 = vadd.f32 %v3517, -0.4999988
        %v3519 = vmul.f32 %v3514, %v3518
        %v3520 = vadd.f32 1.0, %v3519
        %v3521 = vmul.f32 %v3512, %v3512
        %v3522 = vmul.f32 %v3521, -0.00019511016
        %v3523 = vadd.f32 %v3522, 0.008332121
        %v3524 = vmul.f32 %v3521, %v3523
        %v3525 = vadd.f32 %v3524, -0.16666654
        %v3526 = vmul.f32 %v3521, %v3525
        %v3527 = vadd.f32 %v3526, 1.0
        %v3528 = vmul.f32 %v3527, %v3512
        %vm3529 = vweird.f32 %v409
        %v3530 = vadd.s32 %v3513, 3
        %v3531 = vand.u32 %v3530, 3
        %vm3532 = vcmp.lt.s32.totalorder %v3531, 2
        %vm3533 = vcmp.eq.s32.totalorder %v3531, 0
        %v3534 = vxor.u32 %v3528, 2147483648
        %v3535 = vsel %vm3533, %v3520, %v3534
        %vm3536 = vcmp.eq.s32.totalorder %v3531, 2
        %v3537 = vxor.u32 %v3520, 2147483648
        %v3538 = vsel %vm3536, %v3537, %v3528
        %v3539 = vsel %vm3532, %v3535, %v3538
        %v3540 = vsel %vm3529, nan, %v3539
        %v3541 = vand.u32 2147483647, %v425
        %vm3542 = vcmp.le.f32.partialorder %v3541, 0.7853982
        %vm3543 = vcmp.lt.s32.totalorder %v425, 0
        %v3544 = vand.u32 %v425, 2139095040
        %v3545 = vshrl.u32 %v3544, 23
        %v3546 = vsub.s32 %v3545, 127
        %v3547 = vand.u32 2147483647, %v425
        %v3548 = vand.u32 %v3547, 8388607
        %v3549 = vor.u32 %v3548, 8388608
        %v3550 = vsub.s32 0, %v3549
        %v3551 = vadd.s32 %v3546, 1
        %vm3552 = vcmp.gt.s32.totalorder %v3551, 0
        %v3553 = vsel %vm3552, %v3551, 0
        %v3554 = vshrl.u32 %v3553, 5
        %v3555 = vand.u32 %v3553, 31
        %v3556 = vsub.s32 32, %v3555
        %v3557 = vshrl.u32 683565275, %v3556
        %v3558 = vshll.u32 683565275, %v3555
        %v3559 = vshrl.u32 2475754826, %v3556
        %v3560 = vor.u32 %v3558, %v3559
        %v3561 = vshll.u32 2475754826, %v3555
        %v3562 = vshrl.u32 2131351028, %v3556
        %v3563 = vor.u32 %v3561, %v3562
        %v3564 = vshll.u32 2131351028, %v3555
        %v3565 = vshrl.u32 2102212464, %v3556
        %v3566 = vor.u32 %v3564, %v3565
        %v3567 = vshll.u32 2102212464, %v3555
        %v3568 = vshrl.u32 920167782, %v3556
        %v3569 = vor.u32 %v3567, %v3568
        %v3570 = vshll.u32 920167782, %v3555
        %v3571 = vshrl.u32 1326507024, %v3556
        %v3572 = vor.u32 %v3570, %v3571
        %vm3573 = vcmp.lt.s32.totalorder %v3554, 1
        %vm3574 = vcmp.lt.s32.totalorder %v3554, 2
        %vm3575 = vcmp.lt.s32.totalorder %v3554, 3
        %vm3576 = vcmp.lt.s32.totalorder %v3554, 4
        %v3577 = vsel %vm3573, %v3557, %v3560
        %v3578 = vsel %vm3576, %v3566, 2102212464
        %v3579 = vsel %vm3575, %v3563, %v3578
        %v3580 = vsel %vm3574, %v3577, %v3579
        %v3581 = vsel %vm3573, %v3560, %v3563
        %v3582 = vsel %vm3576, %v3569, 920167782
        %v3583 = vsel %vm3575, %v3566, %v3582
        %v3584 = vsel %vm3574, %v3581, %v3583
        %v3585 = vsel %vm3573, %v3563, %v3566
        %v3586 = vsel %vm3576, %v3572, 1326507024
        %v3587 = vsel %vm3575, %v3569, %v3586
        %v3588 = vsel %vm3574, %v3585, %v3587
        %v3589 = vshll.u32 %v3549, 8
        %v3590 = vand.u32 %v3589, 65535
        %v3591 = vshrl.u32 %v3589, 16
        %v3592 = vand.u32 %v3588, 65535
        %v3593 = vshrl.u32 %v3588, 16
        %v3594 = vmul.u32 %v3590, %v3592
        %v3595 = vmul.u32 %v3590, %v3593
        %v3596 = vmul.u32 %v3591, %v3592
        %v3597 = vmul.u32 %v3591, %v3593
        %v3598 = vshll.u32 %v3595, 16
        %v3599 = vshrl.u32 %v3595, 16
        %v3600 = vshll.u32 %v3596, 16
        %v3601 = vshrl.u32 %v3596, 16
        %vm3602 = vc.u32 %v3594, %v3598
        %v3603 = vsel %vm3602, 1, 0
        %v3604 = vadd.s32 %v3594, %v3598
        %v3605 = vadd.s32 %v3597, %v3603
        %vm3606 = vc.u32 %v3604, %v3600
        %v3607 = vsel %vm3606, 1, 0
        %v3608 = vadd.s32 %v3604, %v3600
        %v3609 = vadd.s32 %v3605, %v3607
        %v3610 = vadd.s32 %v3609, %v3599
        %v3611 = vadd.s32 %v3610, %v3601
        %v3612 = vand.u32 %v3589, 65535
        %v3613 = vshrl.u32 %v3589, 16
        %v3614 = vand.u32 %v3584, 65535
        %v3615 = vshrl.u32 %v3584, 16
        %v3616 = vmul.u32 %v3612, %v3614
        %v3617 = vmul.u32 %v3612, %v3615
        %v3618 = vmul.u32 %v3613, %v3614
        %v3619 = vmul.u32 %v3613, %v3615
        %v3620 = vshll.u32 %v3617, 16
        %v3621 = vshrl.u32 %v3617, 16
        %v3622 = vshll.u32 %v3618, 16
        %v3623 = vshrl.u32 %v3618, 16
        %vm3624 = vc.u32 %v3616, %v3620
        %v3625 = vsel %vm3624, 1, 0
        %v3626 = vadd.s32 %v3616, %v3620
        %v3627 = vadd.s32 %v3619, %v3625
        %vm3628 = vc.u32 %v3626, %v3622
        %v3629 = vsel %vm3628, 1, 0
        %v3630 = vadd.s32 %v3626, %v3622
        %v3631 = vadd.s32 %v3627, %v3629
        %v3632 = vadd.s32 %v3631, %v3621
        %v3633 = vadd.s32 %v3632, %v3623
        %v3634 = vmul.u32 %v3589, %v3580
        %v3635 = vadd.s32 %v3611, %v3630
        %vm3636 = vc.u32 %v3611, %v3630
        %v3637 = vadd.s32 %v3633, 1
        %v3638 = vsel %vm3636, %v3637, %v3633
        %v3639 = vadd.s32 %v3634, %v3638
        %v3640 = vadd.s32 %v3639, 536870912
        %v3641 = vshrl.u32 %v3640, 30
        %v3642 = vshll.u32 %v3641, 30
        %v3643 = vsub.s32 %v3639, %v3642
        %vm3644 = vcmp.lt.s32.totalorder %v3643, 0
        %v3645 = vsub.s32 0, %v3643
        %v3646 = vsel %vm3644, %v3645, %v3643
        %v3647 = vclz %v3646
        %v3648 = vsub.s32 %v3647, 2
        %vm3649 = vcmp.gt.s32.totalorder 0, %v3648
        %v3650 = vsel %vm3649, 0, %v3648
        %v3651 = vsub.s32 32, %v3650
        %v3652 = vshll.u32 %v3643, %v3650
        %v3653 = vshrl.u32 %v3635, %v3651
        %v3654 = vor.u32 %v3652, %v3653
        %v3655 = vsub.s32 4294967266, %v3650
        %v3656 = vadd.s32 %v3655, 127
        %v3657 = vshll.u32 %v3656, 23
        %v3658 = vor.u32 4788187, %v3657
        %v3659 = vand.u32 2147483647, %v3658
        %v3661 = vcvt.s32.f32 %v3654
        %v3662 = vmul.f32 %v3661, %v3659
        %v3663 = vxor.u32 %v3662, 2147483648
        %v3664 = vsel %vm3543, %v3663, %v3662
        %v3665 = vsub.s32 4, %v3641
        %v3666 = vsel %vm3543, %v3665, %v3641
        %v3667 = vsel %vm3542, %v425, %v3664
        %v3668 = vsel %vm3542, 0, %v3666
        %v3669 = vmul.f32 %v3667, %v3667
        %v3670 = vmul.f32 %v3669, -0.001358992
        %v3671 = vadd.f32 %v3670, 0.041655596
        %v3672 = vmul.f32 %v3669, %v3671
        %v3673 = vadd.f32 %v3672, -0.4999988
        %v3674 = vmul.f32 %v3669, %v3673
        %v3675 = vadd.f32 1.0, %v3674
        %v3676 = vmul.f32 %v3667, %v3667
        %v3677 = vmul.f32 %v3676, -0.00019511016
        %v3678 = vadd.f32 %v3677, 0.008332121
        %v3679 = vmul.f32 %v3676, %v3678
        %v3680 = vadd.f32 %v3679, -0.16666654
        %v3681 = vmul.f32 %v3676, %v3680
        %v3682 = vadd.f32 %v3681, 1.0
        %v3683 = vmul.f32 %v3682, %v3667
        %vm3684 = vweird.f32 %v425
        %v3685 = vadd.s32 %v3668, 3
        %v3686 = vand.u32 %v3685, 3
        %vm3687 = vcmp.lt.s32.totalorder %v3686, 2
        %vm3688 = vcmp.eq.s32.totalorder %v3686, 0
        %v3689 = vxor.u32 %v3683, 2147483648
        %v3690 = vsel %vm3688, %v3675, %v3689
        %vm3691 = vcmp.eq.s32.totalorder %v3686, 2
        %v3692 = vxor.u32 %v3675, 2147483648
        %v3693 = vsel %vm3691, %v3692, %v3683
        %v3694 = vsel %vm3687, %v3690, %v3693
        %v3695 = vsel %vm3684, nan, %v3694
        %v3696 = vand.u32 2147483647, %v426
        %vm3697 = vcmp.le.f32.partialorder %v3696, 0.7853982
        %vm3698 = vcmp.lt.s32.totalorder %v426, 0
        %v3699 = vand.u32 %v426, 2139095040
        %v3700 = vshrl.u32 %v3699, 23
        %v3701 = vsub.s32 %v3700, 127
        %v3702 = vand.u32 2147483647, %v426
        %v3703 = vand.u32 %v3702, 8388607
        %v3704 = vor.u32 %v3703, 8388608
        %v3705 = vsub.s32 0, %v3704
        %v3706 = vadd.s32 %v3701, 1
        %vm3707 = vcmp.gt.s32.totalorder %v3706, 0
        %v3708 = vsel %vm3707, %v3706, 0
        %v3709 = vshrl.u32 %v3708, 5
        %v3710 = vand.u32 %v3708, 31
        %v3711 = vsub.s32 32, %v3710
        %v3712 = vshrl.u32 683565275, %v3711
        %v3713 = vshll.u32 683565275, %v3710
        %v3714 = vshrl.u32 2475754826, %v3711
        %v3715 = vor.u32 %v3713, %v3714
        %v3716 = vshll.u32 2475754826, %v3710
        %v3717 = vshrl.u32 2131351028, %v3711
        %v3718 = vor.u32 %v3716, %v3717
        %v3719 = vshll.u32 2131351028, %v3710
        %v3720 = vshrl.u32 2102212464, %v3711
        %v3721 = vor.u32 %v3719, %v3720
        %v3722 = vshll.u32 2102212464, %v3710
        %v3723 = vshrl.u32 920167782, %v3711
        %v3724 = vor.u32 %v3722, %v3723
        %v3725 = vshll.u32 920167782, %v3710
        %v3726 = vshrl.u32 1326507024, %v3711
        %v3727 = vor.u32 %v3725, %v3726
        %vm3728 = vcmp.lt.s32.totalorder %v3709, 1
        %vm3729 = vcmp.lt.s32.totalorder %v3709, 2
        %vm3730 = vcmp.lt.s32.totalorder %v3709, 3
        %vm3731 = vcmp.lt.s32.totalorder %v3709, 4
        %v3732 = vsel %vm3728, %v3712, %v3715
        %v3733 = vsel %vm3731, %v3721, 2102212464
        %v3734 = vsel %vm3730, %v3718, %v3733
        %v3735 = vsel %vm3729, %v3732, %v3734
        %v3736 = vsel %vm3728, %v3715, %v3718
        %v3737 = vsel %vm3731, %v3724, 920167782
        %v3738 = vsel %vm3730, %v3721, %v3737
        %v3739 = vsel %vm3729, %v3736, %v3738
        %v3740 = vsel %vm3728, %v3718, %v3721
        %v3741 = vsel %vm3731, %v3727, 1326507024
        %v3742 = vsel %vm3730, %v3724, %v3741
        %v3743 = vsel %vm3729, %v3740, %v3742
        %v3744 = vshll.u32 %v3704, 8
        %v3745 = vand.u32 %v3744, 65535
        %v3746 = vshrl.u32 %v3744, 16
        %v3747 = vand.u32 %v3743, 65535
        %v3748 = vshrl.u32 %v3743, 16
        %v3749 = vmul.u32 %v3745, %v3747
        %v3750 = vmul.u32 %v3745, %v3748
        %v3751 = vmul.u32 %v3746, %v3747
        %v3752 = vmul.u32 %v3746, %v3748
        %v3753 = vshll.u32 %v3750, 16
        %v3754 = vshrl.u32 %v3750, 16
        %v3755 = vshll.u32 %v3751, 16
        %v3756 = vshrl.u32 %v3751, 16
        %vm3757 = vc.u32 %v3749, %v3753
        %v3758 = vsel %vm3757, 1, 0
        %v3759 = vadd.s32 %v3749, %v3753
        %v3760 = vadd.s32 %v3752, %v3758
        %vm3761 = vc.u32 %v3759, %v3755
        %v3762 = vsel %vm3761, 1, 0
        %v3763 = vadd.s32 %v3759, %v3755
        %v3764 = vadd.s32 %v3760, %v3762
        %v3765 = vadd.s32 %v3764, %v3754
        %v3766 = vadd.s32 %v3765, %v3756
        %v3767 = vand.u32 %v3744, 65535
        %v3768 = vshrl.u32 %v3744, 16
        %v3769 = vand.u32 %v3739, 65535
        %v3770 = vshrl.u32 %v3739, 16
        %v3771 = vmul.u32 %v3767, %v3769
        %v3772 = vmul.u32 %v3767, %v3770
        %v3773 = vmul.u32 %v3768, %v3769
        %v3774 = vmul.u32 %v3768, %v3770
        %v3775 = vshll.u32 %v3772, 16
        %v3776 = vshrl.u32 %v3772, 16
        %v3777 = vshll.u32 %v3773, 16
        %v3778 = vshrl.u32 %v3773, 16
        %vm3779 = vc.u32 %v3771, %v3775
        %v3780 = vsel %vm3779, 1, 0
        %v3781 = vadd.s32 %v3771, %v3775
        %v3782 = vadd.s32 %v3774, %v3780
        %vm3783 = vc.u32 %v3781, %v3777
        %v3784 = vsel %vm3783, 1, 0
        %v3785 = vadd.s32 %v3781, %v3777
        %v3786 = vadd.s32 %v3782, %v3784
        %v3787 = vadd.s32 %v3786, %v3776
        %v3788 = vadd.s32 %v3787, %v3778
        %v3789 = vmul.u32 %v3744, %v3735
        %v3790 = vadd.s32 %v3766, %v3785
        %vm3791 = vc.u32 %v3766, %v3785
        %v3792 = vadd.s32 %v3788, 1
        %v3793 = vsel %vm3791, %v3792, %v3788
        %v3794 = vadd.s32 %v3789, %v3793
        %v3795 = vadd.s32 %v3794, 536870912
        %v3796 = vshrl.u32 %v3795, 30
        %v3797 = vshll.u32 %v3796, 30
        %v3798 = vsub.s32 %v3794, %v3797
        %vm3799 = vcmp.lt.s32.totalorder %v3798, 0
        %v3800 = vsub.s32 0, %v3798
        %v3801 = vsel %vm3799, %v3800, %v3798
        %v3802 = vclz %v3801
        %v3803 = vsub.s32 %v3802, 2
        %vm3804 = vcmp.gt.s32.totalorder 0, %v3803
        %v3805 = vsel %vm3804, 0, %v3803
        %v3806 = vsub.s32 32, %v3805
        %v3807 = vshll.u32 %v3798, %v3805
        %v3808 = vshrl.u32 %v3790, %v3806
        %v3809 = vor.u32 %v3807, %v3808
        %v3810 = vsub.s32 4294967266, %v3805
        %v3811 = vadd.s32 %v3810, 127
        %v3812 = vshll.u32 %v3811, 23
        %v3813 = vor.u32 4788187, %v3812
        %v3814 = vand.u32 2147483647, %v3813
        %v3816 = vcvt.s32.f32 %v3809
        %v3817 = vmul.f32 %v3816, %v3814
        %v3818 = vxor.u32 %v3817, 2147483648
        %v3819 = vsel %vm3698, %v3818, %v3817
        %v3820 = vsub.s32 4, %v3796
        %v3821 = vsel %vm3698, %v3820, %v3796
        %v3822 = vsel %vm3697, %v426, %v3819
        %v3823 = vsel %vm3697, 0, %v3821
        %v3824 = vmul.f32 %v3822, %v3822
        %v3825 = vmul.f32 %v3824, -0.001358992
        %v3826 = vadd.f32 %v3825, 0.041655596
        %v3827 = vmul.f32 %v3824, %v3826
        %v3828 = vadd.f32 %v3827, -0.4999988
        %v3829 = vmul.f32 %v3824, %v3828
        %v3830 = vadd.f32 1.0, %v3829
        %v3831 = vmul.f32 %v3822, %v3822
        %v3832 = vmul.f32 %v3831, -0.00019511016
        %v3833 = vadd.f32 %v3832, 0.008332121
        %v3834 = vmul.f32 %v3831, %v3833
        %v3835 = vadd.f32 %v3834, -0.16666654
        %v3836 = vmul.f32 %v3831, %v3835
        %v3837 = vadd.f32 %v3836, 1.0
        %v3838 = vmul.f32 %v3837, %v3822
        %vm3839 = vweird.f32 %v426
        %v3840 = vadd.s32 %v3823, 3
        %v3841 = vand.u32 %v3840, 3
        %vm3842 = vcmp.lt.s32.totalorder %v3841, 2
        %vm3843 = vcmp.eq.s32.totalorder %v3841, 0
        %v3844 = vxor.u32 %v3838, 2147483648
        %v3845 = vsel %vm3843, %v3830, %v3844
        %vm3846 = vcmp.eq.s32.totalorder %v3841, 2
        %v3847 = vxor.u32 %v3830, 2147483648
        %v3848 = vsel %vm3846, %v3847, %v3838
        %v3849 = vsel %vm3842, %v3845, %v3848
        %v3850 = vsel %vm3839, nan, %v3849
        %v3851 = vand.u32 2147483647, %v427
        %vm3852 = vcmp.le.f32.partialorder %v3851, 0.7853982
        %vm3853 = vcmp.lt.s32.totalorder %v427, 0
        %v3854 = vand.u32 %v427, 2139095040
        %v3855 = vshrl.u32 %v3854, 23
        %v3856 = vsub.s32 %v3855, 127
        %v3857 = vand.u32 2147483647, %v427
        %v3858 = vand.u32 %v3857, 8388607
        %v3859 = vor.u32 %v3858, 8388608
        %v3860 = vsub.s32 0, %v3859
        %v3861 = vadd.s32 %v3856, 1
        %vm3862 = vcmp.gt.s32.totalorder %v3861, 0
        %v3863 = vsel %vm3862, %v3861, 0
        %v3864 = vshrl.u32 %v3863, 5
        %v3865 = vand.u32 %v3863, 31
        %v3866 = vsub.s32 32, %v3865
        %v3867 = vshrl.u32 683565275, %v3866
        %v3868 = vshll.u32 683565275, %v3865
        %v3869 = vshrl.u32 2475754826, %v3866
        %v3870 = vor.u32 %v3868, %v3869
        %v3871 = vshll.u32 2475754826, %v3865
        %v3872 = vshrl.u32 2131351028, %v3866
        %v3873 = vor.u32 %v3871, %v3872
        %v3874 = vshll.u32 2131351028, %v3865
        %v3875 = vshrl.u32 2102212464, %v3866
        %v3876 = vor.u32 %v3874, %v3875
        %v3877 = vshll.u32 2102212464, %v3865
        %v3878 = vshrl.u32 920167782, %v3866
        %v3879 = vor.u32 %v3877, %v3878
        %v3880 = vshll.u32 920167782, %v3865
        %v3881 = vshrl.u32 1326507024, %v3866
        %v3882 = vor.u32 %v3880, %v3881
        %vm3883 = vcmp.lt.s32.totalorder %v3864, 1
        %vm3884 = vcmp.lt.s32.totalorder %v3864, 2
        %vm3885 = vcmp.lt.s32.totalorder %v3864, 3
        %vm3886 = vcmp.lt.s32.totalorder %v3864, 4
        %v3887 = vsel %vm3883, %v3867, %v3870
        %v3888 = vsel %vm3886, %v3876, 2102212464
        %v3889 = vsel %vm3885, %v3873, %v3888
        %v3890 = vsel %vm3884, %v3887, %v3889
        %v3891 = vsel %vm3883, %v3870, %v3873
        %v3892 = vsel %vm3886, %v3879, 920167782
        %v3893 = vsel %vm3885, %v3876, %v3892
        %v3894 = vsel %vm3884, %v3891, %v3893
        %v3895 = vsel %vm3883, %v3873, %v3876
        %v3896 = vsel %vm3886, %v3882, 1326507024
        %v3897 = vsel %vm3885, %v3879, %v3896
        %v3898 = vsel %vm3884, %v3895, %v3897
        %v3899 = vshll.u32 %v3859, 8
        %v3900 = vand.u32 %v3899, 65535
        %v3901 = vshrl.u32 %v3899, 16
        %v3902 = vand.u32 %v3898, 65535
        %v3903 = vshrl.u32 %v3898, 16
        %v3904 = vmul.u32 %v3900, %v3902
        %v3905 = vmul.u32 %v3900, %v3903
        %v3906 = vmul.u32 %v3901, %v3902
        %v3907 = vmul.u32 %v3901, %v3903
        %v3908 = vshll.u32 %v3905, 16
        %v3909 = vshrl.u32 %v3905, 16
        %v3910 = vshll.u32 %v3906, 16
        %v3911 = vshrl.u32 %v3906, 16
        %vm3912 = vc.u32 %v3904, %v3908
        %v3913 = vsel %vm3912, 1, 0
        %v3914 = vadd.s32 %v3904, %v3908
        %v3915 = vadd.s32 %v3907, %v3913
        %vm3916 = vc.u32 %v3914, %v3910
        %v3917 = vsel %vm3916, 1, 0
        %v3918 = vadd.s32 %v3914, %v3910
        %v3919 = vadd.s32 %v3915, %v3917
        %v3920 = vadd.s32 %v3919, %v3909
        %v3921 = vadd.s32 %v3920, %v3911
        %v3922 = vand.u32 %v3899, 65535
        %v3923 = vshrl.u32 %v3899, 16
        %v3924 = vand.u32 %v3894, 65535
        %v3925 = vshrl.u32 %v3894, 16
        %v3926 = vmul.u32 %v3922, %v3924
        %v3927 = vmul.u32 %v3922, %v3925
        %v3928 = vmul.u32 %v3923, %v3924
        %v3929 = vmul.u32 %v3923, %v3925
        %v3930 = vshll.u32 %v3927, 16
        %v3931 = vshrl.u32 %v3927, 16
        %v3932 = vshll.u32 %v3928, 16
        %v3933 = vshrl.u32 %v3928, 16
        %vm3934 = vc.u32 %v3926, %v3930
        %v3935 = vsel %vm3934, 1, 0
        %v3936 = vadd.s32 %v3926, %v3930
        %v3937 = vadd.s32 %v3929, %v3935
        %vm3938 = vc.u32 %v3936, %v3932
        %v3939 = vsel %vm3938, 1, 0
        %v3940 = vadd.s32 %v3936, %v3932
        %v3941 = vadd.s32 %v3937, %v3939
        %v3942 = vadd.s32 %v3941, %v3931
        %v3943 = vadd.s32 %v3942, %v3933
        %v3944 = vmul.u32 %v3899, %v3890
        %v3945 = vadd.s32 %v3921, %v3940
        %vm3946 = vc.u32 %v3921, %v3940
        %v3947 = vadd.s32 %v3943, 1
        %v3948 = vsel %vm3946, %v3947, %v3943
        %v3949 = vadd.s32 %v3944, %v3948
        %v3950 = vadd.s32 %v3949, 536870912
        %v3951 = vshrl.u32 %v3950, 30
        %v3952 = vshll.u32 %v3951, 30
        %v3953 = vsub.s32 %v3949, %v3952
        %vm3954 = vcmp.lt.s32.totalorder %v3953, 0
        %v3955 = vsub.s32 0, %v3953
        %v3956 = vsel %vm3954, %v3955, %v3953
        %v3957 = vclz %v3956
        %v3958 = vsub.s32 %v3957, 2
        %vm3959 = vcmp.gt.s32.totalorder 0, %v3958
        %v3960 = vsel %vm3959, 0, %v3958
        %v3961 = vsub.s32 32, %v3960
        %v3962 = vshll.u32 %v3953, %v3960
        %v3963 = vshrl.u32 %v3945, %v3961
        %v3964 = vor.u32 %v3962, %v3963
        %v3965 = vsub.s32 4294967266, %v3960
        %v3966 = vadd.s32 %v3965, 127
        %v3967 = vshll.u32 %v3966, 23
        %v3968 = vor.u32 4788187, %v3967
        %v3969 = vand.u32 2147483647, %v3968
        %v3971 = vcvt.s32.f32 %v3964
        %v3972 = vmul.f32 %v3971, %v3969
        %v3973 = vxor.u32 %v3972, 2147483648
        %v3974 = vsel %vm3853, %v3973, %v3972
        %v3975 = vsub.s32 4, %v3951
        %v3976 = vsel %vm3853, %v3975, %v3951
        %v3977 = vsel %vm3852, %v427, %v3974
        %v3978 = vsel %vm3852, 0, %v3976
        %v3979 = vmul.f32 %v3977, %v3977
        %v3980 = vmul.f32 %v3979, -0.001358992
        %v3981 = vadd.f32 %v3980, 0.041655596
        %v3982 = vmul.f32 %v3979, %v3981
        %v3983 = vadd.f32 %v3982, -0.4999988
        %v3984 = vmul.f32 %v3979, %v3983
        %v3985 = vadd.f32 1.0, %v3984
        %v3986 = vmul.f32 %v3977, %v3977
        %v3987 = vmul.f32 %v3986, -0.00019511016
        %v3988 = vadd.f32 %v3987, 0.008332121
        %v3989 = vmul.f32 %v3986, %v3988
        %v3990 = vadd.f32 %v3989, -0.16666654
        %v3991 = vmul.f32 %v3986, %v3990
        %v3992 = vadd.f32 %v3991, 1.0
        %v3993 = vmul.f32 %v3992, %v3977
        %vm3994 = vweird.f32 %v427
        %v3995 = vadd.s32 %v3978, 3
        %v3996 = vand.u32 %v3995, 3
        %vm3997 = vcmp.lt.s32.totalorder %v3996, 2
        %vm3998 = vcmp.eq.s32.totalorder %v3996, 0
        %v3999 = vxor.u32 %v3993, 2147483648
        %v4000 = vsel %vm3998, %v3985, %v3999
        %vm4001 = vcmp.eq.s32.totalorder %v3996, 2
        %v4002 = vxor.u32 %v3985, 2147483648
        %v4003 = vsel %vm4001, %v4002, %v3993
        %v4004 = vsel %vm3997, %v4000, %v4003
        %v4005 = vsel %vm3994, nan, %v4004
        %v4006 = vand.u32 2147483647, %v428
        %vm4007 = vcmp.le.f32.partialorder %v4006, 0.7853982
        %vm4008 = vcmp.lt.s32.totalorder %v428, 0
        %v4009 = vand.u32 %v428, 2139095040
        %v4010 = vshrl.u32 %v4009, 23
        %v4011 = vsub.s32 %v4010, 127
        %v4012 = vand.u32 2147483647, %v428
        %v4013 = vand.u32 %v4012, 8388607
        %v4014 = vor.u32 %v4013, 8388608
        %v4015 = vsub.s32 0, %v4014
        %v4016 = vadd.s32 %v4011, 1
        %vm4017 = vcmp.gt.s32.totalorder %v4016, 0
        %v4018 = vsel %vm4017, %v4016, 0
        %v4019 = vshrl.u32 %v4018, 5
        %v4020 = vand.u32 %v4018, 31
        %v4021 = vsub.s32 32, %v4020
        %v4022 = vshrl.u32 683565275, %v4021
        %v4023 = vshll.u32 683565275, %v4020
        %v4024 = vshrl.u32 2475754826, %v4021
        %v4025 = vor.u32 %v4023, %v4024
        %v4026 = vshll.u32 2475754826, %v4020
        %v4027 = vshrl.u32 2131351028, %v4021
        %v4028 = vor.u32 %v4026, %v4027
        %v4029 = vshll.u32 2131351028, %v4020
        %v4030 = vshrl.u32 2102212464, %v4021
        %v4031 = vor.u32 %v4029, %v4030
        %v4032 = vshll.u32 2102212464, %v4020
        %v4033 = vshrl.u32 920167782, %v4021
        %v4034 = vor.u32 %v4032, %v4033
        %v4035 = vshll.u32 920167782, %v4020
        %v4036 = vshrl.u32 1326507024, %v4021
        %v4037 = vor.u32 %v4035, %v4036
        %vm4038 = vcmp.lt.s32.totalorder %v4019, 1
        %vm4039 = vcmp.lt.s32.totalorder %v4019, 2
        %vm4040 = vcmp.lt.s32.totalorder %v4019, 3
        %vm4041 = vcmp.lt.s32.totalorder %v4019, 4
        %v4042 = vsel %vm4038, %v4022, %v4025
        %v4043 = vsel %vm4041, %v4031, 2102212464
        %v4044 = vsel %vm4040, %v4028, %v4043
        %v4045 = vsel %vm4039, %v4042, %v4044
        %v4046 = vsel %vm4038, %v4025, %v4028
        %v4047 = vsel %vm4041, %v4034, 920167782
        %v4048 = vsel %vm4040, %v4031, %v4047
        %v4049 = vsel %vm4039, %v4046, %v4048
        %v4050 = vsel %vm4038, %v4028, %v4031
        %v4051 = vsel %vm4041, %v4037, 1326507024
        %v4052 = vsel %vm4040, %v4034, %v4051
        %v4053 = vsel %vm4039, %v4050, %v4052
        %v4054 = vshll.u32 %v4014, 8
        %v4055 = vand.u32 %v4054, 65535
        %v4056 = vshrl.u32 %v4054, 16
        %v4057 = vand.u32 %v4053, 65535
        %v4058 = vshrl.u32 %v4053, 16
        %v4059 = vmul.u32 %v4055, %v4057
        %v4060 = vmul.u32 %v4055, %v4058
        %v4061 = vmul.u32 %v4056, %v4057
        %v4062 = vmul.u32 %v4056, %v4058
        %v4063 = vshll.u32 %v4060, 16
        %v4064 = vshrl.u32 %v4060, 16
        %v4065 = vshll.u32 %v4061, 16
        %v4066 = vshrl.u32 %v4061, 16
        %vm4067 = vc.u32 %v4059, %v4063
        %v4068 = vsel %vm4067, 1, 0
        %v4069 = vadd.s32 %v4059, %v4063
        %v4070 = vadd.s32 %v4062, %v4068
        %vm4071 = vc.u32 %v4069, %v4065
        %v4072 = vsel %vm4071, 1, 0
        %v4073 = vadd.s32 %v4069, %v4065
        %v4074 = vadd.s32 %v4070, %v4072
        %v4075 = vadd.s32 %v4074, %v4064
        %v4076 = vadd.s32 %v4075, %v4066
        %v4077 = vand.u32 %v4054, 65535
        %v4078 = vshrl.u32 %v4054, 16
        %v4079 = vand.u32 %v4049, 65535
        %v4080 = vshrl.u32 %v4049, 16
        %v4081 = vmul.u32 %v4077, %v4079
        %v4082 = vmul.u32 %v4077, %v4080
        %v4083 = vmul.u32 %v4078, %v4079
        %v4084 = vmul.u32 %v4078, %v4080
        %v4085 = vshll.u32 %v4082, 16
        %v4086 = vshrl.u32 %v4082, 16
        %v4087 = vshll.u32 %v4083, 16
        %v4088 = vshrl.u32 %v4083, 16
        %vm4089 = vc.u32 %v4081, %v4085
        %v4090 = vsel %vm4089, 1, 0
        %v4091 = vadd.s32 %v4081, %v4085
        %v4092 = vadd.s32 %v4084, %v4090
        %vm4093 = vc.u32 %v4091, %v4087
        %v4094 = vsel %vm4093, 1, 0
        %v4095 = vadd.s32 %v4091, %v4087
        %v4096 = vadd.s32 %v4092, %v4094
        %v4097 = vadd.s32 %v4096, %v4086
        %v4098 = vadd.s32 %v4097, %v4088
        %v4099 = vmul.u32 %v4054, %v4045
        %v4100 = vadd.s32 %v4076, %v4095
        %vm4101 = vc.u32 %v4076, %v4095
        %v4102 = vadd.s32 %v4098, 1
        %v4103 = vsel %vm4101, %v4102, %v4098
        %v4104 = vadd.s32 %v4099, %v4103
        %v4105 = vadd.s32 %v4104, 536870912
        %v4106 = vshrl.u32 %v4105, 30
        %v4107 = vshll.u32 %v4106, 30
        %v4108 = vsub.s32 %v4104, %v4107
        %vm4109 = vcmp.lt.s32.totalorder %v4108, 0
        %v4110 = vsub.s32 0, %v4108
        %v4111 = vsel %vm4109, %v4110, %v4108
        %v4112 = vclz %v4111
        %v4113 = vsub.s32 %v4112, 2
        %vm4114 = vcmp.gt.s32.totalorder 0, %v4113
        %v4115 = vsel %vm4114, 0, %v4113
        %v4116 = vsub.s32 32, %v4115
        %v4117 = vshll.u32 %v4108, %v4115
        %v4118 = vshrl.u32 %v4100, %v4116
        %v4119 = vor.u32 %v4117, %v4118
        %v4120 = vsub.s32 4294967266, %v4115
        %v4121 = vadd.s32 %v4120, 127
        %v4122 = vshll.u32 %v4121, 23
        %v4123 = vor.u32 4788187, %v4122
        %v4124 = vand.u32 2147483647, %v4123
        %v4126 = vcvt.s32.f32 %v4119
        %v4127 = vmul.f32 %v4126, %v4124
        %v4128 = vxor.u32 %v4127, 2147483648
        %v4129 = vsel %vm4008, %v4128, %v4127
        %v4130 = vsub.s32 4, %v4106
        %v4131 = vsel %vm4008, %v4130, %v4106
        %v4132 = vsel %vm4007, %v428, %v4129
        %v4133 = vsel %vm4007, 0, %v4131
        %v4134 = vmul.f32 %v4132, %v4132
        %v4135 = vmul.f32 %v4134, -0.001358992
        %v4136 = vadd.f32 %v4135, 0.041655596
        %v4137 = vmul.f32 %v4134, %v4136
        %v4138 = vadd.f32 %v4137, -0.4999988
        %v4139 = vmul.f32 %v4134, %v4138
        %v4140 = vadd.f32 1.0, %v4139
        %v4141 = vmul.f32 %v4132, %v4132
        %v4142 = vmul.f32 %v4141, -0.00019511016
        %v4143 = vadd.f32 %v4142, 0.008332121
        %v4144 = vmul.f32 %v4141, %v4143
        %v4145 = vadd.f32 %v4144, -0.16666654
        %v4146 = vmul.f32 %v4141, %v4145
        %v4147 = vadd.f32 %v4146, 1.0
        %v4148 = vmul.f32 %v4147, %v4132
        %vm4149 = vweird.f32 %v428
        %v4150 = vadd.s32 %v4133, 3
        %v4151 = vand.u32 %v4150, 3
        %vm4152 = vcmp.lt.s32.totalorder %v4151, 2
        %vm4153 = vcmp.eq.s32.totalorder %v4151, 0
        %v4154 = vxor.u32 %v4148, 2147483648
        %v4155 = vsel %vm4153, %v4140, %v4154
        %vm4156 = vcmp.eq.s32.totalorder %v4151, 2
        %v4157 = vxor.u32 %v4140, 2147483648
        %v4158 = vsel %vm4156, %v4157, %v4148
        %v4159 = vsel %vm4152, %v4155, %v4158
        %v4160 = vsel %vm4149, nan, %v4159
        %v4161 = vld [vmem:[%s1 + $0x8] sm:$0xff]
        %4163 = vset.pattern.permute.xlu0 0
        %4164 = vperm.xlu0 %4163, %v4161
        %v4165 = vpop.permute.xlu0 %4164
        %v4168 = vperm.slane %v231, 0
        %v4169 = vperm.slane %v231, 1
        %v4170 = vperm.slane %v231, 2
        %v4171 = vperm.slane %v231, 3
        %v4176 = vmul.f32 %v4165, %v4168
        %v4177 = vmul.f32 %v4165, %v4169
        %v4178 = vmul.f32 %v4165, %v4170
        %v4179 = vmul.f32 %v4165, %v4171
        %4180 = vset.pattern.permute.xlu0 1
        %4181 = vperm.xlu0 %4180, %v4161
        %v4182 = vpop.permute.xlu0 %4181
        %v4184 = vadd.f32 %v4176, %v4182
        %v4185 = vadd.f32 %v4177, %v4182
        %v4186 = vadd.f32 %v4178, %v4182
        %v4187 = vadd.f32 %v4179, %v4182
        %v4188 = vmax.f32 %v4184, 0.0
        %v4189 = vmax.f32 %v4185, 0.0
        %v4190 = vmax.f32 %v4186, 0.0
        %v4191 = vmax.f32 %v4187, 0.0
        %v4192 = vld [vmem:[%s1 + $0x50] sm:$0xff]
        %v4193 = vld [vmem:[%s1 + $0x58] sm:$0xff]
        %v4194 = vld [vmem:[%s1 + $0x60] sm:$0xff]
        %v4195 = vld [vmem:[%s1 + $0x68] sm:$0xff]
        %v4196 = vld [vmem:[%s1 + $0x70] sm:$0xff]
        %v4197 = vld [vmem:[%s1 + $0x78] sm:$0xff]
        %v4198 = vld [vmem:[%s1 + $0x80] sm:$0xff]
        %v4199 = vld [vmem:[%s1 + $0x88] sm:$0xff]
        %4201 = vset.pattern.permute.xlu0 24
        %4202 = vperm.xlu0 %4201, %v4192
        %v4203 = vpop.permute.xlu0 %4202
        %4206 = vset.pattern.permute.xlu0 24
        %4207 = vperm.xlu0 %4206, %v4193
        %v4208 = vpop.permute.xlu0 %4207
        %4211 = vset.pattern.permute.xlu0 24
        %4212 = vperm.xlu0 %4211, %v4194
        %v4213 = vpop.permute.xlu0 %4212
        %4216 = vset.pattern.permute.xlu0 24
        %4217 = vperm.xlu0 %4216, %v4195
        %v4218 = vpop.permute.xlu0 %4217
        %4221 = vset.pattern.permute.xlu0 24
        %4222 = vperm.xlu0 %4221, %v4196
        %v4223 = vpop.permute.xlu0 %4222
        %4226 = vset.pattern.permute.xlu0 24
        %4227 = vperm.xlu0 %4226, %v4197
        %v4228 = vpop.permute.xlu0 %4227
        %4231 = vset.pattern.permute.xlu0 24
        %4232 = vperm.xlu0 %4231, %v4198
        %v4233 = vpop.permute.xlu0 %4232
        %4236 = vset.pattern.permute.xlu0 24
        %4237 = vperm.xlu0 %4236, %v4199
        %v4238 = vpop.permute.xlu0 %4237
        %vm4240 = vcmask 195584
        %v4241 = vsel %vm4240, %v4192, 0
        %v4243 = vsel %vm4240, %v4193, 0
        %v4245 = vsel %vm4240, %v4194, 0
        %v4247 = vsel %vm4240, %v4195, 0
        %v4249 = vsel %vm4240, %v4196, 0
        %v4251 = vsel %vm4240, %v4197, 0
        %v4253 = vsel %vm4240, %v4198, 0
        %v4255 = vsel %vm4240, %v4199, 0
        %4257 = vmatpush.msra.mxu0 0.0
        %4258 = vmatpush.msra.mxu0 0.0
        %4259 = vmatpush.msra.mxu0 0.0
        %4260 = vmatpush.msra.mxu0 0.0
        %4261 = vmatpush.msra.mxu0 0.0
        %4262 = vmatpush.msra.mxu0 0.0
        %4263 = vmatpush.msra.mxu0 0.0
        %4264 = vmatpush.msra.mxu0 0.0
        %4265 = vmatpush.msra.mxu0 0.0
        %4266 = vmatpush.msra.mxu0 0.0
        %4267 = vmatpush.msra.mxu0 0.0
        %4268 = vmatpush.msra.mxu0 0.0
        %4269 = vmatpush.msra.mxu0 0.0
        %4270 = vmatpush.msra.mxu0 %v2297
        %4271 = vmatpush.msra.mxu0 %v2293
        %4272 = vmatpush.msra.mxu0 %v2289
        %4273 = vmatmul.f32.gmra.mxu0 %v4241
        %v4274 = vpop.f32.mrf.mxu0
        %v4275 = vadd.f32 %v4203, %v4274
        %4276 = vmatmul.f32.gmra.mxu0 %v4243
        %v4277 = vpop.f32.mrf.mxu0
        %v4278 = vadd.f32 %v4208, %v4277
        %4279 = vmatmul.f32.gmra.mxu0 %v4245
        %v4280 = vpop.f32.mrf.mxu0
        %v4281 = vadd.f32 %v4213, %v4280
        %4282 = vmatmul.f32.gmra.mxu0 %v4247
        %v4283 = vpop.f32.mrf.mxu0
        %v4284 = vadd.f32 %v4218, %v4283
        %4285 = vmatmul.f32.gmra.mxu0 %v4249
        %v4286 = vpop.f32.mrf.mxu0
        %v4287 = vadd.f32 %v4223, %v4286
        %4288 = vmatmul.f32.gmra.mxu0 %v4251
        %v4289 = vpop.f32.mrf.mxu0
        %v4290 = vadd.f32 %v4228, %v4289
        %4291 = vmatmul.f32.gmra.mxu0 %v4253
        %v4292 = vpop.f32.mrf.mxu0
        %v4293 = vadd.f32 %v4233, %v4292
        %4294 = vmatmul.f32.gmra.mxu0 %v4255
        %v4295 = vpop.f32.mrf.mxu0
        %v4296 = vadd.f32 %v4238, %v4295
        %4297 = vdwg.mxu0
        %4298 = vmatpush.msra.mxu0 0.0
        %4299 = vmatpush.msra.mxu0 0.0
        %4300 = vmatpush.msra.mxu0 0.0
        %4301 = vmatpush.msra.mxu0 0.0
        %4302 = vmatpush.msra.mxu0 0.0
        %4303 = vmatpush.msra.mxu0 0.0
        %4304 = vmatpush.msra.mxu0 0.0
        %4305 = vmatpush.msra.mxu0 0.0
        %4306 = vmatpush.msra.mxu0 0.0
        %4307 = vmatpush.msra.mxu0 0.0
        %4308 = vmatpush.msra.mxu0 0.0
        %4309 = vmatpush.msra.mxu0 0.0
        %4310 = vmatpush.msra.mxu0 0.0
        %4311 = vmatpush.msra.mxu0 %v2298
        %4312 = vmatpush.msra.mxu0 %v2294
        %4313 = vmatpush.msra.mxu0 %v2290
        %4314 = vmatmul.f32.gmra.mxu0 %v4241
        %v4315 = vpop.f32.mrf.mxu0
        %v4316 = vadd.f32 %v4203, %v4315
        %4317 = vmatmul.f32.gmra.mxu0 %v4243
        %v4318 = vpop.f32.mrf.mxu0
        %v4319 = vadd.f32 %v4208, %v4318
        %4320 = vmatmul.f32.gmra.mxu0 %v4245
        %v4321 = vpop.f32.mrf.mxu0
        %v4322 = vadd.f32 %v4213, %v4321
        %4323 = vmatmul.f32.gmra.mxu0 %v4247
        %v4324 = vpop.f32.mrf.mxu0
        %v4325 = vadd.f32 %v4218, %v4324
        %4326 = vmatmul.f32.gmra.mxu0 %v4249
        %v4327 = vpop.f32.mrf.mxu0
        %v4328 = vadd.f32 %v4223, %v4327
        %4329 = vmatmul.f32.gmra.mxu0 %v4251
        %v4330 = vpop.f32.mrf.mxu0
        %v4331 = vadd.f32 %v4228, %v4330
        %4332 = vmatmul.f32.gmra.mxu0 %v4253
        %v4333 = vpop.f32.mrf.mxu0
        %v4334 = vadd.f32 %v4233, %v4333
        %4335 = vmatmul.f32.gmra.mxu0 %v4255
        %v4336 = vpop.f32.mrf.mxu0
        %v4337 = vadd.f32 %v4238, %v4336
        %4338 = vdwg.mxu0
        %4339 = vmatpush.msra.mxu0 0.0
        %4340 = vmatpush.msra.mxu0 0.0
        %4341 = vmatpush.msra.mxu0 0.0
        %4342 = vmatpush.msra.mxu0 0.0
        %4343 = vmatpush.msra.mxu0 0.0
        %4344 = vmatpush.msra.mxu0 0.0
        %4345 = vmatpush.msra.mxu0 0.0
        %4346 = vmatpush.msra.mxu0 0.0
        %4347 = vmatpush.msra.mxu0 0.0
        %4348 = vmatpush.msra.mxu0 0.0
        %4349 = vmatpush.msra.mxu0 0.0
        %4350 = vmatpush.msra.mxu0 0.0
        %4351 = vmatpush.msra.mxu0 0.0
        %4352 = vmatpush.msra.mxu0 %v2299
        %4353 = vmatpush.msra.mxu0 %v2295
        %4354 = vmatpush.msra.mxu0 %v2291
        %4355 = vmatmul.f32.gmra.mxu0 %v4241
        %v4356 = vpop.f32.mrf.mxu0
        %v4357 = vadd.f32 %v4203, %v4356
        %4358 = vmatmul.f32.gmra.mxu0 %v4243
        %v4359 = vpop.f32.mrf.mxu0
        %v4360 = vadd.f32 %v4208, %v4359
        %4361 = vmatmul.f32.gmra.mxu0 %v4245
        %v4362 = vpop.f32.mrf.mxu0
        %v4363 = vadd.f32 %v4213, %v4362
        %4364 = vmatmul.f32.gmra.mxu0 %v4247
        %v4365 = vpop.f32.mrf.mxu0
        %v4366 = vadd.f32 %v4218, %v4365
        %4367 = vmatmul.f32.gmra.mxu0 %v4249
        %v4368 = vpop.f32.mrf.mxu0
        %v4369 = vadd.f32 %v4223, %v4368
        %4370 = vmatmul.f32.gmra.mxu0 %v4251
        %v4371 = vpop.f32.mrf.mxu0
        %v4372 = vadd.f32 %v4228, %v4371
        %4373 = vmatmul.f32.gmra.mxu0 %v4253
        %v4374 = vpop.f32.mrf.mxu0
        %v4375 = vadd.f32 %v4233, %v4374
        %4376 = vmatmul.f32.gmra.mxu0 %v4255
        %v4377 = vpop.f32.mrf.mxu0
        %v4378 = vadd.f32 %v4238, %v4377
        %4379 = vdwg.mxu0
        %4380 = vmatpush.msra.mxu0 0.0
        %4381 = vmatpush.msra.mxu0 0.0
        %4382 = vmatpush.msra.mxu0 0.0
        %4383 = vmatpush.msra.mxu0 0.0
        %4384 = vmatpush.msra.mxu0 0.0
        %4385 = vmatpush.msra.mxu0 0.0
        %4386 = vmatpush.msra.mxu0 0.0
        %4387 = vmatpush.msra.mxu0 0.0
        %4388 = vmatpush.msra.mxu0 0.0
        %4389 = vmatpush.msra.mxu0 0.0
        %4390 = vmatpush.msra.mxu0 0.0
        %4391 = vmatpush.msra.mxu0 0.0
        %4392 = vmatpush.msra.mxu0 0.0
        %4393 = vmatpush.msra.mxu0 %v2300
        %4394 = vmatpush.msra.mxu0 %v2296
        %4395 = vmatpush.msra.mxu0 %v2292
        %4396 = vmatmul.f32.gmra.mxu0 %v4241
        %v4397 = vpop.f32.mrf.mxu0
        %v4398 = vadd.f32 %v4203, %v4397
        %4399 = vmatmul.f32.gmra.mxu0 %v4243
        %v4400 = vpop.f32.mrf.mxu0
        %v4401 = vadd.f32 %v4208, %v4400
        %4402 = vmatmul.f32.gmra.mxu0 %v4245
        %v4403 = vpop.f32.mrf.mxu0
        %v4404 = vadd.f32 %v4213, %v4403
        %4405 = vmatmul.f32.gmra.mxu0 %v4247
        %v4406 = vpop.f32.mrf.mxu0
        %v4407 = vadd.f32 %v4218, %v4406
        %4408 = vmatmul.f32.gmra.mxu0 %v4249
        %v4409 = vpop.f32.mrf.mxu0
        %v4410 = vadd.f32 %v4223, %v4409
        %4411 = vmatmul.f32.gmra.mxu0 %v4251
        %v4412 = vpop.f32.mrf.mxu0
        %v4413 = vadd.f32 %v4228, %v4412
        %4414 = vmatmul.f32.gmra.mxu0 %v4253
        %v4415 = vpop.f32.mrf.mxu0
        %v4416 = vadd.f32 %v4233, %v4415
        %4417 = vmatmul.f32.gmra.mxu0 %v4255
        %v4418 = vpop.f32.mrf.mxu0
        %v4419 = vadd.f32 %v4238, %v4418
        %4420 = vdwg.mxu0
        %v4421 = vld [vmem:[%s1 + $0x10] sm:$0xff]
        %v4422 = vld [vmem:[%s1 + $0x18] sm:$0xff]
        %v4423 = vld [vmem:[%s1 + $0x20] sm:$0xff]
        %v4424 = vld [vmem:[%s1 + $0x28] sm:$0xff]
        %v4425 = vld [vmem:[%s1 + $0x30] sm:$0xff]
        %v4426 = vld [vmem:[%s1 + $0x38] sm:$0xff]
        %v4427 = vld [vmem:[%s1 + $0x40] sm:$0xff]
        %v4428 = vld [vmem:[%s1 + $0x48] sm:$0xff]
        %vm4429 = vcmask 23552
        %v4431 = vsel %vm4429, %v4421, 0
        %v4434 = vsel %vm4429, %v4422, 0
        %v4437 = vsel %vm4429, %v4423, 0
        %v4440 = vsel %vm4429, %v4424, 0
        %v4443 = vsel %vm4429, %v4425, 0
        %v4446 = vsel %vm4429, %v4426, 0
        %v4449 = vsel %vm4429, %v4427, 0
        %v4452 = vsel %vm4429, %v4428, 0
        %vm4454 = vcmask 1042432
        %v4456 = vsel %vm4454, %v226, 0
        %v4459 = vsel %vm4454, %v227, 0
        %v4462 = vsel %vm4454, %v228, 0
        %v4465 = vsel %vm4454, %v229, 0
        %4467 = vmatpush.msra.mxu0 0.0
        %4468 = vmatpush.msra.mxu0 0.0
        %4469 = vmatpush.msra.mxu0 0.0
        %4470 = vmatpush.msra.mxu0 0.0
        %4471 = vmatpush.msra.mxu0 0.0
        %4472 = vmatpush.msra.mxu0 0.0
        %4473 = vmatpush.msra.mxu0 0.0
        %4474 = vmatpush.msra.mxu0 0.0
        %4475 = vmatpush.msra.mxu0 0.0
        %4476 = vmatpush.msra.mxu0 0.0
        %4477 = vmatpush.msra.mxu0 0.0
        %4478 = vmatpush.msra.mxu0 0.0
        %4479 = vmatpush.msra.mxu0 0.0
        %4480 = vmatpush.msra.mxu0 0.0
        %4481 = vmatpush.msra.mxu0 0.0
        %4482 = vmatpush.msra.mxu0 %v4456
        %4483 = vmatmul.f32.gmra.mxu0 %v4431
        %v4484 = vpop.f32.mrf.mxu0
        %v4485 = vadd.f32 0.0, %v4484
        %4486 = vmatmul.f32.gmra.mxu0 %v4434
        %v4487 = vpop.f32.mrf.mxu0
        %v4488 = vadd.f32 0.0, %v4487
        %4489 = vmatmul.f32.gmra.mxu0 %v4437
        %v4490 = vpop.f32.mrf.mxu0
        %v4491 = vadd.f32 0.0, %v4490
        %4492 = vmatmul.f32.gmra.mxu0 %v4440
        %v4493 = vpop.f32.mrf.mxu0
        %v4494 = vadd.f32 0.0, %v4493
        %4495 = vmatmul.f32.gmra.mxu0 %v4443
        %v4496 = vpop.f32.mrf.mxu0
        %v4497 = vadd.f32 0.0, %v4496
        %4498 = vmatmul.f32.gmra.mxu0 %v4446
        %v4499 = vpop.f32.mrf.mxu0
        %v4500 = vadd.f32 0.0, %v4499
        %4501 = vmatmul.f32.gmra.mxu0 %v4449
        %v4502 = vpop.f32.mrf.mxu0
        %v4503 = vadd.f32 0.0, %v4502
        %4504 = vmatmul.f32.gmra.mxu0 %v4452
        %v4505 = vpop.f32.mrf.mxu0
        %v4506 = vadd.f32 0.0, %v4505
        %4507 = vdwg.mxu0
        %4508 = vmatpush.msra.mxu0 0.0
        %4509 = vmatpush.msra.mxu0 0.0
        %4510 = vmatpush.msra.mxu0 0.0
        %4511 = vmatpush.msra.mxu0 0.0
        %4512 = vmatpush.msra.mxu0 0.0
        %4513 = vmatpush.msra.mxu0 0.0
        %4514 = vmatpush.msra.mxu0 0.0
        %4515 = vmatpush.msra.mxu0 0.0
        %4516 = vmatpush.msra.mxu0 0.0
        %4517 = vmatpush.msra.mxu0 0.0
        %4518 = vmatpush.msra.mxu0 0.0
        %4519 = vmatpush.msra.mxu0 0.0
        %4520 = vmatpush.msra.mxu0 0.0
        %4521 = vmatpush.msra.mxu0 0.0
        %4522 = vmatpush.msra.mxu0 0.0
        %4523 = vmatpush.msra.mxu0 %v4459
        %4524 = vmatmul.f32.gmra.mxu0 %v4431
        %v4525 = vpop.f32.mrf.mxu0
        %v4526 = vadd.f32 0.0, %v4525
        %4527 = vmatmul.f32.gmra.mxu0 %v4434
        %v4528 = vpop.f32.mrf.mxu0
        %v4529 = vadd.f32 0.0, %v4528
        %4530 = vmatmul.f32.gmra.mxu0 %v4437
        %v4531 = vpop.f32.mrf.mxu0
        %v4532 = vadd.f32 0.0, %v4531
        %4533 = vmatmul.f32.gmra.mxu0 %v4440
        %v4534 = vpop.f32.mrf.mxu0
        %v4535 = vadd.f32 0.0, %v4534
        %4536 = vmatmul.f32.gmra.mxu0 %v4443
        %v4537 = vpop.f32.mrf.mxu0
        %v4538 = vadd.f32 0.0, %v4537
        %4539 = vmatmul.f32.gmra.mxu0 %v4446
        %v4540 = vpop.f32.mrf.mxu0
        %v4541 = vadd.f32 0.0, %v4540
        %4542 = vmatmul.f32.gmra.mxu0 %v4449
        %v4543 = vpop.f32.mrf.mxu0
        %v4544 = vadd.f32 0.0, %v4543
        %4545 = vmatmul.f32.gmra.mxu0 %v4452
        %v4546 = vpop.f32.mrf.mxu0
        %v4547 = vadd.f32 0.0, %v4546
        %4548 = vdwg.mxu0
        %4549 = vmatpush.msra.mxu0 0.0
        %4550 = vmatpush.msra.mxu0 0.0
        %4551 = vmatpush.msra.mxu0 0.0
        %4552 = vmatpush.msra.mxu0 0.0
        %4553 = vmatpush.msra.mxu0 0.0
        %4554 = vmatpush.msra.mxu0 0.0
        %4555 = vmatpush.msra.mxu0 0.0
        %4556 = vmatpush.msra.mxu0 0.0
        %4557 = vmatpush.msra.mxu0 0.0
        %4558 = vmatpush.msra.mxu0 0.0
        %4559 = vmatpush.msra.mxu0 0.0
        %4560 = vmatpush.msra.mxu0 0.0
        %4561 = vmatpush.msra.mxu0 0.0
        %4562 = vmatpush.msra.mxu0 0.0
        %4563 = vmatpush.msra.mxu0 0.0
        %4564 = vmatpush.msra.mxu0 %v4462
        %4565 = vmatmul.f32.gmra.mxu0 %v4431
        %v4566 = vpop.f32.mrf.mxu0
        %v4567 = vadd.f32 0.0, %v4566
        %4568 = vmatmul.f32.gmra.mxu0 %v4434
        %v4569 = vpop.f32.mrf.mxu0
        %v4570 = vadd.f32 0.0, %v4569
        %4571 = vmatmul.f32.gmra.mxu0 %v4437
        %v4572 = vpop.f32.mrf.mxu0
        %v4573 = vadd.f32 0.0, %v4572
        %4574 = vmatmul.f32.gmra.mxu0 %v4440
        %v4575 = vpop.f32.mrf.mxu0
        %v4576 = vadd.f32 0.0, %v4575
        %4577 = vmatmul.f32.gmra.mxu0 %v4443
        %v4578 = vpop.f32.mrf.mxu0
        %v4579 = vadd.f32 0.0, %v4578
        %4580 = vmatmul.f32.gmra.mxu0 %v4446
        %v4581 = vpop.f32.mrf.mxu0
        %v4582 = vadd.f32 0.0, %v4581
        %4583 = vmatmul.f32.gmra.mxu0 %v4449
        %v4584 = vpop.f32.mrf.mxu0
        %v4585 = vadd.f32 0.0, %v4584
        %4586 = vmatmul.f32.gmra.mxu0 %v4452
        %v4587 = vpop.f32.mrf.mxu0
        %v4588 = vadd.f32 0.0, %v4587
        %4589 = vdwg.mxu0
        %4590 = vmatpush.msra.mxu0 0.0
        %4591 = vmatpush.msra.mxu0 0.0
        %4592 = vmatpush.msra.mxu0 0.0
        %4593 = vmatpush.msra.mxu0 0.0
        %4594 = vmatpush.msra.mxu0 0.0
        %4595 = vmatpush.msra.mxu0 0.0
        %4596 = vmatpush.msra.mxu0 0.0
        %4597 = vmatpush.msra.mxu0 0.0
        %4598 = vmatpush.msra.mxu0 0.0
        %4599 = vmatpush.msra.mxu0 0.0
        %4600 = vmatpush.msra.mxu0 0.0
        %4601 = vmatpush.msra.mxu0 0.0
        %4602 = vmatpush.msra.mxu0 0.0
        %4603 = vmatpush.msra.mxu0 0.0
        %4604 = vmatpush.msra.mxu0 0.0
        %4605 = vmatpush.msra.mxu0 %v4465
        %4606 = vmatmul.f32.gmra.mxu0 %v4431
        %v4607 = vpop.f32.mrf.mxu0
        %v4608 = vadd.f32 0.0, %v4607
        %4609 = vmatmul.f32.gmra.mxu0 %v4434
        %v4610 = vpop.f32.mrf.mxu0
        %v4611 = vadd.f32 0.0, %v4610
        %4612 = vmatmul.f32.gmra.mxu0 %v4437
        %v4613 = vpop.f32.mrf.mxu0
        %v4614 = vadd.f32 0.0, %v4613
        %4615 = vmatmul.f32.gmra.mxu0 %v4440
        %v4616 = vpop.f32.mrf.mxu0
        %v4617 = vadd.f32 0.0, %v4616
        %4618 = vmatmul.f32.gmra.mxu0 %v4443
        %v4619 = vpop.f32.mrf.mxu0
        %v4620 = vadd.f32 0.0, %v4619
        %4621 = vmatmul.f32.gmra.mxu0 %v4446
        %v4622 = vpop.f32.mrf.mxu0
        %v4623 = vadd.f32 0.0, %v4622
        %4624 = vmatmul.f32.gmra.mxu0 %v4449
        %v4625 = vpop.f32.mrf.mxu0
        %v4626 = vadd.f32 0.0, %v4625
        %4627 = vmatmul.f32.gmra.mxu0 %v4452
        %v4628 = vpop.f32.mrf.mxu0
        %v4629 = vadd.f32 0.0, %v4628
        %4630 = vdwg.mxu0
        %v4631 = vadd.f32 %v4275, %v4485
        %v4632 = vadd.f32 %v4316, %v4526
        %v4633 = vadd.f32 %v4357, %v4567
        %v4634 = vadd.f32 %v4398, %v4608
        %v4635 = vadd.f32 %v4278, %v4488
        %v4636 = vadd.f32 %v4319, %v4529
        %v4637 = vadd.f32 %v4360, %v4570
        %v4638 = vadd.f32 %v4401, %v4611
        %v4639 = vadd.f32 %v4281, %v4491
        %v4640 = vadd.f32 %v4322, %v4532
        %v4641 = vadd.f32 %v4363, %v4573
        %v4642 = vadd.f32 %v4404, %v4614
        %v4643 = vadd.f32 %v4284, %v4494
        %v4644 = vadd.f32 %v4325, %v4535
        %v4645 = vadd.f32 %v4366, %v4576
        %v4646 = vadd.f32 %v4407, %v4617
        %v4647 = vadd.f32 %v4287, %v4497
        %v4648 = vadd.f32 %v4328, %v4538
        %v4649 = vadd.f32 %v4369, %v4579
        %v4650 = vadd.f32 %v4410, %v4620
        %v4651 = vadd.f32 %v4290, %v4500
        %v4652 = vadd.f32 %v4331, %v4541
        %v4653 = vadd.f32 %v4372, %v4582
        %v4654 = vadd.f32 %v4413, %v4623
        %v4655 = vadd.f32 %v4293, %v4503
        %v4656 = vadd.f32 %v4334, %v4544
        %v4657 = vadd.f32 %v4375, %v4585
        %v4658 = vadd.f32 %v4416, %v4626
        %v4659 = vadd.f32 %v4296, %v4506
        %v4660 = vadd.f32 %v4337, %v4547
        %v4661 = vadd.f32 %v4378, %v4588
        %v4662 = vadd.f32 %v4419, %v4629
        %v4663 = vmax.f32 %v4631, 0.0
        %v4664 = vmax.f32 %v4632, 0.0
        %v4665 = vmax.f32 %v4633, 0.0
        %v4666 = vmax.f32 %v4634, 0.0
        %v4667 = vmax.f32 %v4635, 0.0
        %v4668 = vmax.f32 %v4636, 0.0
        %v4669 = vmax.f32 %v4637, 0.0
        %v4670 = vmax.f32 %v4638, 0.0
        %v4671 = vmax.f32 %v4639, 0.0
        %v4672 = vmax.f32 %v4640, 0.0
        %v4673 = vmax.f32 %v4641, 0.0
        %v4674 = vmax.f32 %v4642, 0.0
        %v4675 = vmax.f32 %v4643, 0.0
        %v4676 = vmax.f32 %v4644, 0.0
        %v4677 = vmax.f32 %v4645, 0.0
        %v4678 = vmax.f32 %v4646, 0.0
        %v4679 = vmax.f32 %v4647, 0.0
        %v4680 = vmax.f32 %v4648, 0.0
        %v4681 = vmax.f32 %v4649, 0.0
        %v4682 = vmax.f32 %v4650, 0.0
        %v4683 = vmax.f32 %v4651, 0.0
        %v4684 = vmax.f32 %v4652, 0.0
        %v4685 = vmax.f32 %v4653, 0.0
        %v4686 = vmax.f32 %v4654, 0.0
        %v4687 = vmax.f32 %v4655, 0.0
        %v4688 = vmax.f32 %v4656, 0.0
        %v4689 = vmax.f32 %v4657, 0.0
        %v4690 = vmax.f32 %v4658, 0.0
        %v4691 = vmax.f32 %v4659, 0.0
        %v4692 = vmax.f32 %v4660, 0.0
        %v4693 = vmax.f32 %v4661, 0.0
        %v4694 = vmax.f32 %v4662, 0.0
        %v4695 = vld [vmem:[%s1 + $0x90] sm:$0xff]
        %v4696 = vld [vmem:[%s1 + $0x98] sm:$0xff]
        %v4697 = vld [vmem:[%s1 + $0xa0] sm:$0xff]
        %v4698 = vld [vmem:[%s1 + $0xa8] sm:$0xff]
        %v4699 = vld [vmem:[%s1 + $0xb0] sm:$0xff]
        %v4700 = vld [vmem:[%s1 + $0xb8] sm:$0xff]
        %v4701 = vld [vmem:[%s1 + $0xc0] sm:$0xff]
        %v4702 = vld [vmem:[%s1 + $0xc8] sm:$0xff]
        %4704 = vset.pattern.permute.xlu0 64
        %4705 = vperm.xlu0 %4704, %v4695
        %v4706 = vpop.permute.xlu0 %4705
        %4709 = vset.pattern.permute.xlu0 64
        %4710 = vperm.xlu0 %4709, %v4696
        %v4711 = vpop.permute.xlu0 %4710
        %4714 = vset.pattern.permute.xlu0 64
        %4715 = vperm.xlu0 %4714, %v4697
        %v4716 = vpop.permute.xlu0 %4715
        %4719 = vset.pattern.permute.xlu0 64
        %4720 = vperm.xlu0 %4719, %v4698
        %v4721 = vpop.permute.xlu0 %4720
        %4724 = vset.pattern.permute.xlu0 64
        %4725 = vperm.xlu0 %4724, %v4699
        %v4726 = vpop.permute.xlu0 %4725
        %4729 = vset.pattern.permute.xlu0 64
        %4730 = vperm.xlu0 %4729, %v4700
        %v4731 = vpop.permute.xlu0 %4730
        %4734 = vset.pattern.permute.xlu0 64
        %4735 = vperm.xlu0 %4734, %v4701
        %v4736 = vpop.permute.xlu0 %4735
        %4739 = vset.pattern.permute.xlu0 64
        %4740 = vperm.xlu0 %4739, %v4702
        %v4741 = vpop.permute.xlu0 %4740
        %vm4743 = vcmask 523264
        %v4744 = vsel %vm4743, %v4695, 0
        %v4746 = vsel %vm4743, %v4696, 0
        %v4748 = vsel %vm4743, %v4697, 0
        %v4750 = vsel %vm4743, %v4698, 0
        %v4752 = vsel %vm4743, %v4699, 0
        %v4754 = vsel %vm4743, %v4700, 0
        %v4756 = vsel %vm4743, %v4701, 0
        %v4758 = vsel %vm4743, %v4702, 0
        %4760 = vmatpush.msra.mxu0 0.0
        %4761 = vmatpush.msra.mxu0 0.0
        %4762 = vmatpush.msra.mxu0 0.0
        %4763 = vmatpush.msra.mxu0 0.0
        %4764 = vmatpush.msra.mxu0 0.0
        %4765 = vmatpush.msra.mxu0 0.0
        %4766 = vmatpush.msra.mxu0 0.0
        %4767 = vmatpush.msra.mxu0 0.0
        %4768 = vmatpush.msra.mxu0 %v4691
        %4769 = vmatpush.msra.mxu0 %v4687
        %4770 = vmatpush.msra.mxu0 %v4683
        %4771 = vmatpush.msra.mxu0 %v4679
        %4772 = vmatpush.msra.mxu0 %v4675
        %4773 = vmatpush.msra.mxu0 %v4671
        %4774 = vmatpush.msra.mxu0 %v4667
        %4775 = vmatpush.msra.mxu0 %v4663
        %4776 = vmatmul.f32.gmra.mxu0 %v4744
        %v4777 = vpop.f32.mrf.mxu0
        %v4778 = vadd.f32 %v4706, %v4777
        %4779 = vmatmul.f32.gmra.mxu0 %v4746
        %v4780 = vpop.f32.mrf.mxu0
        %v4781 = vadd.f32 %v4711, %v4780
        %4782 = vmatmul.f32.gmra.mxu0 %v4748
        %v4783 = vpop.f32.mrf.mxu0
        %v4784 = vadd.f32 %v4716, %v4783
        %4785 = vmatmul.f32.gmra.mxu0 %v4750
        %v4786 = vpop.f32.mrf.mxu0
        %v4787 = vadd.f32 %v4721, %v4786
        %4788 = vmatmul.f32.gmra.mxu0 %v4752
        %v4789 = vpop.f32.mrf.mxu0
        %v4790 = vadd.f32 %v4726, %v4789
        %4791 = vmatmul.f32.gmra.mxu0 %v4754
        %v4792 = vpop.f32.mrf.mxu0
        %v4793 = vadd.f32 %v4731, %v4792
        %4794 = vmatmul.f32.gmra.mxu0 %v4756
        %v4795 = vpop.f32.mrf.mxu0
        %v4796 = vadd.f32 %v4736, %v4795
        %4797 = vmatmul.f32.gmra.mxu0 %v4758
        %v4798 = vpop.f32.mrf.mxu0
        %v4799 = vadd.f32 %v4741, %v4798
        %4800 = vdwg.mxu0
        %4801 = vmatpush.msra.mxu0 0.0
        %4802 = vmatpush.msra.mxu0 0.0
        %4803 = vmatpush.msra.mxu0 0.0
        %4804 = vmatpush.msra.mxu0 0.0
        %4805 = vmatpush.msra.mxu0 0.0
        %4806 = vmatpush.msra.mxu0 0.0
        %4807 = vmatpush.msra.mxu0 0.0
        %4808 = vmatpush.msra.mxu0 0.0
        %4809 = vmatpush.msra.mxu0 %v4692
        %4810 = vmatpush.msra.mxu0 %v4688
        %4811 = vmatpush.msra.mxu0 %v4684
        %4812 = vmatpush.msra.mxu0 %v4680
        %4813 = vmatpush.msra.mxu0 %v4676
        %4814 = vmatpush.msra.mxu0 %v4672
        %4815 = vmatpush.msra.mxu0 %v4668
        %4816 = vmatpush.msra.mxu0 %v4664
        %4817 = vmatmul.f32.gmra.mxu0 %v4744
        %v4818 = vpop.f32.mrf.mxu0
        %v4819 = vadd.f32 %v4706, %v4818
        %4820 = vmatmul.f32.gmra.mxu0 %v4746
        %v4821 = vpop.f32.mrf.mxu0
        %v4822 = vadd.f32 %v4711, %v4821
        %4823 = vmatmul.f32.gmra.mxu0 %v4748
        %v4824 = vpop.f32.mrf.mxu0
        %v4825 = vadd.f32 %v4716, %v4824
        %4826 = vmatmul.f32.gmra.mxu0 %v4750
        %v4827 = vpop.f32.mrf.mxu0
        %v4828 = vadd.f32 %v4721, %v4827
        %4829 = vmatmul.f32.gmra.mxu0 %v4752
        %v4830 = vpop.f32.mrf.mxu0
        %v4831 = vadd.f32 %v4726, %v4830
        %4832 = vmatmul.f32.gmra.mxu0 %v4754
        %v4833 = vpop.f32.mrf.mxu0
        %v4834 = vadd.f32 %v4731, %v4833
        %4835 = vmatmul.f32.gmra.mxu0 %v4756
        %v4836 = vpop.f32.mrf.mxu0
        %v4837 = vadd.f32 %v4736, %v4836
        %4838 = vmatmul.f32.gmra.mxu0 %v4758
        %v4839 = vpop.f32.mrf.mxu0
        %v4840 = vadd.f32 %v4741, %v4839
        %4841 = vdwg.mxu0
        %4842 = vmatpush.msra.mxu0 0.0
        %4843 = vmatpush.msra.mxu0 0.0
        %4844 = vmatpush.msra.mxu0 0.0
        %4845 = vmatpush.msra.mxu0 0.0
        %4846 = vmatpush.msra.mxu0 0.0
        %4847 = vmatpush.msra.mxu0 0.0
        %4848 = vmatpush.msra.mxu0 0.0
        %4849 = vmatpush.msra.mxu0 0.0
        %4850 = vmatpush.msra.mxu0 %v4693
        %4851 = vmatpush.msra.mxu0 %v4689
        %4852 = vmatpush.msra.mxu0 %v4685
        %4853 = vmatpush.msra.mxu0 %v4681
        %4854 = vmatpush.msra.mxu0 %v4677
        %4855 = vmatpush.msra.mxu0 %v4673
        %4856 = vmatpush.msra.mxu0 %v4669
        %4857 = vmatpush.msra.mxu0 %v4665
        %4858 = vmatmul.f32.gmra.mxu0 %v4744
        %v4859 = vpop.f32.mrf.mxu0
        %v4860 = vadd.f32 %v4706, %v4859
        %4861 = vmatmul.f32.gmra.mxu0 %v4746
        %v4862 = vpop.f32.mrf.mxu0
        %v4863 = vadd.f32 %v4711, %v4862
        %4864 = vmatmul.f32.gmra.mxu0 %v4748
        %v4865 = vpop.f32.mrf.mxu0
        %v4866 = vadd.f32 %v4716, %v4865
        %4867 = vmatmul.f32.gmra.mxu0 %v4750
        %v4868 = vpop.f32.mrf.mxu0
        %v4869 = vadd.f32 %v4721, %v4868
        %4870 = vmatmul.f32.gmra.mxu0 %v4752
        %v4871 = vpop.f32.mrf.mxu0
        %v4872 = vadd.f32 %v4726, %v4871
        %4873 = vmatmul.f32.gmra.mxu0 %v4754
        %v4874 = vpop.f32.mrf.mxu0
        %v4875 = vadd.f32 %v4731, %v4874
        %4876 = vmatmul.f32.gmra.mxu0 %v4756
        %v4877 = vpop.f32.mrf.mxu0
        %v4878 = vadd.f32 %v4736, %v4877
        %4879 = vmatmul.f32.gmra.mxu0 %v4758
        %v4880 = vpop.f32.mrf.mxu0
        %v4881 = vadd.f32 %v4741, %v4880
        %4882 = vdwg.mxu0
        %4883 = vmatpush.msra.mxu0 0.0
        %4884 = vmatpush.msra.mxu0 0.0
        %4885 = vmatpush.msra.mxu0 0.0
        %4886 = vmatpush.msra.mxu0 0.0
        %4887 = vmatpush.msra.mxu0 0.0
        %4888 = vmatpush.msra.mxu0 0.0
        %4889 = vmatpush.msra.mxu0 0.0
        %4890 = vmatpush.msra.mxu0 0.0
        %4891 = vmatpush.msra.mxu0 %v4694
        %4892 = vmatpush.msra.mxu0 %v4690
        %4893 = vmatpush.msra.mxu0 %v4686
        %4894 = vmatpush.msra.mxu0 %v4682
        %4895 = vmatpush.msra.mxu0 %v4678
        %4896 = vmatpush.msra.mxu0 %v4674
        %4897 = vmatpush.msra.mxu0 %v4670
        %4898 = vmatpush.msra.mxu0 %v4666
        %4899 = vmatmul.f32.gmra.mxu0 %v4744
        %v4900 = vpop.f32.mrf.mxu0
        %v4901 = vadd.f32 %v4706, %v4900
        %4902 = vmatmul.f32.gmra.mxu0 %v4746
        %v4903 = vpop.f32.mrf.mxu0
        %v4904 = vadd.f32 %v4711, %v4903
        %4905 = vmatmul.f32.gmra.mxu0 %v4748
        %v4906 = vpop.f32.mrf.mxu0
        %v4907 = vadd.f32 %v4716, %v4906
        %4908 = vmatmul.f32.gmra.mxu0 %v4750
        %v4909 = vpop.f32.mrf.mxu0
        %v4910 = vadd.f32 %v4721, %v4909
        %4911 = vmatmul.f32.gmra.mxu0 %v4752
        %v4912 = vpop.f32.mrf.mxu0
        %v4913 = vadd.f32 %v4726, %v4912
        %4914 = vmatmul.f32.gmra.mxu0 %v4754
        %v4915 = vpop.f32.mrf.mxu0
        %v4916 = vadd.f32 %v4731, %v4915
        %4917 = vmatmul.f32.gmra.mxu0 %v4756
        %v4918 = vpop.f32.mrf.mxu0
        %v4919 = vadd.f32 %v4736, %v4918
        %4920 = vmatmul.f32.gmra.mxu0 %v4758
        %v4921 = vpop.f32.mrf.mxu0
        %v4922 = vadd.f32 %v4741, %v4921
        %4923 = vdwg.mxu0
        %v4924 = vmax.f32 %v4778, 0.0
        %v4925 = vmax.f32 %v4819, 0.0
        %v4926 = vmax.f32 %v4860, 0.0
        %v4927 = vmax.f32 %v4901, 0.0
        %v4928 = vmax.f32 %v4781, 0.0
        %v4929 = vmax.f32 %v4822, 0.0
        %v4930 = vmax.f32 %v4863, 0.0
        %v4931 = vmax.f32 %v4904, 0.0
        %v4932 = vmax.f32 %v4784, 0.0
        %v4933 = vmax.f32 %v4825, 0.0
        %v4934 = vmax.f32 %v4866, 0.0
        %v4935 = vmax.f32 %v4907, 0.0
        %v4936 = vmax.f32 %v4787, 0.0
        %v4937 = vmax.f32 %v4828, 0.0
        %v4938 = vmax.f32 %v4869, 0.0
        %v4939 = vmax.f32 %v4910, 0.0
        %v4940 = vmax.f32 %v4790, 0.0
        %v4941 = vmax.f32 %v4831, 0.0
        %v4942 = vmax.f32 %v4872, 0.0
        %v4943 = vmax.f32 %v4913, 0.0
        %v4944 = vmax.f32 %v4793, 0.0
        %v4945 = vmax.f32 %v4834, 0.0
        %v4946 = vmax.f32 %v4875, 0.0
        %v4947 = vmax.f32 %v4916, 0.0
        %v4948 = vmax.f32 %v4796, 0.0
        %v4949 = vmax.f32 %v4837, 0.0
        %v4950 = vmax.f32 %v4878, 0.0
        %v4951 = vmax.f32 %v4919, 0.0
        %v4952 = vmax.f32 %v4799, 0.0
        %v4953 = vmax.f32 %v4840, 0.0
        %v4954 = vmax.f32 %v4881, 0.0
        %v4955 = vmax.f32 %v4922, 0.0
        %v4956 = vld [vmem:[%s1 + $0xd0] sm:$0xff]
        %v4957 = vld [vmem:[%s1 + $0xd8] sm:$0xff]
        %v4958 = vld [vmem:[%s1 + $0xe0] sm:$0xff]
        %v4959 = vld [vmem:[%s1 + $0xe8] sm:$0xff]
        %v4960 = vld [vmem:[%s1 + $0xf0] sm:$0xff]
        %v4961 = vld [vmem:[%s1 + $0xf8] sm:$0xff]
        %v4962 = vld [vmem:[%s1 + $0x100] sm:$0xff]
        %v4963 = vld [vmem:[%s1 + $0x108] sm:$0xff]
        %v4964 = vld [vmem:[%s1 + $0x150] sm:$0xff]
        %v4965 = vld [vmem:[%s1 + $0x158] sm:$0xff]
        %v4966 = vld [vmem:[%s1 + $0x160] sm:$0xff]
        %v4967 = vld [vmem:[%s1 + $0x168] sm:$0xff]
        %v4968 = vld [vmem:[%s1 + $0x170] sm:$0xff]
        %v4969 = vld [vmem:[%s1 + $0x178] sm:$0xff]
        %v4970 = vld [vmem:[%s1 + $0x180] sm:$0xff]
        %v4971 = vld [vmem:[%s1 + $0x188] sm:$0xff]
        %4973 = vset.pattern.permute.xlu0 24
        %4974 = vperm.xlu0 %4973, %v4964
        %v4975 = vpop.permute.xlu0 %4974
        %4978 = vset.pattern.permute.xlu0 24
        %4979 = vperm.xlu0 %4978, %v4965
        %v4980 = vpop.permute.xlu0 %4979
        %4983 = vset.pattern.permute.xlu0 24
        %4984 = vperm.xlu0 %4983, %v4966
        %v4985 = vpop.permute.xlu0 %4984
        %4988 = vset.pattern.permute.xlu0 24
        %4989 = vperm.xlu0 %4988, %v4967
        %v4990 = vpop.permute.xlu0 %4989
        %4993 = vset.pattern.permute.xlu0 24
        %4994 = vperm.xlu0 %4993, %v4968
        %v4995 = vpop.permute.xlu0 %4994
        %4998 = vset.pattern.permute.xlu0 24
        %4999 = vperm.xlu0 %4998, %v4969
        %v5000 = vpop.permute.xlu0 %4999
        %5003 = vset.pattern.permute.xlu0 24
        %5004 = vperm.xlu0 %5003, %v4970
        %v5005 = vpop.permute.xlu0 %5004
        %5008 = vset.pattern.permute.xlu0 24
        %5009 = vperm.xlu0 %5008, %v4971
        %v5010 = vpop.permute.xlu0 %5009
        %v5012 = vsel %vm4240, %v4964, 0
        %v5014 = vsel %vm4240, %v4965, 0
        %v5016 = vsel %vm4240, %v4966, 0
        %v5018 = vsel %vm4240, %v4967, 0
        %v5020 = vsel %vm4240, %v4968, 0
        %v5022 = vsel %vm4240, %v4969, 0
        %v5024 = vsel %vm4240, %v4970, 0
        %v5026 = vsel %vm4240, %v4971, 0
        %5028 = vmatpush.msra.mxu0 0.0
        %5029 = vmatpush.msra.mxu0 0.0
        %5030 = vmatpush.msra.mxu0 0.0
        %5031 = vmatpush.msra.mxu0 0.0
        %5032 = vmatpush.msra.mxu0 0.0
        %5033 = vmatpush.msra.mxu0 0.0
        %5034 = vmatpush.msra.mxu0 0.0
        %5035 = vmatpush.msra.mxu0 0.0
        %5036 = vmatpush.msra.mxu0 0.0
        %5037 = vmatpush.msra.mxu0 0.0
        %5038 = vmatpush.msra.mxu0 0.0
        %5039 = vmatpush.msra.mxu0 0.0
        %5040 = vmatpush.msra.mxu0 0.0
        %5041 = vmatpush.msra.mxu0 %v2297
        %5042 = vmatpush.msra.mxu0 %v2293
        %5043 = vmatpush.msra.mxu0 %v2289
        %5044 = vmatmul.f32.gmra.mxu0 %v5012
        %v5045 = vpop.f32.mrf.mxu0
        %v5046 = vadd.f32 %v4975, %v5045
        %5047 = vmatmul.f32.gmra.mxu0 %v5014
        %v5048 = vpop.f32.mrf.mxu0
        %v5049 = vadd.f32 %v4980, %v5048
        %5050 = vmatmul.f32.gmra.mxu0 %v5016
        %v5051 = vpop.f32.mrf.mxu0
        %v5052 = vadd.f32 %v4985, %v5051
        %5053 = vmatmul.f32.gmra.mxu0 %v5018
        %v5054 = vpop.f32.mrf.mxu0
        %v5055 = vadd.f32 %v4990, %v5054
        %5056 = vmatmul.f32.gmra.mxu0 %v5020
        %v5057 = vpop.f32.mrf.mxu0
        %v5058 = vadd.f32 %v4995, %v5057
        %5059 = vmatmul.f32.gmra.mxu0 %v5022
        %v5060 = vpop.f32.mrf.mxu0
        %v5061 = vadd.f32 %v5000, %v5060
        %5062 = vmatmul.f32.gmra.mxu0 %v5024
        %v5063 = vpop.f32.mrf.mxu0
        %v5064 = vadd.f32 %v5005, %v5063
        %5065 = vmatmul.f32.gmra.mxu0 %v5026
        %v5066 = vpop.f32.mrf.mxu0
        %v5067 = vadd.f32 %v5010, %v5066
        %5068 = vdwg.mxu0
        %5069 = vmatpush.msra.mxu0 0.0
        %5070 = vmatpush.msra.mxu0 0.0
        %5071 = vmatpush.msra.mxu0 0.0
        %5072 = vmatpush.msra.mxu0 0.0
        %5073 = vmatpush.msra.mxu0 0.0
        %5074 = vmatpush.msra.mxu0 0.0
        %5075 = vmatpush.msra.mxu0 0.0
        %5076 = vmatpush.msra.mxu0 0.0
        %5077 = vmatpush.msra.mxu0 0.0
        %5078 = vmatpush.msra.mxu0 0.0
        %5079 = vmatpush.msra.mxu0 0.0
        %5080 = vmatpush.msra.mxu0 0.0
        %5081 = vmatpush.msra.mxu0 0.0
        %5082 = vmatpush.msra.mxu0 %v2298
        %5083 = vmatpush.msra.mxu0 %v2294
        %5084 = vmatpush.msra.mxu0 %v2290
        %5085 = vmatmul.f32.gmra.mxu0 %v5012
        %v5086 = vpop.f32.mrf.mxu0
        %v5087 = vadd.f32 %v4975, %v5086
        %5088 = vmatmul.f32.gmra.mxu0 %v5014
        %v5089 = vpop.f32.mrf.mxu0
        %v5090 = vadd.f32 %v4980, %v5089
        %5091 = vmatmul.f32.gmra.mxu0 %v5016
        %v5092 = vpop.f32.mrf.mxu0
        %v5093 = vadd.f32 %v4985, %v5092
        %5094 = vmatmul.f32.gmra.mxu0 %v5018
        %v5095 = vpop.f32.mrf.mxu0
        %v5096 = vadd.f32 %v4990, %v5095
        %5097 = vmatmul.f32.gmra.mxu0 %v5020
        %v5098 = vpop.f32.mrf.mxu0
        %v5099 = vadd.f32 %v4995, %v5098
        %5100 = vmatmul.f32.gmra.mxu0 %v5022
        %v5101 = vpop.f32.mrf.mxu0
        %v5102 = vadd.f32 %v5000, %v5101
        %5103 = vmatmul.f32.gmra.mxu0 %v5024
        %v5104 = vpop.f32.mrf.mxu0
        %v5105 = vadd.f32 %v5005, %v5104
        %5106 = vmatmul.f32.gmra.mxu0 %v5026
        %v5107 = vpop.f32.mrf.mxu0
        %v5108 = vadd.f32 %v5010, %v5107
        %5109 = vdwg.mxu0
        %5110 = vmatpush.msra.mxu0 0.0
        %5111 = vmatpush.msra.mxu0 0.0
        %5112 = vmatpush.msra.mxu0 0.0
        %5113 = vmatpush.msra.mxu0 0.0
        %5114 = vmatpush.msra.mxu0 0.0
        %5115 = vmatpush.msra.mxu0 0.0
        %5116 = vmatpush.msra.mxu0 0.0
        %5117 = vmatpush.msra.mxu0 0.0
        %5118 = vmatpush.msra.mxu0 0.0
        %5119 = vmatpush.msra.mxu0 0.0
        %5120 = vmatpush.msra.mxu0 0.0
        %5121 = vmatpush.msra.mxu0 0.0
        %5122 = vmatpush.msra.mxu0 0.0
        %5123 = vmatpush.msra.mxu0 %v2299
        %5124 = vmatpush.msra.mxu0 %v2295
        %5125 = vmatpush.msra.mxu0 %v2291
        %5126 = vmatmul.f32.gmra.mxu0 %v5012
        %v5127 = vpop.f32.mrf.mxu0
        %v5128 = vadd.f32 %v4975, %v5127
        %5129 = vmatmul.f32.gmra.mxu0 %v5014
        %v5130 = vpop.f32.mrf.mxu0
        %v5131 = vadd.f32 %v4980, %v5130
        %5132 = vmatmul.f32.gmra.mxu0 %v5016
        %v5133 = vpop.f32.mrf.mxu0
        %v5134 = vadd.f32 %v4985, %v5133
        %5135 = vmatmul.f32.gmra.mxu0 %v5018
        %v5136 = vpop.f32.mrf.mxu0
        %v5137 = vadd.f32 %v4990, %v5136
        %5138 = vmatmul.f32.gmra.mxu0 %v5020
        %v5139 = vpop.f32.mrf.mxu0
        %v5140 = vadd.f32 %v4995, %v5139
        %5141 = vmatmul.f32.gmra.mxu0 %v5022
        %v5142 = vpop.f32.mrf.mxu0
        %v5143 = vadd.f32 %v5000, %v5142
        %5144 = vmatmul.f32.gmra.mxu0 %v5024
        %v5145 = vpop.f32.mrf.mxu0
        %v5146 = vadd.f32 %v5005, %v5145
        %5147 = vmatmul.f32.gmra.mxu0 %v5026
        %v5148 = vpop.f32.mrf.mxu0
        %v5149 = vadd.f32 %v5010, %v5148
        %5150 = vdwg.mxu0
        %5151 = vmatpush.msra.mxu0 0.0
        %5152 = vmatpush.msra.mxu0 0.0
        %5153 = vmatpush.msra.mxu0 0.0
        %5154 = vmatpush.msra.mxu0 0.0
        %5155 = vmatpush.msra.mxu0 0.0
        %5156 = vmatpush.msra.mxu0 0.0
        %5157 = vmatpush.msra.mxu0 0.0
        %5158 = vmatpush.msra.mxu0 0.0
        %5159 = vmatpush.msra.mxu0 0.0
        %5160 = vmatpush.msra.mxu0 0.0
        %5161 = vmatpush.msra.mxu0 0.0
        %5162 = vmatpush.msra.mxu0 0.0
        %5163 = vmatpush.msra.mxu0 0.0
        %5164 = vmatpush.msra.mxu0 %v2300
        %5165 = vmatpush.msra.mxu0 %v2296
        %5166 = vmatpush.msra.mxu0 %v2292
        %5167 = vmatmul.f32.gmra.mxu0 %v5012
        %v5168 = vpop.f32.mrf.mxu0
        %v5169 = vadd.f32 %v4975, %v5168
        %5170 = vmatmul.f32.gmra.mxu0 %v5014
        %v5171 = vpop.f32.mrf.mxu0
        %v5172 = vadd.f32 %v4980, %v5171
        %5173 = vmatmul.f32.gmra.mxu0 %v5016
        %v5174 = vpop.f32.mrf.mxu0
        %v5175 = vadd.f32 %v4985, %v5174
        %5176 = vmatmul.f32.gmra.mxu0 %v5018
        %v5177 = vpop.f32.mrf.mxu0
        %v5178 = vadd.f32 %v4990, %v5177
        %5179 = vmatmul.f32.gmra.mxu0 %v5020
        %v5180 = vpop.f32.mrf.mxu0
        %v5181 = vadd.f32 %v4995, %v5180
        %5182 = vmatmul.f32.gmra.mxu0 %v5022
        %v5183 = vpop.f32.mrf.mxu0
        %v5184 = vadd.f32 %v5000, %v5183
        %5185 = vmatmul.f32.gmra.mxu0 %v5024
        %v5186 = vpop.f32.mrf.mxu0
        %v5187 = vadd.f32 %v5005, %v5186
        %5188 = vmatmul.f32.gmra.mxu0 %v5026
        %v5189 = vpop.f32.mrf.mxu0
        %v5190 = vadd.f32 %v5010, %v5189
        %5191 = vdwg.mxu0
        %v5193 = vsel %vm4743, %v4956, 0
        %v5196 = vsel %vm4743, %v4957, 0
        %v5199 = vsel %vm4743, %v4958, 0
        %v5202 = vsel %vm4743, %v4959, 0
        %v5205 = vsel %vm4743, %v4960, 0
        %v5208 = vsel %vm4743, %v4961, 0
        %v5211 = vsel %vm4743, %v4962, 0
        %v5214 = vsel %vm4743, %v4963, 0
        %5216 = vmatpush.msra.mxu0 0.0
        %5217 = vmatpush.msra.mxu0 0.0
        %5218 = vmatpush.msra.mxu0 0.0
        %5219 = vmatpush.msra.mxu0 0.0
        %5220 = vmatpush.msra.mxu0 0.0
        %5221 = vmatpush.msra.mxu0 0.0
        %5222 = vmatpush.msra.mxu0 0.0
        %5223 = vmatpush.msra.mxu0 0.0
        %5224 = vmatpush.msra.mxu0 %v4952
        %5225 = vmatpush.msra.mxu0 %v4948
        %5226 = vmatpush.msra.mxu0 %v4944
        %5227 = vmatpush.msra.mxu0 %v4940
        %5228 = vmatpush.msra.mxu0 %v4936
        %5229 = vmatpush.msra.mxu0 %v4932
        %5230 = vmatpush.msra.mxu0 %v4928
        %5231 = vmatpush.msra.mxu0 %v4924
        %5232 = vmatmul.f32.gmra.mxu0 %v5193
        %v5233 = vpop.f32.mrf.mxu0
        %v5234 = vadd.f32 %v5046, %v5233
        %5235 = vmatmul.f32.gmra.mxu0 %v5196
        %v5236 = vpop.f32.mrf.mxu0
        %v5237 = vadd.f32 %v5049, %v5236
        %5238 = vmatmul.f32.gmra.mxu0 %v5199
        %v5239 = vpop.f32.mrf.mxu0
        %v5240 = vadd.f32 %v5052, %v5239
        %5241 = vmatmul.f32.gmra.mxu0 %v5202
        %v5242 = vpop.f32.mrf.mxu0
        %v5243 = vadd.f32 %v5055, %v5242
        %5244 = vmatmul.f32.gmra.mxu0 %v5205
        %v5245 = vpop.f32.mrf.mxu0
        %v5246 = vadd.f32 %v5058, %v5245
        %5247 = vmatmul.f32.gmra.mxu0 %v5208
        %v5248 = vpop.f32.mrf.mxu0
        %v5249 = vadd.f32 %v5061, %v5248
        %5250 = vmatmul.f32.gmra.mxu0 %v5211
        %v5251 = vpop.f32.mrf.mxu0
        %v5252 = vadd.f32 %v5064, %v5251
        %5253 = vmatmul.f32.gmra.mxu0 %v5214
        %v5254 = vpop.f32.mrf.mxu0
        %v5255 = vadd.f32 %v5067, %v5254
        %5256 = vdwg.mxu0
        %5257 = vmatpush.msra.mxu0 0.0
        %5258 = vmatpush.msra.mxu0 0.0
        %5259 = vmatpush.msra.mxu0 0.0
        %5260 = vmatpush.msra.mxu0 0.0
        %5261 = vmatpush.msra.mxu0 0.0
        %5262 = vmatpush.msra.mxu0 0.0
        %5263 = vmatpush.msra.mxu0 0.0
        %5264 = vmatpush.msra.mxu0 0.0
        %5265 = vmatpush.msra.mxu0 %v4953
        %5266 = vmatpush.msra.mxu0 %v4949
        %5267 = vmatpush.msra.mxu0 %v4945
        %5268 = vmatpush.msra.mxu0 %v4941
        %5269 = vmatpush.msra.mxu0 %v4937
        %5270 = vmatpush.msra.mxu0 %v4933
        %5271 = vmatpush.msra.mxu0 %v4929
        %5272 = vmatpush.msra.mxu0 %v4925
        %5273 = vmatmul.f32.gmra.mxu0 %v5193
        %v5274 = vpop.f32.mrf.mxu0
        %v5275 = vadd.f32 %v5087, %v5274
        %5276 = vmatmul.f32.gmra.mxu0 %v5196
        %v5277 = vpop.f32.mrf.mxu0
        %v5278 = vadd.f32 %v5090, %v5277
        %5279 = vmatmul.f32.gmra.mxu0 %v5199
        %v5280 = vpop.f32.mrf.mxu0
        %v5281 = vadd.f32 %v5093, %v5280
        %5282 = vmatmul.f32.gmra.mxu0 %v5202
        %v5283 = vpop.f32.mrf.mxu0
        %v5284 = vadd.f32 %v5096, %v5283
        %5285 = vmatmul.f32.gmra.mxu0 %v5205
        %v5286 = vpop.f32.mrf.mxu0
        %v5287 = vadd.f32 %v5099, %v5286
        %5288 = vmatmul.f32.gmra.mxu0 %v5208
        %v5289 = vpop.f32.mrf.mxu0
        %v5290 = vadd.f32 %v5102, %v5289
        %5291 = vmatmul.f32.gmra.mxu0 %v5211
        %v5292 = vpop.f32.mrf.mxu0
        %v5293 = vadd.f32 %v5105, %v5292
        %5294 = vmatmul.f32.gmra.mxu0 %v5214
        %v5295 = vpop.f32.mrf.mxu0
        %v5296 = vadd.f32 %v5108, %v5295
        %5297 = vdwg.mxu0
        %5298 = vmatpush.msra.mxu0 0.0
        %5299 = vmatpush.msra.mxu0 0.0
        %5300 = vmatpush.msra.mxu0 0.0
        %5301 = vmatpush.msra.mxu0 0.0
        %5302 = vmatpush.msra.mxu0 0.0
        %5303 = vmatpush.msra.mxu0 0.0
        %5304 = vmatpush.msra.mxu0 0.0
        %5305 = vmatpush.msra.mxu0 0.0
        %5306 = vmatpush.msra.mxu0 %v4954
        %5307 = vmatpush.msra.mxu0 %v4950
        %5308 = vmatpush.msra.mxu0 %v4946
        %5309 = vmatpush.msra.mxu0 %v4942
        %5310 = vmatpush.msra.mxu0 %v4938
        %5311 = vmatpush.msra.mxu0 %v4934
        %5312 = vmatpush.msra.mxu0 %v4930
        %5313 = vmatpush.msra.mxu0 %v4926
        %5314 = vmatmul.f32.gmra.mxu0 %v5193
        %v5315 = vpop.f32.mrf.mxu0
        %v5316 = vadd.f32 %v5128, %v5315
        %5317 = vmatmul.f32.gmra.mxu0 %v5196
        %v5318 = vpop.f32.mrf.mxu0
        %v5319 = vadd.f32 %v5131, %v5318
        %5320 = vmatmul.f32.gmra.mxu0 %v5199
        %v5321 = vpop.f32.mrf.mxu0
        %v5322 = vadd.f32 %v5134, %v5321
        %5323 = vmatmul.f32.gmra.mxu0 %v5202
        %v5324 = vpop.f32.mrf.mxu0
        %v5325 = vadd.f32 %v5137, %v5324
        %5326 = vmatmul.f32.gmra.mxu0 %v5205
        %v5327 = vpop.f32.mrf.mxu0
        %v5328 = vadd.f32 %v5140, %v5327
        %5329 = vmatmul.f32.gmra.mxu0 %v5208
        %v5330 = vpop.f32.mrf.mxu0
        %v5331 = vadd.f32 %v5143, %v5330
        %5332 = vmatmul.f32.gmra.mxu0 %v5211
        %v5333 = vpop.f32.mrf.mxu0
        %v5334 = vadd.f32 %v5146, %v5333
        %5335 = vmatmul.f32.gmra.mxu0 %v5214
        %v5336 = vpop.f32.mrf.mxu0
        %v5337 = vadd.f32 %v5149, %v5336
        %5338 = vdwg.mxu0
        %5339 = vmatpush.msra.mxu0 0.0
        %5340 = vmatpush.msra.mxu0 0.0
        %5341 = vmatpush.msra.mxu0 0.0
        %5342 = vmatpush.msra.mxu0 0.0
        %5343 = vmatpush.msra.mxu0 0.0
        %5344 = vmatpush.msra.mxu0 0.0
        %5345 = vmatpush.msra.mxu0 0.0
        %5346 = vmatpush.msra.mxu0 0.0
        %5347 = vmatpush.msra.mxu0 %v4955
        %5348 = vmatpush.msra.mxu0 %v4951
        %5349 = vmatpush.msra.mxu0 %v4947
        %5350 = vmatpush.msra.mxu0 %v4943
        %5351 = vmatpush.msra.mxu0 %v4939
        %5352 = vmatpush.msra.mxu0 %v4935
        %5353 = vmatpush.msra.mxu0 %v4931
        %5354 = vmatpush.msra.mxu0 %v4927
        %5355 = vmatmul.f32.gmra.mxu0 %v5193
        %v5356 = vpop.f32.mrf.mxu0
        %v5357 = vadd.f32 %v5169, %v5356
        %5358 = vmatmul.f32.gmra.mxu0 %v5196
        %v5359 = vpop.f32.mrf.mxu0
        %v5360 = vadd.f32 %v5172, %v5359
        %5361 = vmatmul.f32.gmra.mxu0 %v5199
        %v5362 = vpop.f32.mrf.mxu0
        %v5363 = vadd.f32 %v5175, %v5362
        %5364 = vmatmul.f32.gmra.mxu0 %v5202
        %v5365 = vpop.f32.mrf.mxu0
        %v5366 = vadd.f32 %v5178, %v5365
        %5367 = vmatmul.f32.gmra.mxu0 %v5205
        %v5368 = vpop.f32.mrf.mxu0
        %v5369 = vadd.f32 %v5181, %v5368
        %5370 = vmatmul.f32.gmra.mxu0 %v5208
        %v5371 = vpop.f32.mrf.mxu0
        %v5372 = vadd.f32 %v5184, %v5371
        %5373 = vmatmul.f32.gmra.mxu0 %v5211
        %v5374 = vpop.f32.mrf.mxu0
        %v5375 = vadd.f32 %v5187, %v5374
        %5376 = vmatmul.f32.gmra.mxu0 %v5214
        %v5377 = vpop.f32.mrf.mxu0
        %v5378 = vadd.f32 %v5190, %v5377
        %5379 = vdwg.mxu0
        %v5380 = vld [vmem:[%s1 + $0x110] sm:$0xff]
        %v5381 = vld [vmem:[%s1 + $0x118] sm:$0xff]
        %v5382 = vld [vmem:[%s1 + $0x120] sm:$0xff]
        %v5383 = vld [vmem:[%s1 + $0x128] sm:$0xff]
        %v5384 = vld [vmem:[%s1 + $0x130] sm:$0xff]
        %v5385 = vld [vmem:[%s1 + $0x138] sm:$0xff]
        %v5386 = vld [vmem:[%s1 + $0x140] sm:$0xff]
        %v5387 = vld [vmem:[%s1 + $0x148] sm:$0xff]
        %v5389 = vsel %vm4429, %v5380, 0
        %v5392 = vsel %vm4429, %v5381, 0
        %v5395 = vsel %vm4429, %v5382, 0
        %v5398 = vsel %vm4429, %v5383, 0
        %v5401 = vsel %vm4429, %v5384, 0
        %v5404 = vsel %vm4429, %v5385, 0
        %v5407 = vsel %vm4429, %v5386, 0
        %v5410 = vsel %vm4429, %v5387, 0
        %5412 = vmatpush.msra.mxu0 0.0
        %5413 = vmatpush.msra.mxu0 0.0
        %5414 = vmatpush.msra.mxu0 0.0
        %5415 = vmatpush.msra.mxu0 0.0
        %5416 = vmatpush.msra.mxu0 0.0
        %5417 = vmatpush.msra.mxu0 0.0
        %5418 = vmatpush.msra.mxu0 0.0
        %5419 = vmatpush.msra.mxu0 0.0
        %5420 = vmatpush.msra.mxu0 0.0
        %5421 = vmatpush.msra.mxu0 0.0
        %5422 = vmatpush.msra.mxu0 0.0
        %5423 = vmatpush.msra.mxu0 0.0
        %5424 = vmatpush.msra.mxu0 0.0
        %5425 = vmatpush.msra.mxu0 0.0
        %5426 = vmatpush.msra.mxu0 0.0
        %5427 = vmatpush.msra.mxu0 %v4456
        %5428 = vmatmul.f32.gmra.mxu0 %v5389
        %v5429 = vpop.f32.mrf.mxu0
        %v5430 = vadd.f32 0.0, %v5429
        %5431 = vmatmul.f32.gmra.mxu0 %v5392
        %v5432 = vpop.f32.mrf.mxu0
        %v5433 = vadd.f32 0.0, %v5432
        %5434 = vmatmul.f32.gmra.mxu0 %v5395
        %v5435 = vpop.f32.mrf.mxu0
        %v5436 = vadd.f32 0.0, %v5435
        %5437 = vmatmul.f32.gmra.mxu0 %v5398
        %v5438 = vpop.f32.mrf.mxu0
        %v5439 = vadd.f32 0.0, %v5438
        %5440 = vmatmul.f32.gmra.mxu0 %v5401
        %v5441 = vpop.f32.mrf.mxu0
        %v5442 = vadd.f32 0.0, %v5441
        %5443 = vmatmul.f32.gmra.mxu0 %v5404
        %v5444 = vpop.f32.mrf.mxu0
        %v5445 = vadd.f32 0.0, %v5444
        %5446 = vmatmul.f32.gmra.mxu0 %v5407
        %v5447 = vpop.f32.mrf.mxu0
        %v5448 = vadd.f32 0.0, %v5447
        %5449 = vmatmul.f32.gmra.mxu0 %v5410
        %v5450 = vpop.f32.mrf.mxu0
        %v5451 = vadd.f32 0.0, %v5450
        %5452 = vdwg.mxu0
        %5453 = vmatpush.msra.mxu0 0.0
        %5454 = vmatpush.msra.mxu0 0.0
        %5455 = vmatpush.msra.mxu0 0.0
        %5456 = vmatpush.msra.mxu0 0.0
        %5457 = vmatpush.msra.mxu0 0.0
        %5458 = vmatpush.msra.mxu0 0.0
        %5459 = vmatpush.msra.mxu0 0.0
        %5460 = vmatpush.msra.mxu0 0.0
        %5461 = vmatpush.msra.mxu0 0.0
        %5462 = vmatpush.msra.mxu0 0.0
        %5463 = vmatpush.msra.mxu0 0.0
        %5464 = vmatpush.msra.mxu0 0.0
        %5465 = vmatpush.msra.mxu0 0.0
        %5466 = vmatpush.msra.mxu0 0.0
        %5467 = vmatpush.msra.mxu0 0.0
        %5468 = vmatpush.msra.mxu0 %v4459
        %5469 = vmatmul.f32.gmra.mxu0 %v5389
        %v5470 = vpop.f32.mrf.mxu0
        %v5471 = vadd.f32 0.0, %v5470
        %5472 = vmatmul.f32.gmra.mxu0 %v5392
        %v5473 = vpop.f32.mrf.mxu0
        %v5474 = vadd.f32 0.0, %v5473
        %5475 = vmatmul.f32.gmra.mxu0 %v5395
        %v5476 = vpop.f32.mrf.mxu0
        %v5477 = vadd.f32 0.0, %v5476
        %5478 = vmatmul.f32.gmra.mxu0 %v5398
        %v5479 = vpop.f32.mrf.mxu0
        %v5480 = vadd.f32 0.0, %v5479
        %5481 = vmatmul.f32.gmra.mxu0 %v5401
        %v5482 = vpop.f32.mrf.mxu0
        %v5483 = vadd.f32 0.0, %v5482
        %5484 = vmatmul.f32.gmra.mxu0 %v5404
        %v5485 = vpop.f32.mrf.mxu0
        %v5486 = vadd.f32 0.0, %v5485
        %5487 = vmatmul.f32.gmra.mxu0 %v5407
        %v5488 = vpop.f32.mrf.mxu0
        %v5489 = vadd.f32 0.0, %v5488
        %5490 = vmatmul.f32.gmra.mxu0 %v5410
        %v5491 = vpop.f32.mrf.mxu0
        %v5492 = vadd.f32 0.0, %v5491
        %5493 = vdwg.mxu0
        %5494 = vmatpush.msra.mxu0 0.0
        %5495 = vmatpush.msra.mxu0 0.0
        %5496 = vmatpush.msra.mxu0 0.0
        %5497 = vmatpush.msra.mxu0 0.0
        %5498 = vmatpush.msra.mxu0 0.0
        %5499 = vmatpush.msra.mxu0 0.0
        %5500 = vmatpush.msra.mxu0 0.0
        %5501 = vmatpush.msra.mxu0 0.0
        %5502 = vmatpush.msra.mxu0 0.0
        %5503 = vmatpush.msra.mxu0 0.0
        %5504 = vmatpush.msra.mxu0 0.0
        %5505 = vmatpush.msra.mxu0 0.0
        %5506 = vmatpush.msra.mxu0 0.0
        %5507 = vmatpush.msra.mxu0 0.0
        %5508 = vmatpush.msra.mxu0 0.0
        %5509 = vmatpush.msra.mxu0 %v4462
        %5510 = vmatmul.f32.gmra.mxu0 %v5389
        %v5511 = vpop.f32.mrf.mxu0
        %v5512 = vadd.f32 0.0, %v5511
        %5513 = vmatmul.f32.gmra.mxu0 %v5392
        %v5514 = vpop.f32.mrf.mxu0
        %v5515 = vadd.f32 0.0, %v5514
        %5516 = vmatmul.f32.gmra.mxu0 %v5395
        %v5517 = vpop.f32.mrf.mxu0
        %v5518 = vadd.f32 0.0, %v5517
        %5519 = vmatmul.f32.gmra.mxu0 %v5398
        %v5520 = vpop.f32.mrf.mxu0
        %v5521 = vadd.f32 0.0, %v5520
        %5522 = vmatmul.f32.gmra.mxu0 %v5401
        %v5523 = vpop.f32.mrf.mxu0
        %v5524 = vadd.f32 0.0, %v5523
        %5525 = vmatmul.f32.gmra.mxu0 %v5404
        %v5526 = vpop.f32.mrf.mxu0
        %v5527 = vadd.f32 0.0, %v5526
        %5528 = vmatmul.f32.gmra.mxu0 %v5407
        %v5529 = vpop.f32.mrf.mxu0
        %v5530 = vadd.f32 0.0, %v5529
        %5531 = vmatmul.f32.gmra.mxu0 %v5410
        %v5532 = vpop.f32.mrf.mxu0
        %v5533 = vadd.f32 0.0, %v5532
        %5534 = vdwg.mxu0
        %5535 = vmatpush.msra.mxu0 0.0
        %5536 = vmatpush.msra.mxu0 0.0
        %5537 = vmatpush.msra.mxu0 0.0
        %5538 = vmatpush.msra.mxu0 0.0
        %5539 = vmatpush.msra.mxu0 0.0
        %5540 = vmatpush.msra.mxu0 0.0
        %5541 = vmatpush.msra.mxu0 0.0
        %5542 = vmatpush.msra.mxu0 0.0
        %5543 = vmatpush.msra.mxu0 0.0
        %5544 = vmatpush.msra.mxu0 0.0
        %5545 = vmatpush.msra.mxu0 0.0
        %5546 = vmatpush.msra.mxu0 0.0
        %5547 = vmatpush.msra.mxu0 0.0
        %5548 = vmatpush.msra.mxu0 0.0
        %5549 = vmatpush.msra.mxu0 0.0
        %5550 = vmatpush.msra.mxu0 %v4465
        %5551 = vmatmul.f32.gmra.mxu0 %v5389
        %v5552 = vpop.f32.mrf.mxu0
        %v5553 = vadd.f32 0.0, %v5552
        %5554 = vmatmul.f32.gmra.mxu0 %v5392
        %v5555 = vpop.f32.mrf.mxu0
        %v5556 = vadd.f32 0.0, %v5555
        %5557 = vmatmul.f32.gmra.mxu0 %v5395
        %v5558 = vpop.f32.mrf.mxu0
        %v5559 = vadd.f32 0.0, %v5558
        %5560 = vmatmul.f32.gmra.mxu0 %v5398
        %v5561 = vpop.f32.mrf.mxu0
        %v5562 = vadd.f32 0.0, %v5561
        %5563 = vmatmul.f32.gmra.mxu0 %v5401
        %v5564 = vpop.f32.mrf.mxu0
        %v5565 = vadd.f32 0.0, %v5564
        %5566 = vmatmul.f32.gmra.mxu0 %v5404
        %v5567 = vpop.f32.mrf.mxu0
        %v5568 = vadd.f32 0.0, %v5567
        %5569 = vmatmul.f32.gmra.mxu0 %v5407
        %v5570 = vpop.f32.mrf.mxu0
        %v5571 = vadd.f32 0.0, %v5570
        %5572 = vmatmul.f32.gmra.mxu0 %v5410
        %v5573 = vpop.f32.mrf.mxu0
        %v5574 = vadd.f32 0.0, %v5573
        %5575 = vdwg.mxu0
        %v5576 = vadd.f32 %v5234, %v5430
        %v5577 = vadd.f32 %v5275, %v5471
        %v5578 = vadd.f32 %v5316, %v5512
        %v5579 = vadd.f32 %v5357, %v5553
        %v5580 = vadd.f32 %v5237, %v5433
        %v5581 = vadd.f32 %v5278, %v5474
        %v5582 = vadd.f32 %v5319, %v5515
        %v5583 = vadd.f32 %v5360, %v5556
        %v5584 = vadd.f32 %v5240, %v5436
        %v5585 = vadd.f32 %v5281, %v5477
        %v5586 = vadd.f32 %v5322, %v5518
        %v5587 = vadd.f32 %v5363, %v5559
        %v5588 = vadd.f32 %v5243, %v5439
        %v5589 = vadd.f32 %v5284, %v5480
        %v5590 = vadd.f32 %v5325, %v5521
        %v5591 = vadd.f32 %v5366, %v5562
        %v5592 = vadd.f32 %v5246, %v5442
        %v5593 = vadd.f32 %v5287, %v5483
        %v5594 = vadd.f32 %v5328, %v5524
        %v5595 = vadd.f32 %v5369, %v5565
        %v5596 = vadd.f32 %v5249, %v5445
        %v5597 = vadd.f32 %v5290, %v5486
        %v5598 = vadd.f32 %v5331, %v5527
        %v5599 = vadd.f32 %v5372, %v5568
        %v5600 = vadd.f32 %v5252, %v5448
        %v5601 = vadd.f32 %v5293, %v5489
        %v5602 = vadd.f32 %v5334, %v5530
        %v5603 = vadd.f32 %v5375, %v5571
        %v5604 = vadd.f32 %v5255, %v5451
        %v5605 = vadd.f32 %v5296, %v5492
        %v5606 = vadd.f32 %v5337, %v5533
        %v5607 = vadd.f32 %v5378, %v5574
        %v5608 = vmax.f32 %v5576, 0.0
        %v5609 = vmax.f32 %v5577, 0.0
        %v5610 = vmax.f32 %v5578, 0.0
        %v5611 = vmax.f32 %v5579, 0.0
        %v5612 = vmax.f32 %v5580, 0.0
        %v5613 = vmax.f32 %v5581, 0.0
        %v5614 = vmax.f32 %v5582, 0.0
        %v5615 = vmax.f32 %v5583, 0.0
        %v5616 = vmax.f32 %v5584, 0.0
        %v5617 = vmax.f32 %v5585, 0.0
        %v5618 = vmax.f32 %v5586, 0.0
        %v5619 = vmax.f32 %v5587, 0.0
        %v5620 = vmax.f32 %v5588, 0.0
        %v5621 = vmax.f32 %v5589, 0.0
        %v5622 = vmax.f32 %v5590, 0.0
        %v5623 = vmax.f32 %v5591, 0.0
        %v5624 = vmax.f32 %v5592, 0.0
        %v5625 = vmax.f32 %v5593, 0.0
        %v5626 = vmax.f32 %v5594, 0.0
        %v5627 = vmax.f32 %v5595, 0.0
        %v5628 = vmax.f32 %v5596, 0.0
        %v5629 = vmax.f32 %v5597, 0.0
        %v5630 = vmax.f32 %v5598, 0.0
        %v5631 = vmax.f32 %v5599, 0.0
        %v5632 = vmax.f32 %v5600, 0.0
        %v5633 = vmax.f32 %v5601, 0.0
        %v5634 = vmax.f32 %v5602, 0.0
        %v5635 = vmax.f32 %v5603, 0.0
        %v5636 = vmax.f32 %v5604, 0.0
        %v5637 = vmax.f32 %v5605, 0.0
        %v5638 = vmax.f32 %v5606, 0.0
        %v5639 = vmax.f32 %v5607, 0.0
        %v5640 = vld [vmem:[%s1 + $0x190] sm:$0xff]
        %v5641 = vld [vmem:[%s1 + $0x198] sm:$0xff]
        %v5642 = vld [vmem:[%s1 + $0x1a0] sm:$0xff]
        %v5643 = vld [vmem:[%s1 + $0x1a8] sm:$0xff]
        %v5644 = vld [vmem:[%s1 + $0x1b0] sm:$0xff]
        %v5645 = vld [vmem:[%s1 + $0x1b8] sm:$0xff]
        %v5646 = vld [vmem:[%s1 + $0x1c0] sm:$0xff]
        %v5647 = vld [vmem:[%s1 + $0x1c8] sm:$0xff]
        %5649 = vset.pattern.permute.xlu0 64
        %5650 = vperm.xlu0 %5649, %v5640
        %v5651 = vpop.permute.xlu0 %5650
        %5654 = vset.pattern.permute.xlu0 64
        %5655 = vperm.xlu0 %5654, %v5641
        %v5656 = vpop.permute.xlu0 %5655
        %5659 = vset.pattern.permute.xlu0 64
        %5660 = vperm.xlu0 %5659, %v5642
        %v5661 = vpop.permute.xlu0 %5660
        %5664 = vset.pattern.permute.xlu0 64
        %5665 = vperm.xlu0 %5664, %v5643
        %v5666 = vpop.permute.xlu0 %5665
        %5669 = vset.pattern.permute.xlu0 64
        %5670 = vperm.xlu0 %5669, %v5644
        %v5671 = vpop.permute.xlu0 %5670
        %5674 = vset.pattern.permute.xlu0 64
        %5675 = vperm.xlu0 %5674, %v5645
        %v5676 = vpop.permute.xlu0 %5675
        %5679 = vset.pattern.permute.xlu0 64
        %5680 = vperm.xlu0 %5679, %v5646
        %v5681 = vpop.permute.xlu0 %5680
        %5684 = vset.pattern.permute.xlu0 64
        %5685 = vperm.xlu0 %5684, %v5647
        %v5686 = vpop.permute.xlu0 %5685
        %v5688 = vsel %vm4743, %v5640, 0
        %v5690 = vsel %vm4743, %v5641, 0
        %v5692 = vsel %vm4743, %v5642, 0
        %v5694 = vsel %vm4743, %v5643, 0
        %v5696 = vsel %vm4743, %v5644, 0
        %v5698 = vsel %vm4743, %v5645, 0
        %v5700 = vsel %vm4743, %v5646, 0
        %v5702 = vsel %vm4743, %v5647, 0
        %5704 = vmatpush.msra.mxu0 0.0
        %5705 = vmatpush.msra.mxu0 0.0
        %5706 = vmatpush.msra.mxu0 0.0
        %5707 = vmatpush.msra.mxu0 0.0
        %5708 = vmatpush.msra.mxu0 0.0
        %5709 = vmatpush.msra.mxu0 0.0
        %5710 = vmatpush.msra.mxu0 0.0
        %5711 = vmatpush.msra.mxu0 0.0
        %5712 = vmatpush.msra.mxu0 %v5636
        %5713 = vmatpush.msra.mxu0 %v5632
        %5714 = vmatpush.msra.mxu0 %v5628
        %5715 = vmatpush.msra.mxu0 %v5624
        %5716 = vmatpush.msra.mxu0 %v5620
        %5717 = vmatpush.msra.mxu0 %v5616
        %5718 = vmatpush.msra.mxu0 %v5612
        %5719 = vmatpush.msra.mxu0 %v5608
        %5720 = vmatmul.f32.gmra.mxu0 %v5688
        %v5721 = vpop.f32.mrf.mxu0
        %v5722 = vadd.f32 %v5651, %v5721
        %5723 = vmatmul.f32.gmra.mxu0 %v5690
        %v5724 = vpop.f32.mrf.mxu0
        %v5725 = vadd.f32 %v5656, %v5724
        %5726 = vmatmul.f32.gmra.mxu0 %v5692
        %v5727 = vpop.f32.mrf.mxu0
        %v5728 = vadd.f32 %v5661, %v5727
        %5729 = vmatmul.f32.gmra.mxu0 %v5694
        %v5730 = vpop.f32.mrf.mxu0
        %v5731 = vadd.f32 %v5666, %v5730
        %5732 = vmatmul.f32.gmra.mxu0 %v5696
        %v5733 = vpop.f32.mrf.mxu0
        %v5734 = vadd.f32 %v5671, %v5733
        %5735 = vmatmul.f32.gmra.mxu0 %v5698
        %v5736 = vpop.f32.mrf.mxu0
        %v5737 = vadd.f32 %v5676, %v5736
        %5738 = vmatmul.f32.gmra.mxu0 %v5700
        %v5739 = vpop.f32.mrf.mxu0
        %v5740 = vadd.f32 %v5681, %v5739
        %5741 = vmatmul.f32.gmra.mxu0 %v5702
        %v5742 = vpop.f32.mrf.mxu0
        %v5743 = vadd.f32 %v5686, %v5742
        %5744 = vdwg.mxu0
        %5745 = vmatpush.msra.mxu0 0.0
        %5746 = vmatpush.msra.mxu0 0.0
        %5747 = vmatpush.msra.mxu0 0.0
        %5748 = vmatpush.msra.mxu0 0.0
        %5749 = vmatpush.msra.mxu0 0.0
        %5750 = vmatpush.msra.mxu0 0.0
        %5751 = vmatpush.msra.mxu0 0.0
        %5752 = vmatpush.msra.mxu0 0.0
        %5753 = vmatpush.msra.mxu0 %v5637
        %5754 = vmatpush.msra.mxu0 %v5633
        %5755 = vmatpush.msra.mxu0 %v5629
        %5756 = vmatpush.msra.mxu0 %v5625
        %5757 = vmatpush.msra.mxu0 %v5621
        %5758 = vmatpush.msra.mxu0 %v5617
        %5759 = vmatpush.msra.mxu0 %v5613
        %5760 = vmatpush.msra.mxu0 %v5609
        %5761 = vmatmul.f32.gmra.mxu0 %v5688
        %v5762 = vpop.f32.mrf.mxu0
        %v5763 = vadd.f32 %v5651, %v5762
        %5764 = vmatmul.f32.gmra.mxu0 %v5690
        %v5765 = vpop.f32.mrf.mxu0
        %v5766 = vadd.f32 %v5656, %v5765
        %5767 = vmatmul.f32.gmra.mxu0 %v5692
        %v5768 = vpop.f32.mrf.mxu0
        %v5769 = vadd.f32 %v5661, %v5768
        %5770 = vmatmul.f32.gmra.mxu0 %v5694
        %v5771 = vpop.f32.mrf.mxu0
        %v5772 = vadd.f32 %v5666, %v5771
        %5773 = vmatmul.f32.gmra.mxu0 %v5696
        %v5774 = vpop.f32.mrf.mxu0
        %v5775 = vadd.f32 %v5671, %v5774
        %5776 = vmatmul.f32.gmra.mxu0 %v5698
        %v5777 = vpop.f32.mrf.mxu0
        %v5778 = vadd.f32 %v5676, %v5777
        %5779 = vmatmul.f32.gmra.mxu0 %v5700
        %v5780 = vpop.f32.mrf.mxu0
        %v5781 = vadd.f32 %v5681, %v5780
        %5782 = vmatmul.f32.gmra.mxu0 %v5702
        %v5783 = vpop.f32.mrf.mxu0
        %v5784 = vadd.f32 %v5686, %v5783
        %5785 = vdwg.mxu0
        %5786 = vmatpush.msra.mxu0 0.0
        %5787 = vmatpush.msra.mxu0 0.0
        %5788 = vmatpush.msra.mxu0 0.0
        %5789 = vmatpush.msra.mxu0 0.0
        %5790 = vmatpush.msra.mxu0 0.0
        %5791 = vmatpush.msra.mxu0 0.0
        %5792 = vmatpush.msra.mxu0 0.0
        %5793 = vmatpush.msra.mxu0 0.0
        %5794 = vmatpush.msra.mxu0 %v5638
        %5795 = vmatpush.msra.mxu0 %v5634
        %5796 = vmatpush.msra.mxu0 %v5630
        %5797 = vmatpush.msra.mxu0 %v5626
        %5798 = vmatpush.msra.mxu0 %v5622
        %5799 = vmatpush.msra.mxu0 %v5618
        %5800 = vmatpush.msra.mxu0 %v5614
        %5801 = vmatpush.msra.mxu0 %v5610
        %5802 = vmatmul.f32.gmra.mxu0 %v5688
        %v5803 = vpop.f32.mrf.mxu0
        %v5804 = vadd.f32 %v5651, %v5803
        %5805 = vmatmul.f32.gmra.mxu0 %v5690
        %v5806 = vpop.f32.mrf.mxu0
        %v5807 = vadd.f32 %v5656, %v5806
        %5808 = vmatmul.f32.gmra.mxu0 %v5692
        %v5809 = vpop.f32.mrf.mxu0
        %v5810 = vadd.f32 %v5661, %v5809
        %5811 = vmatmul.f32.gmra.mxu0 %v5694
        %v5812 = vpop.f32.mrf.mxu0
        %v5813 = vadd.f32 %v5666, %v5812
        %5814 = vmatmul.f32.gmra.mxu0 %v5696
        %v5815 = vpop.f32.mrf.mxu0
        %v5816 = vadd.f32 %v5671, %v5815
        %5817 = vmatmul.f32.gmra.mxu0 %v5698
        %v5818 = vpop.f32.mrf.mxu0
        %v5819 = vadd.f32 %v5676, %v5818
        %5820 = vmatmul.f32.gmra.mxu0 %v5700
        %v5821 = vpop.f32.mrf.mxu0
        %v5822 = vadd.f32 %v5681, %v5821
        %5823 = vmatmul.f32.gmra.mxu0 %v5702
        %v5824 = vpop.f32.mrf.mxu0
        %v5825 = vadd.f32 %v5686, %v5824
        %5826 = vdwg.mxu0
        %5827 = vmatpush.msra.mxu0 0.0
        %5828 = vmatpush.msra.mxu0 0.0
        %5829 = vmatpush.msra.mxu0 0.0
        %5830 = vmatpush.msra.mxu0 0.0
        %5831 = vmatpush.msra.mxu0 0.0
        %5832 = vmatpush.msra.mxu0 0.0
        %5833 = vmatpush.msra.mxu0 0.0
        %5834 = vmatpush.msra.mxu0 0.0
        %5835 = vmatpush.msra.mxu0 %v5639
        %5836 = vmatpush.msra.mxu0 %v5635
        %5837 = vmatpush.msra.mxu0 %v5631
        %5838 = vmatpush.msra.mxu0 %v5627
        %5839 = vmatpush.msra.mxu0 %v5623
        %5840 = vmatpush.msra.mxu0 %v5619
        %5841 = vmatpush.msra.mxu0 %v5615
        %5842 = vmatpush.msra.mxu0 %v5611
        %5843 = vmatmul.f32.gmra.mxu0 %v5688
        %v5844 = vpop.f32.mrf.mxu0
        %v5845 = vadd.f32 %v5651, %v5844
        %5846 = vmatmul.f32.gmra.mxu0 %v5690
        %v5847 = vpop.f32.mrf.mxu0
        %v5848 = vadd.f32 %v5656, %v5847
        %5849 = vmatmul.f32.gmra.mxu0 %v5692
        %v5850 = vpop.f32.mrf.mxu0
        %v5851 = vadd.f32 %v5661, %v5850
        %5852 = vmatmul.f32.gmra.mxu0 %v5694
        %v5853 = vpop.f32.mrf.mxu0
        %v5854 = vadd.f32 %v5666, %v5853
        %5855 = vmatmul.f32.gmra.mxu0 %v5696
        %v5856 = vpop.f32.mrf.mxu0
        %v5857 = vadd.f32 %v5671, %v5856
        %5858 = vmatmul.f32.gmra.mxu0 %v5698
        %v5859 = vpop.f32.mrf.mxu0
        %v5860 = vadd.f32 %v5676, %v5859
        %5861 = vmatmul.f32.gmra.mxu0 %v5700
        %v5862 = vpop.f32.mrf.mxu0
        %v5863 = vadd.f32 %v5681, %v5862
        %5864 = vmatmul.f32.gmra.mxu0 %v5702
        %v5865 = vpop.f32.mrf.mxu0
        %v5866 = vadd.f32 %v5686, %v5865
        %5867 = vdwg.mxu0
        %v5868 = vmax.f32 %v5722, 0.0
        %v5869 = vmax.f32 %v5763, 0.0
        %v5870 = vmax.f32 %v5804, 0.0
        %v5871 = vmax.f32 %v5845, 0.0
        %v5872 = vmax.f32 %v5725, 0.0
        %v5873 = vmax.f32 %v5766, 0.0
        %v5874 = vmax.f32 %v5807, 0.0
        %v5875 = vmax.f32 %v5848, 0.0
        %v5876 = vmax.f32 %v5728, 0.0
        %v5877 = vmax.f32 %v5769, 0.0
        %v5878 = vmax.f32 %v5810, 0.0
        %v5879 = vmax.f32 %v5851, 0.0
        %v5880 = vmax.f32 %v5731, 0.0
        %v5881 = vmax.f32 %v5772, 0.0
        %v5882 = vmax.f32 %v5813, 0.0
        %v5883 = vmax.f32 %v5854, 0.0
        %v5884 = vmax.f32 %v5734, 0.0
        %v5885 = vmax.f32 %v5775, 0.0
        %v5886 = vmax.f32 %v5816, 0.0
        %v5887 = vmax.f32 %v5857, 0.0
        %v5888 = vmax.f32 %v5737, 0.0
        %v5889 = vmax.f32 %v5778, 0.0
        %v5890 = vmax.f32 %v5819, 0.0
        %v5891 = vmax.f32 %v5860, 0.0
        %v5892 = vmax.f32 %v5740, 0.0
        %v5893 = vmax.f32 %v5781, 0.0
        %v5894 = vmax.f32 %v5822, 0.0
        %v5895 = vmax.f32 %v5863, 0.0
        %v5896 = vmax.f32 %v5743, 0.0
        %v5897 = vmax.f32 %v5784, 0.0
        %v5898 = vmax.f32 %v5825, 0.0
        %v5899 = vmax.f32 %v5866, 0.0
        %v5900 = vld [vmem:[%s1 + $0x1d0] sm:$0xff]
        %v5901 = vld [vmem:[%s1 + $0x1d8] sm:$0xff]
        %v5902 = vld [vmem:[%s1 + $0x1e0] sm:$0xff]
        %v5903 = vld [vmem:[%s1 + $0x1e8] sm:$0xff]
        %v5904 = vld [vmem:[%s1 + $0x1f0] sm:$0xff]
        %v5905 = vld [vmem:[%s1 + $0x1f8] sm:$0xff]
        %v5906 = vld [vmem:[%s1 + $0x200] sm:$0xff]
        %v5907 = vld [vmem:[%s1 + $0x208] sm:$0xff]
        %v5908 = vld [vmem:[%s1 + $0x210] sm:$0x1]
        %5910 = vset.pattern.permute.xlu0 64
        %5911 = vperm.xlu0 %5910, %v5900
        %v5912 = vpop.permute.xlu0 %5911
        %5915 = vset.pattern.permute.xlu0 64
        %5916 = vperm.xlu0 %5915, %v5901
        %v5917 = vpop.permute.xlu0 %5916
        %5920 = vset.pattern.permute.xlu0 64
        %5921 = vperm.xlu0 %5920, %v5902
        %v5922 = vpop.permute.xlu0 %5921
        %5925 = vset.pattern.permute.xlu0 64
        %5926 = vperm.xlu0 %5925, %v5903
        %v5927 = vpop.permute.xlu0 %5926
        %5930 = vset.pattern.permute.xlu0 64
        %5931 = vperm.xlu0 %5930, %v5904
        %v5932 = vpop.permute.xlu0 %5931
        %5935 = vset.pattern.permute.xlu0 64
        %5936 = vperm.xlu0 %5935, %v5905
        %v5937 = vpop.permute.xlu0 %5936
        %5940 = vset.pattern.permute.xlu0 64
        %5941 = vperm.xlu0 %5940, %v5906
        %v5942 = vpop.permute.xlu0 %5941
        %5945 = vset.pattern.permute.xlu0 64
        %5946 = vperm.xlu0 %5945, %v5907
        %v5947 = vpop.permute.xlu0 %5946
        %5950 = vset.pattern.permute.xlu0 64
        %5951 = vperm.xlu0 %5950, %v5908
        %v5952 = vpop.permute.xlu0 %5951
        %v5954 = vsel %vm4743, %v5900, 0
        %v5956 = vsel %vm4743, %v5901, 0
        %v5958 = vsel %vm4743, %v5902, 0
        %v5960 = vsel %vm4743, %v5903, 0
        %v5962 = vsel %vm4743, %v5904, 0
        %v5964 = vsel %vm4743, %v5905, 0
        %v5966 = vsel %vm4743, %v5906, 0
        %v5968 = vsel %vm4743, %v5907, 0
        %v5970 = vsel %vm4743, %v5908, 0
        %5972 = vmatpush.msra.mxu0 0.0
        %5973 = vmatpush.msra.mxu0 0.0
        %5974 = vmatpush.msra.mxu0 0.0
        %5975 = vmatpush.msra.mxu0 0.0
        %5976 = vmatpush.msra.mxu0 0.0
        %5977 = vmatpush.msra.mxu0 0.0
        %5978 = vmatpush.msra.mxu0 0.0
        %5979 = vmatpush.msra.mxu0 0.0
        %5980 = vmatpush.msra.mxu0 %v5896
        %5981 = vmatpush.msra.mxu0 %v5892
        %5982 = vmatpush.msra.mxu0 %v5888
        %5983 = vmatpush.msra.mxu0 %v5884
        %5984 = vmatpush.msra.mxu0 %v5880
        %5985 = vmatpush.msra.mxu0 %v5876
        %5986 = vmatpush.msra.mxu0 %v5872
        %5987 = vmatpush.msra.mxu0 %v5868
        %5988 = vmatmul.f32.gmra.mxu0 %v5954
        %v5989 = vpop.f32.mrf.mxu0
        %v5990 = vadd.f32 %v5912, %v5989
        %5991 = vmatmul.f32.gmra.mxu0 %v5956
        %v5992 = vpop.f32.mrf.mxu0
        %v5993 = vadd.f32 %v5917, %v5992
        %5994 = vmatmul.f32.gmra.mxu0 %v5958
        %v5995 = vpop.f32.mrf.mxu0
        %v5996 = vadd.f32 %v5922, %v5995
        %5997 = vmatmul.f32.gmra.mxu0 %v5960
        %v5998 = vpop.f32.mrf.mxu0
        %v5999 = vadd.f32 %v5927, %v5998
        %6000 = vmatmul.f32.gmra.mxu0 %v5962
        %v6001 = vpop.f32.mrf.mxu0
        %v6002 = vadd.f32 %v5932, %v6001
        %6003 = vmatmul.f32.gmra.mxu0 %v5964
        %v6004 = vpop.f32.mrf.mxu0
        %v6005 = vadd.f32 %v5937, %v6004
        %6006 = vmatmul.f32.gmra.mxu0 %v5966
        %v6007 = vpop.f32.mrf.mxu0
        %v6008 = vadd.f32 %v5942, %v6007
        %6009 = vmatmul.f32.gmra.mxu0 %v5968
        %v6010 = vpop.f32.mrf.mxu0
        %v6011 = vadd.f32 %v5947, %v6010
        %6012 = vmatmul.f32.gmra.mxu0 %v5970
        %v6013 = vpop.f32.mrf.mxu0
        %v6014 = vadd.f32 %v5952, %v6013
        %6015 = vdwg.mxu0
        %6016 = vmatpush.msra.mxu0 0.0
        %6017 = vmatpush.msra.mxu0 0.0
        %6018 = vmatpush.msra.mxu0 0.0
        %6019 = vmatpush.msra.mxu0 0.0
        %6020 = vmatpush.msra.mxu0 0.0
        %6021 = vmatpush.msra.mxu0 0.0
        %6022 = vmatpush.msra.mxu0 0.0
        %6023 = vmatpush.msra.mxu0 0.0
        %6024 = vmatpush.msra.mxu0 %v5897
        %6025 = vmatpush.msra.mxu0 %v5893
        %6026 = vmatpush.msra.mxu0 %v5889
        %6027 = vmatpush.msra.mxu0 %v5885
        %6028 = vmatpush.msra.mxu0 %v5881
        %6029 = vmatpush.msra.mxu0 %v5877
        %6030 = vmatpush.msra.mxu0 %v5873
        %6031 = vmatpush.msra.mxu0 %v5869
        %6032 = vmatmul.f32.gmra.mxu0 %v5954
        %v6033 = vpop.f32.mrf.mxu0
        %v6034 = vadd.f32 %v5912, %v6033
        %6035 = vmatmul.f32.gmra.mxu0 %v5956
        %v6036 = vpop.f32.mrf.mxu0
        %v6037 = vadd.f32 %v5917, %v6036
        %6038 = vmatmul.f32.gmra.mxu0 %v5958
        %v6039 = vpop.f32.mrf.mxu0
        %v6040 = vadd.f32 %v5922, %v6039
        %6041 = vmatmul.f32.gmra.mxu0 %v5960
        %v6042 = vpop.f32.mrf.mxu0
        %v6043 = vadd.f32 %v5927, %v6042
        %6044 = vmatmul.f32.gmra.mxu0 %v5962
        %v6045 = vpop.f32.mrf.mxu0
        %v6046 = vadd.f32 %v5932, %v6045
        %6047 = vmatmul.f32.gmra.mxu0 %v5964
        %v6048 = vpop.f32.mrf.mxu0
        %v6049 = vadd.f32 %v5937, %v6048
        %6050 = vmatmul.f32.gmra.mxu0 %v5966
        %v6051 = vpop.f32.mrf.mxu0
        %v6052 = vadd.f32 %v5942, %v6051
        %6053 = vmatmul.f32.gmra.mxu0 %v5968
        %v6054 = vpop.f32.mrf.mxu0
        %v6055 = vadd.f32 %v5947, %v6054
        %6056 = vmatmul.f32.gmra.mxu0 %v5970
        %v6057 = vpop.f32.mrf.mxu0
        %v6058 = vadd.f32 %v5952, %v6057
        %6059 = vdwg.mxu0
        %6060 = vmatpush.msra.mxu0 0.0
        %6061 = vmatpush.msra.mxu0 0.0
        %6062 = vmatpush.msra.mxu0 0.0
        %6063 = vmatpush.msra.mxu0 0.0
        %6064 = vmatpush.msra.mxu0 0.0
        %6065 = vmatpush.msra.mxu0 0.0
        %6066 = vmatpush.msra.mxu0 0.0
        %6067 = vmatpush.msra.mxu0 0.0
        %6068 = vmatpush.msra.mxu0 %v5898
        %6069 = vmatpush.msra.mxu0 %v5894
        %6070 = vmatpush.msra.mxu0 %v5890
        %6071 = vmatpush.msra.mxu0 %v5886
        %6072 = vmatpush.msra.mxu0 %v5882
        %6073 = vmatpush.msra.mxu0 %v5878
        %6074 = vmatpush.msra.mxu0 %v5874
        %6075 = vmatpush.msra.mxu0 %v5870
        %6076 = vmatmul.f32.gmra.mxu0 %v5954
        %v6077 = vpop.f32.mrf.mxu0
        %v6078 = vadd.f32 %v5912, %v6077
        %6079 = vmatmul.f32.gmra.mxu0 %v5956
        %v6080 = vpop.f32.mrf.mxu0
        %v6081 = vadd.f32 %v5917, %v6080
        %6082 = vmatmul.f32.gmra.mxu0 %v5958
        %v6083 = vpop.f32.mrf.mxu0
        %v6084 = vadd.f32 %v5922, %v6083
        %6085 = vmatmul.f32.gmra.mxu0 %v5960
        %v6086 = vpop.f32.mrf.mxu0
        %v6087 = vadd.f32 %v5927, %v6086
        %6088 = vmatmul.f32.gmra.mxu0 %v5962
        %v6089 = vpop.f32.mrf.mxu0
        %v6090 = vadd.f32 %v5932, %v6089
        %6091 = vmatmul.f32.gmra.mxu0 %v5964
        %v6092 = vpop.f32.mrf.mxu0
        %v6093 = vadd.f32 %v5937, %v6092
        %6094 = vmatmul.f32.gmra.mxu0 %v5966
        %v6095 = vpop.f32.mrf.mxu0
        %v6096 = vadd.f32 %v5942, %v6095
        %6097 = vmatmul.f32.gmra.mxu0 %v5968
        %v6098 = vpop.f32.mrf.mxu0
        %v6099 = vadd.f32 %v5947, %v6098
        %6100 = vmatmul.f32.gmra.mxu0 %v5970
        %v6101 = vpop.f32.mrf.mxu0
        %v6102 = vadd.f32 %v5952, %v6101
        %6103 = vdwg.mxu0
        %6104 = vmatpush.msra.mxu0 0.0
        %6105 = vmatpush.msra.mxu0 0.0
        %6106 = vmatpush.msra.mxu0 0.0
        %6107 = vmatpush.msra.mxu0 0.0
        %6108 = vmatpush.msra.mxu0 0.0
        %6109 = vmatpush.msra.mxu0 0.0
        %6110 = vmatpush.msra.mxu0 0.0
        %6111 = vmatpush.msra.mxu0 0.0
        %6112 = vmatpush.msra.mxu0 %v5899
        %6113 = vmatpush.msra.mxu0 %v5895
        %6114 = vmatpush.msra.mxu0 %v5891
        %6115 = vmatpush.msra.mxu0 %v5887
        %6116 = vmatpush.msra.mxu0 %v5883
        %6117 = vmatpush.msra.mxu0 %v5879
        %6118 = vmatpush.msra.mxu0 %v5875
        %6119 = vmatpush.msra.mxu0 %v5871
        %6120 = vmatmul.f32.gmra.mxu0 %v5954
        %v6121 = vpop.f32.mrf.mxu0
        %v6122 = vadd.f32 %v5912, %v6121
        %6123 = vmatmul.f32.gmra.mxu0 %v5956
        %v6124 = vpop.f32.mrf.mxu0
        %v6125 = vadd.f32 %v5917, %v6124
        %6126 = vmatmul.f32.gmra.mxu0 %v5958
        %v6127 = vpop.f32.mrf.mxu0
        %v6128 = vadd.f32 %v5922, %v6127
        %6129 = vmatmul.f32.gmra.mxu0 %v5960
        %v6130 = vpop.f32.mrf.mxu0
        %v6131 = vadd.f32 %v5927, %v6130
        %6132 = vmatmul.f32.gmra.mxu0 %v5962
        %v6133 = vpop.f32.mrf.mxu0
        %v6134 = vadd.f32 %v5932, %v6133
        %6135 = vmatmul.f32.gmra.mxu0 %v5964
        %v6136 = vpop.f32.mrf.mxu0
        %v6137 = vadd.f32 %v5937, %v6136
        %6138 = vmatmul.f32.gmra.mxu0 %v5966
        %v6139 = vpop.f32.mrf.mxu0
        %v6140 = vadd.f32 %v5942, %v6139
        %6141 = vmatmul.f32.gmra.mxu0 %v5968
        %v6142 = vpop.f32.mrf.mxu0
        %v6143 = vadd.f32 %v5947, %v6142
        %6144 = vmatmul.f32.gmra.mxu0 %v5970
        %v6145 = vpop.f32.mrf.mxu0
        %v6146 = vadd.f32 %v5952, %v6145
        %6147 = vdwg.mxu0
        %v6148 = vmul.f32 %v6014, 1.442695
        %v6149 = vpow.pop %v6148
        %v6150 = vmul.f32 %v6058, 1.442695
        %v6151 = vpow.pop %v6150
        %v6152 = vmul.f32 %v6102, 1.442695
        %v6153 = vpow.pop %v6152
        %v6154 = vmul.f32 %v6146, 1.442695
        %v6155 = vpow.pop %v6154
        %v6156 = vld [vmem:[%s1 + $0x218] sm:$0xff]
        %v6157 = vld [vmem:[%s1 + $0x220] sm:$0xff]
        %v6158 = vld [vmem:[%s1 + $0x228] sm:$0xff]
        %v6159 = vld [vmem:[%s1 + $0x230] sm:$0xff]
        %6161 = vset.pattern.permute.xlu0 64
        %6162 = vperm.xlu0 %6161, %v6156
        %v6163 = vpop.permute.xlu0 %6162
        %6166 = vset.pattern.permute.xlu0 64
        %6167 = vperm.xlu0 %6166, %v6157
        %v6168 = vpop.permute.xlu0 %6167
        %6171 = vset.pattern.permute.xlu0 64
        %6172 = vperm.xlu0 %6171, %v6158
        %v6173 = vpop.permute.xlu0 %6172
        %6176 = vset.pattern.permute.xlu0 64
        %6177 = vperm.xlu0 %6176, %v6159
        %v6178 = vpop.permute.xlu0 %6177
        %v6180 = vsel %vm4743, %v6156, 0
        %v6182 = vsel %vm4743, %v6157, 0
        %v6184 = vsel %vm4743, %v6158, 0
        %v6186 = vsel %vm4743, %v6159, 0
        %6188 = vmatpush.msra.mxu0 0.0
        %6189 = vmatpush.msra.mxu0 0.0
        %6190 = vmatpush.msra.mxu0 0.0
        %6191 = vmatpush.msra.mxu0 0.0
        %6192 = vmatpush.msra.mxu0 0.0
        %6193 = vmatpush.msra.mxu0 0.0
        %6194 = vmatpush.msra.mxu0 0.0
        %6195 = vmatpush.msra.mxu0 0.0
        %6196 = vmatpush.msra.mxu0 %v6011
        %6197 = vmatpush.msra.mxu0 %v6008
        %6198 = vmatpush.msra.mxu0 %v6005
        %6199 = vmatpush.msra.mxu0 %v6002
        %6200 = vmatpush.msra.mxu0 %v5999
        %6201 = vmatpush.msra.mxu0 %v5996
        %6202 = vmatpush.msra.mxu0 %v5993
        %6203 = vmatpush.msra.mxu0 %v5990
        %6204 = vmatmul.f32.gmra.mxu0 %v6180
        %v6205 = vpop.f32.mrf.mxu0
        %v6206 = vadd.f32 %v6163, %v6205
        %6207 = vmatmul.f32.gmra.mxu0 %v6182
        %v6208 = vpop.f32.mrf.mxu0
        %v6209 = vadd.f32 %v6168, %v6208
        %6210 = vmatmul.f32.gmra.mxu0 %v6184
        %v6211 = vpop.f32.mrf.mxu0
        %v6212 = vadd.f32 %v6173, %v6211
        %6213 = vmatmul.f32.gmra.mxu0 %v6186
        %v6214 = vpop.f32.mrf.mxu0
        %v6215 = vadd.f32 %v6178, %v6214
        %6216 = vdwg.mxu0
        %6217 = vmatpush.msra.mxu0 0.0
        %6218 = vmatpush.msra.mxu0 0.0
        %6219 = vmatpush.msra.mxu0 0.0
        %6220 = vmatpush.msra.mxu0 0.0
        %6221 = vmatpush.msra.mxu0 0.0
        %6222 = vmatpush.msra.mxu0 0.0
        %6223 = vmatpush.msra.mxu0 0.0
        %6224 = vmatpush.msra.mxu0 0.0
        %6225 = vmatpush.msra.mxu0 %v6055
        %6226 = vmatpush.msra.mxu0 %v6052
        %6227 = vmatpush.msra.mxu0 %v6049
        %6228 = vmatpush.msra.mxu0 %v6046
        %6229 = vmatpush.msra.mxu0 %v6043
        %6230 = vmatpush.msra.mxu0 %v6040
        %6231 = vmatpush.msra.mxu0 %v6037
        %6232 = vmatpush.msra.mxu0 %v6034
        %6233 = vmatmul.f32.gmra.mxu0 %v6180
        %v6234 = vpop.f32.mrf.mxu0
        %v6235 = vadd.f32 %v6163, %v6234
        %6236 = vmatmul.f32.gmra.mxu0 %v6182
        %v6237 = vpop.f32.mrf.mxu0
        %v6238 = vadd.f32 %v6168, %v6237
        %6239 = vmatmul.f32.gmra.mxu0 %v6184
        %v6240 = vpop.f32.mrf.mxu0
        %v6241 = vadd.f32 %v6173, %v6240
        %6242 = vmatmul.f32.gmra.mxu0 %v6186
        %v6243 = vpop.f32.mrf.mxu0
        %v6244 = vadd.f32 %v6178, %v6243
        %6245 = vdwg.mxu0
        %6246 = vmatpush.msra.mxu0 0.0
        %6247 = vmatpush.msra.mxu0 0.0
        %6248 = vmatpush.msra.mxu0 0.0
        %6249 = vmatpush.msra.mxu0 0.0
        %6250 = vmatpush.msra.mxu0 0.0
        %6251 = vmatpush.msra.mxu0 0.0
        %6252 = vmatpush.msra.mxu0 0.0
        %6253 = vmatpush.msra.mxu0 0.0
        %6254 = vmatpush.msra.mxu0 %v6099
        %6255 = vmatpush.msra.mxu0 %v6096
        %6256 = vmatpush.msra.mxu0 %v6093
        %6257 = vmatpush.msra.mxu0 %v6090
        %6258 = vmatpush.msra.mxu0 %v6087
        %6259 = vmatpush.msra.mxu0 %v6084
        %6260 = vmatpush.msra.mxu0 %v6081
        %6261 = vmatpush.msra.mxu0 %v6078
        %6262 = vmatmul.f32.gmra.mxu0 %v6180
        %v6263 = vpop.f32.mrf.mxu0
        %v6264 = vadd.f32 %v6163, %v6263
        %6265 = vmatmul.f32.gmra.mxu0 %v6182
        %v6266 = vpop.f32.mrf.mxu0
        %v6267 = vadd.f32 %v6168, %v6266
        %6268 = vmatmul.f32.gmra.mxu0 %v6184
        %v6269 = vpop.f32.mrf.mxu0
        %v6270 = vadd.f32 %v6173, %v6269
        %6271 = vmatmul.f32.gmra.mxu0 %v6186
        %v6272 = vpop.f32.mrf.mxu0
        %v6273 = vadd.f32 %v6178, %v6272
        %6274 = vdwg.mxu0
        %6275 = vmatpush.msra.mxu0 0.0
        %6276 = vmatpush.msra.mxu0 0.0
        %6277 = vmatpush.msra.mxu0 0.0
        %6278 = vmatpush.msra.mxu0 0.0
        %6279 = vmatpush.msra.mxu0 0.0
        %6280 = vmatpush.msra.mxu0 0.0
        %6281 = vmatpush.msra.mxu0 0.0
        %6282 = vmatpush.msra.mxu0 0.0
        %6283 = vmatpush.msra.mxu0 %v6143
        %6284 = vmatpush.msra.mxu0 %v6140
        %6285 = vmatpush.msra.mxu0 %v6137
        %6286 = vmatpush.msra.mxu0 %v6134
        %6287 = vmatpush.msra.mxu0 %v6131
        %6288 = vmatpush.msra.mxu0 %v6128
        %6289 = vmatpush.msra.mxu0 %v6125
        %6290 = vmatpush.msra.mxu0 %v6122
        %6291 = vmatmul.f32.gmra.mxu0 %v6180
        %v6292 = vpop.f32.mrf.mxu0
        %v6293 = vadd.f32 %v6163, %v6292
        %6294 = vmatmul.f32.gmra.mxu0 %v6182
        %v6295 = vpop.f32.mrf.mxu0
        %v6296 = vadd.f32 %v6168, %v6295
        %6297 = vmatmul.f32.gmra.mxu0 %v6184
        %v6298 = vpop.f32.mrf.mxu0
        %v6299 = vadd.f32 %v6173, %v6298
        %6300 = vmatmul.f32.gmra.mxu0 %v6186
        %v6301 = vpop.f32.mrf.mxu0
        %v6302 = vadd.f32 %v6178, %v6301
        %6303 = vdwg.mxu0
        %v6304 = vld [vmem:[%s1 + $0x238] sm:$0xff]
        %v6305 = vld [vmem:[%s1 + $0x240] sm:$0xff]
        %v6306 = vld [vmem:[%s1 + $0x248] sm:$0xff]
        %v6307 = vld [vmem:[%s1 + $0x250] sm:$0xff]
        %v6309 = vsel %vm4240, %v6304, 0
        %v6312 = vsel %vm4240, %v6305, 0
        %v6315 = vsel %vm4240, %v6306, 0
        %v6318 = vsel %vm4240, %v6307, 0
        %6320 = vmatpush.msra.mxu0 0.0
        %6321 = vmatpush.msra.mxu0 0.0
        %6322 = vmatpush.msra.mxu0 0.0
        %6323 = vmatpush.msra.mxu0 0.0
        %6324 = vmatpush.msra.mxu0 0.0
        %6325 = vmatpush.msra.mxu0 0.0
        %6326 = vmatpush.msra.mxu0 0.0
        %6327 = vmatpush.msra.mxu0 0.0
        %6328 = vmatpush.msra.mxu0 0.0
        %6329 = vmatpush.msra.mxu0 0.0
        %6330 = vmatpush.msra.mxu0 0.0
        %6331 = vmatpush.msra.mxu0 0.0
        %6332 = vmatpush.msra.mxu0 0.0
        %6333 = vmatpush.msra.mxu0 %v3695
        %6334 = vmatpush.msra.mxu0 %v3075
        %6335 = vmatpush.msra.mxu0 %v2455
        %6336 = vmatmul.f32.gmra.mxu0 %v6309
        %v6337 = vpop.f32.mrf.mxu0
        %v6338 = vadd.f32 0.0, %v6337
        %6339 = vmatmul.f32.gmra.mxu0 %v6312
        %v6340 = vpop.f32.mrf.mxu0
        %v6341 = vadd.f32 0.0, %v6340
        %6342 = vmatmul.f32.gmra.mxu0 %v6315
        %v6343 = vpop.f32.mrf.mxu0
        %v6344 = vadd.f32 0.0, %v6343
        %6345 = vmatmul.f32.gmra.mxu0 %v6318
        %v6346 = vpop.f32.mrf.mxu0
        %v6347 = vadd.f32 0.0, %v6346
        %6348 = vdwg.mxu0
        %6349 = vmatpush.msra.mxu0 0.0
        %6350 = vmatpush.msra.mxu0 0.0
        %6351 = vmatpush.msra.mxu0 0.0
        %6352 = vmatpush.msra.mxu0 0.0
        %6353 = vmatpush.msra.mxu0 0.0
        %6354 = vmatpush.msra.mxu0 0.0
        %6355 = vmatpush.msra.mxu0 0.0
        %6356 = vmatpush.msra.mxu0 0.0
        %6357 = vmatpush.msra.mxu0 0.0
        %6358 = vmatpush.msra.mxu0 0.0
        %6359 = vmatpush.msra.mxu0 0.0
        %6360 = vmatpush.msra.mxu0 0.0
        %6361 = vmatpush.msra.mxu0 0.0
        %6362 = vmatpush.msra.mxu0 %v3850
        %6363 = vmatpush.msra.mxu0 %v3230
        %6364 = vmatpush.msra.mxu0 %v2610
        %6365 = vmatmul.f32.gmra.mxu0 %v6309
        %v6366 = vpop.f32.mrf.mxu0
        %v6367 = vadd.f32 0.0, %v6366
        %6368 = vmatmul.f32.gmra.mxu0 %v6312
        %v6369 = vpop.f32.mrf.mxu0
        %v6370 = vadd.f32 0.0, %v6369
        %6371 = vmatmul.f32.gmra.mxu0 %v6315
        %v6372 = vpop.f32.mrf.mxu0
        %v6373 = vadd.f32 0.0, %v6372
        %6374 = vmatmul.f32.gmra.mxu0 %v6318
        %v6375 = vpop.f32.mrf.mxu0
        %v6376 = vadd.f32 0.0, %v6375
        %6377 = vdwg.mxu0
        %6378 = vmatpush.msra.mxu0 0.0
        %6379 = vmatpush.msra.mxu0 0.0
        %6380 = vmatpush.msra.mxu0 0.0
        %6381 = vmatpush.msra.mxu0 0.0
        %6382 = vmatpush.msra.mxu0 0.0
        %6383 = vmatpush.msra.mxu0 0.0
        %6384 = vmatpush.msra.mxu0 0.0
        %6385 = vmatpush.msra.mxu0 0.0
        %6386 = vmatpush.msra.mxu0 0.0
        %6387 = vmatpush.msra.mxu0 0.0
        %6388 = vmatpush.msra.mxu0 0.0
        %6389 = vmatpush.msra.mxu0 0.0
        %6390 = vmatpush.msra.mxu0 0.0
        %6391 = vmatpush.msra.mxu0 %v4005
        %6392 = vmatpush.msra.mxu0 %v3385
        %6393 = vmatpush.msra.mxu0 %v2765
        %6394 = vmatmul.f32.gmra.mxu0 %v6309
        %v6395 = vpop.f32.mrf.mxu0
        %v6396 = vadd.f32 0.0, %v6395
        %6397 = vmatmul.f32.gmra.mxu0 %v6312
        %v6398 = vpop.f32.mrf.mxu0
        %v6399 = vadd.f32 0.0, %v6398
        %6400 = vmatmul.f32.gmra.mxu0 %v6315
        %v6401 = vpop.f32.mrf.mxu0
        %v6402 = vadd.f32 0.0, %v6401
        %6403 = vmatmul.f32.gmra.mxu0 %v6318
        %v6404 = vpop.f32.mrf.mxu0
        %v6405 = vadd.f32 0.0, %v6404
        %6406 = vdwg.mxu0
        %6407 = vmatpush.msra.mxu0 0.0
        %6408 = vmatpush.msra.mxu0 0.0
        %6409 = vmatpush.msra.mxu0 0.0
        %6410 = vmatpush.msra.mxu0 0.0
        %6411 = vmatpush.msra.mxu0 0.0
        %6412 = vmatpush.msra.mxu0 0.0
        %6413 = vmatpush.msra.mxu0 0.0
        %6414 = vmatpush.msra.mxu0 0.0
        %6415 = vmatpush.msra.mxu0 0.0
        %6416 = vmatpush.msra.mxu0 0.0
        %6417 = vmatpush.msra.mxu0 0.0
        %6418 = vmatpush.msra.mxu0 0.0
        %6419 = vmatpush.msra.mxu0 0.0
        %6420 = vmatpush.msra.mxu0 %v4160
        %6421 = vmatpush.msra.mxu0 %v3540
        %6422 = vmatpush.msra.mxu0 %v2920
        %6423 = vmatmul.f32.gmra.mxu0 %v6309
        %v6424 = vpop.f32.mrf.mxu0
        %v6425 = vadd.f32 0.0, %v6424
        %6426 = vmatmul.f32.gmra.mxu0 %v6312
        %v6427 = vpop.f32.mrf.mxu0
        %v6428 = vadd.f32 0.0, %v6427
        %6429 = vmatmul.f32.gmra.mxu0 %v6315
        %v6430 = vpop.f32.mrf.mxu0
        %v6431 = vadd.f32 0.0, %v6430
        %6432 = vmatmul.f32.gmra.mxu0 %v6318
        %v6433 = vpop.f32.mrf.mxu0
        %v6434 = vadd.f32 0.0, %v6433
        %6435 = vdwg.mxu0
        %v6436 = vadd.f32 %v6206, %v6338
        %v6437 = vadd.f32 %v6235, %v6367
        %v6438 = vadd.f32 %v6264, %v6396
        %v6439 = vadd.f32 %v6293, %v6425
        %v6440 = vadd.f32 %v6209, %v6341
        %v6441 = vadd.f32 %v6238, %v6370
        %v6442 = vadd.f32 %v6267, %v6399
        %v6443 = vadd.f32 %v6296, %v6428
        %v6444 = vadd.f32 %v6212, %v6344
        %v6445 = vadd.f32 %v6241, %v6373
        %v6446 = vadd.f32 %v6270, %v6402
        %v6447 = vadd.f32 %v6299, %v6431
        %v6448 = vadd.f32 %v6215, %v6347
        %v6449 = vadd.f32 %v6244, %v6376
        %v6450 = vadd.f32 %v6273, %v6405
        %v6451 = vadd.f32 %v6302, %v6434
        %v6452 = vld [vmem:[%s1 + $0x258] sm:$0xff]
        %v6453 = vld [vmem:[%s1 + $0x260] sm:$0xff]
        %v6454 = vld [vmem:[%s1 + $0x268] sm:$0xff]
        %v6455 = vld [vmem:[%s1 + $0x270] sm:$0xff]
        %vm6456 = vcmask 261120
        %v6458 = vsel %vm6456, %v6452, 0
        %v6461 = vsel %vm6456, %v6453, 0
        %v6464 = vsel %vm6456, %v6454, 0
        %v6467 = vsel %vm6456, %v6455, 0
        %6469 = vmatpush.msra.mxu0 0.0
        %6470 = vmatpush.msra.mxu0 0.0
        %6471 = vmatpush.msra.mxu0 0.0
        %6472 = vmatpush.msra.mxu0 0.0
        %6473 = vmatpush.msra.mxu0 0.0
        %6474 = vmatpush.msra.mxu0 0.0
        %6475 = vmatpush.msra.mxu0 0.0
        %6476 = vmatpush.msra.mxu0 0.0
        %6477 = vmatpush.msra.mxu0 0.0
        %6478 = vmatpush.msra.mxu0 0.0
        %6479 = vmatpush.msra.mxu0 0.0
        %6480 = vmatpush.msra.mxu0 0.0
        %6481 = vmatpush.msra.mxu0 %v222
        %6482 = vmatpush.msra.mxu0 %v218
        %6483 = vmatpush.msra.mxu0 %v214
        %6484 = vmatpush.msra.mxu0 %v210
        %6485 = vmatmul.f32.gmra.mxu0 %v6458
        %v6486 = vpop.f32.mrf.mxu0
        %v6487 = vadd.f32 0.0, %v6486
        %6488 = vmatmul.f32.gmra.mxu0 %v6461
        %v6489 = vpop.f32.mrf.mxu0
        %v6490 = vadd.f32 0.0, %v6489
        %6491 = vmatmul.f32.gmra.mxu0 %v6464
        %v6492 = vpop.f32.mrf.mxu0
        %v6493 = vadd.f32 0.0, %v6492
        %6494 = vmatmul.f32.gmra.mxu0 %v6467
        %v6495 = vpop.f32.mrf.mxu0
        %v6496 = vadd.f32 0.0, %v6495
        %6497 = vdwg.mxu0
        %6498 = vmatpush.msra.mxu0 0.0
        %6499 = vmatpush.msra.mxu0 0.0
        %6500 = vmatpush.msra.mxu0 0.0
        %6501 = vmatpush.msra.mxu0 0.0
        %6502 = vmatpush.msra.mxu0 0.0
        %6503 = vmatpush.msra.mxu0 0.0
        %6504 = vmatpush.msra.mxu0 0.0
        %6505 = vmatpush.msra.mxu0 0.0
        %6506 = vmatpush.msra.mxu0 0.0
        %6507 = vmatpush.msra.mxu0 0.0
        %6508 = vmatpush.msra.mxu0 0.0
        %6509 = vmatpush.msra.mxu0 0.0
        %6510 = vmatpush.msra.mxu0 %v223
        %6511 = vmatpush.msra.mxu0 %v219
        %6512 = vmatpush.msra.mxu0 %v215
        %6513 = vmatpush.msra.mxu0 %v211
        %6514 = vmatmul.f32.gmra.mxu0 %v6458
        %v6515 = vpop.f32.mrf.mxu0
        %v6516 = vadd.f32 0.0, %v6515
        %6517 = vmatmul.f32.gmra.mxu0 %v6461
        %v6518 = vpop.f32.mrf.mxu0
        %v6519 = vadd.f32 0.0, %v6518
        %6520 = vmatmul.f32.gmra.mxu0 %v6464
        %v6521 = vpop.f32.mrf.mxu0
        %v6522 = vadd.f32 0.0, %v6521
        %6523 = vmatmul.f32.gmra.mxu0 %v6467
        %v6524 = vpop.f32.mrf.mxu0
        %v6525 = vadd.f32 0.0, %v6524
        %6526 = vdwg.mxu0
        %6527 = vmatpush.msra.mxu0 0.0
        %6528 = vmatpush.msra.mxu0 0.0
        %6529 = vmatpush.msra.mxu0 0.0
        %6530 = vmatpush.msra.mxu0 0.0
        %6531 = vmatpush.msra.mxu0 0.0
        %6532 = vmatpush.msra.mxu0 0.0
        %6533 = vmatpush.msra.mxu0 0.0
        %6534 = vmatpush.msra.mxu0 0.0
        %6535 = vmatpush.msra.mxu0 0.0
        %6536 = vmatpush.msra.mxu0 0.0
        %6537 = vmatpush.msra.mxu0 0.0
        %6538 = vmatpush.msra.mxu0 0.0
        %6539 = vmatpush.msra.mxu0 %v224
        %6540 = vmatpush.msra.mxu0 %v220
        %6541 = vmatpush.msra.mxu0 %v216
        %6542 = vmatpush.msra.mxu0 %v212
        %6543 = vmatmul.f32.gmra.mxu0 %v6458
        %v6544 = vpop.f32.mrf.mxu0
        %v6545 = vadd.f32 0.0, %v6544
        %6546 = vmatmul.f32.gmra.mxu0 %v6461
        %v6547 = vpop.f32.mrf.mxu0
        %v6548 = vadd.f32 0.0, %v6547
        %6549 = vmatmul.f32.gmra.mxu0 %v6464
        %v6550 = vpop.f32.mrf.mxu0
        %v6551 = vadd.f32 0.0, %v6550
        %6552 = vmatmul.f32.gmra.mxu0 %v6467
        %v6553 = vpop.f32.mrf.mxu0
        %v6554 = vadd.f32 0.0, %v6553
        %6555 = vdwg.mxu0
        %6556 = vmatpush.msra.mxu0 0.0
        %6557 = vmatpush.msra.mxu0 0.0
        %6558 = vmatpush.msra.mxu0 0.0
        %6559 = vmatpush.msra.mxu0 0.0
        %6560 = vmatpush.msra.mxu0 0.0
        %6561 = vmatpush.msra.mxu0 0.0
        %6562 = vmatpush.msra.mxu0 0.0
        %6563 = vmatpush.msra.mxu0 0.0
        %6564 = vmatpush.msra.mxu0 0.0
        %6565 = vmatpush.msra.mxu0 0.0
        %6566 = vmatpush.msra.mxu0 0.0
        %6567 = vmatpush.msra.mxu0 0.0
        %6568 = vmatpush.msra.mxu0 %v225
        %6569 = vmatpush.msra.mxu0 %v221
        %6570 = vmatpush.msra.mxu0 %v217
        %6571 = vmatpush.msra.mxu0 %v213
        %6572 = vmatmul.f32.gmra.mxu0 %v6458
        %v6573 = vpop.f32.mrf.mxu0
        %v6574 = vadd.f32 0.0, %v6573
        %6575 = vmatmul.f32.gmra.mxu0 %v6461
        %v6576 = vpop.f32.mrf.mxu0
        %v6577 = vadd.f32 0.0, %v6576
        %6578 = vmatmul.f32.gmra.mxu0 %v6464
        %v6579 = vpop.f32.mrf.mxu0
        %v6580 = vadd.f32 0.0, %v6579
        %6581 = vmatmul.f32.gmra.mxu0 %v6467
        %v6582 = vpop.f32.mrf.mxu0
        %v6583 = vadd.f32 0.0, %v6582
        %6584 = vdwg.mxu0
        %v6585 = vadd.f32 %v6436, %v6487
        %v6586 = vadd.f32 %v6437, %v6516
        %v6587 = vadd.f32 %v6438, %v6545
        %v6588 = vadd.f32 %v6439, %v6574
        %v6589 = vadd.f32 %v6440, %v6490
        %v6590 = vadd.f32 %v6441, %v6519
        %v6591 = vadd.f32 %v6442, %v6548
        %v6592 = vadd.f32 %v6443, %v6577
        %v6593 = vadd.f32 %v6444, %v6493
        %v6594 = vadd.f32 %v6445, %v6522
        %v6595 = vadd.f32 %v6446, %v6551
        %v6596 = vadd.f32 %v6447, %v6580
        %v6597 = vadd.f32 %v6448, %v6496
        %v6598 = vadd.f32 %v6449, %v6525
        %v6599 = vadd.f32 %v6450, %v6554
        %v6600 = vadd.f32 %v6451, %v6583
        %v6601 = vld [vmem:[%s1 + $0x278] sm:$0xff]
        %v6602 = vld [vmem:[%s1 + $0x280] sm:$0xff]
        %v6603 = vld [vmem:[%s1 + $0x288] sm:$0xff]
        %v6604 = vld [vmem:[%s1 + $0x290] sm:$0xff]
        %vm6605 = vcmask 64512
        %v6607 = vsel %vm6605, %v6601, 0
        %v6610 = vsel %vm6605, %v6602, 0
        %v6613 = vsel %vm6605, %v6603, 0
        %v6616 = vsel %vm6605, %v6604, 0
        %6618 = vmatpush.msra.mxu0 0.0
        %6619 = vmatpush.msra.mxu0 0.0
        %6620 = vmatpush.msra.mxu0 0.0
        %6621 = vmatpush.msra.mxu0 0.0
        %6622 = vmatpush.msra.mxu0 0.0
        %6623 = vmatpush.msra.mxu0 0.0
        %6624 = vmatpush.msra.mxu0 0.0
        %6625 = vmatpush.msra.mxu0 0.0
        %6626 = vmatpush.msra.mxu0 0.0
        %6627 = vmatpush.msra.mxu0 0.0
        %6628 = vmatpush.msra.mxu0 0.0
        %6629 = vmatpush.msra.mxu0 0.0
        %6630 = vmatpush.msra.mxu0 0.0
        %6631 = vmatpush.msra.mxu0 0.0
        %6632 = vmatpush.msra.mxu0 0.0
        %6633 = vmatpush.msra.mxu0 %v4188
        %6634 = vmatmul.f32.gmra.mxu0 %v6607
        %v6635 = vpop.f32.mrf.mxu0
        %v6636 = vadd.f32 0.0, %v6635
        %6637 = vmatmul.f32.gmra.mxu0 %v6610
        %v6638 = vpop.f32.mrf.mxu0
        %v6639 = vadd.f32 0.0, %v6638
        %6640 = vmatmul.f32.gmra.mxu0 %v6613
        %v6641 = vpop.f32.mrf.mxu0
        %v6642 = vadd.f32 0.0, %v6641
        %6643 = vmatmul.f32.gmra.mxu0 %v6616
        %v6644 = vpop.f32.mrf.mxu0
        %v6645 = vadd.f32 0.0, %v6644
        %6646 = vdwg.mxu0
        %6647 = vmatpush.msra.mxu0 0.0
        %6648 = vmatpush.msra.mxu0 0.0
        %6649 = vmatpush.msra.mxu0 0.0
        %6650 = vmatpush.msra.mxu0 0.0
        %6651 = vmatpush.msra.mxu0 0.0
        %6652 = vmatpush.msra.mxu0 0.0
        %6653 = vmatpush.msra.mxu0 0.0
        %6654 = vmatpush.msra.mxu0 0.0
        %6655 = vmatpush.msra.mxu0 0.0
        %6656 = vmatpush.msra.mxu0 0.0
        %6657 = vmatpush.msra.mxu0 0.0
        %6658 = vmatpush.msra.mxu0 0.0
        %6659 = vmatpush.msra.mxu0 0.0
        %6660 = vmatpush.msra.mxu0 0.0
        %6661 = vmatpush.msra.mxu0 0.0
        %6662 = vmatpush.msra.mxu0 %v4189
        %6663 = vmatmul.f32.gmra.mxu0 %v6607
        %v6664 = vpop.f32.mrf.mxu0
        %v6665 = vadd.f32 0.0, %v6664
        %6666 = vmatmul.f32.gmra.mxu0 %v6610
        %v6667 = vpop.f32.mrf.mxu0
        %v6668 = vadd.f32 0.0, %v6667
        %6669 = vmatmul.f32.gmra.mxu0 %v6613
        %v6670 = vpop.f32.mrf.mxu0
        %v6671 = vadd.f32 0.0, %v6670
        %6672 = vmatmul.f32.gmra.mxu0 %v6616
        %v6673 = vpop.f32.mrf.mxu0
        %v6674 = vadd.f32 0.0, %v6673
        %6675 = vdwg.mxu0
        %6676 = vmatpush.msra.mxu0 0.0
        %6677 = vmatpush.msra.mxu0 0.0
        %6678 = vmatpush.msra.mxu0 0.0
        %6679 = vmatpush.msra.mxu0 0.0
        %6680 = vmatpush.msra.mxu0 0.0
        %6681 = vmatpush.msra.mxu0 0.0
        %6682 = vmatpush.msra.mxu0 0.0
        %6683 = vmatpush.msra.mxu0 0.0
        %6684 = vmatpush.msra.mxu0 0.0
        %6685 = vmatpush.msra.mxu0 0.0
        %6686 = vmatpush.msra.mxu0 0.0
        %6687 = vmatpush.msra.mxu0 0.0
        %6688 = vmatpush.msra.mxu0 0.0
        %6689 = vmatpush.msra.mxu0 0.0
        %6690 = vmatpush.msra.mxu0 0.0
        %6691 = vmatpush.msra.mxu0 %v4190
        %6692 = vmatmul.f32.gmra.mxu0 %v6607
        %v6693 = vpop.f32.mrf.mxu0
        %v6694 = vadd.f32 0.0, %v6693
        %6695 = vmatmul.f32.gmra.mxu0 %v6610
        %v6696 = vpop.f32.mrf.mxu0
        %v6697 = vadd.f32 0.0, %v6696
        %6698 = vmatmul.f32.gmra.mxu0 %v6613
        %v6699 = vpop.f32.mrf.mxu0
        %v6700 = vadd.f32 0.0, %v6699
        %6701 = vmatmul.f32.gmra.mxu0 %v6616
        %v6702 = vpop.f32.mrf.mxu0
        %v6703 = vadd.f32 0.0, %v6702
        %6704 = vdwg.mxu0
        %6705 = vmatpush.msra.mxu0 0.0
        %6706 = vmatpush.msra.mxu0 0.0
        %6707 = vmatpush.msra.mxu0 0.0
        %6708 = vmatpush.msra.mxu0 0.0
        %6709 = vmatpush.msra.mxu0 0.0
        %6710 = vmatpush.msra.mxu0 0.0
        %6711 = vmatpush.msra.mxu0 0.0
        %6712 = vmatpush.msra.mxu0 0.0
        %6713 = vmatpush.msra.mxu0 0.0
        %6714 = vmatpush.msra.mxu0 0.0
        %6715 = vmatpush.msra.mxu0 0.0
        %6716 = vmatpush.msra.mxu0 0.0
        %6717 = vmatpush.msra.mxu0 0.0
        %6718 = vmatpush.msra.mxu0 0.0
        %6719 = vmatpush.msra.mxu0 0.0
        %6720 = vmatpush.msra.mxu0 %v4191
        %6721 = vmatmul.f32.gmra.mxu0 %v6607
        %v6722 = vpop.f32.mrf.mxu0
        %v6723 = vadd.f32 0.0, %v6722
        %6724 = vmatmul.f32.gmra.mxu0 %v6610
        %v6725 = vpop.f32.mrf.mxu0
        %v6726 = vadd.f32 0.0, %v6725
        %6727 = vmatmul.f32.gmra.mxu0 %v6613
        %v6728 = vpop.f32.mrf.mxu0
        %v6729 = vadd.f32 0.0, %v6728
        %6730 = vmatmul.f32.gmra.mxu0 %v6616
        %v6731 = vpop.f32.mrf.mxu0
        %v6732 = vadd.f32 0.0, %v6731
        %6733 = vdwg.mxu0
        %v6734 = vadd.f32 %v6585, %v6636
        %v6735 = vadd.f32 %v6586, %v6665
        %v6736 = vadd.f32 %v6587, %v6694
        %v6737 = vadd.f32 %v6588, %v6723
        %v6738 = vadd.f32 %v6589, %v6639
        %v6739 = vadd.f32 %v6590, %v6668
        %v6740 = vadd.f32 %v6591, %v6697
        %v6741 = vadd.f32 %v6592, %v6726
        %v6742 = vadd.f32 %v6593, %v6642
        %v6743 = vadd.f32 %v6594, %v6671
        %v6744 = vadd.f32 %v6595, %v6700
        %v6745 = vadd.f32 %v6596, %v6729
        %v6746 = vadd.f32 %v6597, %v6645
        %v6747 = vadd.f32 %v6598, %v6674
        %v6748 = vadd.f32 %v6599, %v6703
        %v6749 = vadd.f32 %v6600, %v6732
        %v6750 = vmax.f32 %v6734, 0.0
        %v6751 = vmax.f32 %v6735, 0.0
        %v6752 = vmax.f32 %v6736, 0.0
        %v6753 = vmax.f32 %v6737, 0.0
        %v6754 = vmax.f32 %v6738, 0.0
        %v6755 = vmax.f32 %v6739, 0.0
        %v6756 = vmax.f32 %v6740, 0.0
        %v6757 = vmax.f32 %v6741, 0.0
        %v6758 = vmax.f32 %v6742, 0.0
        %v6759 = vmax.f32 %v6743, 0.0
        %v6760 = vmax.f32 %v6744, 0.0
        %v6761 = vmax.f32 %v6745, 0.0
        %v6762 = vmax.f32 %v6746, 0.0
        %v6763 = vmax.f32 %v6747, 0.0
        %v6764 = vmax.f32 %v6748, 0.0
        %v6765 = vmax.f32 %v6749, 0.0
        %v6766 = vld [vmem:[%s1 + $0x298] sm:$0xff]
        %v6767 = vld [vmem:[%s1 + $0x2a0] sm:$0xff]
        %v6768 = vld [vmem:[%s1 + $0x2a8] sm:$0xff]
        %v6769 = vld [vmem:[%s1 + $0x2b0] sm:$0xff]
        %6771 = vset.pattern.permute.xlu0 32
        %6772 = vperm.xlu0 %6771, %v6766
        %v6773 = vpop.permute.xlu0 %6772
        %6776 = vset.pattern.permute.xlu0 32
        %6777 = vperm.xlu0 %6776, %v6767
        %v6778 = vpop.permute.xlu0 %6777
        %6781 = vset.pattern.permute.xlu0 32
        %6782 = vperm.xlu0 %6781, %v6768
        %v6783 = vpop.permute.xlu0 %6782
        %6786 = vset.pattern.permute.xlu0 32
        %6787 = vperm.xlu0 %6786, %v6769
        %v6788 = vpop.permute.xlu0 %6787
        %v6790 = vsel %vm6456, %v6766, 0
        %v6792 = vsel %vm6456, %v6767, 0
        %v6794 = vsel %vm6456, %v6768, 0
        %v6796 = vsel %vm6456, %v6769, 0
        %6798 = vmatpush.msra.mxu0 0.0
        %6799 = vmatpush.msra.mxu0 0.0
        %6800 = vmatpush.msra.mxu0 0.0
        %6801 = vmatpush.msra.mxu0 0.0
        %6802 = vmatpush.msra.mxu0 0.0
        %6803 = vmatpush.msra.mxu0 0.0
        %6804 = vmatpush.msra.mxu0 0.0
        %6805 = vmatpush.msra.mxu0 0.0
        %6806 = vmatpush.msra.mxu0 0.0
        %6807 = vmatpush.msra.mxu0 0.0
        %6808 = vmatpush.msra.mxu0 0.0
        %6809 = vmatpush.msra.mxu0 0.0
        %6810 = vmatpush.msra.mxu0 %v6762
        %6811 = vmatpush.msra.mxu0 %v6758
        %6812 = vmatpush.msra.mxu0 %v6754
        %6813 = vmatpush.msra.mxu0 %v6750
        %6814 = vmatmul.f32.gmra.mxu0 %v6790
        %v6815 = vpop.f32.mrf.mxu0
        %v6816 = vadd.f32 %v6773, %v6815
        %6817 = vmatmul.f32.gmra.mxu0 %v6792
        %v6818 = vpop.f32.mrf.mxu0
        %v6819 = vadd.f32 %v6778, %v6818
        %6820 = vmatmul.f32.gmra.mxu0 %v6794
        %v6821 = vpop.f32.mrf.mxu0
        %v6822 = vadd.f32 %v6783, %v6821
        %6823 = vmatmul.f32.gmra.mxu0 %v6796
        %v6824 = vpop.f32.mrf.mxu0
        %v6825 = vadd.f32 %v6788, %v6824
        %6826 = vdwg.mxu0
        %6827 = vmatpush.msra.mxu0 0.0
        %6828 = vmatpush.msra.mxu0 0.0
        %6829 = vmatpush.msra.mxu0 0.0
        %6830 = vmatpush.msra.mxu0 0.0
        %6831 = vmatpush.msra.mxu0 0.0
        %6832 = vmatpush.msra.mxu0 0.0
        %6833 = vmatpush.msra.mxu0 0.0
        %6834 = vmatpush.msra.mxu0 0.0
        %6835 = vmatpush.msra.mxu0 0.0
        %6836 = vmatpush.msra.mxu0 0.0
        %6837 = vmatpush.msra.mxu0 0.0
        %6838 = vmatpush.msra.mxu0 0.0
        %6839 = vmatpush.msra.mxu0 %v6763
        %6840 = vmatpush.msra.mxu0 %v6759
        %6841 = vmatpush.msra.mxu0 %v6755
        %6842 = vmatpush.msra.mxu0 %v6751
        %6843 = vmatmul.f32.gmra.mxu0 %v6790
        %v6844 = vpop.f32.mrf.mxu0
        %v6845 = vadd.f32 %v6773, %v6844
        %6846 = vmatmul.f32.gmra.mxu0 %v6792
        %v6847 = vpop.f32.mrf.mxu0
        %v6848 = vadd.f32 %v6778, %v6847
        %6849 = vmatmul.f32.gmra.mxu0 %v6794
        %v6850 = vpop.f32.mrf.mxu0
        %v6851 = vadd.f32 %v6783, %v6850
        %6852 = vmatmul.f32.gmra.mxu0 %v6796
        %v6853 = vpop.f32.mrf.mxu0
        %v6854 = vadd.f32 %v6788, %v6853
        %6855 = vdwg.mxu0
        %6856 = vmatpush.msra.mxu0 0.0
        %6857 = vmatpush.msra.mxu0 0.0
        %6858 = vmatpush.msra.mxu0 0.0
        %6859 = vmatpush.msra.mxu0 0.0
        %6860 = vmatpush.msra.mxu0 0.0
        %6861 = vmatpush.msra.mxu0 0.0
        %6862 = vmatpush.msra.mxu0 0.0
        %6863 = vmatpush.msra.mxu0 0.0
        %6864 = vmatpush.msra.mxu0 0.0
        %6865 = vmatpush.msra.mxu0 0.0
        %6866 = vmatpush.msra.mxu0 0.0
        %6867 = vmatpush.msra.mxu0 0.0
        %6868 = vmatpush.msra.mxu0 %v6764
        %6869 = vmatpush.msra.mxu0 %v6760
        %6870 = vmatpush.msra.mxu0 %v6756
        %6871 = vmatpush.msra.mxu0 %v6752
        %6872 = vmatmul.f32.gmra.mxu0 %v6790
        %v6873 = vpop.f32.mrf.mxu0
        %v6874 = vadd.f32 %v6773, %v6873
        %6875 = vmatmul.f32.gmra.mxu0 %v6792
        %v6876 = vpop.f32.mrf.mxu0
        %v6877 = vadd.f32 %v6778, %v6876
        %6878 = vmatmul.f32.gmra.mxu0 %v6794
        %v6879 = vpop.f32.mrf.mxu0
        %v6880 = vadd.f32 %v6783, %v6879
        %6881 = vmatmul.f32.gmra.mxu0 %v6796
        %v6882 = vpop.f32.mrf.mxu0
        %v6883 = vadd.f32 %v6788, %v6882
        %6884 = vdwg.mxu0
        %6885 = vmatpush.msra.mxu0 0.0
        %6886 = vmatpush.msra.mxu0 0.0
        %6887 = vmatpush.msra.mxu0 0.0
        %6888 = vmatpush.msra.mxu0 0.0
        %6889 = vmatpush.msra.mxu0 0.0
        %6890 = vmatpush.msra.mxu0 0.0
        %6891 = vmatpush.msra.mxu0 0.0
        %6892 = vmatpush.msra.mxu0 0.0
        %6893 = vmatpush.msra.mxu0 0.0
        %6894 = vmatpush.msra.mxu0 0.0
        %6895 = vmatpush.msra.mxu0 0.0
        %6896 = vmatpush.msra.mxu0 0.0
        %6897 = vmatpush.msra.mxu0 %v6765
        %6898 = vmatpush.msra.mxu0 %v6761
        %6899 = vmatpush.msra.mxu0 %v6757
        %6900 = vmatpush.msra.mxu0 %v6753
        %6901 = vmatmul.f32.gmra.mxu0 %v6790
        %v6902 = vpop.f32.mrf.mxu0
        %v6903 = vadd.f32 %v6773, %v6902
        %6904 = vmatmul.f32.gmra.mxu0 %v6792
        %v6905 = vpop.f32.mrf.mxu0
        %v6906 = vadd.f32 %v6778, %v6905
        %6907 = vmatmul.f32.gmra.mxu0 %v6794
        %v6908 = vpop.f32.mrf.mxu0
        %v6909 = vadd.f32 %v6783, %v6908
        %6910 = vmatmul.f32.gmra.mxu0 %v6796
        %v6911 = vpop.f32.mrf.mxu0
        %v6912 = vadd.f32 %v6788, %v6911
        %6913 = vdwg.mxu0
        %v6914 = vmax.f32 %v6816, 0.0
        %v6915 = vmax.f32 %v6845, 0.0
        %v6916 = vmax.f32 %v6874, 0.0
        %v6917 = vmax.f32 %v6903, 0.0
        %v6918 = vmax.f32 %v6819, 0.0
        %v6919 = vmax.f32 %v6848, 0.0
        %v6920 = vmax.f32 %v6877, 0.0
        %v6921 = vmax.f32 %v6906, 0.0
        %v6922 = vmax.f32 %v6822, 0.0
        %v6923 = vmax.f32 %v6851, 0.0
        %v6924 = vmax.f32 %v6880, 0.0
        %v6925 = vmax.f32 %v6909, 0.0
        %v6926 = vmax.f32 %v6825, 0.0
        %v6927 = vmax.f32 %v6854, 0.0
        %v6928 = vmax.f32 %v6883, 0.0
        %v6929 = vmax.f32 %v6912, 0.0
        %v6930 = vld [vmem:[%s1 + $0x2b8] sm:$0x7]
        %6932 = vset.pattern.permute.xlu0 32
        %6933 = vperm.xlu0 %6932, %v6930
        %v6934 = vpop.permute.xlu0 %6933
        %v6936 = vsel %vm6456, %v6930, 0
        %6938 = vmatpush.msra.mxu0 0.0
        %6939 = vmatpush.msra.mxu0 0.0
        %6940 = vmatpush.msra.mxu0 0.0
        %6941 = vmatpush.msra.mxu0 0.0
        %6942 = vmatpush.msra.mxu0 0.0
        %6943 = vmatpush.msra.mxu0 0.0
        %6944 = vmatpush.msra.mxu0 0.0
        %6945 = vmatpush.msra.mxu0 0.0
        %6946 = vmatpush.msra.mxu0 0.0
        %6947 = vmatpush.msra.mxu0 0.0
        %6948 = vmatpush.msra.mxu0 0.0
        %6949 = vmatpush.msra.mxu0 0.0
        %6950 = vmatpush.msra.mxu0 %v6926
        %6951 = vmatpush.msra.mxu0 %v6922
        %6952 = vmatpush.msra.mxu0 %v6918
        %6953 = vmatpush.msra.mxu0 %v6914
        %6954 = vmatmul.f32.gmra.mxu0 %v6936
        %v6955 = vpop.f32.mrf.mxu0
        %v6956 = vadd.f32 %v6934, %v6955
        %6957 = vdwg.mxu0
        %6958 = vmatpush.msra.mxu0 0.0
        %6959 = vmatpush.msra.mxu0 0.0
        %6960 = vmatpush.msra.mxu0 0.0
        %6961 = vmatpush.msra.mxu0 0.0
        %6962 = vmatpush.msra.mxu0 0.0
        %6963 = vmatpush.msra.mxu0 0.0
        %6964 = vmatpush.msra.mxu0 0.0
        %6965 = vmatpush.msra.mxu0 0.0
        %6966 = vmatpush.msra.mxu0 0.0
        %6967 = vmatpush.msra.mxu0 0.0
        %6968 = vmatpush.msra.mxu0 0.0
        %6969 = vmatpush.msra.mxu0 0.0
        %6970 = vmatpush.msra.mxu0 %v6927
        %6971 = vmatpush.msra.mxu0 %v6923
        %6972 = vmatpush.msra.mxu0 %v6919
        %6973 = vmatpush.msra.mxu0 %v6915
        %6974 = vmatmul.f32.gmra.mxu0 %v6936
        %v6975 = vpop.f32.mrf.mxu0
        %v6976 = vadd.f32 %v6934, %v6975
        %6977 = vdwg.mxu0
        %6978 = vmatpush.msra.mxu0 0.0
        %6979 = vmatpush.msra.mxu0 0.0
        %6980 = vmatpush.msra.mxu0 0.0
        %6981 = vmatpush.msra.mxu0 0.0
        %6982 = vmatpush.msra.mxu0 0.0
        %6983 = vmatpush.msra.mxu0 0.0
        %6984 = vmatpush.msra.mxu0 0.0
        %6985 = vmatpush.msra.mxu0 0.0
        %6986 = vmatpush.msra.mxu0 0.0
        %6987 = vmatpush.msra.mxu0 0.0
        %6988 = vmatpush.msra.mxu0 0.0
        %6989 = vmatpush.msra.mxu0 0.0
        %6990 = vmatpush.msra.mxu0 %v6928
        %6991 = vmatpush.msra.mxu0 %v6924
        %6992 = vmatpush.msra.mxu0 %v6920
        %6993 = vmatpush.msra.mxu0 %v6916
        %6994 = vmatmul.f32.gmra.mxu0 %v6936
        %v6995 = vpop.f32.mrf.mxu0
        %v6996 = vadd.f32 %v6934, %v6995
        %6997 = vdwg.mxu0
        %6998 = vmatpush.msra.mxu0 0.0
        %6999 = vmatpush.msra.mxu0 0.0
        %7000 = vmatpush.msra.mxu0 0.0
        %7001 = vmatpush.msra.mxu0 0.0
        %7002 = vmatpush.msra.mxu0 0.0
        %7003 = vmatpush.msra.mxu0 0.0
        %7004 = vmatpush.msra.mxu0 0.0
        %7005 = vmatpush.msra.mxu0 0.0
        %7006 = vmatpush.msra.mxu0 0.0
        %7007 = vmatpush.msra.mxu0 0.0
        %7008 = vmatpush.msra.mxu0 0.0
        %7009 = vmatpush.msra.mxu0 0.0
        %7010 = vmatpush.msra.mxu0 %v6929
        %7011 = vmatpush.msra.mxu0 %v6925
        %7012 = vmatpush.msra.mxu0 %v6921
        %7013 = vmatpush.msra.mxu0 %v6917
        %7014 = vmatmul.f32.gmra.mxu0 %v6936
        %v7015 = vpop.f32.mrf.mxu0
        %v7016 = vadd.f32 %v6934, %v7015
        %7017 = vdwg.mxu0
        %v7018 = vxor.u32 %v6956, 2147483648
        %v7019 = vxor.u32 %v6976, 2147483648
        %v7020 = vxor.u32 %v6996, 2147483648
        %v7021 = vxor.u32 %v7016, 2147483648
        %v7022 = vmul.f32 %v7018, 1.442695
        %v7023 = vpow.pop %v7022
        %v7024 = vmul.f32 %v7019, 1.442695
        %v7025 = vpow.pop %v7024
        %v7026 = vmul.f32 %v7020, 1.442695
        %v7027 = vpow.pop %v7026
        %v7028 = vmul.f32 %v7021, 1.442695
        %v7029 = vpow.pop %v7028
        %v7030 = vadd.f32 %v7023, 1.0
        %v7031 = vadd.f32 %v7025, 1.0
        %v7032 = vadd.f32 %v7027, 1.0
        %v7033 = vadd.f32 %v7029, 1.0
        %v7034 = vrcp.pop %v7030
        %v7035 = vmul.f32 %v7030, %v7034
        %v7036 = vsub.f32 1.0, %v7035
        %v7037 = vmul.f32 %v7034, %v7036
        %v7038 = vadd.f32 %v7034, %v7037
        %vm7039 = vweird.f32 %v7030
        %vm7040 = vweird.f32 %v7034
        %vm7041 = vmor %vm7039, %vm7040
        %v7042 = vsel %vm7041, %v7034, %v7038
        %v7043 = vand.u32 2147483647, %v7030
        %vm7044 = vcmp.eq.f32.partialorder %v7043, 8.507059e+37
        %v7045 = vand.u32 %v7030, 2147483648
        %v7046 = vor.u32 1.1754944e-38, %v7045
        %v7047 = vsel %vm7044, %v7046, %v7042
        %v7048 = vmul.f32 1.0, %v7047
        %v7049 = vrcp.pop %v7031
        %v7050 = vmul.f32 %v7031, %v7049
        %v7051 = vsub.f32 1.0, %v7050
        %v7052 = vmul.f32 %v7049, %v7051
        %v7053 = vadd.f32 %v7049, %v7052
        %vm7054 = vweird.f32 %v7031
        %vm7055 = vweird.f32 %v7049
        %vm7056 = vmor %vm7054, %vm7055
        %v7057 = vsel %vm7056, %v7049, %v7053
        %v7058 = vand.u32 2147483647, %v7031
        %vm7059 = vcmp.eq.f32.partialorder %v7058, 8.507059e+37
        %v7060 = vand.u32 %v7031, 2147483648
        %v7061 = vor.u32 1.1754944e-38, %v7060
        %v7062 = vsel %vm7059, %v7061, %v7057
        %v7063 = vmul.f32 1.0, %v7062
        %v7064 = vrcp.pop %v7032
        %v7065 = vmul.f32 %v7032, %v7064
        %v7066 = vsub.f32 1.0, %v7065
        %v7067 = vmul.f32 %v7064, %v7066
        %v7068 = vadd.f32 %v7064, %v7067
        %vm7069 = vweird.f32 %v7032
        %vm7070 = vweird.f32 %v7064
        %vm7071 = vmor %vm7069, %vm7070
        %v7072 = vsel %vm7071, %v7064, %v7068
        %v7073 = vand.u32 2147483647, %v7032
        %vm7074 = vcmp.eq.f32.partialorder %v7073, 8.507059e+37
        %v7075 = vand.u32 %v7032, 2147483648
        %v7076 = vor.u32 1.1754944e-38, %v7075
        %v7077 = vsel %vm7074, %v7076, %v7072
        %v7078 = vmul.f32 1.0, %v7077
        %v7079 = vrcp.pop %v7033
        %v7080 = vmul.f32 %v7033, %v7079
        %v7081 = vsub.f32 1.0, %v7080
        %v7082 = vmul.f32 %v7079, %v7081
        %v7083 = vadd.f32 %v7079, %v7082
        %vm7084 = vweird.f32 %v7033
        %vm7085 = vweird.f32 %v7079
        %vm7086 = vmor %vm7084, %vm7085
        %v7087 = vsel %vm7086, %v7079, %v7083
        %v7088 = vand.u32 2147483647, %v7033
        %vm7089 = vcmp.eq.f32.partialorder %v7088, 8.507059e+37
        %v7090 = vand.u32 %v7033, 2147483648
        %v7091 = vor.u32 1.1754944e-38, %v7090
        %v7092 = vsel %vm7089, %v7091, %v7087
        %v7093 = vmul.f32 1.0, %v7092
        %v7098 = vrot.slane %v6058, 7
        %v7099 = vrot.slane %v6102, 6
        %v7100 = vrot.slane %v6146, 5
        %vm7101 = vcmask 1040384
        %v7102 = vsel %vm7101, %v6014, %v7098
        %vm7103 = vcmask 1042434
        %v7104 = vsel %vm7103, %v7099, %v7100
        %vm7105 = vcmask 1041408
        %v7106 = vsel %vm7105, %v7102, %v7104
        %v7108 = vlaneseq
        %vm7109 = vcmp.ge.s32.totalorder %v7108, 0
        %vm7110 = vcmp.lt.s32.totalorder %v7108, 512
        %vm7111 = vmand %vm7109, %vm7110
        %7112 = vst.msk [vmem:[%s207] ss:$8 sm:$0xf] %vm7111, %v7106
        %7113 = vst.msk [vmem:[%s207] ss:$8 sm:$0x0] %vm7111, %v7106
        %v7118 = vrot.slane %v6151, 7
        %v7119 = vrot.slane %v6153, 6
        %v7120 = vrot.slane %v6155, 5
        %v7121 = vsel %vm7101, %v6149, %v7118
        %v7122 = vsel %vm7103, %v7119, %v7120
        %v7123 = vsel %vm7105, %v7121, %v7122
        %s7125 = scalar_lea.vmem %s207, 1 [#allocation3]
        %7126 = vst.msk [vmem:[%s7125] ss:$8 sm:$0xf] %vm7111, %v7123
        %7127 = vst.msk [vmem:[%s7125] ss:$8 sm:$0x0] %vm7111, %v7123
        %v7132 = vrot.slane %v6956, 6
        %v7133 = vrot.slane %v6976, 6
        %v7134 = vrot.slane %v6996, 6
        %v7135 = vrot.slane %v7016, 6
        %7140 = vst [vmem:[%s207] sm:$0x1c] %v7132
        %7141 = vst [vmem:[%s207 + $0x8] sm:$0x1c] %v7133
        %7142 = vst [vmem:[%s207 + $0x10] sm:$0x1c] %v7134
        %7143 = vst [vmem:[%s207 + $0x18] sm:$0x1c] %v7135
        %v7148 = vrot.slane %v7048, 3
        %v7149 = vrot.slane %v7063, 3
        %v7150 = vrot.slane %v7078, 3
        %v7151 = vrot.slane %v7093, 3
        %7156 = vst [vmem:[%s207] sm:$0xe0] %v7148
        %7157 = vst [vmem:[%s207 + $0x8] sm:$0xe0] %v7149
        %7158 = vst [vmem:[%s207 + $0x10] sm:$0xe0] %v7150
        %7159 = vst [vmem:[%s207 + $0x18] sm:$0xe0] %v7151
        %s7160 = sand.u32 %s71, 1
        %s7161 = scalar_lea.sflag [#allocation4], %s7160
        %s7162 = sand.u32 %s71, 1
        %s7163 = smul.addr %s7162, 32
        %s7164 = scalar_lea.vmem [#allocation3], %s7163
        // Predicated region
        $region52: #{tpu_custom_call.1} parent=46 // pred_check
          %p7165 = pneg %p81
        $region53: #{tpu_custom_call.1} parent=46 // pred_check_branch
          %7167 = sbr.rel (%p7165) target = $region55
        $region54: #{tpu_custom_call.1} parent=46 // pred_region
          %s7168 = smul.u32 4, %s16
          %7170 = vsyncadd %s7161, 0
          %s7171 = smul.addr %s7168, 8
          %s7172 = scalar_lea.hbm %s2, %s7171
          %s7174 = sshll.u32 %s7164, 4
          %s7175 = int_to_ptr.vmem [resolvable:$true] %s7174
          %s7176 = sshll.u32 %s7172, 4
          %s7177 = int_to_ptr.hbm [resolvable:$true] %s7176
          %7179 = dma.vmem_to_hbm [thread:$0]  %s7175, 512, %s7177, %s7161
        $region55: #{tpu_custom_call.1} parent=46 // pred_fallthru
          _
      $region47: #{tpu_custom_call.1} parent=5 // pred_fallthru
        _
      %p7180 = scmp.le.s32.totalorder 2, %s11
      // Predicated region
      $region56: #{tpu_custom_call.1} parent=5 // pred_check
        %p7181 = pneg %p7180
      $region57: #{tpu_custom_call.1} parent=5 // pred_check_branch
        %7183 = sbr.rel (%p7181) target = $region59
      $region58: #{tpu_custom_call.1} parent=5 // pred_region
        %s7184 = ssub.s32 %s11, 2
        // Predicated region
        $region60: #{tpu_custom_call.1} parent=58 // pred_check
          %p7185 = pneg %p87
        $region61: #{tpu_custom_call.1} parent=58 // pred_check_branch
          %7187 = sbr.rel (%p7185) target = $region63
        $region62: #{tpu_custom_call.1} parent=58 // pred_region
          %s7188 = sand.u32 %s72, 1
          %s7189 = scalar_lea.sflag [#allocation4], %s7188
          %s7190 = sand.u32 %s72, 1
          %s7191 = smul.addr %s7190, 32
          %s7192 = scalar_lea.vmem [#allocation3], %s7191
          %7194 = dma.done %s7189, 512
        $region63: #{tpu_custom_call.1} parent=58 // pred_fallthru
          _
      $region59: #{tpu_custom_call.1} parent=5 // pred_fallthru
        _
    $region6: #{tpu_custom_call.1} parent=1 // loop_footer
      %s15 = sadd.s32 1, %s11
    $region7: #{tpu_custom_call.1} parent=1 // loop_footer_branch
      %10 = sbr.rel target = $region3
    $region8: #{tpu_custom_call.1} parent=1 // loop_exit
      _
    %7195 = vsyncpa [#allocation4], 1
    %s7196 = scalar_lea.sflag [#allocation4], 1
    %7197 = vsyncpa %s7196, 1

</llo_original>
